<compile_context>
chip_gen: v6e
topology: v6e:2x2x1
jax: 0.10.0
libtpu: 0.0.40
codegen_flags: <defaults>
</compile_context>

<pallas_src>
import functools
import math

import jax
import jax.numpy as jnp
from jax.experimental import pallas as pl
from jax.experimental.pallas import tpu as pltpu

BN_EPS = 1e-5
DT = jnp.bfloat16                     # activation / matmul-weight storage dtype
VMEM_LIMIT = 32 * 1024 * 1024         # safe on v5e / v6e / v7x


# ---------------------------------------------------------------------------
# Pallas kernels
# ---------------------------------------------------------------------------
def _pointwise_kernel(x_ref, w_ref, s_ref, b_ref, o_ref, *, relu):
    """(Grouped) 1x1 conv as matmul + folded BN (+ optional ReLU), f32 accum."""
    y = jnp.dot(x_ref[...], w_ref[...], preferred_element_type=jnp.float32)
    y = y * s_ref[...] + b_ref[...]
    if relu:
        y = jnp.maximum(y, 0.0)
    o_ref[...] = y.astype(o_ref.dtype)


def _pointwise_residual_kernel(x_ref, w_ref, s_ref, b_ref, r_ref, o_ref):
    """Grouped 1x1 conv + BN, fused residual add + ReLU (output aliases r)."""
    y = jnp.dot(x_ref[...], w_ref[...], preferred_element_type=jnp.float32)
    y = y * s_ref[...] + b_ref[...] + r_ref[...].astype(jnp.float32)
    o_ref[...] = jnp.maximum(y, 0.0).astype(o_ref.dtype)


def _taps(x_refs, stride, ho, wo):
    """Nine 3x3-window taps read in-kernel as shifted slices.

    stride 1: x_refs = (padded_block,)            -> slice at offset (ky, kx)
    stride 2: x_refs = 4 even/odd phase blocks    -> contiguous slice per phase
    """
    taps = []
    for k in range(9):
        ky, kx = k // 3, k % 3
        if stride == 1:
            t = x_refs[0][pl.ds(ky, ho), pl.ds(kx, wo), :]
        else:
            ph = x_refs[2 * (ky % 2) + (kx % 2)]
            t = ph[pl.ds(ky // 2, ho), pl.ds(kx // 2, wo), :]
        taps.append(t.astype(jnp.float32))
    return taps


def _dwconv_kernel(*refs, stride):
    """Depthwise 3x3 conv + folded BN; one batch image per grid step."""
    o_ref = refs[-1]
    w_ref, s_ref, b_ref = refs[-4], refs[-3], refs[-2]
    x_refs = refs[:-4]
    ho, wo, _ = o_ref.shape
    taps = _taps(x_refs, stride, ho, wo)
    acc = taps[0] * w_ref[0]
    for k in range(1, 9):
        acc = acc + taps[k] * w_ref[k]
    o_ref[...] = (acc * s_ref[0] + b_ref[0]).astype(o_ref.dtype)


def _pool_kernel(*refs, op, relu):
    """3x3 stride-2 max / avg pooling (+ optional ReLU); one image per step."""
    o_ref = refs[-1]
    x_refs = refs[:-1]
    ho, wo, _ = o_ref.shape
    taps = _taps(x_refs, 2, ho, wo)
    acc = taps[0]
    for t in taps[1:]:
        acc = jnp.maximum(acc, t) if op == "max" else acc + t
    if op == "avg":
        acc = acc * (1.0 / 9.0)
    if relu:
        acc = jnp.maximum(acc, 0.0)
    o_ref[...] = acc.astype(o_ref.dtype)


def _head_kernel(x_ref, w_ref, b_ref, o_ref):
    """Global average pool + fully-connected classifier (tiny, single program)."""
    pooled = jnp.mean(x_ref[...].astype(jnp.float32), axis=1)       # (N, C)
    o_ref[...] = jnp.dot(pooled, w_ref[...],
                         preferred_element_type=jnp.float32) + b_ref[...]


# ---------------------------------------------------------------------------
# pallas_call wrappers
# ---------------------------------------------------------------------------
def _compiler_params():
    return pltpu.CompilerParams(dimension_semantics=("parallel",),
                                vmem_limit_bytes=VMEM_LIMIT)


def _row_tile(m, target=512):
    """Largest multiple-of-8 tile <= target that divides M (else whole M)."""
    if m <= target:
        return m
    for cand in range(target, 0, -8):
        if m % cand == 0:
            return cand
    return m


def _pointwise(x2d, w, scale, bias, relu=False, residual=None):
    """(M, Cin) @ (Cin, Cout) + BN epilogue, tiled over M with a parallel grid."""
    m, cin = x2d.shape
    cout = w.shape[1]
    x2d = x2d.astype(DT)
    w = w.astype(DT)
    scale = scale.astype(jnp.float32).reshape(1, cout)
    bias = bias.astype(jnp.float32).reshape(1, cout)
    tm = _row_tile(m)
    grid = (m // tm,)
    x_spec = pl.BlockSpec((tm, cin), lambda i: (i, 0))
    w_spec = pl.BlockSpec((cin, cout), lambda i: (0, 0))
    v_spec = pl.BlockSpec((1, cout), lambda i: (0, 0))
    o_spec = pl.BlockSpec((tm, cout), lambda i: (i, 0))
    cost = pl.CostEstimate(
        flops=2 * m * cin * cout, transcendentals=0,
        bytes_accessed=2 * (m * cin + cin * cout + 2 * m * cout) + 8 * cout)
    common = dict(grid=grid,
                  out_shape=jax.ShapeDtypeStruct((m, cout), DT),
                  out_specs=o_spec,
                  compiler_params=_compiler_params(),
                  cost_estimate=cost)
    if residual is not None:
        return pl.pallas_call(
            _pointwise_residual_kernel,
            in_specs=[x_spec, w_spec, v_spec, v_spec, o_spec],
            input_output_aliases={4: 0},
            **common,
        )(x2d, w, scale, bias, residual.astype(DT))
    return pl.pallas_call(
        functools.partial(_pointwise_kernel, relu=relu),
        in_specs=[x_spec, w_spec, v_spec, v_spec],
        **common,
    )(x2d, w, scale, bias)


def _batch_call(kernel, ins, aux, out_hw, c, n):
    """pallas_call gridded over the batch dimension (one image block / step)."""
    ho, wo = out_hw
    in_specs = [pl.BlockSpec((None,) + a.shape[1:],
                             lambda b: (b, 0, 0, 0)) for a in ins]
    in_specs += [pl.BlockSpec(a.shape, lambda b, nd=a.ndim: (0,) * nd)
                 for a in aux]
    return pl.pallas_call(
        kernel,
        grid=(n,),
        in_specs=in_specs,
        out_specs=pl.BlockSpec((None, ho, wo, c), lambda b: (b, 0, 0, 0)),
        out_shape=jax.ShapeDtypeStruct((n, ho, wo, c), DT),
        compiler_params=_compiler_params(),
    )(*ins, *aux)


def _pad_hw(x, value=0.0):
    return jnp.pad(x, ((0, 0), (1, 1), (1, 1), (0, 0)), constant_values=value)


def _phase_split(xp):
    """Even/odd row-column phases so stride-2 taps become contiguous reads."""
    return (xp[:, 0::2, 0::2, :], xp[:, 0::2, 1::2, :],
            xp[:, 1::2, 0::2, :], xp[:, 1::2, 1::2, :])


def _out_hw(h, w):
    return (h - 1) // 2 + 1, (w - 1) // 2 + 1


def _dwconv3x3(x, wd, sd, bd, stride):
    n, h, w, c = x.shape
    xp = _pad_hw(x)
    if stride == 1:
        ins, ohw = (xp,), (h, w)
    else:
        ins, ohw = _phase_split(xp), _out_hw(h, w)
    kern = functools.partial(_dwconv_kernel, stride=stride)
    return _batch_call(kern, ins, (wd, sd, bd), ohw, c, n)


def _pool3x3_s2(x, op, relu):
    n, h, w, c = x.shape
    xp = _pad_hw(x, float("-inf") if op == "max" else 0.0)
    kern = functools.partial(_pool_kernel, op=op, relu=relu)
    return _batch_call(kern, _phase_split(xp), (), _out_hw(h, w), c, n)


# ---------------------------------------------------------------------------
# Glue: BN folding, block-diagonal grouped weights, channel-shuffle fold
# ---------------------------------------------------------------------------
def _fold_bn(p):
    scale = p["gamma"] / jnp.sqrt(p["var"] + BN_EPS)
    bias = scale * (p["b"] - p["mean"]) + p["beta"]
    return scale, bias


def _dense_1x1(w, groups):
    """Grouped 1x1 conv weight (Cout, Cin/G, 1, 1) -> dense (Cin, Cout)."""
    cout, cin_g = w.shape[0], w.shape[1]
    cout_g, cin = cout // groups, cin_g * groups
    w2 = w[:, :, 0, 0]
    dense = jnp.zeros((cin, cout), jnp.float32)
    for g in range(groups):
        dense = dense.at[g * cin_g:(g + 1) * cin_g,
                         g * cout_g:(g + 1) * cout_g].set(
            w2[g * cout_g:(g + 1) * cout_g, :].T)
    return dense


def _shuffle_perm(c, groups):
    """perm[j] = source channel of shuffled channel j (view(G,C/G).T.flatten)."""
    j = jnp.arange(c)
    return (j % groups) * (c // groups) + j // groups


# ---------------------------------------------------------------------------
# Model forward
# ---------------------------------------------------------------------------
def _stage1_forward(x, p):
    # Conv2d(3->24, k=3, s=2, p=1) + BN + ReLU via lane-contiguous (M, 27) im2col.
    n, h, w, c = x.shape
    xp = _pad_hw(x)
    ho, wo = _out_hw(h, w)
    cols = jnp.concatenate(
        [xp[:, ky:ky + 2 * (ho - 1) + 1:2, kx:kx + 2 * (wo - 1) + 1:2, :]
         for ky in range(3) for kx in range(3)], axis=-1)
    cols = cols.reshape(n * ho * wo, 9 * c)
    cout = p["w"].shape[0]
    w_mat = jnp.transpose(p["w"], (2, 3, 1, 0)).reshape(9 * c, cout)
    scale, bias = _fold_bn(p)
    y = _pointwise(cols, w_mat, scale, bias, relu=True).reshape(n, ho, wo, cout)
    # MaxPool2d(k=3, s=2, p=1)
    return _pool3x3_s2(y, "max", relu=False)


def _unit_forward(x, p):
    n, h, w, cin = x.shape
    groups, stride = p["groups"], p["stride"]

    # Grouped 1x1 "down" conv + BN + ReLU; channel shuffle folded into the
    # output columns so no activation permutation is needed afterwards.
    c1 = p["conv1"]
    w1 = _dense_1x1(c1["w"], c1["groups"])
    s1, b1 = _fold_bn(c1)
    hidden = w1.shape[1]
    perm = _shuffle_perm(hidden, groups)
    w1, s1, b1 = w1[:, perm], s1[perm], b1[perm]
    h1 = _pointwise(x.reshape(-1, cin), w1, s1, b1, relu=True)
    h1 = h1.reshape(n, h, w, hidden)

    # Depthwise 3x3 + BN (taps generated in-kernel, stride via phase split).
    dwp = p["dw"]
    wd = jnp.transpose(dwp["w"][:, 0], (1, 2, 0)).reshape(9, 1, hidden)
    wd = wd.astype(jnp.float32)
    sd, bd = _fold_bn(dwp)
    sd = sd.reshape(1, 1, hidden).astype(jnp.float32)
    bd = bd.reshape(1, 1, hidden).astype(jnp.float32)
    d = _dwconv3x3(h1, wd, sd, bd, stride)
    _, ho, wo, _ = d.shape

    # Grouped 1x1 "up" conv + BN (+ fused residual / ReLU).
    c3 = p["conv3"]
    w3 = _dense_1x1(c3["w"], groups)
    s3, b3 = _fold_bn(c3)
    cout_up = w3.shape[1]

    if stride != 1:
        # relu(concat([res, avgpool(x)])) == concat([relu(res), relu(avgpool(x))])
        res = _pointwise(d.reshape(-1, hidden), w3, s3, b3, relu=True)
        res = res.reshape(n, ho, wo, cout_up)
        short = _pool3x3_s2(x, "avg", relu=True)
        return jnp.concatenate([res, short], axis=-1)
    out = _pointwise(d.reshape(-1, hidden), w3, s3, b3,
                     residual=x.reshape(-1, cout_up))
    return out.reshape(n, ho, wo, cout_up)


def _head(x, fc_w, fc_b):
    n, h, w, c = x.shape
    x3 = x.reshape(n, h * w, c)
    wt = fc_w.T.astype(jnp.float32)
    bt = fc_b.reshape(1, -1).astype(jnp.float32)
    return pl.pallas_call(
        _head_kernel,
        out_shape=jax.ShapeDtypeStruct((n, wt.shape[1]), jnp.float32),
        in_specs=[pl.BlockSpec(memory_space=pltpu.MemorySpace.VMEM)] * 3,
        out_specs=pl.BlockSpec(memory_space=pltpu.MemorySpace.VMEM),
    )(x3, wt, bt)


def shufflenet_v1_forward(x_nchw, params):
    x = jnp.transpose(x_nchw, (0, 2, 3, 1)).astype(DT)    # NCHW -> NHWC, bf16
    x = _stage1_forward(x, params["stage1_conv"])
    for stage in params["stages"]:
        for unit in stage:
            x = _unit_forward(x, unit)
    return _head(x, params["fc_w"], params["fc_b"])


# ---------------------------------------------------------------------------
# Deterministic parameter construction (PyTorch shapes)
# ---------------------------------------------------------------------------
class _ParamGen:
    def __init__(self, seed):
        self._key = jax.random.PRNGKey(seed)

    def normal(self, shape, std=0.1):
        self._key, k = jax.random.split(self._key)
        return std * jax.random.normal(k, shape, dtype=jnp.float32)


def _make_conv_bn(pg, cin, cout, groups, ksize):
    fan_in = (cin // groups) * ksize * ksize
    return dict(
        w=pg.normal((cout, cin // groups, ksize, ksize), std=1.0 / math.sqrt(fan_in)),
        b=pg.normal((cout,), std=0.01),
        gamma=1.0 + pg.normal((cout,), std=0.1),
        beta=pg.normal((cout,), std=0.1),
        mean=pg.normal((cout,), std=0.1),
        var=jnp.abs(pg.normal((cout,), std=0.1)) + 1.0,
        groups=groups,
    )


def _make_unit(pg, cin, cout, stride, num_groups, grouped_conv1=True,
               bottleneck_scale=0.25):
    hidden = int(bottleneck_scale * cout)
    up_out = cout - cin if stride != 1 else cout
    return dict(
        conv1=_make_conv_bn(pg, cin, hidden, num_groups if grouped_conv1 else 1, 1),
        dw=_make_conv_bn(pg, hidden, hidden, hidden, 3),
        conv3=_make_conv_bn(pg, hidden, up_out, num_groups, 1),
        stride=stride,
        groups=num_groups,
    )


def make_params(pg, num_classes, num_groups, scale_factor=1):
    group2channels = {1: 144, 2: 200, 3: 240, 4: 272, 8: 384}
    assert num_groups in group2channels, "Unknown num_groups"
    out_channels = int(group2channels[num_groups] * scale_factor)

    params = {"stage1_conv": _make_conv_bn(pg, 3, 24, 1, 3)}
    stage2 = [_make_unit(pg, 24, out_channels, 2, num_groups, grouped_conv1=False)]
    stage2 += [_make_unit(pg, out_channels, out_channels, 1, num_groups)
               for _ in range(3)]
    stage3 = [_make_unit(pg, out_channels, 2 * out_channels, 2, num_groups)]
    stage3 += [_make_unit(pg, 2 * out_channels, 2 * out_channels, 1, num_groups)
               for _ in range(7)]
    stage4 = [_make_unit(pg, 2 * out_channels, 4 * out_channels, 2, num_groups)]
    stage4 += [_make_unit(pg, 4 * out_channels, 4 * out_channels, 1, num_groups)
               for _ in range(3)]
    params["stages"] = [stage2, stage3, stage4]
    params["fc_w"] = pg.normal((num_classes, 4 * out_channels),
                               std=1.0 / math.sqrt(4 * out_channels))
    params["fc_b"] = pg.normal((num_classes,), std=0.01)
    return params


# ---------------------------------------------------------------------------
if __name__ == "__main__":
    num_classes, num_groups, scale_factor = 10, 2, 0.2   # out_channels = 40
    params = make_params(_ParamGen(0), num_classes, num_groups, scale_factor)

    x = jax.random.normal(jax.random.PRNGKey(0), (2, 3, 32, 32), dtype=jnp.float32)

    fwd = jax.jit(lambda inp: shufflenet_v1_forward(inp, params))
    y = fwd(x)
    jax.block_until_ready(y)
    assert y.shape == (2, num_classes), y.shape
    assert bool(jnp.all(jnp.isfinite(y)))
    print("KERNEL_OK")
</pallas_src>

<mosaic_0001>
module attributes {stable_mosaic.version = 11 : i64} {
  func.func @_pointwise_kernel(%arg0: i32, %arg1: memref<512x27xbf16, #tpu.memory_space<vmem>>, %arg2: memref<27x24xbf16, #tpu.memory_space<vmem>>, %arg3: memref<1x24xf32, #tpu.memory_space<vmem>>, %arg4: memref<1x24xf32, #tpu.memory_space<vmem>>, %arg5: memref<512x24xbf16, #tpu.memory_space<vmem>>) attributes {dimension_semantics = [#tpu.dimension_semantics<parallel>], iteration_bounds = array<i64: 1>, scalar_prefetch = 0 : i64, scratch_operands = 0 : i64, tpu.core_type = #tpu.core_type<tc>, window_params = [{transform_indices = @transform_0, window_bounds = array<i64: 512, 27>}, {pipeline_mode = #tpu.pipeline_mode<synchronous>, transform_indices = @transform_1, window_bounds = array<i64: 27, 24>}, {pipeline_mode = #tpu.pipeline_mode<synchronous>, transform_indices = @transform_2, window_bounds = array<i64: 1, 24>}, {pipeline_mode = #tpu.pipeline_mode<synchronous>, transform_indices = @transform_3, window_bounds = array<i64: 1, 24>}, {transform_indices = @transform_4, window_bounds = array<i64: 512, 24>}]} {
    %c0 = arith.constant 0 : index
    %c0_0 = arith.constant 0 : index
    %0 = vector.load %arg1[%c0, %c0_0] : memref<512x27xbf16, #tpu.memory_space<vmem>>, vector<512x27xbf16>
    %c0_1 = arith.constant 0 : index
    %c0_2 = arith.constant 0 : index
    %1 = vector.load %arg2[%c0_1, %c0_2] : memref<27x24xbf16, #tpu.memory_space<vmem>>, vector<27x24xbf16>
    %cst = arith.constant dense<0.000000e+00> : vector<512x24xf32>
    %2 = tpu.matmul %0, %1, %cst {dimension_numbers = #tpu.dot_dimension_numbers<[1], [0], [0], [1], [0, 0, 1, 1], [], []>} : vector<512x27xbf16>, vector<27x24xbf16>, vector<512x24xf32> -> vector<512x24xf32>
    %c0_3 = arith.constant 0 : index
    %c0_4 = arith.constant 0 : index
    %3 = vector.load %arg3[%c0_3, %c0_4] : memref<1x24xf32, #tpu.memory_space<vmem>>, vector<1x24xf32>
    %4 = vector.broadcast %3 : vector<1x24xf32> to vector<512x24xf32>
    %5 = arith.mulf %2, %4 : vector<512x24xf32>
    %c0_5 = arith.constant 0 : index
    %c0_6 = arith.constant 0 : index
    %6 = vector.load %arg4[%c0_5, %c0_6] : memref<1x24xf32, #tpu.memory_space<vmem>>, vector<1x24xf32>
    %7 = vector.broadcast %6 : vector<1x24xf32> to vector<512x24xf32>
    %8 = arith.addf %5, %7 : vector<512x24xf32>
    %cst_7 = arith.constant 0.000000e+00 : f32
    %9 = vector.broadcast %cst_7 : f32 to vector<512x24xf32>
    %10 = arith.maximumf %8, %9 : vector<512x24xf32>
    %11 = arith.truncf %10 : vector<512x24xf32> to vector<512x24xbf16>
    %c0_8 = arith.constant 0 : index
    %c0_9 = arith.constant 0 : index
    %12 = vector.load %arg5[%c0_8, %c0_9] : memref<512x24xbf16, #tpu.memory_space<vmem>>, vector<512x24xbf16>
    tpu.vector_store %arg5[%c0_8, %c0_9], %11 {strides = array<i32>} : memref<512x24xbf16, #tpu.memory_space<vmem>>, vector<512x24xbf16>,
    return
  }
  func.func @transform_0(%arg0: i32) -> (i32, i32) {
    %c0_i32 = arith.constant 0 : i32
    %c0_i32_0 = arith.constant 0 : i32
    return %arg0, %c0_i32 : i32, i32
  }
  func.func @transform_1(%arg0: i32) -> (i32, i32) {
    %c0_i32 = arith.constant 0 : i32
    %c0_i32_0 = arith.constant 0 : i32
    %c0_i32_1 = arith.constant 0 : i32
    return %c0_i32, %c0_i32_0 : i32, i32
  }
  func.func @transform_2(%arg0: i32) -> (i32, i32) {
    %c0_i32 = arith.constant 0 : i32
    %c0_i32_0 = arith.constant 0 : i32
    %c0_i32_1 = arith.constant 0 : i32
    return %c0_i32, %c0_i32_0 : i32, i32
  }
  func.func @transform_3(%arg0: i32) -> (i32, i32) {
    %c0_i32 = arith.constant 0 : i32
    %c0_i32_0 = arith.constant 0 : i32
    %c0_i32_1 = arith.constant 0 : i32
    return %c0_i32, %c0_i32_0 : i32, i32
  }
  func.func @transform_4(%arg0: i32) -> (i32, i32) {
    %c0_i32 = arith.constant 0 : i32
    %c0_i32_0 = arith.constant 0 : i32
    return %arg0, %c0_i32 : i32, i32
  }
}

module attributes {stable_mosaic.version = 11 : i64} {
  func.func @_pool_kernel(%arg0: i32, %arg1: memref<1x9x9x24xbf16, #tpu.memory_space<vmem>>, %arg2: memref<1x9x9x24xbf16, #tpu.memory_space<vmem>>, %arg3: memref<1x9x9x24xbf16, #tpu.memory_space<vmem>>, %arg4: memref<1x9x9x24xbf16, #tpu.memory_space<vmem>>, %arg5: memref<1x8x8x24xbf16, #tpu.memory_space<vmem>>) attributes {dimension_semantics = [#tpu.dimension_semantics<parallel>], iteration_bounds = array<i64: 2>, scalar_prefetch = 0 : i64, scratch_operands = 0 : i64, tpu.core_type = #tpu.core_type<tc>, window_params = [{transform_indices = @transform_0, window_bounds = array<i64: 1, 9, 9, 24>}, {transform_indices = @transform_1, window_bounds = array<i64: 1, 9, 9, 24>}, {transform_indices = @transform_2, window_bounds = array<i64: 1, 9, 9, 24>}, {transform_indices = @transform_3, window_bounds = array<i64: 1, 9, 9, 24>}, {transform_indices = @transform_4, window_bounds = array<i64: 1, 8, 8, 24>}]} {
    %c0 = arith.constant 0 : index
    %c0_0 = arith.constant 0 : index
    %c0_1 = arith.constant 0 : index
    %c0_2 = arith.constant 0 : index
    %0 = vector.load %arg1[%c0, %c0_0, %c0_1, %c0_2] : memref<1x9x9x24xbf16, #tpu.memory_space<vmem>>, vector<1x8x8x24xbf16>
    %1 = vector.shape_cast %0 : vector<1x8x8x24xbf16> to vector<8x8x24xbf16>
    %2 = arith.extf %1 : vector<8x8x24xbf16> to vector<8x8x24xf32>
    %c0_3 = arith.constant 0 : index
    %c0_4 = arith.constant 0 : index
    %c0_5 = arith.constant 0 : index
    %c0_6 = arith.constant 0 : index
    %3 = vector.load %arg2[%c0_3, %c0_4, %c0_5, %c0_6] : memref<1x9x9x24xbf16, #tpu.memory_space<vmem>>, vector<1x8x8x24xbf16>
    %4 = vector.shape_cast %3 : vector<1x8x8x24xbf16> to vector<8x8x24xbf16>
    %5 = arith.extf %4 : vector<8x8x24xbf16> to vector<8x8x24xf32>
    %c0_7 = arith.constant 0 : index
    %c0_8 = arith.constant 0 : index
    %c1 = arith.constant 1 : index
    %c0_9 = arith.constant 0 : index
    %6 = vector.load %arg1[%c0_7, %c0_8, %c1, %c0_9] : memref<1x9x9x24xbf16, #tpu.memory_space<vmem>>, vector<1x8x8x24xbf16>
    %7 = vector.shape_cast %6 : vector<1x8x8x24xbf16> to vector<8x8x24xbf16>
    %8 = arith.extf %7 : vector<8x8x24xbf16> to vector<8x8x24xf32>
    %c0_10 = arith.constant 0 : index
    %c0_11 = arith.constant 0 : index
    %c0_12 = arith.constant 0 : index
    %c0_13 = arith.constant 0 : index
    %9 = vector.load %arg3[%c0_10, %c0_11, %c0_12, %c0_13] : memref<1x9x9x24xbf16, #tpu.memory_space<vmem>>, vector<1x8x8x24xbf16>
    %10 = vector.shape_cast %9 : vector<1x8x8x24xbf16> to vector<8x8x24xbf16>
    %11 = arith.extf %10 : vector<8x8x24xbf16> to vector<8x8x24xf32>
    %c0_14 = arith.constant 0 : index
    %c0_15 = arith.constant 0 : index
    %c0_16 = arith.constant 0 : index
    %c0_17 = arith.constant 0 : index
    %12 = vector.load %arg4[%c0_14, %c0_15, %c0_16, %c0_17] : memref<1x9x9x24xbf16, #tpu.memory_space<vmem>>, vector<1x8x8x24xbf16>
    %13 = vector.shape_cast %12 : vector<1x8x8x24xbf16> to vector<8x8x24xbf16>
    %14 = arith.extf %13 : vector<8x8x24xbf16> to vector<8x8x24xf32>
    %c0_18 = arith.constant 0 : index
    %c0_19 = arith.constant 0 : index
    %c1_20 = arith.constant 1 : index
    %c0_21 = arith.constant 0 : index
    %15 = vector.load %arg3[%c0_18, %c0_19, %c1_20, %c0_21] : memref<1x9x9x24xbf16, #tpu.memory_space<vmem>>, vector<1x8x8x24xbf16>
    %16 = vector.shape_cast %15 : vector<1x8x8x24xbf16> to vector<8x8x24xbf16>
    %17 = arith.extf %16 : vector<8x8x24xbf16> to vector<8x8x24xf32>
    %c0_22 = arith.constant 0 : index
    %c1_23 = arith.constant 1 : index
    %c0_24 = arith.constant 0 : index
    %c0_25 = arith.constant 0 : index
    %18 = vector.load %arg1[%c0_22, %c1_23, %c0_24, %c0_25] : memref<1x9x9x24xbf16, #tpu.memory_space<vmem>>, vector<1x8x8x24xbf16>
    %19 = vector.shape_cast %18 : vector<1x8x8x24xbf16> to vector<8x8x24xbf16>
    %20 = arith.extf %19 : vector<8x8x24xbf16> to vector<8x8x24xf32>
    %c0_26 = arith.constant 0 : index
    %c1_27 = arith.constant 1 : index
    %c0_28 = arith.constant 0 : index
    %c0_29 = arith.constant 0 : index
    %21 = vector.load %arg2[%c0_26, %c1_27, %c0_28, %c0_29] : memref<1x9x9x24xbf16, #tpu.memory_space<vmem>>, vector<1x8x8x24xbf16>
    %22 = vector.shape_cast %21 : vector<1x8x8x24xbf16> to vector<8x8x24xbf16>
    %23 = arith.extf %22 : vector<8x8x24xbf16> to vector<8x8x24xf32>
    %c0_30 = arith.constant 0 : index
    %c1_31 = arith.constant 1 : index
    %c1_32 = arith.constant 1 : index
    %c0_33 = arith.constant 0 : index
    %24 = vector.load %arg1[%c0_30, %c1_31, %c1_32, %c0_33] : memref<1x9x9x24xbf16, #tpu.memory_space<vmem>>, vector<1x8x8x24xbf16>
    %25 = vector.shape_cast %24 : vector<1x8x8x24xbf16> to vector<8x8x24xbf16>
    %26 = arith.extf %25 : vector<8x8x24xbf16> to vector<8x8x24xf32>
    %27 = arith.maximumf %2, %5 : vector<8x8x24xf32>
    %28 = arith.maximumf %27, %8 : vector<8x8x24xf32>
    %29 = arith.maximumf %28, %11 : vector<8x8x24xf32>
    %30 = arith.maximumf %29, %14 : vector<8x8x24xf32>
    %31 = arith.maximumf %30, %17 : vector<8x8x24xf32>
    %32 = arith.maximumf %31, %20 : vector<8x8x24xf32>
    %33 = arith.maximumf %32, %23 : vector<8x8x24xf32>
    %34 = arith.maximumf %33, %26 : vector<8x8x24xf32>
    %35 = arith.truncf %34 : vector<8x8x24xf32> to vector<8x8x24xbf16>
    %c0_34 = arith.constant 0 : index
    %c0_35 = arith.constant 0 : index
    %c0_36 = arith.constant 0 : index
    %c0_37 = arith.constant 0 : index
    %36 = vector.load %arg5[%c0_34, %c0_35, %c0_36, %c0_37] : memref<1x8x8x24xbf16, #tpu.memory_space<vmem>>, vector<1x8x8x24xbf16>
    %37 = vector.shape_cast %36 : vector<1x8x8x24xbf16> to vector<8x8x24xbf16>
    %38 = vector.shape_cast %35 : vector<8x8x24xbf16> to vector<1x8x8x24xbf16>
    tpu.vector_store %arg5[%c0_34, %c0_35, %c0_36, %c0_37], %38 {strides = array<i32>} : memref<1x8x8x24xbf16, #tpu.memory_space<vmem>>, vector<1x8x8x24xbf16>,
    return
  }
  func.func @transform_0(%arg0: i32) -> (i32, i32, i32, i32) {
    %c0_i32 = arith.constant 0 : i32
    %c0_i32_0 = arith.constant 0 : i32
    %c0_i32_1 = arith.constant 0 : i32
    %c0_i32_2 = arith.constant 0 : i32
    return %arg0, %c0_i32, %c0_i32_0, %c0_i32_1 : i32, i32, i32, i32
  }
  func.func @transform_1(%arg0: i32) -> (i32, i32, i32, i32) {
    %c0_i32 = arith.constant 0 : i32
    %c0_i32_0 = arith.constant 0 : i32
    %c0_i32_1 = arith.constant 0 : i32
    %c0_i32_2 = arith.constant 0 : i32
    return %arg0, %c0_i32, %c0_i32_0, %c0_i32_1 : i32, i32, i32, i32
  }
  func.func @transform_2(%arg0: i32) -> (i32, i32, i32, i32) {
    %c0_i32 = arith.constant 0 : i32
    %c0_i32_0 = arith.constant 0 : i32
    %c0_i32_1 = arith.constant 0 : i32
    %c0_i32_2 = arith.constant 0 : i32
    return %arg0, %c0_i32, %c0_i32_0, %c0_i32_1 : i32, i32, i32, i32
  }
  func.func @transform_3(%arg0: i32) -> (i32, i32, i32, i32) {
    %c0_i32 = arith.constant 0 : i32
    %c0_i32_0 = arith.constant 0 : i32
    %c0_i32_1 = arith.constant 0 : i32
    %c0_i32_2 = arith.constant 0 : i32
    return %arg0, %c0_i32, %c0_i32_0, %c0_i32_1 : i32, i32, i32, i32
  }
  func.func @transform_4(%arg0: i32) -> (i32, i32, i32, i32) {
    %c0_i32 = arith.constant 0 : i32
    %c0_i32_0 = arith.constant 0 : i32
    %c0_i32_1 = arith.constant 0 : i32
    %c0_i32_2 = arith.constant 0 : i32
    return %arg0, %c0_i32, %c0_i32_0, %c0_i32_1 : i32, i32, i32, i32
  }
}

module attributes {stable_mosaic.version = 11 : i64} {
  func.func @_pointwise_kernel(%arg0: i32, %arg1: memref<128x24xbf16, #tpu.memory_space<vmem>>, %arg2: memref<24x10xbf16, #tpu.memory_space<vmem>>, %arg3: memref<1x10xf32, #tpu.memory_space<vmem>>, %arg4: memref<1x10xf32, #tpu.memory_space<vmem>>, %arg5: memref<128x10xbf16, #tpu.memory_space<vmem>>) attributes {dimension_semantics = [#tpu.dimension_semantics<parallel>], iteration_bounds = array<i64: 1>, scalar_prefetch = 0 : i64, scratch_operands = 0 : i64, tpu.core_type = #tpu.core_type<tc>, window_params = [{transform_indices = @transform_0, window_bounds = array<i64: 128, 24>}, {pipeline_mode = #tpu.pipeline_mode<synchronous>, transform_indices = @transform_1, window_bounds = array<i64: 24, 10>}, {pipeline_mode = #tpu.pipeline_mode<synchronous>, transform_indices = @transform_2, window_bounds = array<i64: 1, 10>}, {pipeline_mode = #tpu.pipeline_mode<synchronous>, transform_indices = @transform_3, window_bounds = array<i64: 1, 10>}, {transform_indices = @transform_4, window_bounds = array<i64: 128, 10>}]} {
    %c0 = arith.constant 0 : index
    %c0_0 = arith.constant 0 : index
    %0 = vector.load %arg1[%c0, %c0_0] : memref<128x24xbf16, #tpu.memory_space<vmem>>, vector<128x24xbf16>
    %c0_1 = arith.constant 0 : index
    %c0_2 = arith.constant 0 : index
    %1 = vector.load %arg2[%c0_1, %c0_2] : memref<24x10xbf16, #tpu.memory_space<vmem>>, vector<24x10xbf16>
    %cst = arith.constant dense<0.000000e+00> : vector<128x10xf32>
    %2 = tpu.matmul %0, %1, %cst {dimension_numbers = #tpu.dot_dimension_numbers<[1], [0], [0], [1], [0, 0, 1, 1], [], []>} : vector<128x24xbf16>, vector<24x10xbf16>, vector<128x10xf32> -> vector<128x10xf32>
    %c0_3 = arith.constant 0 : index
    %c0_4 = arith.constant 0 : index
    %3 = vector.load %arg3[%c0_3, %c0_4] : memref<1x10xf32, #tpu.memory_space<vmem>>, vector<1x10xf32>
    %4 = vector.broadcast %3 : vector<1x10xf32> to vector<128x10xf32>
    %5 = arith.mulf %2, %4 : vector<128x10xf32>
    %c0_5 = arith.constant 0 : index
    %c0_6 = arith.constant 0 : index
    %6 = vector.load %arg4[%c0_5, %c0_6] : memref<1x10xf32, #tpu.memory_space<vmem>>, vector<1x10xf32>
    %7 = vector.broadcast %6 : vector<1x10xf32> to vector<128x10xf32>
    %8 = arith.addf %5, %7 : vector<128x10xf32>
    %cst_7 = arith.constant 0.000000e+00 : f32
    %9 = vector.broadcast %cst_7 : f32 to vector<128x10xf32>
    %10 = arith.maximumf %8, %9 : vector<128x10xf32>
    %11 = arith.truncf %10 : vector<128x10xf32> to vector<128x10xbf16>
    %c0_8 = arith.constant 0 : index
    %c0_9 = arith.constant 0 : index
    %12 = vector.load %arg5[%c0_8, %c0_9] : memref<128x10xbf16, #tpu.memory_space<vmem>>, vector<128x10xbf16>
    tpu.vector_store %arg5[%c0_8, %c0_9], %11 {strides = array<i32>} : memref<128x10xbf16, #tpu.memory_space<vmem>>, vector<128x10xbf16>,
    return
  }
  func.func @transform_0(%arg0: i32) -> (i32, i32) {
    %c0_i32 = arith.constant 0 : i32
    %c0_i32_0 = arith.constant 0 : i32
    return %arg0, %c0_i32 : i32, i32
  }
  func.func @transform_1(%arg0: i32) -> (i32, i32) {
    %c0_i32 = arith.constant 0 : i32
    %c0_i32_0 = arith.constant 0 : i32
    %c0_i32_1 = arith.constant 0 : i32
    return %c0_i32, %c0_i32_0 : i32, i32
  }
  func.func @transform_2(%arg0: i32) -> (i32, i32) {
    %c0_i32 = arith.constant 0 : i32
    %c0_i32_0 = arith.constant 0 : i32
    %c0_i32_1 = arith.constant 0 : i32
    return %c0_i32, %c0_i32_0 : i32, i32
  }
  func.func @transform_3(%arg0: i32) -> (i32, i32) {
    %c0_i32 = arith.constant 0 : i32
    %c0_i32_0 = arith.constant 0 : i32
    %c0_i32_1 = arith.constant 0 : i32
    return %c0_i32, %c0_i32_0 : i32, i32
  }
  func.func @transform_4(%arg0: i32) -> (i32, i32) {
    %c0_i32 = arith.constant 0 : i32
    %c0_i32_0 = arith.constant 0 : i32
    return %arg0, %c0_i32 : i32, i32
  }
}

module attributes {stable_mosaic.version = 11 : i64} {
  func.func @_dwconv_kernel(%arg0: i32, %arg1: memref<1x5x5x10xbf16, #tpu.memory_space<vmem>>, %arg2: memref<1x5x5x10xbf16, #tpu.memory_space<vmem>>, %arg3: memref<1x5x5x10xbf16, #tpu.memory_space<vmem>>, %arg4: memref<1x5x5x10xbf16, #tpu.memory_space<vmem>>, %arg5: memref<9x1x10xf32, #tpu.memory_space<vmem>>, %arg6: memref<1x1x10xf32, #tpu.memory_space<vmem>>, %arg7: memref<1x1x10xf32, #tpu.memory_space<vmem>>, %arg8: memref<1x4x4x10xbf16, #tpu.memory_space<vmem>>) attributes {dimension_semantics = [#tpu.dimension_semantics<parallel>], iteration_bounds = array<i64: 2>, scalar_prefetch = 0 : i64, scratch_operands = 0 : i64, tpu.core_type = #tpu.core_type<tc>, window_params = [{transform_indices = @transform_0, window_bounds = array<i64: 1, 5, 5, 10>}, {transform_indices = @transform_1, window_bounds = array<i64: 1, 5, 5, 10>}, {transform_indices = @transform_2, window_bounds = array<i64: 1, 5, 5, 10>}, {transform_indices = @transform_3, window_bounds = array<i64: 1, 5, 5, 10>}, {pipeline_mode = #tpu.pipeline_mode<synchronous>, transform_indices = @transform_4, window_bounds = array<i64: 9, 1, 10>}, {pipeline_mode = #tpu.pipeline_mode<synchronous>, transform_indices = @transform_5, window_bounds = array<i64: 1, 1, 10>}, {pipeline_mode = #tpu.pipeline_mode<synchronous>, transform_indices = @transform_6, window_bounds = array<i64: 1, 1, 10>}, {transform_indices = @transform_7, window_bounds = array<i64: 1, 4, 4, 10>}]} {
    %c0 = arith.constant 0 : index
    %c0_0 = arith.constant 0 : index
    %c0_1 = arith.constant 0 : index
    %c0_2 = arith.constant 0 : index
    %0 = vector.load %arg1[%c0, %c0_0, %c0_1, %c0_2] : memref<1x5x5x10xbf16, #tpu.memory_space<vmem>>, vector<1x4x4x10xbf16>
    %1 = vector.shape_cast %0 : vector<1x4x4x10xbf16> to vector<4x4x10xbf16>
    %2 = arith.extf %1 : vector<4x4x10xbf16> to vector<4x4x10xf32>
    %c0_3 = arith.constant 0 : index
    %c0_4 = arith.constant 0 : index
    %c0_5 = arith.constant 0 : index
    %c0_6 = arith.constant 0 : index
    %3 = vector.load %arg2[%c0_3, %c0_4, %c0_5, %c0_6] : memref<1x5x5x10xbf16, #tpu.memory_space<vmem>>, vector<1x4x4x10xbf16>
    %4 = vector.shape_cast %3 : vector<1x4x4x10xbf16> to vector<4x4x10xbf16>
    %5 = arith.extf %4 : vector<4x4x10xbf16> to vector<4x4x10xf32>
    %c0_7 = arith.constant 0 : index
    %c0_8 = arith.constant 0 : index
    %c1 = arith.constant 1 : index
    %c0_9 = arith.constant 0 : index
    %6 = vector.load %arg1[%c0_7, %c0_8, %c1, %c0_9] : memref<1x5x5x10xbf16, #tpu.memory_space<vmem>>, vector<1x4x4x10xbf16>
    %7 = vector.shape_cast %6 : vector<1x4x4x10xbf16> to vector<4x4x10xbf16>
    %8 = arith.extf %7 : vector<4x4x10xbf16> to vector<4x4x10xf32>
    %c0_10 = arith.constant 0 : index
    %c0_11 = arith.constant 0 : index
    %c0_12 = arith.constant 0 : index
    %c0_13 = arith.constant 0 : index
    %9 = vector.load %arg3[%c0_10, %c0_11, %c0_12, %c0_13] : memref<1x5x5x10xbf16, #tpu.memory_space<vmem>>, vector<1x4x4x10xbf16>
    %10 = vector.shape_cast %9 : vector<1x4x4x10xbf16> to vector<4x4x10xbf16>
    %11 = arith.extf %10 : vector<4x4x10xbf16> to vector<4x4x10xf32>
    %c0_14 = arith.constant 0 : index
    %c0_15 = arith.constant 0 : index
    %c0_16 = arith.constant 0 : index
    %c0_17 = arith.constant 0 : index
    %12 = vector.load %arg4[%c0_14, %c0_15, %c0_16, %c0_17] : memref<1x5x5x10xbf16, #tpu.memory_space<vmem>>, vector<1x4x4x10xbf16>
    %13 = vector.shape_cast %12 : vector<1x4x4x10xbf16> to vector<4x4x10xbf16>
    %14 = arith.extf %13 : vector<4x4x10xbf16> to vector<4x4x10xf32>
    %c0_18 = arith.constant 0 : index
    %c0_19 = arith.constant 0 : index
    %c1_20 = arith.constant 1 : index
    %c0_21 = arith.constant 0 : index
    %15 = vector.load %arg3[%c0_18, %c0_19, %c1_20, %c0_21] : memref<1x5x5x10xbf16, #tpu.memory_space<vmem>>, vector<1x4x4x10xbf16>
    %16 = vector.shape_cast %15 : vector<1x4x4x10xbf16> to vector<4x4x10xbf16>
    %17 = arith.extf %16 : vector<4x4x10xbf16> to vector<4x4x10xf32>
    %c0_22 = arith.constant 0 : index
    %c1_23 = arith.constant 1 : index
    %c0_24 = arith.constant 0 : index
    %c0_25 = arith.constant 0 : index
    %18 = vector.load %arg1[%c0_22, %c1_23, %c0_24, %c0_25] : memref<1x5x5x10xbf16, #tpu.memory_space<vmem>>, vector<1x4x4x10xbf16>
    %19 = vector.shape_cast %18 : vector<1x4x4x10xbf16> to vector<4x4x10xbf16>
    %20 = arith.extf %19 : vector<4x4x10xbf16> to vector<4x4x10xf32>
    %c0_26 = arith.constant 0 : index
    %c1_27 = arith.constant 1 : index
    %c0_28 = arith.constant 0 : index
    %c0_29 = arith.constant 0 : index
    %21 = vector.load %arg2[%c0_26, %c1_27, %c0_28, %c0_29] : memref<1x5x5x10xbf16, #tpu.memory_space<vmem>>, vector<1x4x4x10xbf16>
    %22 = vector.shape_cast %21 : vector<1x4x4x10xbf16> to vector<4x4x10xbf16>
    %23 = arith.extf %22 : vector<4x4x10xbf16> to vector<4x4x10xf32>
    %c0_30 = arith.constant 0 : index
    %c1_31 = arith.constant 1 : index
    %c1_32 = arith.constant 1 : index
    %c0_33 = arith.constant 0 : index
    %24 = vector.load %arg1[%c0_30, %c1_31, %c1_32, %c0_33] : memref<1x5x5x10xbf16, #tpu.memory_space<vmem>>, vector<1x4x4x10xbf16>
    %25 = vector.shape_cast %24 : vector<1x4x4x10xbf16> to vector<4x4x10xbf16>
    %26 = arith.extf %25 : vector<4x4x10xbf16> to vector<4x4x10xf32>
    %c0_34 = arith.constant 0 : index
    %c0_35 = arith.constant 0 : index
    %c0_36 = arith.constant 0 : index
    %27 = vector.load %arg5[%c0_34, %c0_35, %c0_36] : memref<9x1x10xf32, #tpu.memory_space<vmem>>, vector<1x1x10xf32>
    %28 = vector.shape_cast %27 : vector<1x1x10xf32> to vector<1x10xf32>
    %29 = vector.shape_cast %28 : vector<1x10xf32> to vector<1x1x10xf32>
    %30 = vector.broadcast %29 : vector<1x1x10xf32> to vector<4x4x10xf32>
    %31 = arith.mulf %2, %30 : vector<4x4x10xf32>
    %c1_37 = arith.constant 1 : index
    %c0_38 = arith.constant 0 : index
    %c0_39 = arith.constant 0 : index
    %32 = vector.load %arg5[%c1_37, %c0_38, %c0_39] : memref<9x1x10xf32, #tpu.memory_space<vmem>>, vector<1x1x10xf32>
    %33 = vector.shape_cast %32 : vector<1x1x10xf32> to vector<1x10xf32>
    %34 = vector.shape_cast %33 : vector<1x10xf32> to vector<1x1x10xf32>
    %35 = vector.broadcast %34 : vector<1x1x10xf32> to vector<4x4x10xf32>
    %36 = arith.mulf %5, %35 : vector<4x4x10xf32>
    %37 = arith.addf %31, %36 : vector<4x4x10xf32>
    %c2 = arith.constant 2 : index
    %c0_40 = arith.constant 0 : index
    %c0_41 = arith.constant 0 : index
    %38 = vector.load %arg5[%c2, %c0_40, %c0_41] : memref<9x1x10xf32, #tpu.memory_space<vmem>>, vector<1x1x10xf32>
    %39 = vector.shape_cast %38 : vector<1x1x10xf32> to vector<1x10xf32>
    %40 = vector.shape_cast %39 : vector<1x10xf32> to vector<1x1x10xf32>
    %41 = vector.broadcast %40 : vector<1x1x10xf32> to vector<4x4x10xf32>
    %42 = arith.mulf %8, %41 : vector<4x4x10xf32>
    %43 = arith.addf %37, %42 : vector<4x4x10xf32>
    %c3 = arith.constant 3 : index
    %c0_42 = arith.constant 0 : index
    %c0_43 = arith.constant 0 : index
    %44 = vector.load %arg5[%c3, %c0_42, %c0_43] : memref<9x1x10xf32, #tpu.memory_space<vmem>>, vector<1x1x10xf32>
    %45 = vector.shape_cast %44 : vector<1x1x10xf32> to vector<1x10xf32>
    %46 = vector.shape_cast %45 : vector<1x10xf32> to vector<1x1x10xf32>
    %47 = vector.broadcast %46 : vector<1x1x10xf32> to vector<4x4x10xf32>
    %48 = arith.mulf %11, %47 : vector<4x4x10xf32>
    %49 = arith.addf %43, %48 : vector<4x4x10xf32>
    %c4 = arith.constant 4 : index
    %c0_44 = arith.constant 0 : index
    %c0_45 = arith.constant 0 : index
    %50 = vector.load %arg5[%c4, %c0_44, %c0_45] : memref<9x1x10xf32, #tpu.memory_space<vmem>>, vector<1x1x10xf32>
    %51 = vector.shape_cast %50 : vector<1x1x10xf32> to vector<1x10xf32>
    %52 = vector.shape_cast %51 : vector<1x10xf32> to vector<1x1x10xf32>
    %53 = vector.broadcast %52 : vector<1x1x10xf32> to vector<4x4x10xf32>
    %54 = arith.mulf %14, %53 : vector<4x4x10xf32>
    %55 = arith.addf %49, %54 : vector<4x4x10xf32>
    %c5 = arith.constant 5 : index
    %c0_46 = arith.constant 0 : index
    %c0_47 = arith.constant 0 : index
    %56 = vector.load %arg5[%c5, %c0_46, %c0_47] : memref<9x1x10xf32, #tpu.memory_space<vmem>>, vector<1x1x10xf32>
    %57 = vector.shape_cast %56 : vector<1x1x10xf32> to vector<1x10xf32>
    %58 = vector.shape_cast %57 : vector<1x10xf32> to vector<1x1x10xf32>
    %59 = vector.broadcast %58 : vector<1x1x10xf32> to vector<4x4x10xf32>
    %60 = arith.mulf %17, %59 : vector<4x4x10xf32>
    %61 = arith.addf %55, %60 : vector<4x4x10xf32>
    %c6 = arith.constant 6 : index
    %c0_48 = arith.constant 0 : index
    %c0_49 = arith.constant 0 : index
    %62 = vector.load %arg5[%c6, %c0_48, %c0_49] : memref<9x1x10xf32, #tpu.memory_space<vmem>>, vector<1x1x10xf32>
    %63 = vector.shape_cast %62 : vector<1x1x10xf32> to vector<1x10xf32>
    %64 = vector.shape_cast %63 : vector<1x10xf32> to vector<1x1x10xf32>
    %65 = vector.broadcast %64 : vector<1x1x10xf32> to vector<4x4x10xf32>
    %66 = arith.mulf %20, %65 : vector<4x4x10xf32>
    %67 = arith.addf %61, %66 : vector<4x4x10xf32>
    %c7 = arith.constant 7 : index
    %c0_50 = arith.constant 0 : index
    %c0_51 = arith.constant 0 : index
    %68 = vector.load %arg5[%c7, %c0_50, %c0_51] : memref<9x1x10xf32, #tpu.memory_space<vmem>>, vector<1x1x10xf32>
    %69 = vector.shape_cast %68 : vector<1x1x10xf32> to vector<1x10xf32>
    %70 = vector.shape_cast %69 : vector<1x10xf32> to vector<1x1x10xf32>
    %71 = vector.broadcast %70 : vector<1x1x10xf32> to vector<4x4x10xf32>
    %72 = arith.mulf %23, %71 : vector<4x4x10xf32>
    %73 = arith.addf %67, %72 : vector<4x4x10xf32>
    %c8 = arith.constant 8 : index
    %c0_52 = arith.constant 0 : index
    %c0_53 = arith.constant 0 : index
    %74 = vector.load %arg5[%c8, %c0_52, %c0_53] : memref<9x1x10xf32, #tpu.memory_space<vmem>>, vector<1x1x10xf32>
    %75 = vector.shape_cast %74 : vector<1x1x10xf32> to vector<1x10xf32>
    %76 = vector.shape_cast %75 : vector<1x10xf32> to vector<1x1x10xf32>
    %77 = vector.broadcast %76 : vector<1x1x10xf32> to vector<4x4x10xf32>
    %78 = arith.mulf %26, %77 : vector<4x4x10xf32>
    %79 = arith.addf %73, %78 : vector<4x4x10xf32>
    %c0_54 = arith.constant 0 : index
    %c0_55 = arith.constant 0 : index
    %c0_56 = arith.constant 0 : index
    %80 = vector.load %arg6[%c0_54, %c0_55, %c0_56] : memref<1x1x10xf32, #tpu.memory_space<vmem>>, vector<1x1x10xf32>
    %81 = vector.shape_cast %80 : vector<1x1x10xf32> to vector<1x10xf32>
    %82 = vector.shape_cast %81 : vector<1x10xf32> to vector<1x1x10xf32>
    %83 = vector.broadcast %82 : vector<1x1x10xf32> to vector<4x4x10xf32>
    %84 = arith.mulf %79, %83 : vector<4x4x10xf32>
    %c0_57 = arith.constant 0 : index
    %c0_58 = arith.constant 0 : index
    %c0_59 = arith.constant 0 : index
    %85 = vector.load %arg7[%c0_57, %c0_58, %c0_59] : memref<1x1x10xf32, #tpu.memory_space<vmem>>, vector<1x1x10xf32>
    %86 = vector.shape_cast %85 : vector<1x1x10xf32> to vector<1x10xf32>
    %87 = vector.shape_cast %86 : vector<1x10xf32> to vector<1x1x10xf32>
    %88 = vector.broadcast %87 : vector<1x1x10xf32> to vector<4x4x10xf32>
    %89 = arith.addf %84, %88 : vector<4x4x10xf32>
    %90 = arith.truncf %89 : vector<4x4x10xf32> to vector<4x4x10xbf16>
    %c0_60 = arith.constant 0 : index
    %c0_61 = arith.constant 0 : index
    %c0_62 = arith.constant 0 : index
    %c0_63 = arith.constant 0 : index
    %91 = vector.load %arg8[%c0_60, %c0_61, %c0_62, %c0_63] : memref<1x4x4x10xbf16, #tpu.memory_space<vmem>>, vector<1x4x4x10xbf16>
    %92 = vector.shape_cast %91 : vector<1x4x4x10xbf16> to vector<4x4x10xbf16>
    %93 = vector.shape_cast %90 : vector<4x4x10xbf16> to vector<1x4x4x10xbf16>
    tpu.vector_store %arg8[%c0_60, %c0_61, %c0_62, %c0_63], %93 {strides = array<i32>} : memref<1x4x4x10xbf16, #tpu.memory_space<vmem>>, vector<1x4x4x10xbf16>,
    return
  }
  func.func @transform_0(%arg0: i32) -> (i32, i32, i32, i32) {
    %c0_i32 = arith.constant 0 : i32
    %c0_i32_0 = arith.constant 0 : i32
    %c0_i32_1 = arith.constant 0 : i32
    %c0_i32_2 = arith.constant 0 : i32
    return %arg0, %c0_i32, %c0_i32_0, %c0_i32_1 : i32, i32, i32, i32
  }
  func.func @transform_1(%arg0: i32) -> (i32, i32, i32, i32) {
    %c0_i32 = arith.constant 0 : i32
    %c0_i32_0 = arith.constant 0 : i32
    %c0_i32_1 = arith.constant 0 : i32
    %c0_i32_2 = arith.constant 0 : i32
    return %arg0, %c0_i32, %c0_i32_0, %c0_i32_1 : i32, i32, i32, i32
  }
  func.func @transform_2(%arg0: i32) -> (i32, i32, i32, i32) {
    %c0_i32 = arith.constant 0 : i32
    %c0_i32_0 = arith.constant 0 : i32
    %c0_i32_1 = arith.constant 0 : i32
    %c0_i32_2 = arith.constant 0 : i32
    return %arg0, %c0_i32, %c0_i32_0, %c0_i32_1 : i32, i32, i32, i32
  }
  func.func @transform_3(%arg0: i32) -> (i32, i32, i32, i32) {
    %c0_i32 = arith.constant 0 : i32
    %c0_i32_0 = arith.constant 0 : i32
    %c0_i32_1 = arith.constant 0 : i32
    %c0_i32_2 = arith.constant 0 : i32
    return %arg0, %c0_i32, %c0_i32_0, %c0_i32_1 : i32, i32, i32, i32
  }
  func.func @transform_4(%arg0: i32) -> (i32, i32, i32) {
    %c0_i32 = arith.constant 0 : i32
    %c0_i32_0 = arith.constant 0 : i32
    %c0_i32_1 = arith.constant 0 : i32
    %c0_i32_2 = arith.constant 0 : i32
    return %c0_i32, %c0_i32_0, %c0_i32_1 : i32, i32, i32
  }
  func.func @transform_5(%arg0: i32) -> (i32, i32, i32) {
    %c0_i32 = arith.constant 0 : i32
    %c0_i32_0 = arith.constant 0 : i32
    %c0_i32_1 = arith.constant 0 : i32
    %c0_i32_2 = arith.constant 0 : i32
    return %c0_i32, %c0_i32_0, %c0_i32_1 : i32, i32, i32
  }
  func.func @transform_6(%arg0: i32) -> (i32, i32, i32) {
    %c0_i32 = arith.constant 0 : i32
    %c0_i32_0 = arith.constant 0 : i32
    %c0_i32_1 = arith.constant 0 : i32
    %c0_i32_2 = arith.constant 0 : i32
    return %c0_i32, %c0_i32_0, %c0_i32_1 : i32, i32, i32
  }
  func.func @transform_7(%arg0: i32) -> (i32, i32, i32, i32) {
    %c0_i32 = arith.constant 0 : i32
    %c0_i32_0 = arith.constant 0 : i32
    %c0_i32_1 = arith.constant 0 : i32
    %c0_i32_2 = arith.constant 0 : i32
    return %arg0, %c0_i32, %c0_i32_0, %c0_i32_1 : i32, i32, i32, i32
  }
}

module attributes {stable_mosaic.version = 11 : i64} {
  func.func @_pointwise_kernel(%arg0: i32, %arg1: memref<32x10xbf16, #tpu.memory_space<vmem>>, %arg2: memref<10x16xbf16, #tpu.memory_space<vmem>>, %arg3: memref<1x16xf32, #tpu.memory_space<vmem>>, %arg4: memref<1x16xf32, #tpu.memory_space<vmem>>, %arg5: memref<32x16xbf16, #tpu.memory_space<vmem>>) attributes {dimension_semantics = [#tpu.dimension_semantics<parallel>], iteration_bounds = array<i64: 1>, scalar_prefetch = 0 : i64, scratch_operands = 0 : i64, tpu.core_type = #tpu.core_type<tc>, window_params = [{transform_indices = @transform_0, window_bounds = array<i64: 32, 10>}, {pipeline_mode = #tpu.pipeline_mode<synchronous>, transform_indices = @transform_1, window_bounds = array<i64: 10, 16>}, {pipeline_mode = #tpu.pipeline_mode<synchronous>, transform_indices = @transform_2, window_bounds = array<i64: 1, 16>}, {pipeline_mode = #tpu.pipeline_mode<synchronous>, transform_indices = @transform_3, window_bounds = array<i64: 1, 16>}, {transform_indices = @transform_4, window_bounds = array<i64: 32, 16>}]} {
    %c0 = arith.constant 0 : index
    %c0_0 = arith.constant 0 : index
    %0 = vector.load %arg1[%c0, %c0_0] : memref<32x10xbf16, #tpu.memory_space<vmem>>, vector<32x10xbf16>
    %c0_1 = arith.constant 0 : index
    %c0_2 = arith.constant 0 : index
    %1 = vector.load %arg2[%c0_1, %c0_2] : memref<10x16xbf16, #tpu.memory_space<vmem>>, vector<10x16xbf16>
    %cst = arith.constant dense<0.000000e+00> : vector<32x16xf32>
    %2 = tpu.matmul %0, %1, %cst {dimension_numbers = #tpu.dot_dimension_numbers<[1], [0], [0], [1], [0, 0, 1, 1], [], []>} : vector<32x10xbf16>, vector<10x16xbf16>, vector<32x16xf32> -> vector<32x16xf32>
    %c0_3 = arith.constant 0 : index
    %c0_4 = arith.constant 0 : index
    %3 = vector.load %arg3[%c0_3, %c0_4] : memref<1x16xf32, #tpu.memory_space<vmem>>, vector<1x16xf32>
    %4 = vector.broadcast %3 : vector<1x16xf32> to vector<32x16xf32>
    %5 = arith.mulf %2, %4 : vector<32x16xf32>
    %c0_5 = arith.constant 0 : index
    %c0_6 = arith.constant 0 : index
    %6 = vector.load %arg4[%c0_5, %c0_6] : memref<1x16xf32, #tpu.memory_space<vmem>>, vector<1x16xf32>
    %7 = vector.broadcast %6 : vector<1x16xf32> to vector<32x16xf32>
    %8 = arith.addf %5, %7 : vector<32x16xf32>
    %cst_7 = arith.constant 0.000000e+00 : f32
    %9 = vector.broadcast %cst_7 : f32 to vector<32x16xf32>
    %10 = arith.maximumf %8, %9 : vector<32x16xf32>
    %11 = arith.truncf %10 : vector<32x16xf32> to vector<32x16xbf16>
    %c0_8 = arith.constant 0 : index
    %c0_9 = arith.constant 0 : index
    %12 = vector.load %arg5[%c0_8, %c0_9] : memref<32x16xbf16, #tpu.memory_space<vmem>>, vector<32x16xbf16>
    tpu.vector_store %arg5[%c0_8, %c0_9], %11 {strides = array<i32>} : memref<32x16xbf16, #tpu.memory_space<vmem>>, vector<32x16xbf16>,
    return
  }
  func.func @transform_0(%arg0: i32) -> (i32, i32) {
    %c0_i32 = arith.constant 0 : i32
    %c0_i32_0 = arith.constant 0 : i32
    return %arg0, %c0_i32 : i32, i32
  }
  func.func @transform_1(%arg0: i32) -> (i32, i32) {
    %c0_i32 = arith.constant 0 : i32
    %c0_i32_0 = arith.constant 0 : i32
    %c0_i32_1 = arith.constant 0 : i32
    return %c0_i32, %c0_i32_0 : i32, i32
  }
  func.func @transform_2(%arg0: i32) -> (i32, i32) {
    %c0_i32 = arith.constant 0 : i32
    %c0_i32_0 = arith.constant 0 : i32
    %c0_i32_1 = arith.constant 0 : i32
    return %c0_i32, %c0_i32_0 : i32, i32
  }
  func.func @transform_3(%arg0: i32) -> (i32, i32) {
    %c0_i32 = arith.constant 0 : i32
    %c0_i32_0 = arith.constant 0 : i32
    %c0_i32_1 = arith.constant 0 : i32
    return %c0_i32, %c0_i32_0 : i32, i32
  }
  func.func @transform_4(%arg0: i32) -> (i32, i32) {
    %c0_i32 = arith.constant 0 : i32
    %c0_i32_0 = arith.constant 0 : i32
    return %arg0, %c0_i32 : i32, i32
  }
}

module attributes {stable_mosaic.version = 11 : i64} {
  func.func @_pool_kernel(%arg0: i32, %arg1: memref<1x5x5x24xbf16, #tpu.memory_space<vmem>>, %arg2: memref<1x5x5x24xbf16, #tpu.memory_space<vmem>>, %arg3: memref<1x5x5x24xbf16, #tpu.memory_space<vmem>>, %arg4: memref<1x5x5x24xbf16, #tpu.memory_space<vmem>>, %arg5: memref<1x4x4x24xbf16, #tpu.memory_space<vmem>>) attributes {dimension_semantics = [#tpu.dimension_semantics<parallel>], iteration_bounds = array<i64: 2>, scalar_prefetch = 0 : i64, scratch_operands = 0 : i64, tpu.core_type = #tpu.core_type<tc>, window_params = [{transform_indices = @transform_0, window_bounds = array<i64: 1, 5, 5, 24>}, {transform_indices = @transform_1, window_bounds = array<i64: 1, 5, 5, 24>}, {transform_indices = @transform_2, window_bounds = array<i64: 1, 5, 5, 24>}, {transform_indices = @transform_3, window_bounds = array<i64: 1, 5, 5, 24>}, {transform_indices = @transform_4, window_bounds = array<i64: 1, 4, 4, 24>}]} {
    %c0 = arith.constant 0 : index
    %c0_0 = arith.constant 0 : index
    %c0_1 = arith.constant 0 : index
    %c0_2 = arith.constant 0 : index
    %0 = vector.load %arg1[%c0, %c0_0, %c0_1, %c0_2] : memref<1x5x5x24xbf16, #tpu.memory_space<vmem>>, vector<1x4x4x24xbf16>
    %1 = vector.shape_cast %0 : vector<1x4x4x24xbf16> to vector<4x4x24xbf16>
    %2 = arith.extf %1 : vector<4x4x24xbf16> to vector<4x4x24xf32>
    %c0_3 = arith.constant 0 : index
    %c0_4 = arith.constant 0 : index
    %c0_5 = arith.constant 0 : index
    %c0_6 = arith.constant 0 : index
    %3 = vector.load %arg2[%c0_3, %c0_4, %c0_5, %c0_6] : memref<1x5x5x24xbf16, #tpu.memory_space<vmem>>, vector<1x4x4x24xbf16>
    %4 = vector.shape_cast %3 : vector<1x4x4x24xbf16> to vector<4x4x24xbf16>
    %5 = arith.extf %4 : vector<4x4x24xbf16> to vector<4x4x24xf32>
    %c0_7 = arith.constant 0 : index
    %c0_8 = arith.constant 0 : index
    %c1 = arith.constant 1 : index
    %c0_9 = arith.constant 0 : index
    %6 = vector.load %arg1[%c0_7, %c0_8, %c1, %c0_9] : memref<1x5x5x24xbf16, #tpu.memory_space<vmem>>, vector<1x4x4x24xbf16>
    %7 = vector.shape_cast %6 : vector<1x4x4x24xbf16> to vector<4x4x24xbf16>
    %8 = arith.extf %7 : vector<4x4x24xbf16> to vector<4x4x24xf32>
    %c0_10 = arith.constant 0 : index
    %c0_11 = arith.constant 0 : index
    %c0_12 = arith.constant 0 : index
    %c0_13 = arith.constant 0 : index
    %9 = vector.load %arg3[%c0_10, %c0_11, %c0_12, %c0_13] : memref<1x5x5x24xbf16, #tpu.memory_space<vmem>>, vector<1x4x4x24xbf16>
    %10 = vector.shape_cast %9 : vector<1x4x4x24xbf16> to vector<4x4x24xbf16>
    %11 = arith.extf %10 : vector<4x4x24xbf16> to vector<4x4x24xf32>
    %c0_14 = arith.constant 0 : index
    %c0_15 = arith.constant 0 : index
    %c0_16 = arith.constant 0 : index
    %c0_17 = arith.constant 0 : index
    %12 = vector.load %arg4[%c0_14, %c0_15, %c0_16, %c0_17] : memref<1x5x5x24xbf16, #tpu.memory_space<vmem>>, vector<1x4x4x24xbf16>
    %13 = vector.shape_cast %12 : vector<1x4x4x24xbf16> to vector<4x4x24xbf16>
    %14 = arith.extf %13 : vector<4x4x24xbf16> to vector<4x4x24xf32>
    %c0_18 = arith.constant 0 : index
    %c0_19 = arith.constant 0 : index
    %c1_20 = arith.constant 1 : index
    %c0_21 = arith.constant 0 : index
    %15 = vector.load %arg3[%c0_18, %c0_19, %c1_20, %c0_21] : memref<1x5x5x24xbf16, #tpu.memory_space<vmem>>, vector<1x4x4x24xbf16>
    %16 = vector.shape_cast %15 : vector<1x4x4x24xbf16> to vector<4x4x24xbf16>
    %17 = arith.extf %16 : vector<4x4x24xbf16> to vector<4x4x24xf32>
    %c0_22 = arith.constant 0 : index
    %c1_23 = arith.constant 1 : index
    %c0_24 = arith.constant 0 : index
    %c0_25 = arith.constant 0 : index
    %18 = vector.load %arg1[%c0_22, %c1_23, %c0_24, %c0_25] : memref<1x5x5x24xbf16, #tpu.memory_space<vmem>>, vector<1x4x4x24xbf16>
    %19 = vector.shape_cast %18 : vector<1x4x4x24xbf16> to vector<4x4x24xbf16>
    %20 = arith.extf %19 : vector<4x4x24xbf16> to vector<4x4x24xf32>
    %c0_26 = arith.constant 0 : index
    %c1_27 = arith.constant 1 : index
    %c0_28 = arith.constant 0 : index
    %c0_29 = arith.constant 0 : index
    %21 = vector.load %arg2[%c0_26, %c1_27, %c0_28, %c0_29] : memref<1x5x5x24xbf16, #tpu.memory_space<vmem>>, vector<1x4x4x24xbf16>
    %22 = vector.shape_cast %21 : vector<1x4x4x24xbf16> to vector<4x4x24xbf16>
    %23 = arith.extf %22 : vector<4x4x24xbf16> to vector<4x4x24xf32>
    %c0_30 = arith.constant 0 : index
    %c1_31 = arith.constant 1 : index
    %c1_32 = arith.constant 1 : index
    %c0_33 = arith.constant 0 : index
    %24 = vector.load %arg1[%c0_30, %c1_31, %c1_32, %c0_33] : memref<1x5x5x24xbf16, #tpu.memory_space<vmem>>, vector<1x4x4x24xbf16>
    %25 = vector.shape_cast %24 : vector<1x4x4x24xbf16> to vector<4x4x24xbf16>
    %26 = arith.extf %25 : vector<4x4x24xbf16> to vector<4x4x24xf32>
    %27 = arith.addf %2, %5 : vector<4x4x24xf32>
    %28 = arith.addf %27, %8 : vector<4x4x24xf32>
    %29 = arith.addf %28, %11 : vector<4x4x24xf32>
    %30 = arith.addf %29, %14 : vector<4x4x24xf32>
    %31 = arith.addf %30, %17 : vector<4x4x24xf32>
    %32 = arith.addf %31, %20 : vector<4x4x24xf32>
    %33 = arith.addf %32, %23 : vector<4x4x24xf32>
    %34 = arith.addf %33, %26 : vector<4x4x24xf32>
    %cst = arith.constant 0.111111112 : f32
    %35 = vector.broadcast %cst : f32 to vector<4x4x24xf32>
    %36 = arith.mulf %34, %35 : vector<4x4x24xf32>
    %cst_34 = arith.constant 0.000000e+00 : f32
    %37 = vector.broadcast %cst_34 : f32 to vector<4x4x24xf32>
    %38 = arith.maximumf %36, %37 : vector<4x4x24xf32>
    %39 = arith.truncf %38 : vector<4x4x24xf32> to vector<4x4x24xbf16>
    %c0_35 = arith.constant 0 : index
    %c0_36 = arith.constant 0 : index
    %c0_37 = arith.constant 0 : index
    %c0_38 = arith.constant 0 : index
    %40 = vector.load %arg5[%c0_35, %c0_36, %c0_37, %c0_38] : memref<1x4x4x24xbf16, #tpu.memory_space<vmem>>, vector<1x4x4x24xbf16>
    %41 = vector.shape_cast %40 : vector<1x4x4x24xbf16> to vector<4x4x24xbf16>
    %42 = vector.shape_cast %39 : vector<4x4x24xbf16> to vector<1x4x4x24xbf16>
    tpu.vector_store %arg5[%c0_35, %c0_36, %c0_37, %c0_38], %42 {strides = array<i32>} : memref<1x4x4x24xbf16, #tpu.memory_space<vmem>>, vector<1x4x4x24xbf16>,
    return
  }
  func.func @transform_0(%arg0: i32) -> (i32, i32, i32, i32) {
    %c0_i32 = arith.constant 0 : i32
    %c0_i32_0 = arith.constant 0 : i32
    %c0_i32_1 = arith.constant 0 : i32
    %c0_i32_2 = arith.constant 0 : i32
    return %arg0, %c0_i32, %c0_i32_0, %c0_i32_1 : i32, i32, i32, i32
  }
  func.func @transform_1(%arg0: i32) -> (i32, i32, i32, i32) {
    %c0_i32 = arith.constant 0 : i32
    %c0_i32_0 = arith.constant 0 : i32
    %c0_i32_1 = arith.constant 0 : i32
    %c0_i32_2 = arith.constant 0 : i32
    return %arg0, %c0_i32, %c0_i32_0, %c0_i32_1 : i32, i32, i32, i32
  }
  func.func @transform_2(%arg0: i32) -> (i32, i32, i32, i32) {
    %c0_i32 = arith.constant 0 : i32
    %c0_i32_0 = arith.constant 0 : i32
    %c0_i32_1 = arith.constant 0 : i32
    %c0_i32_2 = arith.constant 0 : i32
    return %arg0, %c0_i32, %c0_i32_0, %c0_i32_1 : i32, i32, i32, i32
  }
  func.func @transform_3(%arg0: i32) -> (i32, i32, i32, i32) {
    %c0_i32 = arith.constant 0 : i32
    %c0_i32_0 = arith.constant 0 : i32
    %c0_i32_1 = arith.constant 0 : i32
    %c0_i32_2 = arith.constant 0 : i32
    return %arg0, %c0_i32, %c0_i32_0, %c0_i32_1 : i32, i32, i32, i32
  }
  func.func @transform_4(%arg0: i32) -> (i32, i32, i32, i32) {
    %c0_i32 = arith.constant 0 : i32
    %c0_i32_0 = arith.constant 0 : i32
    %c0_i32_1 = arith.constant 0 : i32
    %c0_i32_2 = arith.constant 0 : i32
    return %arg0, %c0_i32, %c0_i32_0, %c0_i32_1 : i32, i32, i32, i32
  }
}

module attributes {stable_mosaic.version = 11 : i64} {
  func.func @_pointwise_kernel(%arg0: i32, %arg1: memref<32x40xbf16, #tpu.memory_space<vmem>>, %arg2: memref<40x10xbf16, #tpu.memory_space<vmem>>, %arg3: memref<1x10xf32, #tpu.memory_space<vmem>>, %arg4: memref<1x10xf32, #tpu.memory_space<vmem>>, %arg5: memref<32x10xbf16, #tpu.memory_space<vmem>>) attributes {dimension_semantics = [#tpu.dimension_semantics<parallel>], iteration_bounds = array<i64: 1>, scalar_prefetch = 0 : i64, scratch_operands = 0 : i64, tpu.core_type = #tpu.core_type<tc>, window_params = [{transform_indices = @transform_0, window_bounds = array<i64: 32, 40>}, {pipeline_mode = #tpu.pipeline_mode<synchronous>, transform_indices = @transform_1, window_bounds = array<i64: 40, 10>}, {pipeline_mode = #tpu.pipeline_mode<synchronous>, transform_indices = @transform_2, window_bounds = array<i64: 1, 10>}, {pipeline_mode = #tpu.pipeline_mode<synchronous>, transform_indices = @transform_3, window_bounds = array<i64: 1, 10>}, {transform_indices = @transform_4, window_bounds = array<i64: 32, 10>}]} {
    %c0 = arith.constant 0 : index
    %c0_0 = arith.constant 0 : index
    %0 = vector.load %arg1[%c0, %c0_0] : memref<32x40xbf16, #tpu.memory_space<vmem>>, vector<32x40xbf16>
    %c0_1 = arith.constant 0 : index
    %c0_2 = arith.constant 0 : index
    %1 = vector.load %arg2[%c0_1, %c0_2] : memref<40x10xbf16, #tpu.memory_space<vmem>>, vector<40x10xbf16>
    %cst = arith.constant dense<0.000000e+00> : vector<32x10xf32>
    %2 = tpu.matmul %0, %1, %cst {dimension_numbers = #tpu.dot_dimension_numbers<[1], [0], [0], [1], [0, 0, 1, 1], [], []>} : vector<32x40xbf16>, vector<40x10xbf16>, vector<32x10xf32> -> vector<32x10xf32>
    %c0_3 = arith.constant 0 : index
    %c0_4 = arith.constant 0 : index
    %3 = vector.load %arg3[%c0_3, %c0_4] : memref<1x10xf32, #tpu.memory_space<vmem>>, vector<1x10xf32>
    %4 = vector.broadcast %3 : vector<1x10xf32> to vector<32x10xf32>
    %5 = arith.mulf %2, %4 : vector<32x10xf32>
    %c0_5 = arith.constant 0 : index
    %c0_6 = arith.constant 0 : index
    %6 = vector.load %arg4[%c0_5, %c0_6] : memref<1x10xf32, #tpu.memory_space<vmem>>, vector<1x10xf32>
    %7 = vector.broadcast %6 : vector<1x10xf32> to vector<32x10xf32>
    %8 = arith.addf %5, %7 : vector<32x10xf32>
    %cst_7 = arith.constant 0.000000e+00 : f32
    %9 = vector.broadcast %cst_7 : f32 to vector<32x10xf32>
    %10 = arith.maximumf %8, %9 : vector<32x10xf32>
    %11 = arith.truncf %10 : vector<32x10xf32> to vector<32x10xbf16>
    %c0_8 = arith.constant 0 : index
    %c0_9 = arith.constant 0 : index
    %12 = vector.load %arg5[%c0_8, %c0_9] : memref<32x10xbf16, #tpu.memory_space<vmem>>, vector<32x10xbf16>
    tpu.vector_store %arg5[%c0_8, %c0_9], %11 {strides = array<i32>} : memref<32x10xbf16, #tpu.memory_space<vmem>>, vector<32x10xbf16>,
    return
  }
  func.func @transform_0(%arg0: i32) -> (i32, i32) {
    %c0_i32 = arith.constant 0 : i32
    %c0_i32_0 = arith.constant 0 : i32
    return %arg0, %c0_i32 : i32, i32
  }
  func.func @transform_1(%arg0: i32) -> (i32, i32) {
    %c0_i32 = arith.constant 0 : i32
    %c0_i32_0 = arith.constant 0 : i32
    %c0_i32_1 = arith.constant 0 : i32
    return %c0_i32, %c0_i32_0 : i32, i32
  }
  func.func @transform_2(%arg0: i32) -> (i32, i32) {
    %c0_i32 = arith.constant 0 : i32
    %c0_i32_0 = arith.constant 0 : i32
    %c0_i32_1 = arith.constant 0 : i32
    return %c0_i32, %c0_i32_0 : i32, i32
  }
  func.func @transform_3(%arg0: i32) -> (i32, i32) {
    %c0_i32 = arith.constant 0 : i32
    %c0_i32_0 = arith.constant 0 : i32
    %c0_i32_1 = arith.constant 0 : i32
    return %c0_i32, %c0_i32_0 : i32, i32
  }
  func.func @transform_4(%arg0: i32) -> (i32, i32) {
    %c0_i32 = arith.constant 0 : i32
    %c0_i32_0 = arith.constant 0 : i32
    return %arg0, %c0_i32 : i32, i32
  }
}

module attributes {stable_mosaic.version = 11 : i64} {
  func.func @_pointwise_residual_kernel(%arg0: i32, %arg1: memref<32x10xbf16, #tpu.memory_space<vmem>>, %arg2: memref<10x40xbf16, #tpu.memory_space<vmem>>, %arg3: memref<1x40xf32, #tpu.memory_space<vmem>>, %arg4: memref<1x40xf32, #tpu.memory_space<vmem>>, %arg5: memref<32x40xbf16, #tpu.memory_space<vmem>>, %arg6: memref<32x40xbf16, #tpu.memory_space<vmem>>) attributes {dimension_semantics = [#tpu.dimension_semantics<parallel>], iteration_bounds = array<i64: 1>, scalar_prefetch = 0 : i64, scratch_operands = 0 : i64, tpu.core_type = #tpu.core_type<tc>, window_params = [{transform_indices = @transform_0, window_bounds = array<i64: 32, 10>}, {pipeline_mode = #tpu.pipeline_mode<synchronous>, transform_indices = @transform_1, window_bounds = array<i64: 10, 40>}, {pipeline_mode = #tpu.pipeline_mode<synchronous>, transform_indices = @transform_2, window_bounds = array<i64: 1, 40>}, {pipeline_mode = #tpu.pipeline_mode<synchronous>, transform_indices = @transform_3, window_bounds = array<i64: 1, 40>}, {transform_indices = @transform_4, window_bounds = array<i64: 32, 40>}, {transform_indices = @transform_5, window_bounds = array<i64: 32, 40>}]} {
    %c0 = arith.constant 0 : index
    %c0_0 = arith.constant 0 : index
    %0 = vector.load %arg1[%c0, %c0_0] : memref<32x10xbf16, #tpu.memory_space<vmem>>, vector<32x10xbf16>
    %c0_1 = arith.constant 0 : index
    %c0_2 = arith.constant 0 : index
    %1 = vector.load %arg2[%c0_1, %c0_2] : memref<10x40xbf16, #tpu.memory_space<vmem>>, vector<10x40xbf16>
    %cst = arith.constant dense<0.000000e+00> : vector<32x40xf32>
    %2 = tpu.matmul %0, %1, %cst {dimension_numbers = #tpu.dot_dimension_numbers<[1], [0], [0], [1], [0, 0, 1, 1], [], []>} : vector<32x10xbf16>, vector<10x40xbf16>, vector<32x40xf32> -> vector<32x40xf32>
    %c0_3 = arith.constant 0 : index
    %c0_4 = arith.constant 0 : index
    %3 = vector.load %arg3[%c0_3, %c0_4] : memref<1x40xf32, #tpu.memory_space<vmem>>, vector<1x40xf32>
    %4 = vector.broadcast %3 : vector<1x40xf32> to vector<32x40xf32>
    %5 = arith.mulf %2, %4 : vector<32x40xf32>
    %c0_5 = arith.constant 0 : index
    %c0_6 = arith.constant 0 : index
    %6 = vector.load %arg4[%c0_5, %c0_6] : memref<1x40xf32, #tpu.memory_space<vmem>>, vector<1x40xf32>
    %7 = vector.broadcast %6 : vector<1x40xf32> to vector<32x40xf32>
    %8 = arith.addf %5, %7 : vector<32x40xf32>
    %c0_7 = arith.constant 0 : index
    %c0_8 = arith.constant 0 : index
    %9 = vector.load %arg5[%c0_7, %c0_8] : memref<32x40xbf16, #tpu.memory_space<vmem>>, vector<32x40xbf16>
    %10 = arith.extf %9 : vector<32x40xbf16> to vector<32x40xf32>
    %11 = arith.addf %8, %10 : vector<32x40xf32>
    %cst_9 = arith.constant 0.000000e+00 : f32
    %12 = vector.broadcast %cst_9 : f32 to vector<32x40xf32>
    %13 = arith.maximumf %11, %12 : vector<32x40xf32>
    %14 = arith.truncf %13 : vector<32x40xf32> to vector<32x40xbf16>
    %c0_10 = arith.constant 0 : index
    %c0_11 = arith.constant 0 : index
    %15 = vector.load %arg6[%c0_10, %c0_11] : memref<32x40xbf16, #tpu.memory_space<vmem>>, vector<32x40xbf16>
    tpu.vector_store %arg6[%c0_10, %c0_11], %14 {strides = array<i32>} : memref<32x40xbf16, #tpu.memory_space<vmem>>, vector<32x40xbf16>,
    return
  }
  func.func @transform_0(%arg0: i32) -> (i32, i32) {
    %c0_i32 = arith.constant 0 : i32
    %c0_i32_0 = arith.constant 0 : i32
    return %arg0, %c0_i32 : i32, i32
  }
  func.func @transform_1(%arg0: i32) -> (i32, i32) {
    %c0_i32 = arith.constant 0 : i32
    %c0_i32_0 = arith.constant 0 : i32
    %c0_i32_1 = arith.constant 0 : i32
    return %c0_i32, %c0_i32_0 : i32, i32
  }
  func.func @transform_2(%arg0: i32) -> (i32, i32) {
    %c0_i32 = arith.constant 0 : i32
    %c0_i32_0 = arith.constant 0 : i32
    %c0_i32_1 = arith.constant 0 : i32
    return %c0_i32, %c0_i32_0 : i32, i32
  }
  func.func @transform_3(%arg0: i32) -> (i32, i32) {
    %c0_i32 = arith.constant 0 : i32
    %c0_i32_0 = arith.constant 0 : i32
    %c0_i32_1 = arith.constant 0 : i32
    return %c0_i32, %c0_i32_0 : i32, i32
  }
  func.func @transform_4(%arg0: i32) -> (i32, i32) {
    %c0_i32 = arith.constant 0 : i32
    %c0_i32_0 = arith.constant 0 : i32
    return %arg0, %c0_i32 : i32, i32
  }
  func.func @transform_5(%arg0: i32) -> (i32, i32) {
    %c0_i32 = arith.constant 0 : i32
    %c0_i32_0 = arith.constant 0 : i32
    return %arg0, %c0_i32 : i32, i32
  }
}

module attributes {stable_mosaic.version = 11 : i64} {
  func.func @_dwconv_kernel(%arg0: i32, %arg1: memref<1x6x6x10xbf16, #tpu.memory_space<vmem>>, %arg2: memref<9x1x10xf32, #tpu.memory_space<vmem>>, %arg3: memref<1x1x10xf32, #tpu.memory_space<vmem>>, %arg4: memref<1x1x10xf32, #tpu.memory_space<vmem>>, %arg5: memref<1x4x4x10xbf16, #tpu.memory_space<vmem>>) attributes {dimension_semantics = [#tpu.dimension_semantics<parallel>], iteration_bounds = array<i64: 2>, scalar_prefetch = 0 : i64, scratch_operands = 0 : i64, tpu.core_type = #tpu.core_type<tc>, window_params = [{transform_indices = @transform_0, window_bounds = array<i64: 1, 6, 6, 10>}, {pipeline_mode = #tpu.pipeline_mode<synchronous>, transform_indices = @transform_1, window_bounds = array<i64: 9, 1, 10>}, {pipeline_mode = #tpu.pipeline_mode<synchronous>, transform_indices = @transform_2, window_bounds = array<i64: 1, 1, 10>}, {pipeline_mode = #tpu.pipeline_mode<synchronous>, transform_indices = @transform_3, window_bounds = array<i64: 1, 1, 10>}, {transform_indices = @transform_4, window_bounds = array<i64: 1, 4, 4, 10>}]} {
    %c0 = arith.constant 0 : index
    %c0_0 = arith.constant 0 : index
    %c0_1 = arith.constant 0 : index
    %c0_2 = arith.constant 0 : index
    %0 = vector.load %arg1[%c0, %c0_0, %c0_1, %c0_2] : memref<1x6x6x10xbf16, #tpu.memory_space<vmem>>, vector<1x4x4x10xbf16>
    %1 = vector.shape_cast %0 : vector<1x4x4x10xbf16> to vector<4x4x10xbf16>
    %2 = arith.extf %1 : vector<4x4x10xbf16> to vector<4x4x10xf32>
    %c0_3 = arith.constant 0 : index
    %c0_4 = arith.constant 0 : index
    %c1 = arith.constant 1 : index
    %c0_5 = arith.constant 0 : index
    %3 = vector.load %arg1[%c0_3, %c0_4, %c1, %c0_5] : memref<1x6x6x10xbf16, #tpu.memory_space<vmem>>, vector<1x4x4x10xbf16>
    %4 = vector.shape_cast %3 : vector<1x4x4x10xbf16> to vector<4x4x10xbf16>
    %5 = arith.extf %4 : vector<4x4x10xbf16> to vector<4x4x10xf32>
    %c0_6 = arith.constant 0 : index
    %c0_7 = arith.constant 0 : index
    %c2 = arith.constant 2 : index
    %c0_8 = arith.constant 0 : index
    %6 = vector.load %arg1[%c0_6, %c0_7, %c2, %c0_8] : memref<1x6x6x10xbf16, #tpu.memory_space<vmem>>, vector<1x4x4x10xbf16>
    %7 = vector.shape_cast %6 : vector<1x4x4x10xbf16> to vector<4x4x10xbf16>
    %8 = arith.extf %7 : vector<4x4x10xbf16> to vector<4x4x10xf32>
    %c0_9 = arith.constant 0 : index
    %c1_10 = arith.constant 1 : index
    %c0_11 = arith.constant 0 : index
    %c0_12 = arith.constant 0 : index
    %9 = vector.load %arg1[%c0_9, %c1_10, %c0_11, %c0_12] : memref<1x6x6x10xbf16, #tpu.memory_space<vmem>>, vector<1x4x4x10xbf16>
    %10 = vector.shape_cast %9 : vector<1x4x4x10xbf16> to vector<4x4x10xbf16>
    %11 = arith.extf %10 : vector<4x4x10xbf16> to vector<4x4x10xf32>
    %c0_13 = arith.constant 0 : index
    %c1_14 = arith.constant 1 : index
    %c1_15 = arith.constant 1 : index
    %c0_16 = arith.constant 0 : index
    %12 = vector.load %arg1[%c0_13, %c1_14, %c1_15, %c0_16] : memref<1x6x6x10xbf16, #tpu.memory_space<vmem>>, vector<1x4x4x10xbf16>
    %13 = vector.shape_cast %12 : vector<1x4x4x10xbf16> to vector<4x4x10xbf16>
    %14 = arith.extf %13 : vector<4x4x10xbf16> to vector<4x4x10xf32>
    %c0_17 = arith.constant 0 : index
    %c1_18 = arith.constant 1 : index
    %c2_19 = arith.constant 2 : index
    %c0_20 = arith.constant 0 : index
    %15 = vector.load %arg1[%c0_17, %c1_18, %c2_19, %c0_20] : memref<1x6x6x10xbf16, #tpu.memory_space<vmem>>, vector<1x4x4x10xbf16>
    %16 = vector.shape_cast %15 : vector<1x4x4x10xbf16> to vector<4x4x10xbf16>
    %17 = arith.extf %16 : vector<4x4x10xbf16> to vector<4x4x10xf32>
    %c0_21 = arith.constant 0 : index
    %c2_22 = arith.constant 2 : index
    %c0_23 = arith.constant 0 : index
    %c0_24 = arith.constant 0 : index
    %18 = vector.load %arg1[%c0_21, %c2_22, %c0_23, %c0_24] : memref<1x6x6x10xbf16, #tpu.memory_space<vmem>>, vector<1x4x4x10xbf16>
    %19 = vector.shape_cast %18 : vector<1x4x4x10xbf16> to vector<4x4x10xbf16>
    %20 = arith.extf %19 : vector<4x4x10xbf16> to vector<4x4x10xf32>
    %c0_25 = arith.constant 0 : index
    %c2_26 = arith.constant 2 : index
    %c1_27 = arith.constant 1 : index
    %c0_28 = arith.constant 0 : index
    %21 = vector.load %arg1[%c0_25, %c2_26, %c1_27, %c0_28] : memref<1x6x6x10xbf16, #tpu.memory_space<vmem>>, vector<1x4x4x10xbf16>
    %22 = vector.shape_cast %21 : vector<1x4x4x10xbf16> to vector<4x4x10xbf16>
    %23 = arith.extf %22 : vector<4x4x10xbf16> to vector<4x4x10xf32>
    %c0_29 = arith.constant 0 : index
    %c2_30 = arith.constant 2 : index
    %c2_31 = arith.constant 2 : index
    %c0_32 = arith.constant 0 : index
    %24 = vector.load %arg1[%c0_29, %c2_30, %c2_31, %c0_32] : memref<1x6x6x10xbf16, #tpu.memory_space<vmem>>, vector<1x4x4x10xbf16>
    %25 = vector.shape_cast %24 : vector<1x4x4x10xbf16> to vector<4x4x10xbf16>
    %26 = arith.extf %25 : vector<4x4x10xbf16> to vector<4x4x10xf32>
    %c0_33 = arith.constant 0 : index
    %c0_34 = arith.constant 0 : index
    %c0_35 = arith.constant 0 : index
    %27 = vector.load %arg2[%c0_33, %c0_34, %c0_35] : memref<9x1x10xf32, #tpu.memory_space<vmem>>, vector<1x1x10xf32>
    %28 = vector.shape_cast %27 : vector<1x1x10xf32> to vector<1x10xf32>
    %29 = vector.shape_cast %28 : vector<1x10xf32> to vector<1x1x10xf32>
    %30 = vector.broadcast %29 : vector<1x1x10xf32> to vector<4x4x10xf32>
    %31 = arith.mulf %2, %30 : vector<4x4x10xf32>
    %c1_36 = arith.constant 1 : index
    %c0_37 = arith.constant 0 : index
    %c0_38 = arith.constant 0 : index
    %32 = vector.load %arg2[%c1_36, %c0_37, %c0_38] : memref<9x1x10xf32, #tpu.memory_space<vmem>>, vector<1x1x10xf32>
    %33 = vector.shape_cast %32 : vector<1x1x10xf32> to vector<1x10xf32>
    %34 = vector.shape_cast %33 : vector<1x10xf32> to vector<1x1x10xf32>
    %35 = vector.broadcast %34 : vector<1x1x10xf32> to vector<4x4x10xf32>
    %36 = arith.mulf %5, %35 : vector<4x4x10xf32>
    %37 = arith.addf %31, %36 : vector<4x4x10xf32>
    %c2_39 = arith.constant 2 : index
    %c0_40 = arith.constant 0 : index
    %c0_41 = arith.constant 0 : index
    %38 = vector.load %arg2[%c2_39, %c0_40, %c0_41] : memref<9x1x10xf32, #tpu.memory_space<vmem>>, vector<1x1x10xf32>
    %39 = vector.shape_cast %38 : vector<1x1x10xf32> to vector<1x10xf32>
    %40 = vector.shape_cast %39 : vector<1x10xf32> to vector<1x1x10xf32>
    %41 = vector.broadcast %40 : vector<1x1x10xf32> to vector<4x4x10xf32>
    %42 = arith.mulf %8, %41 : vector<4x4x10xf32>
    %43 = arith.addf %37, %42 : vector<4x4x10xf32>
    %c3 = arith.constant 3 : index
    %c0_42 = arith.constant 0 : index
    %c0_43 = arith.constant 0 : index
    %44 = vector.load %arg2[%c3, %c0_42, %c0_43] : memref<9x1x10xf32, #tpu.memory_space<vmem>>, vector<1x1x10xf32>
    %45 = vector.shape_cast %44 : vector<1x1x10xf32> to vector<1x10xf32>
    %46 = vector.shape_cast %45 : vector<1x10xf32> to vector<1x1x10xf32>
    %47 = vector.broadcast %46 : vector<1x1x10xf32> to vector<4x4x10xf32>
    %48 = arith.mulf %11, %47 : vector<4x4x10xf32>
    %49 = arith.addf %43, %48 : vector<4x4x10xf32>
    %c4 = arith.constant 4 : index
    %c0_44 = arith.constant 0 : index
    %c0_45 = arith.constant 0 : index
    %50 = vector.load %arg2[%c4, %c0_44, %c0_45] : memref<9x1x10xf32, #tpu.memory_space<vmem>>, vector<1x1x10xf32>
    %51 = vector.shape_cast %50 : vector<1x1x10xf32> to vector<1x10xf32>
    %52 = vector.shape_cast %51 : vector<1x10xf32> to vector<1x1x10xf32>
    %53 = vector.broadcast %52 : vector<1x1x10xf32> to vector<4x4x10xf32>
    %54 = arith.mulf %14, %53 : vector<4x4x10xf32>
    %55 = arith.addf %49, %54 : vector<4x4x10xf32>
    %c5 = arith.constant 5 : index
    %c0_46 = arith.constant 0 : index
    %c0_47 = arith.constant 0 : index
    %56 = vector.load %arg2[%c5, %c0_46, %c0_47] : memref<9x1x10xf32, #tpu.memory_space<vmem>>, vector<1x1x10xf32>
    %57 = vector.shape_cast %56 : vector<1x1x10xf32> to vector<1x10xf32>
    %58 = vector.shape_cast %57 : vector<1x10xf32> to vector<1x1x10xf32>
    %59 = vector.broadcast %58 : vector<1x1x10xf32> to vector<4x4x10xf32>
    %60 = arith.mulf %17, %59 : vector<4x4x10xf32>
    %61 = arith.addf %55, %60 : vector<4x4x10xf32>
    %c6 = arith.constant 6 : index
    %c0_48 = arith.constant 0 : index
    %c0_49 = arith.constant 0 : index
    %62 = vector.load %arg2[%c6, %c0_48, %c0_49] : memref<9x1x10xf32, #tpu.memory_space<vmem>>, vector<1x1x10xf32>
    %63 = vector.shape_cast %62 : vector<1x1x10xf32> to vector<1x10xf32>
    %64 = vector.shape_cast %63 : vector<1x10xf32> to vector<1x1x10xf32>
    %65 = vector.broadcast %64 : vector<1x1x10xf32> to vector<4x4x10xf32>
    %66 = arith.mulf %20, %65 : vector<4x4x10xf32>
    %67 = arith.addf %61, %66 : vector<4x4x10xf32>
    %c7 = arith.constant 7 : index
    %c0_50 = arith.constant 0 : index
    %c0_51 = arith.constant 0 : index
    %68 = vector.load %arg2[%c7, %c0_50, %c0_51] : memref<9x1x10xf32, #tpu.memory_space<vmem>>, vector<1x1x10xf32>
    %69 = vector.shape_cast %68 : vector<1x1x10xf32> to vector<1x10xf32>
    %70 = vector.shape_cast %69 : vector<1x10xf32> to vector<1x1x10xf32>
    %71 = vector.broadcast %70 : vector<1x1x10xf32> to vector<4x4x10xf32>
    %72 = arith.mulf %23, %71 : vector<4x4x10xf32>
    %73 = arith.addf %67, %72 : vector<4x4x10xf32>
    %c8 = arith.constant 8 : index
    %c0_52 = arith.constant 0 : index
    %c0_53 = arith.constant 0 : index
    %74 = vector.load %arg2[%c8, %c0_52, %c0_53] : memref<9x1x10xf32, #tpu.memory_space<vmem>>, vector<1x1x10xf32>
    %75 = vector.shape_cast %74 : vector<1x1x10xf32> to vector<1x10xf32>
    %76 = vector.shape_cast %75 : vector<1x10xf32> to vector<1x1x10xf32>
    %77 = vector.broadcast %76 : vector<1x1x10xf32> to vector<4x4x10xf32>
    %78 = arith.mulf %26, %77 : vector<4x4x10xf32>
    %79 = arith.addf %73, %78 : vector<4x4x10xf32>
    %c0_54 = arith.constant 0 : index
    %c0_55 = arith.constant 0 : index
    %c0_56 = arith.constant 0 : index
    %80 = vector.load %arg3[%c0_54, %c0_55, %c0_56] : memref<1x1x10xf32, #tpu.memory_space<vmem>>, vector<1x1x10xf32>
    %81 = vector.shape_cast %80 : vector<1x1x10xf32> to vector<1x10xf32>
    %82 = vector.shape_cast %81 : vector<1x10xf32> to vector<1x1x10xf32>
    %83 = vector.broadcast %82 : vector<1x1x10xf32> to vector<4x4x10xf32>
    %84 = arith.mulf %79, %83 : vector<4x4x10xf32>
    %c0_57 = arith.constant 0 : index
    %c0_58 = arith.constant 0 : index
    %c0_59 = arith.constant 0 : index
    %85 = vector.load %arg4[%c0_57, %c0_58, %c0_59] : memref<1x1x10xf32, #tpu.memory_space<vmem>>, vector<1x1x10xf32>
    %86 = vector.shape_cast %85 : vector<1x1x10xf32> to vector<1x10xf32>
    %87 = vector.shape_cast %86 : vector<1x10xf32> to vector<1x1x10xf32>
    %88 = vector.broadcast %87 : vector<1x1x10xf32> to vector<4x4x10xf32>
    %89 = arith.addf %84, %88 : vector<4x4x10xf32>
    %90 = arith.truncf %89 : vector<4x4x10xf32> to vector<4x4x10xbf16>
    %c0_60 = arith.constant 0 : index
    %c0_61 = arith.constant 0 : index
    %c0_62 = arith.constant 0 : index
    %c0_63 = arith.constant 0 : index
    %91 = vector.load %arg5[%c0_60, %c0_61, %c0_62, %c0_63] : memref<1x4x4x10xbf16, #tpu.memory_space<vmem>>, vector<1x4x4x10xbf16>
    %92 = vector.shape_cast %91 : vector<1x4x4x10xbf16> to vector<4x4x10xbf16>
    %93 = vector.shape_cast %90 : vector<4x4x10xbf16> to vector<1x4x4x10xbf16>
    tpu.vector_store %arg5[%c0_60, %c0_61, %c0_62, %c0_63], %93 {strides = array<i32>} : memref<1x4x4x10xbf16, #tpu.memory_space<vmem>>, vector<1x4x4x10xbf16>,
    return
  }
  func.func @transform_0(%arg0: i32) -> (i32, i32, i32, i32) {
    %c0_i32 = arith.constant 0 : i32
    %c0_i32_0 = arith.constant 0 : i32
    %c0_i32_1 = arith.constant 0 : i32
    %c0_i32_2 = arith.constant 0 : i32
    return %arg0, %c0_i32, %c0_i32_0, %c0_i32_1 : i32, i32, i32, i32
  }
  func.func @transform_1(%arg0: i32) -> (i32, i32, i32) {
    %c0_i32 = arith.constant 0 : i32
    %c0_i32_0 = arith.constant 0 : i32
    %c0_i32_1 = arith.constant 0 : i32
    %c0_i32_2 = arith.constant 0 : i32
    return %c0_i32, %c0_i32_0, %c0_i32_1 : i32, i32, i32
  }
  func.func @transform_2(%arg0: i32) -> (i32, i32, i32) {
    %c0_i32 = arith.constant 0 : i32
    %c0_i32_0 = arith.constant 0 : i32
    %c0_i32_1 = arith.constant 0 : i32
    %c0_i32_2 = arith.constant 0 : i32
    return %c0_i32, %c0_i32_0, %c0_i32_1 : i32, i32, i32
  }
  func.func @transform_3(%arg0: i32) -> (i32, i32, i32) {
    %c0_i32 = arith.constant 0 : i32
    %c0_i32_0 = arith.constant 0 : i32
    %c0_i32_1 = arith.constant 0 : i32
    %c0_i32_2 = arith.constant 0 : i32
    return %c0_i32, %c0_i32_0, %c0_i32_1 : i32, i32, i32
  }
  func.func @transform_4(%arg0: i32) -> (i32, i32, i32, i32) {
    %c0_i32 = arith.constant 0 : i32
    %c0_i32_0 = arith.constant 0 : i32
    %c0_i32_1 = arith.constant 0 : i32
    %c0_i32_2 = arith.constant 0 : i32
    return %arg0, %c0_i32, %c0_i32_0, %c0_i32_1 : i32, i32, i32, i32
  }
}

module attributes {stable_mosaic.version = 11 : i64} {
  func.func @_pointwise_kernel(%arg0: i32, %arg1: memref<32x40xbf16, #tpu.memory_space<vmem>>, %arg2: memref<40x20xbf16, #tpu.memory_space<vmem>>, %arg3: memref<1x20xf32, #tpu.memory_space<vmem>>, %arg4: memref<1x20xf32, #tpu.memory_space<vmem>>, %arg5: memref<32x20xbf16, #tpu.memory_space<vmem>>) attributes {dimension_semantics = [#tpu.dimension_semantics<parallel>], iteration_bounds = array<i64: 1>, scalar_prefetch = 0 : i64, scratch_operands = 0 : i64, tpu.core_type = #tpu.core_type<tc>, window_params = [{transform_indices = @transform_0, window_bounds = array<i64: 32, 40>}, {pipeline_mode = #tpu.pipeline_mode<synchronous>, transform_indices = @transform_1, window_bounds = array<i64: 40, 20>}, {pipeline_mode = #tpu.pipeline_mode<synchronous>, transform_indices = @transform_2, window_bounds = array<i64: 1, 20>}, {pipeline_mode = #tpu.pipeline_mode<synchronous>, transform_indices = @transform_3, window_bounds = array<i64: 1, 20>}, {transform_indices = @transform_4, window_bounds = array<i64: 32, 20>}]} {
    %c0 = arith.constant 0 : index
    %c0_0 = arith.constant 0 : index
    %0 = vector.load %arg1[%c0, %c0_0] : memref<32x40xbf16, #tpu.memory_space<vmem>>, vector<32x40xbf16>
    %c0_1 = arith.constant 0 : index
    %c0_2 = arith.constant 0 : index
    %1 = vector.load %arg2[%c0_1, %c0_2] : memref<40x20xbf16, #tpu.memory_space<vmem>>, vector<40x20xbf16>
    %cst = arith.constant dense<0.000000e+00> : vector<32x20xf32>
    %2 = tpu.matmul %0, %1, %cst {dimension_numbers = #tpu.dot_dimension_numbers<[1], [0], [0], [1], [0, 0, 1, 1], [], []>} : vector<32x40xbf16>, vector<40x20xbf16>, vector<32x20xf32> -> vector<32x20xf32>
    %c0_3 = arith.constant 0 : index
    %c0_4 = arith.constant 0 : index
    %3 = vector.load %arg3[%c0_3, %c0_4] : memref<1x20xf32, #tpu.memory_space<vmem>>, vector<1x20xf32>
    %4 = vector.broadcast %3 : vector<1x20xf32> to vector<32x20xf32>
    %5 = arith.mulf %2, %4 : vector<32x20xf32>
    %c0_5 = arith.constant 0 : index
    %c0_6 = arith.constant 0 : index
    %6 = vector.load %arg4[%c0_5, %c0_6] : memref<1x20xf32, #tpu.memory_space<vmem>>, vector<1x20xf32>
    %7 = vector.broadcast %6 : vector<1x20xf32> to vector<32x20xf32>
    %8 = arith.addf %5, %7 : vector<32x20xf32>
    %cst_7 = arith.constant 0.000000e+00 : f32
    %9 = vector.broadcast %cst_7 : f32 to vector<32x20xf32>
    %10 = arith.maximumf %8, %9 : vector<32x20xf32>
    %11 = arith.truncf %10 : vector<32x20xf32> to vector<32x20xbf16>
    %c0_8 = arith.constant 0 : index
    %c0_9 = arith.constant 0 : index
    %12 = vector.load %arg5[%c0_8, %c0_9] : memref<32x20xbf16, #tpu.memory_space<vmem>>, vector<32x20xbf16>
    tpu.vector_store %arg5[%c0_8, %c0_9], %11 {strides = array<i32>} : memref<32x20xbf16, #tpu.memory_space<vmem>>, vector<32x20xbf16>,
    return
  }
  func.func @transform_0(%arg0: i32) -> (i32, i32) {
    %c0_i32 = arith.constant 0 : i32
    %c0_i32_0 = arith.constant 0 : i32
    return %arg0, %c0_i32 : i32, i32
  }
  func.func @transform_1(%arg0: i32) -> (i32, i32) {
    %c0_i32 = arith.constant 0 : i32
    %c0_i32_0 = arith.constant 0 : i32
    %c0_i32_1 = arith.constant 0 : i32
    return %c0_i32, %c0_i32_0 : i32, i32
  }
  func.func @transform_2(%arg0: i32) -> (i32, i32) {
    %c0_i32 = arith.constant 0 : i32
    %c0_i32_0 = arith.constant 0 : i32
    %c0_i32_1 = arith.constant 0 : i32
    return %c0_i32, %c0_i32_0 : i32, i32
  }
  func.func @transform_3(%arg0: i32) -> (i32, i32) {
    %c0_i32 = arith.constant 0 : i32
    %c0_i32_0 = arith.constant 0 : i32
    %c0_i32_1 = arith.constant 0 : i32
    return %c0_i32, %c0_i32_0 : i32, i32
  }
  func.func @transform_4(%arg0: i32) -> (i32, i32) {
    %c0_i32 = arith.constant 0 : i32
    %c0_i32_0 = arith.constant 0 : i32
    return %arg0, %c0_i32 : i32, i32
  }
}

module attributes {stable_mosaic.version = 11 : i64} {
  func.func @_dwconv_kernel(%arg0: i32, %arg1: memref<1x3x3x20xbf16, #tpu.memory_space<vmem>>, %arg2: memref<1x3x3x20xbf16, #tpu.memory_space<vmem>>, %arg3: memref<1x3x3x20xbf16, #tpu.memory_space<vmem>>, %arg4: memref<1x3x3x20xbf16, #tpu.memory_space<vmem>>, %arg5: memref<9x1x20xf32, #tpu.memory_space<vmem>>, %arg6: memref<1x1x20xf32, #tpu.memory_space<vmem>>, %arg7: memref<1x1x20xf32, #tpu.memory_space<vmem>>, %arg8: memref<1x2x2x20xbf16, #tpu.memory_space<vmem>>) attributes {dimension_semantics = [#tpu.dimension_semantics<parallel>], iteration_bounds = array<i64: 2>, scalar_prefetch = 0 : i64, scratch_operands = 0 : i64, tpu.core_type = #tpu.core_type<tc>, window_params = [{transform_indices = @transform_0, window_bounds = array<i64: 1, 3, 3, 20>}, {transform_indices = @transform_1, window_bounds = array<i64: 1, 3, 3, 20>}, {transform_indices = @transform_2, window_bounds = array<i64: 1, 3, 3, 20>}, {transform_indices = @transform_3, window_bounds = array<i64: 1, 3, 3, 20>}, {pipeline_mode = #tpu.pipeline_mode<synchronous>, transform_indices = @transform_4, window_bounds = array<i64: 9, 1, 20>}, {pipeline_mode = #tpu.pipeline_mode<synchronous>, transform_indices = @transform_5, window_bounds = array<i64: 1, 1, 20>}, {pipeline_mode = #tpu.pipeline_mode<synchronous>, transform_indices = @transform_6, window_bounds = array<i64: 1, 1, 20>}, {transform_indices = @transform_7, window_bounds = array<i64: 1, 2, 2, 20>}]} {
    %c0 = arith.constant 0 : index
    %c0_0 = arith.constant 0 : index
    %c0_1 = arith.constant 0 : index
    %c0_2 = arith.constant 0 : index
    %0 = vector.load %arg1[%c0, %c0_0, %c0_1, %c0_2] : memref<1x3x3x20xbf16, #tpu.memory_space<vmem>>, vector<1x2x2x20xbf16>
    %1 = vector.shape_cast %0 : vector<1x2x2x20xbf16> to vector<2x2x20xbf16>
    %2 = arith.extf %1 : vector<2x2x20xbf16> to vector<2x2x20xf32>
    %c0_3 = arith.constant 0 : index
    %c0_4 = arith.constant 0 : index
    %c0_5 = arith.constant 0 : index
    %c0_6 = arith.constant 0 : index
    %3 = vector.load %arg2[%c0_3, %c0_4, %c0_5, %c0_6] : memref<1x3x3x20xbf16, #tpu.memory_space<vmem>>, vector<1x2x2x20xbf16>
    %4 = vector.shape_cast %3 : vector<1x2x2x20xbf16> to vector<2x2x20xbf16>
    %5 = arith.extf %4 : vector<2x2x20xbf16> to vector<2x2x20xf32>
    %c0_7 = arith.constant 0 : index
    %c0_8 = arith.constant 0 : index
    %c1 = arith.constant 1 : index
    %c0_9 = arith.constant 0 : index
    %6 = vector.load %arg1[%c0_7, %c0_8, %c1, %c0_9] : memref<1x3x3x20xbf16, #tpu.memory_space<vmem>>, vector<1x2x2x20xbf16>
    %7 = vector.shape_cast %6 : vector<1x2x2x20xbf16> to vector<2x2x20xbf16>
    %8 = arith.extf %7 : vector<2x2x20xbf16> to vector<2x2x20xf32>
    %c0_10 = arith.constant 0 : index
    %c0_11 = arith.constant 0 : index
    %c0_12 = arith.constant 0 : index
    %c0_13 = arith.constant 0 : index
    %9 = vector.load %arg3[%c0_10, %c0_11, %c0_12, %c0_13] : memref<1x3x3x20xbf16, #tpu.memory_space<vmem>>, vector<1x2x2x20xbf16>
    %10 = vector.shape_cast %9 : vector<1x2x2x20xbf16> to vector<2x2x20xbf16>
    %11 = arith.extf %10 : vector<2x2x20xbf16> to vector<2x2x20xf32>
    %c0_14 = arith.constant 0 : index
    %c0_15 = arith.constant 0 : index
    %c0_16 = arith.constant 0 : index
    %c0_17 = arith.constant 0 : index
    %12 = vector.load %arg4[%c0_14, %c0_15, %c0_16, %c0_17] : memref<1x3x3x20xbf16, #tpu.memory_space<vmem>>, vector<1x2x2x20xbf16>
    %13 = vector.shape_cast %12 : vector<1x2x2x20xbf16> to vector<2x2x20xbf16>
    %14 = arith.extf %13 : vector<2x2x20xbf16> to vector<2x2x20xf32>
    %c0_18 = arith.constant 0 : index
    %c0_19 = arith.constant 0 : index
    %c1_20 = arith.constant 1 : index
    %c0_21 = arith.constant 0 : index
    %15 = vector.load %arg3[%c0_18, %c0_19, %c1_20, %c0_21] : memref<1x3x3x20xbf16, #tpu.memory_space<vmem>>, vector<1x2x2x20xbf16>
    %16 = vector.shape_cast %15 : vector<1x2x2x20xbf16> to vector<2x2x20xbf16>
    %17 = arith.extf %16 : vector<2x2x20xbf16> to vector<2x2x20xf32>
    %c0_22 = arith.constant 0 : index
    %c1_23 = arith.constant 1 : index
    %c0_24 = arith.constant 0 : index
    %c0_25 = arith.constant 0 : index
    %18 = vector.load %arg1[%c0_22, %c1_23, %c0_24, %c0_25] : memref<1x3x3x20xbf16, #tpu.memory_space<vmem>>, vector<1x2x2x20xbf16>
    %19 = vector.shape_cast %18 : vector<1x2x2x20xbf16> to vector<2x2x20xbf16>
    %20 = arith.extf %19 : vector<2x2x20xbf16> to vector<2x2x20xf32>
    %c0_26 = arith.constant 0 : index
    %c1_27 = arith.constant 1 : index
    %c0_28 = arith.constant 0 : index
    %c0_29 = arith.constant 0 : index
    %21 = vector.load %arg2[%c0_26, %c1_27, %c0_28, %c0_29] : memref<1x3x3x20xbf16, #tpu.memory_space<vmem>>, vector<1x2x2x20xbf16>
    %22 = vector.shape_cast %21 : vector<1x2x2x20xbf16> to vector<2x2x20xbf16>
    %23 = arith.extf %22 : vector<2x2x20xbf16> to vector<2x2x20xf32>
    %c0_30 = arith.constant 0 : index
    %c1_31 = arith.constant 1 : index
    %c1_32 = arith.constant 1 : index
    %c0_33 = arith.constant 0 : index
    %24 = vector.load %arg1[%c0_30, %c1_31, %c1_32, %c0_33] : memref<1x3x3x20xbf16, #tpu.memory_space<vmem>>, vector<1x2x2x20xbf16>
    %25 = vector.shape_cast %24 : vector<1x2x2x20xbf16> to vector<2x2x20xbf16>
    %26 = arith.extf %25 : vector<2x2x20xbf16> to vector<2x2x20xf32>
    %c0_34 = arith.constant 0 : index
    %c0_35 = arith.constant 0 : index
    %c0_36 = arith.constant 0 : index
    %27 = vector.load %arg5[%c0_34, %c0_35, %c0_36] : memref<9x1x20xf32, #tpu.memory_space<vmem>>, vector<1x1x20xf32>
    %28 = vector.shape_cast %27 : vector<1x1x20xf32> to vector<1x20xf32>
    %29 = vector.shape_cast %28 : vector<1x20xf32> to vector<1x1x20xf32>
    %30 = vector.broadcast %29 : vector<1x1x20xf32> to vector<2x2x20xf32>
    %31 = arith.mulf %2, %30 : vector<2x2x20xf32>
    %c1_37 = arith.constant 1 : index
    %c0_38 = arith.constant 0 : index
    %c0_39 = arith.constant 0 : index
    %32 = vector.load %arg5[%c1_37, %c0_38, %c0_39] : memref<9x1x20xf32, #tpu.memory_space<vmem>>, vector<1x1x20xf32>
    %33 = vector.shape_cast %32 : vector<1x1x20xf32> to vector<1x20xf32>
    %34 = vector.shape_cast %33 : vector<1x20xf32> to vector<1x1x20xf32>
    %35 = vector.broadcast %34 : vector<1x1x20xf32> to vector<2x2x20xf32>
    %36 = arith.mulf %5, %35 : vector<2x2x20xf32>
    %37 = arith.addf %31, %36 : vector<2x2x20xf32>
    %c2 = arith.constant 2 : index
    %c0_40 = arith.constant 0 : index
    %c0_41 = arith.constant 0 : index
    %38 = vector.load %arg5[%c2, %c0_40, %c0_41] : memref<9x1x20xf32, #tpu.memory_space<vmem>>, vector<1x1x20xf32>
    %39 = vector.shape_cast %38 : vector<1x1x20xf32> to vector<1x20xf32>
    %40 = vector.shape_cast %39 : vector<1x20xf32> to vector<1x1x20xf32>
    %41 = vector.broadcast %40 : vector<1x1x20xf32> to vector<2x2x20xf32>
    %42 = arith.mulf %8, %41 : vector<2x2x20xf32>
    %43 = arith.addf %37, %42 : vector<2x2x20xf32>
    %c3 = arith.constant 3 : index
    %c0_42 = arith.constant 0 : index
    %c0_43 = arith.constant 0 : index
    %44 = vector.load %arg5[%c3, %c0_42, %c0_43] : memref<9x1x20xf32, #tpu.memory_space<vmem>>, vector<1x1x20xf32>
    %45 = vector.shape_cast %44 : vector<1x1x20xf32> to vector<1x20xf32>
    %46 = vector.shape_cast %45 : vector<1x20xf32> to vector<1x1x20xf32>
    %47 = vector.broadcast %46 : vector<1x1x20xf32> to vector<2x2x20xf32>
    %48 = arith.mulf %11, %47 : vector<2x2x20xf32>
    %49 = arith.addf %43, %48 : vector<2x2x20xf32>
    %c4 = arith.constant 4 : index
    %c0_44 = arith.constant 0 : index
    %c0_45 = arith.constant 0 : index
    %50 = vector.load %arg5[%c4, %c0_44, %c0_45] : memref<9x1x20xf32, #tpu.memory_space<vmem>>, vector<1x1x20xf32>
    %51 = vector.shape_cast %50 : vector<1x1x20xf32> to vector<1x20xf32>
    %52 = vector.shape_cast %51 : vector<1x20xf32> to vector<1x1x20xf32>
    %53 = vector.broadcast %52 : vector<1x1x20xf32> to vector<2x2x20xf32>
    %54 = arith.mulf %14, %53 : vector<2x2x20xf32>
    %55 = arith.addf %49, %54 : vector<2x2x20xf32>
    %c5 = arith.constant 5 : index
    %c0_46 = arith.constant 0 : index
    %c0_47 = arith.constant 0 : index
    %56 = vector.load %arg5[%c5, %c0_46, %c0_47] : memref<9x1x20xf32, #tpu.memory_space<vmem>>, vector<1x1x20xf32>
    %57 = vector.shape_cast %56 : vector<1x1x20xf32> to vector<1x20xf32>
    %58 = vector.shape_cast %57 : vector<1x20xf32> to vector<1x1x20xf32>
    %59 = vector.broadcast %58 : vector<1x1x20xf32> to vector<2x2x20xf32>
    %60 = arith.mulf %17, %59 : vector<2x2x20xf32>
    %61 = arith.addf %55, %60 : vector<2x2x20xf32>
    %c6 = arith.constant 6 : index
    %c0_48 = arith.constant 0 : index
    %c0_49 = arith.constant 0 : index
    %62 = vector.load %arg5[%c6, %c0_48, %c0_49] : memref<9x1x20xf32, #tpu.memory_space<vmem>>, vector<1x1x20xf32>
    %63 = vector.shape_cast %62 : vector<1x1x20xf32> to vector<1x20xf32>
    %64 = vector.shape_cast %63 : vector<1x20xf32> to vector<1x1x20xf32>
    %65 = vector.broadcast %64 : vector<1x1x20xf32> to vector<2x2x20xf32>
    %66 = arith.mulf %20, %65 : vector<2x2x20xf32>
    %67 = arith.addf %61, %66 : vector<2x2x20xf32>
    %c7 = arith.constant 7 : index
    %c0_50 = arith.constant 0 : index
    %c0_51 = arith.constant 0 : index
    %68 = vector.load %arg5[%c7, %c0_50, %c0_51] : memref<9x1x20xf32, #tpu.memory_space<vmem>>, vector<1x1x20xf32>
    %69 = vector.shape_cast %68 : vector<1x1x20xf32> to vector<1x20xf32>
    %70 = vector.shape_cast %69 : vector<1x20xf32> to vector<1x1x20xf32>
    %71 = vector.broadcast %70 : vector<1x1x20xf32> to vector<2x2x20xf32>
    %72 = arith.mulf %23, %71 : vector<2x2x20xf32>
    %73 = arith.addf %67, %72 : vector<2x2x20xf32>
    %c8 = arith.constant 8 : index
    %c0_52 = arith.constant 0 : index
    %c0_53 = arith.constant 0 : index
    %74 = vector.load %arg5[%c8, %c0_52, %c0_53] : memref<9x1x20xf32, #tpu.memory_space<vmem>>, vector<1x1x20xf32>
    %75 = vector.shape_cast %74 : vector<1x1x20xf32> to vector<1x20xf32>
    %76 = vector.shape_cast %75 : vector<1x20xf32> to vector<1x1x20xf32>
    %77 = vector.broadcast %76 : vector<1x1x20xf32> to vector<2x2x20xf32>
    %78 = arith.mulf %26, %77 : vector<2x2x20xf32>
    %79 = arith.addf %73, %78 : vector<2x2x20xf32>
    %c0_54 = arith.constant 0 : index
    %c0_55 = arith.constant 0 : index
    %c0_56 = arith.constant 0 : index
    %80 = vector.load %arg6[%c0_54, %c0_55, %c0_56] : memref<1x1x20xf32, #tpu.memory_space<vmem>>, vector<1x1x20xf32>
    %81 = vector.shape_cast %80 : vector<1x1x20xf32> to vector<1x20xf32>
    %82 = vector.shape_cast %81 : vector<1x20xf32> to vector<1x1x20xf32>
    %83 = vector.broadcast %82 : vector<1x1x20xf32> to vector<2x2x20xf32>
    %84 = arith.mulf %79, %83 : vector<2x2x20xf32>
    %c0_57 = arith.constant 0 : index
    %c0_58 = arith.constant 0 : index
    %c0_59 = arith.constant 0 : index
    %85 = vector.load %arg7[%c0_57, %c0_58, %c0_59] : memref<1x1x20xf32, #tpu.memory_space<vmem>>, vector<1x1x20xf32>
    %86 = vector.shape_cast %85 : vector<1x1x20xf32> to vector<1x20xf32>
    %87 = vector.shape_cast %86 : vector<1x20xf32> to vector<1x1x20xf32>
    %88 = vector.broadcast %87 : vector<1x1x20xf32> to vector<2x2x20xf32>
    %89 = arith.addf %84, %88 : vector<2x2x20xf32>
    %90 = arith.truncf %89 : vector<2x2x20xf32> to vector<2x2x20xbf16>
    %c0_60 = arith.constant 0 : index
    %c0_61 = arith.constant 0 : index
    %c0_62 = arith.constant 0 : index
    %c0_63 = arith.constant 0 : index
    %91 = vector.load %arg8[%c0_60, %c0_61, %c0_62, %c0_63] : memref<1x2x2x20xbf16, #tpu.memory_space<vmem>>, vector<1x2x2x20xbf16>
    %92 = vector.shape_cast %91 : vector<1x2x2x20xbf16> to vector<2x2x20xbf16>
    %93 = vector.shape_cast %90 : vector<2x2x20xbf16> to vector<1x2x2x20xbf16>
    tpu.vector_store %arg8[%c0_60, %c0_61, %c0_62, %c0_63], %93 {strides = array<i32>} : memref<1x2x2x20xbf16, #tpu.memory_space<vmem>>, vector<1x2x2x20xbf16>,
    return
  }
  func.func @transform_0(%arg0: i32) -> (i32, i32, i32, i32) {
    %c0_i32 = arith.constant 0 : i32
    %c0_i32_0 = arith.constant 0 : i32
    %c0_i32_1 = arith.constant 0 : i32
    %c0_i32_2 = arith.constant 0 : i32
    return %arg0, %c0_i32, %c0_i32_0, %c0_i32_1 : i32, i32, i32, i32
  }
  func.func @transform_1(%arg0: i32) -> (i32, i32, i32, i32) {
    %c0_i32 = arith.constant 0 : i32
    %c0_i32_0 = arith.constant 0 : i32
    %c0_i32_1 = arith.constant 0 : i32
    %c0_i32_2 = arith.constant 0 : i32
    return %arg0, %c0_i32, %c0_i32_0, %c0_i32_1 : i32, i32, i32, i32
  }
  func.func @transform_2(%arg0: i32) -> (i32, i32, i32, i32) {
    %c0_i32 = arith.constant 0 : i32
    %c0_i32_0 = arith.constant 0 : i32
    %c0_i32_1 = arith.constant 0 : i32
    %c0_i32_2 = arith.constant 0 : i32
    return %arg0, %c0_i32, %c0_i32_0, %c0_i32_1 : i32, i32, i32, i32
  }
  func.func @transform_3(%arg0: i32) -> (i32, i32, i32, i32) {
    %c0_i32 = arith.constant 0 : i32
    %c0_i32_0 = arith.constant 0 : i32
    %c0_i32_1 = arith.constant 0 : i32
    %c0_i32_2 = arith.constant 0 : i32
    return %arg0, %c0_i32, %c0_i32_0, %c0_i32_1 : i32, i32, i32, i32
  }
  func.func @transform_4(%arg0: i32) -> (i32, i32, i32) {
    %c0_i32 = arith.constant 0 : i32
    %c0_i32_0 = arith.constant 0 : i32
    %c0_i32_1 = arith.constant 0 : i32
    %c0_i32_2 = arith.constant 0 : i32
    return %c0_i32, %c0_i32_0, %c0_i32_1 : i32, i32, i32
  }
  func.func @transform_5(%arg0: i32) -> (i32, i32, i32) {
    %c0_i32 = arith.constant 0 : i32
    %c0_i32_0 = arith.constant 0 : i32
    %c0_i32_1 = arith.constant 0 : i32
    %c0_i32_2 = arith.constant 0 : i32
    return %c0_i32, %c0_i32_0, %c0_i32_1 : i32, i32, i32
  }
  func.func @transform_6(%arg0: i32) -> (i32, i32, i32) {
    %c0_i32 = arith.constant 0 : i32
    %c0_i32_0 = arith.constant 0 : i32
    %c0_i32_1 = arith.constant 0 : i32
    %c0_i32_2 = arith.constant 0 : i32
    return %c0_i32, %c0_i32_0, %c0_i32_1 : i32, i32, i32
  }
  func.func @transform_7(%arg0: i32) -> (i32, i32, i32, i32) {
    %c0_i32 = arith.constant 0 : i32
    %c0_i32_0 = arith.constant 0 : i32
    %c0_i32_1 = arith.constant 0 : i32
    %c0_i32_2 = arith.constant 0 : i32
    return %arg0, %c0_i32, %c0_i32_0, %c0_i32_1 : i32, i32, i32, i32
  }
}

module attributes {stable_mosaic.version = 11 : i64} {
  func.func @_pointwise_kernel(%arg0: i32, %arg1: memref<8x20xbf16, #tpu.memory_space<vmem>>, %arg2: memref<20x40xbf16, #tpu.memory_space<vmem>>, %arg3: memref<1x40xf32, #tpu.memory_space<vmem>>, %arg4: memref<1x40xf32, #tpu.memory_space<vmem>>, %arg5: memref<8x40xbf16, #tpu.memory_space<vmem>>) attributes {dimension_semantics = [#tpu.dimension_semantics<parallel>], iteration_bounds = array<i64: 1>, scalar_prefetch = 0 : i64, scratch_operands = 0 : i64, tpu.core_type = #tpu.core_type<tc>, window_params = [{transform_indices = @transform_0, window_bounds = array<i64: 8, 20>}, {pipeline_mode = #tpu.pipeline_mode<synchronous>, transform_indices = @transform_1, window_bounds = array<i64: 20, 40>}, {pipeline_mode = #tpu.pipeline_mode<synchronous>, transform_indices = @transform_2, window_bounds = array<i64: 1, 40>}, {pipeline_mode = #tpu.pipeline_mode<synchronous>, transform_indices = @transform_3, window_bounds = array<i64: 1, 40>}, {transform_indices = @transform_4, window_bounds = array<i64: 8, 40>}]} {
    %c0 = arith.constant 0 : index
    %c0_0 = arith.constant 0 : index
    %0 = vector.load %arg1[%c0, %c0_0] : memref<8x20xbf16, #tpu.memory_space<vmem>>, vector<8x20xbf16>
    %c0_1 = arith.constant 0 : index
    %c0_2 = arith.constant 0 : index
    %1 = vector.load %arg2[%c0_1, %c0_2] : memref<20x40xbf16, #tpu.memory_space<vmem>>, vector<20x40xbf16>
    %cst = arith.constant dense<0.000000e+00> : vector<8x40xf32>
    %2 = tpu.matmul %0, %1, %cst {dimension_numbers = #tpu.dot_dimension_numbers<[1], [0], [0], [1], [0, 0, 1, 1], [], []>} : vector<8x20xbf16>, vector<20x40xbf16>, vector<8x40xf32> -> vector<8x40xf32>
    %c0_3 = arith.constant 0 : index
    %c0_4 = arith.constant 0 : index
    %3 = vector.load %arg3[%c0_3, %c0_4] : memref<1x40xf32, #tpu.memory_space<vmem>>, vector<1x40xf32>
    %4 = vector.broadcast %3 : vector<1x40xf32> to vector<8x40xf32>
    %5 = arith.mulf %2, %4 : vector<8x40xf32>
    %c0_5 = arith.constant 0 : index
    %c0_6 = arith.constant 0 : index
    %6 = vector.load %arg4[%c0_5, %c0_6] : memref<1x40xf32, #tpu.memory_space<vmem>>, vector<1x40xf32>
    %7 = vector.broadcast %6 : vector<1x40xf32> to vector<8x40xf32>
    %8 = arith.addf %5, %7 : vector<8x40xf32>
    %cst_7 = arith.constant 0.000000e+00 : f32
    %9 = vector.broadcast %cst_7 : f32 to vector<8x40xf32>
    %10 = arith.maximumf %8, %9 : vector<8x40xf32>
    %11 = arith.truncf %10 : vector<8x40xf32> to vector<8x40xbf16>
    %c0_8 = arith.constant 0 : index
    %c0_9 = arith.constant 0 : index
    %12 = vector.load %arg5[%c0_8, %c0_9] : memref<8x40xbf16, #tpu.memory_space<vmem>>, vector<8x40xbf16>
    tpu.vector_store %arg5[%c0_8, %c0_9], %11 {strides = array<i32>} : memref<8x40xbf16, #tpu.memory_space<vmem>>, vector<8x40xbf16>,
    return
  }
  func.func @transform_0(%arg0: i32) -> (i32, i32) {
    %c0_i32 = arith.constant 0 : i32
    %c0_i32_0 = arith.constant 0 : i32
    return %arg0, %c0_i32 : i32, i32
  }
  func.func @transform_1(%arg0: i32) -> (i32, i32) {
    %c0_i32 = arith.constant 0 : i32
    %c0_i32_0 = arith.constant 0 : i32
    %c0_i32_1 = arith.constant 0 : i32
    return %c0_i32, %c0_i32_0 : i32, i32
  }
  func.func @transform_2(%arg0: i32) -> (i32, i32) {
    %c0_i32 = arith.constant 0 : i32
    %c0_i32_0 = arith.constant 0 : i32
    %c0_i32_1 = arith.constant 0 : i32
    return %c0_i32, %c0_i32_0 : i32, i32
  }
  func.func @transform_3(%arg0: i32) -> (i32, i32) {
    %c0_i32 = arith.constant 0 : i32
    %c0_i32_0 = arith.constant 0 : i32
    %c0_i32_1 = arith.constant 0 : i32
    return %c0_i32, %c0_i32_0 : i32, i32
  }
  func.func @transform_4(%arg0: i32) -> (i32, i32) {
    %c0_i32 = arith.constant 0 : i32
    %c0_i32_0 = arith.constant 0 : i32
    return %arg0, %c0_i32 : i32, i32
  }
}

module attributes {stable_mosaic.version = 11 : i64} {
  func.func @_pool_kernel(%arg0: i32, %arg1: memref<1x3x3x40xbf16, #tpu.memory_space<vmem>>, %arg2: memref<1x3x3x40xbf16, #tpu.memory_space<vmem>>, %arg3: memref<1x3x3x40xbf16, #tpu.memory_space<vmem>>, %arg4: memref<1x3x3x40xbf16, #tpu.memory_space<vmem>>, %arg5: memref<1x2x2x40xbf16, #tpu.memory_space<vmem>>) attributes {dimension_semantics = [#tpu.dimension_semantics<parallel>], iteration_bounds = array<i64: 2>, scalar_prefetch = 0 : i64, scratch_operands = 0 : i64, tpu.core_type = #tpu.core_type<tc>, window_params = [{transform_indices = @transform_0, window_bounds = array<i64: 1, 3, 3, 40>}, {transform_indices = @transform_1, window_bounds = array<i64: 1, 3, 3, 40>}, {transform_indices = @transform_2, window_bounds = array<i64: 1, 3, 3, 40>}, {transform_indices = @transform_3, window_bounds = array<i64: 1, 3, 3, 40>}, {transform_indices = @transform_4, window_bounds = array<i64: 1, 2, 2, 40>}]} {
    %c0 = arith.constant 0 : index
    %c0_0 = arith.constant 0 : index
    %c0_1 = arith.constant 0 : index
    %c0_2 = arith.constant 0 : index
    %0 = vector.load %arg1[%c0, %c0_0, %c0_1, %c0_2] : memref<1x3x3x40xbf16, #tpu.memory_space<vmem>>, vector<1x2x2x40xbf16>
    %1 = vector.shape_cast %0 : vector<1x2x2x40xbf16> to vector<2x2x40xbf16>
    %2 = arith.extf %1 : vector<2x2x40xbf16> to vector<2x2x40xf32>
    %c0_3 = arith.constant 0 : index
    %c0_4 = arith.constant 0 : index
    %c0_5 = arith.constant 0 : index
    %c0_6 = arith.constant 0 : index
    %3 = vector.load %arg2[%c0_3, %c0_4, %c0_5, %c0_6] : memref<1x3x3x40xbf16, #tpu.memory_space<vmem>>, vector<1x2x2x40xbf16>
    %4 = vector.shape_cast %3 : vector<1x2x2x40xbf16> to vector<2x2x40xbf16>
    %5 = arith.extf %4 : vector<2x2x40xbf16> to vector<2x2x40xf32>
    %c0_7 = arith.constant 0 : index
    %c0_8 = arith.constant 0 : index
    %c1 = arith.constant 1 : index
    %c0_9 = arith.constant 0 : index
    %6 = vector.load %arg1[%c0_7, %c0_8, %c1, %c0_9] : memref<1x3x3x40xbf16, #tpu.memory_space<vmem>>, vector<1x2x2x40xbf16>
    %7 = vector.shape_cast %6 : vector<1x2x2x40xbf16> to vector<2x2x40xbf16>
    %8 = arith.extf %7 : vector<2x2x40xbf16> to vector<2x2x40xf32>
    %c0_10 = arith.constant 0 : index
    %c0_11 = arith.constant 0 : index
    %c0_12 = arith.constant 0 : index
    %c0_13 = arith.constant 0 : index
    %9 = vector.load %arg3[%c0_10, %c0_11, %c0_12, %c0_13] : memref<1x3x3x40xbf16, #tpu.memory_space<vmem>>, vector<1x2x2x40xbf16>
    %10 = vector.shape_cast %9 : vector<1x2x2x40xbf16> to vector<2x2x40xbf16>
    %11 = arith.extf %10 : vector<2x2x40xbf16> to vector<2x2x40xf32>
    %c0_14 = arith.constant 0 : index
    %c0_15 = arith.constant 0 : index
    %c0_16 = arith.constant 0 : index
    %c0_17 = arith.constant 0 : index
    %12 = vector.load %arg4[%c0_14, %c0_15, %c0_16, %c0_17] : memref<1x3x3x40xbf16, #tpu.memory_space<vmem>>, vector<1x2x2x40xbf16>
    %13 = vector.shape_cast %12 : vector<1x2x2x40xbf16> to vector<2x2x40xbf16>
    %14 = arith.extf %13 : vector<2x2x40xbf16> to vector<2x2x40xf32>
    %c0_18 = arith.constant 0 : index
    %c0_19 = arith.constant 0 : index
    %c1_20 = arith.constant 1 : index
    %c0_21 = arith.constant 0 : index
    %15 = vector.load %arg3[%c0_18, %c0_19, %c1_20, %c0_21] : memref<1x3x3x40xbf16, #tpu.memory_space<vmem>>, vector<1x2x2x40xbf16>
    %16 = vector.shape_cast %15 : vector<1x2x2x40xbf16> to vector<2x2x40xbf16>
    %17 = arith.extf %16 : vector<2x2x40xbf16> to vector<2x2x40xf32>
    %c0_22 = arith.constant 0 : index
    %c1_23 = arith.constant 1 : index
    %c0_24 = arith.constant 0 : index
    %c0_25 = arith.constant 0 : index
    %18 = vector.load %arg1[%c0_22, %c1_23, %c0_24, %c0_25] : memref<1x3x3x40xbf16, #tpu.memory_space<vmem>>, vector<1x2x2x40xbf16>
    %19 = vector.shape_cast %18 : vector<1x2x2x40xbf16> to vector<2x2x40xbf16>
    %20 = arith.extf %19 : vector<2x2x40xbf16> to vector<2x2x40xf32>
    %c0_26 = arith.constant 0 : index
    %c1_27 = arith.constant 1 : index
    %c0_28 = arith.constant 0 : index
    %c0_29 = arith.constant 0 : index
    %21 = vector.load %arg2[%c0_26, %c1_27, %c0_28, %c0_29] : memref<1x3x3x40xbf16, #tpu.memory_space<vmem>>, vector<1x2x2x40xbf16>
    %22 = vector.shape_cast %21 : vector<1x2x2x40xbf16> to vector<2x2x40xbf16>
    %23 = arith.extf %22 : vector<2x2x40xbf16> to vector<2x2x40xf32>
    %c0_30 = arith.constant 0 : index
    %c1_31 = arith.constant 1 : index
    %c1_32 = arith.constant 1 : index
    %c0_33 = arith.constant 0 : index
    %24 = vector.load %arg1[%c0_30, %c1_31, %c1_32, %c0_33] : memref<1x3x3x40xbf16, #tpu.memory_space<vmem>>, vector<1x2x2x40xbf16>
    %25 = vector.shape_cast %24 : vector<1x2x2x40xbf16> to vector<2x2x40xbf16>
    %26 = arith.extf %25 : vector<2x2x40xbf16> to vector<2x2x40xf32>
    %27 = arith.addf %2, %5 : vector<2x2x40xf32>
    %28 = arith.addf %27, %8 : vector<2x2x40xf32>
    %29 = arith.addf %28, %11 : vector<2x2x40xf32>
    %30 = arith.addf %29, %14 : vector<2x2x40xf32>
    %31 = arith.addf %30, %17 : vector<2x2x40xf32>
    %32 = arith.addf %31, %20 : vector<2x2x40xf32>
    %33 = arith.addf %32, %23 : vector<2x2x40xf32>
    %34 = arith.addf %33, %26 : vector<2x2x40xf32>
    %cst = arith.constant 0.111111112 : f32
    %35 = vector.broadcast %cst : f32 to vector<2x2x40xf32>
    %36 = arith.mulf %34, %35 : vector<2x2x40xf32>
    %cst_34 = arith.constant 0.000000e+00 : f32
    %37 = vector.broadcast %cst_34 : f32 to vector<2x2x40xf32>
    %38 = arith.maximumf %36, %37 : vector<2x2x40xf32>
    %39 = arith.truncf %38 : vector<2x2x40xf32> to vector<2x2x40xbf16>
    %c0_35 = arith.constant 0 : index
    %c0_36 = arith.constant 0 : index
    %c0_37 = arith.constant 0 : index
    %c0_38 = arith.constant 0 : index
    %40 = vector.load %arg5[%c0_35, %c0_36, %c0_37, %c0_38] : memref<1x2x2x40xbf16, #tpu.memory_space<vmem>>, vector<1x2x2x40xbf16>
    %41 = vector.shape_cast %40 : vector<1x2x2x40xbf16> to vector<2x2x40xbf16>
    %42 = vector.shape_cast %39 : vector<2x2x40xbf16> to vector<1x2x2x40xbf16>
    tpu.vector_store %arg5[%c0_35, %c0_36, %c0_37, %c0_38], %42 {strides = array<i32>} : memref<1x2x2x40xbf16, #tpu.memory_space<vmem>>, vector<1x2x2x40xbf16>,
    return
  }
  func.func @transform_0(%arg0: i32) -> (i32, i32, i32, i32) {
    %c0_i32 = arith.constant 0 : i32
    %c0_i32_0 = arith.constant 0 : i32
    %c0_i32_1 = arith.constant 0 : i32
    %c0_i32_2 = arith.constant 0 : i32
    return %arg0, %c0_i32, %c0_i32_0, %c0_i32_1 : i32, i32, i32, i32
  }
  func.func @transform_1(%arg0: i32) -> (i32, i32, i32, i32) {
    %c0_i32 = arith.constant 0 : i32
    %c0_i32_0 = arith.constant 0 : i32
    %c0_i32_1 = arith.constant 0 : i32
    %c0_i32_2 = arith.constant 0 : i32
    return %arg0, %c0_i32, %c0_i32_0, %c0_i32_1 : i32, i32, i32, i32
  }
  func.func @transform_2(%arg0: i32) -> (i32, i32, i32, i32) {
    %c0_i32 = arith.constant 0 : i32
    %c0_i32_0 = arith.constant 0 : i32
    %c0_i32_1 = arith.constant 0 : i32
    %c0_i32_2 = arith.constant 0 : i32
    return %arg0, %c0_i32, %c0_i32_0, %c0_i32_1 : i32, i32, i32, i32
  }
  func.func @transform_3(%arg0: i32) -> (i32, i32, i32, i32) {
    %c0_i32 = arith.constant 0 : i32
    %c0_i32_0 = arith.constant 0 : i32
    %c0_i32_1 = arith.constant 0 : i32
    %c0_i32_2 = arith.constant 0 : i32
    return %arg0, %c0_i32, %c0_i32_0, %c0_i32_1 : i32, i32, i32, i32
  }
  func.func @transform_4(%arg0: i32) -> (i32, i32, i32, i32) {
    %c0_i32 = arith.constant 0 : i32
    %c0_i32_0 = arith.constant 0 : i32
    %c0_i32_1 = arith.constant 0 : i32
    %c0_i32_2 = arith.constant 0 : i32
    return %arg0, %c0_i32, %c0_i32_0, %c0_i32_1 : i32, i32, i32, i32
  }
}

module attributes {stable_mosaic.version = 11 : i64} {
  func.func @_pointwise_kernel(%arg0: i32, %arg1: memref<8x80xbf16, #tpu.memory_space<vmem>>, %arg2: memref<80x20xbf16, #tpu.memory_space<vmem>>, %arg3: memref<1x20xf32, #tpu.memory_space<vmem>>, %arg4: memref<1x20xf32, #tpu.memory_space<vmem>>, %arg5: memref<8x20xbf16, #tpu.memory_space<vmem>>) attributes {dimension_semantics = [#tpu.dimension_semantics<parallel>], iteration_bounds = array<i64: 1>, scalar_prefetch = 0 : i64, scratch_operands = 0 : i64, tpu.core_type = #tpu.core_type<tc>, window_params = [{transform_indices = @transform_0, window_bounds = array<i64: 8, 80>}, {pipeline_mode = #tpu.pipeline_mode<synchronous>, transform_indices = @transform_1, window_bounds = array<i64: 80, 20>}, {pipeline_mode = #tpu.pipeline_mode<synchronous>, transform_indices = @transform_2, window_bounds = array<i64: 1, 20>}, {pipeline_mode = #tpu.pipeline_mode<synchronous>, transform_indices = @transform_3, window_bounds = array<i64: 1, 20>}, {transform_indices = @transform_4, window_bounds = array<i64: 8, 20>}]} {
    %c0 = arith.constant 0 : index
    %c0_0 = arith.constant 0 : index
    %0 = vector.load %arg1[%c0, %c0_0] : memref<8x80xbf16, #tpu.memory_space<vmem>>, vector<8x80xbf16>
    %c0_1 = arith.constant 0 : index
    %c0_2 = arith.constant 0 : index
    %1 = vector.load %arg2[%c0_1, %c0_2] : memref<80x20xbf16, #tpu.memory_space<vmem>>, vector<80x20xbf16>
    %cst = arith.constant dense<0.000000e+00> : vector<8x20xf32>
    %2 = tpu.matmul %0, %1, %cst {dimension_numbers = #tpu.dot_dimension_numbers<[1], [0], [0], [1], [0, 0, 1, 1], [], []>} : vector<8x80xbf16>, vector<80x20xbf16>, vector<8x20xf32> -> vector<8x20xf32>
    %c0_3 = arith.constant 0 : index
    %c0_4 = arith.constant 0 : index
    %3 = vector.load %arg3[%c0_3, %c0_4] : memref<1x20xf32, #tpu.memory_space<vmem>>, vector<1x20xf32>
    %4 = vector.broadcast %3 : vector<1x20xf32> to vector<8x20xf32>
    %5 = arith.mulf %2, %4 : vector<8x20xf32>
    %c0_5 = arith.constant 0 : index
    %c0_6 = arith.constant 0 : index
    %6 = vector.load %arg4[%c0_5, %c0_6] : memref<1x20xf32, #tpu.memory_space<vmem>>, vector<1x20xf32>
    %7 = vector.broadcast %6 : vector<1x20xf32> to vector<8x20xf32>
    %8 = arith.addf %5, %7 : vector<8x20xf32>
    %cst_7 = arith.constant 0.000000e+00 : f32
    %9 = vector.broadcast %cst_7 : f32 to vector<8x20xf32>
    %10 = arith.maximumf %8, %9 : vector<8x20xf32>
    %11 = arith.truncf %10 : vector<8x20xf32> to vector<8x20xbf16>
    %c0_8 = arith.constant 0 : index
    %c0_9 = arith.constant 0 : index
    %12 = vector.load %arg5[%c0_8, %c0_9] : memref<8x20xbf16, #tpu.memory_space<vmem>>, vector<8x20xbf16>
    tpu.vector_store %arg5[%c0_8, %c0_9], %11 {strides = array<i32>} : memref<8x20xbf16, #tpu.memory_space<vmem>>, vector<8x20xbf16>,
    return
  }
  func.func @transform_0(%arg0: i32) -> (i32, i32) {
    %c0_i32 = arith.constant 0 : i32
    %c0_i32_0 = arith.constant 0 : i32
    return %arg0, %c0_i32 : i32, i32
  }
  func.func @transform_1(%arg0: i32) -> (i32, i32) {
    %c0_i32 = arith.constant 0 : i32
    %c0_i32_0 = arith.constant 0 : i32
    %c0_i32_1 = arith.constant 0 : i32
    return %c0_i32, %c0_i32_0 : i32, i32
  }
  func.func @transform_2(%arg0: i32) -> (i32, i32) {
    %c0_i32 = arith.constant 0 : i32
    %c0_i32_0 = arith.constant 0 : i32
    %c0_i32_1 = arith.constant 0 : i32
    return %c0_i32, %c0_i32_0 : i32, i32
  }
  func.func @transform_3(%arg0: i32) -> (i32, i32) {
    %c0_i32 = arith.constant 0 : i32
    %c0_i32_0 = arith.constant 0 : i32
    %c0_i32_1 = arith.constant 0 : i32
    return %c0_i32, %c0_i32_0 : i32, i32
  }
  func.func @transform_4(%arg0: i32) -> (i32, i32) {
    %c0_i32 = arith.constant 0 : i32
    %c0_i32_0 = arith.constant 0 : i32
    return %arg0, %c0_i32 : i32, i32
  }
}

module attributes {stable_mosaic.version = 11 : i64} {
  func.func @_dwconv_kernel(%arg0: i32, %arg1: memref<1x4x4x20xbf16, #tpu.memory_space<vmem>>, %arg2: memref<9x1x20xf32, #tpu.memory_space<vmem>>, %arg3: memref<1x1x20xf32, #tpu.memory_space<vmem>>, %arg4: memref<1x1x20xf32, #tpu.memory_space<vmem>>, %arg5: memref<1x2x2x20xbf16, #tpu.memory_space<vmem>>) attributes {dimension_semantics = [#tpu.dimension_semantics<parallel>], iteration_bounds = array<i64: 2>, scalar_prefetch = 0 : i64, scratch_operands = 0 : i64, tpu.core_type = #tpu.core_type<tc>, window_params = [{transform_indices = @transform_0, window_bounds = array<i64: 1, 4, 4, 20>}, {pipeline_mode = #tpu.pipeline_mode<synchronous>, transform_indices = @transform_1, window_bounds = array<i64: 9, 1, 20>}, {pipeline_mode = #tpu.pipeline_mode<synchronous>, transform_indices = @transform_2, window_bounds = array<i64: 1, 1, 20>}, {pipeline_mode = #tpu.pipeline_mode<synchronous>, transform_indices = @transform_3, window_bounds = array<i64: 1, 1, 20>}, {transform_indices = @transform_4, window_bounds = array<i64: 1, 2, 2, 20>}]} {
    %c0 = arith.constant 0 : index
    %c0_0 = arith.constant 0 : index
    %c0_1 = arith.constant 0 : index
    %c0_2 = arith.constant 0 : index
    %0 = vector.load %arg1[%c0, %c0_0, %c0_1, %c0_2] : memref<1x4x4x20xbf16, #tpu.memory_space<vmem>>, vector<1x2x2x20xbf16>
    %1 = vector.shape_cast %0 : vector<1x2x2x20xbf16> to vector<2x2x20xbf16>
    %2 = arith.extf %1 : vector<2x2x20xbf16> to vector<2x2x20xf32>
    %c0_3 = arith.constant 0 : index
    %c0_4 = arith.constant 0 : index
    %c1 = arith.constant 1 : index
    %c0_5 = arith.constant 0 : index
    %3 = vector.load %arg1[%c0_3, %c0_4, %c1, %c0_5] : memref<1x4x4x20xbf16, #tpu.memory_space<vmem>>, vector<1x2x2x20xbf16>
    %4 = vector.shape_cast %3 : vector<1x2x2x20xbf16> to vector<2x2x20xbf16>
    %5 = arith.extf %4 : vector<2x2x20xbf16> to vector<2x2x20xf32>
    %c0_6 = arith.constant 0 : index
    %c0_7 = arith.constant 0 : index
    %c2 = arith.constant 2 : index
    %c0_8 = arith.constant 0 : index
    %6 = vector.load %arg1[%c0_6, %c0_7, %c2, %c0_8] : memref<1x4x4x20xbf16, #tpu.memory_space<vmem>>, vector<1x2x2x20xbf16>
    %7 = vector.shape_cast %6 : vector<1x2x2x20xbf16> to vector<2x2x20xbf16>
    %8 = arith.extf %7 : vector<2x2x20xbf16> to vector<2x2x20xf32>
    %c0_9 = arith.constant 0 : index
    %c1_10 = arith.constant 1 : index
    %c0_11 = arith.constant 0 : index
    %c0_12 = arith.constant 0 : index
    %9 = vector.load %arg1[%c0_9, %c1_10, %c0_11, %c0_12] : memref<1x4x4x20xbf16, #tpu.memory_space<vmem>>, vector<1x2x2x20xbf16>
    %10 = vector.shape_cast %9 : vector<1x2x2x20xbf16> to vector<2x2x20xbf16>
    %11 = arith.extf %10 : vector<2x2x20xbf16> to vector<2x2x20xf32>
    %c0_13 = arith.constant 0 : index
    %c1_14 = arith.constant 1 : index
    %c1_15 = arith.constant 1 : index
    %c0_16 = arith.constant 0 : index
    %12 = vector.load %arg1[%c0_13, %c1_14, %c1_15, %c0_16] : memref<1x4x4x20xbf16, #tpu.memory_space<vmem>>, vector<1x2x2x20xbf16>
    %13 = vector.shape_cast %12 : vector<1x2x2x20xbf16> to vector<2x2x20xbf16>
    %14 = arith.extf %13 : vector<2x2x20xbf16> to vector<2x2x20xf32>
    %c0_17 = arith.constant 0 : index
    %c1_18 = arith.constant 1 : index
    %c2_19 = arith.constant 2 : index
    %c0_20 = arith.constant 0 : index
    %15 = vector.load %arg1[%c0_17, %c1_18, %c2_19, %c0_20] : memref<1x4x4x20xbf16, #tpu.memory_space<vmem>>, vector<1x2x2x20xbf16>
    %16 = vector.shape_cast %15 : vector<1x2x2x20xbf16> to vector<2x2x20xbf16>
    %17 = arith.extf %16 : vector<2x2x20xbf16> to vector<2x2x20xf32>
    %c0_21 = arith.constant 0 : index
    %c2_22 = arith.constant 2 : index
    %c0_23 = arith.constant 0 : index
    %c0_24 = arith.constant 0 : index
    %18 = vector.load %arg1[%c0_21, %c2_22, %c0_23, %c0_24] : memref<1x4x4x20xbf16, #tpu.memory_space<vmem>>, vector<1x2x2x20xbf16>
    %19 = vector.shape_cast %18 : vector<1x2x2x20xbf16> to vector<2x2x20xbf16>
    %20 = arith.extf %19 : vector<2x2x20xbf16> to vector<2x2x20xf32>
    %c0_25 = arith.constant 0 : index
    %c2_26 = arith.constant 2 : index
    %c1_27 = arith.constant 1 : index
    %c0_28 = arith.constant 0 : index
    %21 = vector.load %arg1[%c0_25, %c2_26, %c1_27, %c0_28] : memref<1x4x4x20xbf16, #tpu.memory_space<vmem>>, vector<1x2x2x20xbf16>
    %22 = vector.shape_cast %21 : vector<1x2x2x20xbf16> to vector<2x2x20xbf16>
    %23 = arith.extf %22 : vector<2x2x20xbf16> to vector<2x2x20xf32>
    %c0_29 = arith.constant 0 : index
    %c2_30 = arith.constant 2 : index
    %c2_31 = arith.constant 2 : index
    %c0_32 = arith.constant 0 : index
    %24 = vector.load %arg1[%c0_29, %c2_30, %c2_31, %c0_32] : memref<1x4x4x20xbf16, #tpu.memory_space<vmem>>, vector<1x2x2x20xbf16>
    %25 = vector.shape_cast %24 : vector<1x2x2x20xbf16> to vector<2x2x20xbf16>
    %26 = arith.extf %25 : vector<2x2x20xbf16> to vector<2x2x20xf32>
    %c0_33 = arith.constant 0 : index
    %c0_34 = arith.constant 0 : index
    %c0_35 = arith.constant 0 : index
    %27 = vector.load %arg2[%c0_33, %c0_34, %c0_35] : memref<9x1x20xf32, #tpu.memory_space<vmem>>, vector<1x1x20xf32>
    %28 = vector.shape_cast %27 : vector<1x1x20xf32> to vector<1x20xf32>
    %29 = vector.shape_cast %28 : vector<1x20xf32> to vector<1x1x20xf32>
    %30 = vector.broadcast %29 : vector<1x1x20xf32> to vector<2x2x20xf32>
    %31 = arith.mulf %2, %30 : vector<2x2x20xf32>
    %c1_36 = arith.constant 1 : index
    %c0_37 = arith.constant 0 : index
    %c0_38 = arith.constant 0 : index
    %32 = vector.load %arg2[%c1_36, %c0_37, %c0_38] : memref<9x1x20xf32, #tpu.memory_space<vmem>>, vector<1x1x20xf32>
    %33 = vector.shape_cast %32 : vector<1x1x20xf32> to vector<1x20xf32>
    %34 = vector.shape_cast %33 : vector<1x20xf32> to vector<1x1x20xf32>
    %35 = vector.broadcast %34 : vector<1x1x20xf32> to vector<2x2x20xf32>
    %36 = arith.mulf %5, %35 : vector<2x2x20xf32>
    %37 = arith.addf %31, %36 : vector<2x2x20xf32>
    %c2_39 = arith.constant 2 : index
    %c0_40 = arith.constant 0 : index
    %c0_41 = arith.constant 0 : index
    %38 = vector.load %arg2[%c2_39, %c0_40, %c0_41] : memref<9x1x20xf32, #tpu.memory_space<vmem>>, vector<1x1x20xf32>
    %39 = vector.shape_cast %38 : vector<1x1x20xf32> to vector<1x20xf32>
    %40 = vector.shape_cast %39 : vector<1x20xf32> to vector<1x1x20xf32>
    %41 = vector.broadcast %40 : vector<1x1x20xf32> to vector<2x2x20xf32>
    %42 = arith.mulf %8, %41 : vector<2x2x20xf32>
    %43 = arith.addf %37, %42 : vector<2x2x20xf32>
    %c3 = arith.constant 3 : index
    %c0_42 = arith.constant 0 : index
    %c0_43 = arith.constant 0 : index
    %44 = vector.load %arg2[%c3, %c0_42, %c0_43] : memref<9x1x20xf32, #tpu.memory_space<vmem>>, vector<1x1x20xf32>
    %45 = vector.shape_cast %44 : vector<1x1x20xf32> to vector<1x20xf32>
    %46 = vector.shape_cast %45 : vector<1x20xf32> to vector<1x1x20xf32>
    %47 = vector.broadcast %46 : vector<1x1x20xf32> to vector<2x2x20xf32>
    %48 = arith.mulf %11, %47 : vector<2x2x20xf32>
    %49 = arith.addf %43, %48 : vector<2x2x20xf32>
    %c4 = arith.constant 4 : index
    %c0_44 = arith.constant 0 : index
    %c0_45 = arith.constant 0 : index
    %50 = vector.load %arg2[%c4, %c0_44, %c0_45] : memref<9x1x20xf32, #tpu.memory_space<vmem>>, vector<1x1x20xf32>
    %51 = vector.shape_cast %50 : vector<1x1x20xf32> to vector<1x20xf32>
    %52 = vector.shape_cast %51 : vector<1x20xf32> to vector<1x1x20xf32>
    %53 = vector.broadcast %52 : vector<1x1x20xf32> to vector<2x2x20xf32>
    %54 = arith.mulf %14, %53 : vector<2x2x20xf32>
    %55 = arith.addf %49, %54 : vector<2x2x20xf32>
    %c5 = arith.constant 5 : index
    %c0_46 = arith.constant 0 : index
    %c0_47 = arith.constant 0 : index
    %56 = vector.load %arg2[%c5, %c0_46, %c0_47] : memref<9x1x20xf32, #tpu.memory_space<vmem>>, vector<1x1x20xf32>
    %57 = vector.shape_cast %56 : vector<1x1x20xf32> to vector<1x20xf32>
    %58 = vector.shape_cast %57 : vector<1x20xf32> to vector<1x1x20xf32>
    %59 = vector.broadcast %58 : vector<1x1x20xf32> to vector<2x2x20xf32>
    %60 = arith.mulf %17, %59 : vector<2x2x20xf32>
    %61 = arith.addf %55, %60 : vector<2x2x20xf32>
    %c6 = arith.constant 6 : index
    %c0_48 = arith.constant 0 : index
    %c0_49 = arith.constant 0 : index
    %62 = vector.load %arg2[%c6, %c0_48, %c0_49] : memref<9x1x20xf32, #tpu.memory_space<vmem>>, vector<1x1x20xf32>
    %63 = vector.shape_cast %62 : vector<1x1x20xf32> to vector<1x20xf32>
    %64 = vector.shape_cast %63 : vector<1x20xf32> to vector<1x1x20xf32>
    %65 = vector.broadcast %64 : vector<1x1x20xf32> to vector<2x2x20xf32>
    %66 = arith.mulf %20, %65 : vector<2x2x20xf32>
    %67 = arith.addf %61, %66 : vector<2x2x20xf32>
    %c7 = arith.constant 7 : index
    %c0_50 = arith.constant 0 : index
    %c0_51 = arith.constant 0 : index
    %68 = vector.load %arg2[%c7, %c0_50, %c0_51] : memref<9x1x20xf32, #tpu.memory_space<vmem>>, vector<1x1x20xf32>
    %69 = vector.shape_cast %68 : vector<1x1x20xf32> to vector<1x20xf32>
    %70 = vector.shape_cast %69 : vector<1x20xf32> to vector<1x1x20xf32>
    %71 = vector.broadcast %70 : vector<1x1x20xf32> to vector<2x2x20xf32>
    %72 = arith.mulf %23, %71 : vector<2x2x20xf32>
    %73 = arith.addf %67, %72 : vector<2x2x20xf32>
    %c8 = arith.constant 8 : index
    %c0_52 = arith.constant 0 : index
    %c0_53 = arith.constant 0 : index
    %74 = vector.load %arg2[%c8, %c0_52, %c0_53] : memref<9x1x20xf32, #tpu.memory_space<vmem>>, vector<1x1x20xf32>
    %75 = vector.shape_cast %74 : vector<1x1x20xf32> to vector<1x20xf32>
    %76 = vector.shape_cast %75 : vector<1x20xf32> to vector<1x1x20xf32>
    %77 = vector.broadcast %76 : vector<1x1x20xf32> to vector<2x2x20xf32>
    %78 = arith.mulf %26, %77 : vector<2x2x20xf32>
    %79 = arith.addf %73, %78 : vector<2x2x20xf32>
    %c0_54 = arith.constant 0 : index
    %c0_55 = arith.constant 0 : index
    %c0_56 = arith.constant 0 : index
    %80 = vector.load %arg3[%c0_54, %c0_55, %c0_56] : memref<1x1x20xf32, #tpu.memory_space<vmem>>, vector<1x1x20xf32>
    %81 = vector.shape_cast %80 : vector<1x1x20xf32> to vector<1x20xf32>
    %82 = vector.shape_cast %81 : vector<1x20xf32> to vector<1x1x20xf32>
    %83 = vector.broadcast %82 : vector<1x1x20xf32> to vector<2x2x20xf32>
    %84 = arith.mulf %79, %83 : vector<2x2x20xf32>
    %c0_57 = arith.constant 0 : index
    %c0_58 = arith.constant 0 : index
    %c0_59 = arith.constant 0 : index
    %85 = vector.load %arg4[%c0_57, %c0_58, %c0_59] : memref<1x1x20xf32, #tpu.memory_space<vmem>>, vector<1x1x20xf32>
    %86 = vector.shape_cast %85 : vector<1x1x20xf32> to vector<1x20xf32>
    %87 = vector.shape_cast %86 : vector<1x20xf32> to vector<1x1x20xf32>
    %88 = vector.broadcast %87 : vector<1x1x20xf32> to vector<2x2x20xf32>
    %89 = arith.addf %84, %88 : vector<2x2x20xf32>
    %90 = arith.truncf %89 : vector<2x2x20xf32> to vector<2x2x20xbf16>
    %c0_60 = arith.constant 0 : index
    %c0_61 = arith.constant 0 : index
    %c0_62 = arith.constant 0 : index
    %c0_63 = arith.constant 0 : index
    %91 = vector.load %arg5[%c0_60, %c0_61, %c0_62, %c0_63] : memref<1x2x2x20xbf16, #tpu.memory_space<vmem>>, vector<1x2x2x20xbf16>
    %92 = vector.shape_cast %91 : vector<1x2x2x20xbf16> to vector<2x2x20xbf16>
    %93 = vector.shape_cast %90 : vector<2x2x20xbf16> to vector<1x2x2x20xbf16>
    tpu.vector_store %arg5[%c0_60, %c0_61, %c0_62, %c0_63], %93 {strides = array<i32>} : memref<1x2x2x20xbf16, #tpu.memory_space<vmem>>, vector<1x2x2x20xbf16>,
    return
  }
  func.func @transform_0(%arg0: i32) -> (i32, i32, i32, i32) {
    %c0_i32 = arith.constant 0 : i32
    %c0_i32_0 = arith.constant 0 : i32
    %c0_i32_1 = arith.constant 0 : i32
    %c0_i32_2 = arith.constant 0 : i32
    return %arg0, %c0_i32, %c0_i32_0, %c0_i32_1 : i32, i32, i32, i32
  }
  func.func @transform_1(%arg0: i32) -> (i32, i32, i32) {
    %c0_i32 = arith.constant 0 : i32
    %c0_i32_0 = arith.constant 0 : i32
    %c0_i32_1 = arith.constant 0 : i32
    %c0_i32_2 = arith.constant 0 : i32
    return %c0_i32, %c0_i32_0, %c0_i32_1 : i32, i32, i32
  }
  func.func @transform_2(%arg0: i32) -> (i32, i32, i32) {
    %c0_i32 = arith.constant 0 : i32
    %c0_i32_0 = arith.constant 0 : i32
    %c0_i32_1 = arith.constant 0 : i32
    %c0_i32_2 = arith.constant 0 : i32
    return %c0_i32, %c0_i32_0, %c0_i32_1 : i32, i32, i32
  }
  func.func @transform_3(%arg0: i32) -> (i32, i32, i32) {
    %c0_i32 = arith.constant 0 : i32
    %c0_i32_0 = arith.constant 0 : i32
    %c0_i32_1 = arith.constant 0 : i32
    %c0_i32_2 = arith.constant 0 : i32
    return %c0_i32, %c0_i32_0, %c0_i32_1 : i32, i32, i32
  }
  func.func @transform_4(%arg0: i32) -> (i32, i32, i32, i32) {
    %c0_i32 = arith.constant 0 : i32
    %c0_i32_0 = arith.constant 0 : i32
    %c0_i32_1 = arith.constant 0 : i32
    %c0_i32_2 = arith.constant 0 : i32
    return %arg0, %c0_i32, %c0_i32_0, %c0_i32_1 : i32, i32, i32, i32
  }
}

module attributes {stable_mosaic.version = 11 : i64} {
  func.func @_pointwise_residual_kernel(%arg0: i32, %arg1: memref<8x20xbf16, #tpu.memory_space<vmem>>, %arg2: memref<20x80xbf16, #tpu.memory_space<vmem>>, %arg3: memref<1x80xf32, #tpu.memory_space<vmem>>, %arg4: memref<1x80xf32, #tpu.memory_space<vmem>>, %arg5: memref<8x80xbf16, #tpu.memory_space<vmem>>, %arg6: memref<8x80xbf16, #tpu.memory_space<vmem>>) attributes {dimension_semantics = [#tpu.dimension_semantics<parallel>], iteration_bounds = array<i64: 1>, scalar_prefetch = 0 : i64, scratch_operands = 0 : i64, tpu.core_type = #tpu.core_type<tc>, window_params = [{transform_indices = @transform_0, window_bounds = array<i64: 8, 20>}, {pipeline_mode = #tpu.pipeline_mode<synchronous>, transform_indices = @transform_1, window_bounds = array<i64: 20, 80>}, {pipeline_mode = #tpu.pipeline_mode<synchronous>, transform_indices = @transform_2, window_bounds = array<i64: 1, 80>}, {pipeline_mode = #tpu.pipeline_mode<synchronous>, transform_indices = @transform_3, window_bounds = array<i64: 1, 80>}, {transform_indices = @transform_4, window_bounds = array<i64: 8, 80>}, {transform_indices = @transform_5, window_bounds = array<i64: 8, 80>}]} {
    %c0 = arith.constant 0 : index
    %c0_0 = arith.constant 0 : index
    %0 = vector.load %arg1[%c0, %c0_0] : memref<8x20xbf16, #tpu.memory_space<vmem>>, vector<8x20xbf16>
    %c0_1 = arith.constant 0 : index
    %c0_2 = arith.constant 0 : index
    %1 = vector.load %arg2[%c0_1, %c0_2] : memref<20x80xbf16, #tpu.memory_space<vmem>>, vector<20x80xbf16>
    %cst = arith.constant dense<0.000000e+00> : vector<8x80xf32>
    %2 = tpu.matmul %0, %1, %cst {dimension_numbers = #tpu.dot_dimension_numbers<[1], [0], [0], [1], [0, 0, 1, 1], [], []>} : vector<8x20xbf16>, vector<20x80xbf16>, vector<8x80xf32> -> vector<8x80xf32>
    %c0_3 = arith.constant 0 : index
    %c0_4 = arith.constant 0 : index
    %3 = vector.load %arg3[%c0_3, %c0_4] : memref<1x80xf32, #tpu.memory_space<vmem>>, vector<1x80xf32>
    %4 = vector.broadcast %3 : vector<1x80xf32> to vector<8x80xf32>
    %5 = arith.mulf %2, %4 : vector<8x80xf32>
    %c0_5 = arith.constant 0 : index
    %c0_6 = arith.constant 0 : index
    %6 = vector.load %arg4[%c0_5, %c0_6] : memref<1x80xf32, #tpu.memory_space<vmem>>, vector<1x80xf32>
    %7 = vector.broadcast %6 : vector<1x80xf32> to vector<8x80xf32>
    %8 = arith.addf %5, %7 : vector<8x80xf32>
    %c0_7 = arith.constant 0 : index
    %c0_8 = arith.constant 0 : index
    %9 = vector.load %arg5[%c0_7, %c0_8] : memref<8x80xbf16, #tpu.memory_space<vmem>>, vector<8x80xbf16>
    %10 = arith.extf %9 : vector<8x80xbf16> to vector<8x80xf32>
    %11 = arith.addf %8, %10 : vector<8x80xf32>
    %cst_9 = arith.constant 0.000000e+00 : f32
    %12 = vector.broadcast %cst_9 : f32 to vector<8x80xf32>
    %13 = arith.maximumf %11, %12 : vector<8x80xf32>
    %14 = arith.truncf %13 : vector<8x80xf32> to vector<8x80xbf16>
    %c0_10 = arith.constant 0 : index
    %c0_11 = arith.constant 0 : index
    %15 = vector.load %arg6[%c0_10, %c0_11] : memref<8x80xbf16, #tpu.memory_space<vmem>>, vector<8x80xbf16>
    tpu.vector_store %arg6[%c0_10, %c0_11], %14 {strides = array<i32>} : memref<8x80xbf16, #tpu.memory_space<vmem>>, vector<8x80xbf16>,
    return
  }
  func.func @transform_0(%arg0: i32) -> (i32, i32) {
    %c0_i32 = arith.constant 0 : i32
    %c0_i32_0 = arith.constant 0 : i32
    return %arg0, %c0_i32 : i32, i32
  }
  func.func @transform_1(%arg0: i32) -> (i32, i32) {
    %c0_i32 = arith.constant 0 : i32
    %c0_i32_0 = arith.constant 0 : i32
    %c0_i32_1 = arith.constant 0 : i32
    return %c0_i32, %c0_i32_0 : i32, i32
  }
  func.func @transform_2(%arg0: i32) -> (i32, i32) {
    %c0_i32 = arith.constant 0 : i32
    %c0_i32_0 = arith.constant 0 : i32
    %c0_i32_1 = arith.constant 0 : i32
    return %c0_i32, %c0_i32_0 : i32, i32
  }
  func.func @transform_3(%arg0: i32) -> (i32, i32) {
    %c0_i32 = arith.constant 0 : i32
    %c0_i32_0 = arith.constant 0 : i32
    %c0_i32_1 = arith.constant 0 : i32
    return %c0_i32, %c0_i32_0 : i32, i32
  }
  func.func @transform_4(%arg0: i32) -> (i32, i32) {
    %c0_i32 = arith.constant 0 : i32
    %c0_i32_0 = arith.constant 0 : i32
    return %arg0, %c0_i32 : i32, i32
  }
  func.func @transform_5(%arg0: i32) -> (i32, i32) {
    %c0_i32 = arith.constant 0 : i32
    %c0_i32_0 = arith.constant 0 : i32
    return %arg0, %c0_i32 : i32, i32
  }
}

module attributes {stable_mosaic.version = 11 : i64} {
  func.func @_pointwise_kernel(%arg0: i32, %arg1: memref<8x80xbf16, #tpu.memory_space<vmem>>, %arg2: memref<80x40xbf16, #tpu.memory_space<vmem>>, %arg3: memref<1x40xf32, #tpu.memory_space<vmem>>, %arg4: memref<1x40xf32, #tpu.memory_space<vmem>>, %arg5: memref<8x40xbf16, #tpu.memory_space<vmem>>) attributes {dimension_semantics = [#tpu.dimension_semantics<parallel>], iteration_bounds = array<i64: 1>, scalar_prefetch = 0 : i64, scratch_operands = 0 : i64, tpu.core_type = #tpu.core_type<tc>, window_params = [{transform_indices = @transform_0, window_bounds = array<i64: 8, 80>}, {pipeline_mode = #tpu.pipeline_mode<synchronous>, transform_indices = @transform_1, window_bounds = array<i64: 80, 40>}, {pipeline_mode = #tpu.pipeline_mode<synchronous>, transform_indices = @transform_2, window_bounds = array<i64: 1, 40>}, {pipeline_mode = #tpu.pipeline_mode<synchronous>, transform_indices = @transform_3, window_bounds = array<i64: 1, 40>}, {transform_indices = @transform_4, window_bounds = array<i64: 8, 40>}]} {
    %c0 = arith.constant 0 : index
    %c0_0 = arith.constant 0 : index
    %0 = vector.load %arg1[%c0, %c0_0] : memref<8x80xbf16, #tpu.memory_space<vmem>>, vector<8x80xbf16>
    %c0_1 = arith.constant 0 : index
    %c0_2 = arith.constant 0 : index
    %1 = vector.load %arg2[%c0_1, %c0_2] : memref<80x40xbf16, #tpu.memory_space<vmem>>, vector<80x40xbf16>
    %cst = arith.constant dense<0.000000e+00> : vector<8x40xf32>
    %2 = tpu.matmul %0, %1, %cst {dimension_numbers = #tpu.dot_dimension_numbers<[1], [0], [0], [1], [0, 0, 1, 1], [], []>} : vector<8x80xbf16>, vector<80x40xbf16>, vector<8x40xf32> -> vector<8x40xf32>
    %c0_3 = arith.constant 0 : index
    %c0_4 = arith.constant 0 : index
    %3 = vector.load %arg3[%c0_3, %c0_4] : memref<1x40xf32, #tpu.memory_space<vmem>>, vector<1x40xf32>
    %4 = vector.broadcast %3 : vector<1x40xf32> to vector<8x40xf32>
    %5 = arith.mulf %2, %4 : vector<8x40xf32>
    %c0_5 = arith.constant 0 : index
    %c0_6 = arith.constant 0 : index
    %6 = vector.load %arg4[%c0_5, %c0_6] : memref<1x40xf32, #tpu.memory_space<vmem>>, vector<1x40xf32>
    %7 = vector.broadcast %6 : vector<1x40xf32> to vector<8x40xf32>
    %8 = arith.addf %5, %7 : vector<8x40xf32>
    %cst_7 = arith.constant 0.000000e+00 : f32
    %9 = vector.broadcast %cst_7 : f32 to vector<8x40xf32>
    %10 = arith.maximumf %8, %9 : vector<8x40xf32>
    %11 = arith.truncf %10 : vector<8x40xf32> to vector<8x40xbf16>
    %c0_8 = arith.constant 0 : index
    %c0_9 = arith.constant 0 : index
    %12 = vector.load %arg5[%c0_8, %c0_9] : memref<8x40xbf16, #tpu.memory_space<vmem>>, vector<8x40xbf16>
    tpu.vector_store %arg5[%c0_8, %c0_9], %11 {strides = array<i32>} : memref<8x40xbf16, #tpu.memory_space<vmem>>, vector<8x40xbf16>,
    return
  }
  func.func @transform_0(%arg0: i32) -> (i32, i32) {
    %c0_i32 = arith.constant 0 : i32
    %c0_i32_0 = arith.constant 0 : i32
    return %arg0, %c0_i32 : i32, i32
  }
  func.func @transform_1(%arg0: i32) -> (i32, i32) {
    %c0_i32 = arith.constant 0 : i32
    %c0_i32_0 = arith.constant 0 : i32
    %c0_i32_1 = arith.constant 0 : i32
    return %c0_i32, %c0_i32_0 : i32, i32
  }
  func.func @transform_2(%arg0: i32) -> (i32, i32) {
    %c0_i32 = arith.constant 0 : i32
    %c0_i32_0 = arith.constant 0 : i32
    %c0_i32_1 = arith.constant 0 : i32
    return %c0_i32, %c0_i32_0 : i32, i32
  }
  func.func @transform_3(%arg0: i32) -> (i32, i32) {
    %c0_i32 = arith.constant 0 : i32
    %c0_i32_0 = arith.constant 0 : i32
    %c0_i32_1 = arith.constant 0 : i32
    return %c0_i32, %c0_i32_0 : i32, i32
  }
  func.func @transform_4(%arg0: i32) -> (i32, i32) {
    %c0_i32 = arith.constant 0 : i32
    %c0_i32_0 = arith.constant 0 : i32
    return %arg0, %c0_i32 : i32, i32
  }
}

module attributes {stable_mosaic.version = 11 : i64} {
  func.func @_dwconv_kernel(%arg0: i32, %arg1: memref<1x2x2x40xbf16, #tpu.memory_space<vmem>>, %arg2: memref<1x2x2x40xbf16, #tpu.memory_space<vmem>>, %arg3: memref<1x2x2x40xbf16, #tpu.memory_space<vmem>>, %arg4: memref<1x2x2x40xbf16, #tpu.memory_space<vmem>>, %arg5: memref<9x1x40xf32, #tpu.memory_space<vmem>>, %arg6: memref<1x1x40xf32, #tpu.memory_space<vmem>>, %arg7: memref<1x1x40xf32, #tpu.memory_space<vmem>>, %arg8: memref<1x1x1x40xbf16, #tpu.memory_space<vmem>>) attributes {dimension_semantics = [#tpu.dimension_semantics<parallel>], iteration_bounds = array<i64: 2>, scalar_prefetch = 0 : i64, scratch_operands = 0 : i64, tpu.core_type = #tpu.core_type<tc>, window_params = [{transform_indices = @transform_0, window_bounds = array<i64: 1, 2, 2, 40>}, {transform_indices = @transform_1, window_bounds = array<i64: 1, 2, 2, 40>}, {transform_indices = @transform_2, window_bounds = array<i64: 1, 2, 2, 40>}, {transform_indices = @transform_3, window_bounds = array<i64: 1, 2, 2, 40>}, {pipeline_mode = #tpu.pipeline_mode<synchronous>, transform_indices = @transform_4, window_bounds = array<i64: 9, 1, 40>}, {pipeline_mode = #tpu.pipeline_mode<synchronous>, transform_indices = @transform_5, window_bounds = array<i64: 1, 1, 40>}, {pipeline_mode = #tpu.pipeline_mode<synchronous>, transform_indices = @transform_6, window_bounds = array<i64: 1, 1, 40>}, {transform_indices = @transform_7, window_bounds = array<i64: 1, 1, 1, 40>}]} {
    %c0 = arith.constant 0 : index
    %c0_0 = arith.constant 0 : index
    %c0_1 = arith.constant 0 : index
    %c0_2 = arith.constant 0 : index
    %0 = vector.load %arg1[%c0, %c0_0, %c0_1, %c0_2] : memref<1x2x2x40xbf16, #tpu.memory_space<vmem>>, vector<1x1x1x40xbf16>
    %1 = vector.shape_cast %0 : vector<1x1x1x40xbf16> to vector<1x1x40xbf16>
    %2 = arith.extf %1 : vector<1x1x40xbf16> to vector<1x1x40xf32>
    %c0_3 = arith.constant 0 : index
    %c0_4 = arith.constant 0 : index
    %c0_5 = arith.constant 0 : index
    %c0_6 = arith.constant 0 : index
    %3 = vector.load %arg2[%c0_3, %c0_4, %c0_5, %c0_6] : memref<1x2x2x40xbf16, #tpu.memory_space<vmem>>, vector<1x1x1x40xbf16>
    %4 = vector.shape_cast %3 : vector<1x1x1x40xbf16> to vector<1x1x40xbf16>
    %5 = arith.extf %4 : vector<1x1x40xbf16> to vector<1x1x40xf32>
    %c0_7 = arith.constant 0 : index
    %c0_8 = arith.constant 0 : index
    %c1 = arith.constant 1 : index
    %c0_9 = arith.constant 0 : index
    %6 = vector.load %arg1[%c0_7, %c0_8, %c1, %c0_9] : memref<1x2x2x40xbf16, #tpu.memory_space<vmem>>, vector<1x1x1x40xbf16>
    %7 = vector.shape_cast %6 : vector<1x1x1x40xbf16> to vector<1x1x40xbf16>
    %8 = arith.extf %7 : vector<1x1x40xbf16> to vector<1x1x40xf32>
    %c0_10 = arith.constant 0 : index
    %c0_11 = arith.constant 0 : index
    %c0_12 = arith.constant 0 : index
    %c0_13 = arith.constant 0 : index
    %9 = vector.load %arg3[%c0_10, %c0_11, %c0_12, %c0_13] : memref<1x2x2x40xbf16, #tpu.memory_space<vmem>>, vector<1x1x1x40xbf16>
    %10 = vector.shape_cast %9 : vector<1x1x1x40xbf16> to vector<1x1x40xbf16>
    %11 = arith.extf %10 : vector<1x1x40xbf16> to vector<1x1x40xf32>
    %c0_14 = arith.constant 0 : index
    %c0_15 = arith.constant 0 : index
    %c0_16 = arith.constant 0 : index
    %c0_17 = arith.constant 0 : index
    %12 = vector.load %arg4[%c0_14, %c0_15, %c0_16, %c0_17] : memref<1x2x2x40xbf16, #tpu.memory_space<vmem>>, vector<1x1x1x40xbf16>
    %13 = vector.shape_cast %12 : vector<1x1x1x40xbf16> to vector<1x1x40xbf16>
    %14 = arith.extf %13 : vector<1x1x40xbf16> to vector<1x1x40xf32>
    %c0_18 = arith.constant 0 : index
    %c0_19 = arith.constant 0 : index
    %c1_20 = arith.constant 1 : index
    %c0_21 = arith.constant 0 : index
    %15 = vector.load %arg3[%c0_18, %c0_19, %c1_20, %c0_21] : memref<1x2x2x40xbf16, #tpu.memory_space<vmem>>, vector<1x1x1x40xbf16>
    %16 = vector.shape_cast %15 : vector<1x1x1x40xbf16> to vector<1x1x40xbf16>
    %17 = arith.extf %16 : vector<1x1x40xbf16> to vector<1x1x40xf32>
    %c0_22 = arith.constant 0 : index
    %c1_23 = arith.constant 1 : index
    %c0_24 = arith.constant 0 : index
    %c0_25 = arith.constant 0 : index
    %18 = vector.load %arg1[%c0_22, %c1_23, %c0_24, %c0_25] : memref<1x2x2x40xbf16, #tpu.memory_space<vmem>>, vector<1x1x1x40xbf16>
    %19 = vector.shape_cast %18 : vector<1x1x1x40xbf16> to vector<1x1x40xbf16>
    %20 = arith.extf %19 : vector<1x1x40xbf16> to vector<1x1x40xf32>
    %c0_26 = arith.constant 0 : index
    %c1_27 = arith.constant 1 : index
    %c0_28 = arith.constant 0 : index
    %c0_29 = arith.constant 0 : index
    %21 = vector.load %arg2[%c0_26, %c1_27, %c0_28, %c0_29] : memref<1x2x2x40xbf16, #tpu.memory_space<vmem>>, vector<1x1x1x40xbf16>
    %22 = vector.shape_cast %21 : vector<1x1x1x40xbf16> to vector<1x1x40xbf16>
    %23 = arith.extf %22 : vector<1x1x40xbf16> to vector<1x1x40xf32>
    %c0_30 = arith.constant 0 : index
    %c1_31 = arith.constant 1 : index
    %c1_32 = arith.constant 1 : index
    %c0_33 = arith.constant 0 : index
    %24 = vector.load %arg1[%c0_30, %c1_31, %c1_32, %c0_33] : memref<1x2x2x40xbf16, #tpu.memory_space<vmem>>, vector<1x1x1x40xbf16>
    %25 = vector.shape_cast %24 : vector<1x1x1x40xbf16> to vector<1x1x40xbf16>
    %26 = arith.extf %25 : vector<1x1x40xbf16> to vector<1x1x40xf32>
    %c0_34 = arith.constant 0 : index
    %c0_35 = arith.constant 0 : index
    %c0_36 = arith.constant 0 : index
    %27 = vector.load %arg5[%c0_34, %c0_35, %c0_36] : memref<9x1x40xf32, #tpu.memory_space<vmem>>, vector<1x1x40xf32>
    %28 = vector.shape_cast %27 : vector<1x1x40xf32> to vector<1x40xf32>
    %29 = vector.shape_cast %28 : vector<1x40xf32> to vector<1x1x40xf32>
    %30 = arith.mulf %2, %29 : vector<1x1x40xf32>
    %c1_37 = arith.constant 1 : index
    %c0_38 = arith.constant 0 : index
    %c0_39 = arith.constant 0 : index
    %31 = vector.load %arg5[%c1_37, %c0_38, %c0_39] : memref<9x1x40xf32, #tpu.memory_space<vmem>>, vector<1x1x40xf32>
    %32 = vector.shape_cast %31 : vector<1x1x40xf32> to vector<1x40xf32>
    %33 = vector.shape_cast %32 : vector<1x40xf32> to vector<1x1x40xf32>
    %34 = arith.mulf %5, %33 : vector<1x1x40xf32>
    %35 = arith.addf %30, %34 : vector<1x1x40xf32>
    %c2 = arith.constant 2 : index
    %c0_40 = arith.constant 0 : index
    %c0_41 = arith.constant 0 : index
    %36 = vector.load %arg5[%c2, %c0_40, %c0_41] : memref<9x1x40xf32, #tpu.memory_space<vmem>>, vector<1x1x40xf32>
    %37 = vector.shape_cast %36 : vector<1x1x40xf32> to vector<1x40xf32>
    %38 = vector.shape_cast %37 : vector<1x40xf32> to vector<1x1x40xf32>
    %39 = arith.mulf %8, %38 : vector<1x1x40xf32>
    %40 = arith.addf %35, %39 : vector<1x1x40xf32>
    %c3 = arith.constant 3 : index
    %c0_42 = arith.constant 0 : index
    %c0_43 = arith.constant 0 : index
    %41 = vector.load %arg5[%c3, %c0_42, %c0_43] : memref<9x1x40xf32, #tpu.memory_space<vmem>>, vector<1x1x40xf32>
    %42 = vector.shape_cast %41 : vector<1x1x40xf32> to vector<1x40xf32>
    %43 = vector.shape_cast %42 : vector<1x40xf32> to vector<1x1x40xf32>
    %44 = arith.mulf %11, %43 : vector<1x1x40xf32>
    %45 = arith.addf %40, %44 : vector<1x1x40xf32>
    %c4 = arith.constant 4 : index
    %c0_44 = arith.constant 0 : index
    %c0_45 = arith.constant 0 : index
    %46 = vector.load %arg5[%c4, %c0_44, %c0_45] : memref<9x1x40xf32, #tpu.memory_space<vmem>>, vector<1x1x40xf32>
    %47 = vector.shape_cast %46 : vector<1x1x40xf32> to vector<1x40xf32>
    %48 = vector.shape_cast %47 : vector<1x40xf32> to vector<1x1x40xf32>
    %49 = arith.mulf %14, %48 : vector<1x1x40xf32>
    %50 = arith.addf %45, %49 : vector<1x1x40xf32>
    %c5 = arith.constant 5 : index
    %c0_46 = arith.constant 0 : index
    %c0_47 = arith.constant 0 : index
    %51 = vector.load %arg5[%c5, %c0_46, %c0_47] : memref<9x1x40xf32, #tpu.memory_space<vmem>>, vector<1x1x40xf32>
    %52 = vector.shape_cast %51 : vector<1x1x40xf32> to vector<1x40xf32>
    %53 = vector.shape_cast %52 : vector<1x40xf32> to vector<1x1x40xf32>
    %54 = arith.mulf %17, %53 : vector<1x1x40xf32>
    %55 = arith.addf %50, %54 : vector<1x1x40xf32>
    %c6 = arith.constant 6 : index
    %c0_48 = arith.constant 0 : index
    %c0_49 = arith.constant 0 : index
    %56 = vector.load %arg5[%c6, %c0_48, %c0_49] : memref<9x1x40xf32, #tpu.memory_space<vmem>>, vector<1x1x40xf32>
    %57 = vector.shape_cast %56 : vector<1x1x40xf32> to vector<1x40xf32>
    %58 = vector.shape_cast %57 : vector<1x40xf32> to vector<1x1x40xf32>
    %59 = arith.mulf %20, %58 : vector<1x1x40xf32>
    %60 = arith.addf %55, %59 : vector<1x1x40xf32>
    %c7 = arith.constant 7 : index
    %c0_50 = arith.constant 0 : index
    %c0_51 = arith.constant 0 : index
    %61 = vector.load %arg5[%c7, %c0_50, %c0_51] : memref<9x1x40xf32, #tpu.memory_space<vmem>>, vector<1x1x40xf32>
    %62 = vector.shape_cast %61 : vector<1x1x40xf32> to vector<1x40xf32>
    %63 = vector.shape_cast %62 : vector<1x40xf32> to vector<1x1x40xf32>
    %64 = arith.mulf %23, %63 : vector<1x1x40xf32>
    %65 = arith.addf %60, %64 : vector<1x1x40xf32>
    %c8 = arith.constant 8 : index
    %c0_52 = arith.constant 0 : index
    %c0_53 = arith.constant 0 : index
    %66 = vector.load %arg5[%c8, %c0_52, %c0_53] : memref<9x1x40xf32, #tpu.memory_space<vmem>>, vector<1x1x40xf32>
    %67 = vector.shape_cast %66 : vector<1x1x40xf32> to vector<1x40xf32>
    %68 = vector.shape_cast %67 : vector<1x40xf32> to vector<1x1x40xf32>
    %69 = arith.mulf %26, %68 : vector<1x1x40xf32>
    %70 = arith.addf %65, %69 : vector<1x1x40xf32>
    %c0_54 = arith.constant 0 : index
    %c0_55 = arith.constant 0 : index
    %c0_56 = arith.constant 0 : index
    %71 = vector.load %arg6[%c0_54, %c0_55, %c0_56] : memref<1x1x40xf32, #tpu.memory_space<vmem>>, vector<1x1x40xf32>
    %72 = vector.shape_cast %71 : vector<1x1x40xf32> to vector<1x40xf32>
    %73 = vector.shape_cast %72 : vector<1x40xf32> to vector<1x1x40xf32>
    %74 = arith.mulf %70, %73 : vector<1x1x40xf32>
    %c0_57 = arith.constant 0 : index
    %c0_58 = arith.constant 0 : index
    %c0_59 = arith.constant 0 : index
    %75 = vector.load %arg7[%c0_57, %c0_58, %c0_59] : memref<1x1x40xf32, #tpu.memory_space<vmem>>, vector<1x1x40xf32>
    %76 = vector.shape_cast %75 : vector<1x1x40xf32> to vector<1x40xf32>
    %77 = vector.shape_cast %76 : vector<1x40xf32> to vector<1x1x40xf32>
    %78 = arith.addf %74, %77 : vector<1x1x40xf32>
    %79 = arith.truncf %78 : vector<1x1x40xf32> to vector<1x1x40xbf16>
    %c0_60 = arith.constant 0 : index
    %c0_61 = arith.constant 0 : index
    %c0_62 = arith.constant 0 : index
    %c0_63 = arith.constant 0 : index
    %80 = vector.load %arg8[%c0_60, %c0_61, %c0_62, %c0_63] : memref<1x1x1x40xbf16, #tpu.memory_space<vmem>>, vector<1x1x1x40xbf16>
    %81 = vector.shape_cast %80 : vector<1x1x1x40xbf16> to vector<1x1x40xbf16>
    %82 = vector.shape_cast %79 : vector<1x1x40xbf16> to vector<1x1x1x40xbf16>
    tpu.vector_store %arg8[%c0_60, %c0_61, %c0_62, %c0_63], %82 {strides = array<i32>} : memref<1x1x1x40xbf16, #tpu.memory_space<vmem>>, vector<1x1x1x40xbf16>,
    return
  }
  func.func @transform_0(%arg0: i32) -> (i32, i32, i32, i32) {
    %c0_i32 = arith.constant 0 : i32
    %c0_i32_0 = arith.constant 0 : i32
    %c0_i32_1 = arith.constant 0 : i32
    %c0_i32_2 = arith.constant 0 : i32
    return %arg0, %c0_i32, %c0_i32_0, %c0_i32_1 : i32, i32, i32, i32
  }
  func.func @transform_1(%arg0: i32) -> (i32, i32, i32, i32) {
    %c0_i32 = arith.constant 0 : i32
    %c0_i32_0 = arith.constant 0 : i32
    %c0_i32_1 = arith.constant 0 : i32
    %c0_i32_2 = arith.constant 0 : i32
    return %arg0, %c0_i32, %c0_i32_0, %c0_i32_1 : i32, i32, i32, i32
  }
  func.func @transform_2(%arg0: i32) -> (i32, i32, i32, i32) {
    %c0_i32 = arith.constant 0 : i32
    %c0_i32_0 = arith.constant 0 : i32
    %c0_i32_1 = arith.constant 0 : i32
    %c0_i32_2 = arith.constant 0 : i32
    return %arg0, %c0_i32, %c0_i32_0, %c0_i32_1 : i32, i32, i32, i32
  }
  func.func @transform_3(%arg0: i32) -> (i32, i32, i32, i32) {
    %c0_i32 = arith.constant 0 : i32
    %c0_i32_0 = arith.constant 0 : i32
    %c0_i32_1 = arith.constant 0 : i32
    %c0_i32_2 = arith.constant 0 : i32
    return %arg0, %c0_i32, %c0_i32_0, %c0_i32_1 : i32, i32, i32, i32
  }
  func.func @transform_4(%arg0: i32) -> (i32, i32, i32) {
    %c0_i32 = arith.constant 0 : i32
    %c0_i32_0 = arith.constant 0 : i32
    %c0_i32_1 = arith.constant 0 : i32
    %c0_i32_2 = arith.constant 0 : i32
    return %c0_i32, %c0_i32_0, %c0_i32_1 : i32, i32, i32
  }
  func.func @transform_5(%arg0: i32) -> (i32, i32, i32) {
    %c0_i32 = arith.constant 0 : i32
    %c0_i32_0 = arith.constant 0 : i32
    %c0_i32_1 = arith.constant 0 : i32
    %c0_i32_2 = arith.constant 0 : i32
    return %c0_i32, %c0_i32_0, %c0_i32_1 : i32, i32, i32
  }
  func.func @transform_6(%arg0: i32) -> (i32, i32, i32) {
    %c0_i32 = arith.constant 0 : i32
    %c0_i32_0 = arith.constant 0 : i32
    %c0_i32_1 = arith.constant 0 : i32
    %c0_i32_2 = arith.constant 0 : i32
    return %c0_i32, %c0_i32_0, %c0_i32_1 : i32, i32, i32
  }
  func.func @transform_7(%arg0: i32) -> (i32, i32, i32, i32) {
    %c0_i32 = arith.constant 0 : i32
    %c0_i32_0 = arith.constant 0 : i32
    %c0_i32_1 = arith.constant 0 : i32
    %c0_i32_2 = arith.constant 0 : i32
    return %arg0, %c0_i32, %c0_i32_0, %c0_i32_1 : i32, i32, i32, i32
  }
}

module attributes {stable_mosaic.version = 11 : i64} {
  func.func @_pointwise_kernel(%arg0: i32, %arg1: memref<2x40xbf16, #tpu.memory_space<vmem>>, %arg2: memref<40x80xbf16, #tpu.memory_space<vmem>>, %arg3: memref<1x80xf32, #tpu.memory_space<vmem>>, %arg4: memref<1x80xf32, #tpu.memory_space<vmem>>, %arg5: memref<2x80xbf16, #tpu.memory_space<vmem>>) attributes {dimension_semantics = [#tpu.dimension_semantics<parallel>], iteration_bounds = array<i64: 1>, scalar_prefetch = 0 : i64, scratch_operands = 0 : i64, tpu.core_type = #tpu.core_type<tc>, window_params = [{transform_indices = @transform_0, window_bounds = array<i64: 2, 40>}, {pipeline_mode = #tpu.pipeline_mode<synchronous>, transform_indices = @transform_1, window_bounds = array<i64: 40, 80>}, {pipeline_mode = #tpu.pipeline_mode<synchronous>, transform_indices = @transform_2, window_bounds = array<i64: 1, 80>}, {pipeline_mode = #tpu.pipeline_mode<synchronous>, transform_indices = @transform_3, window_bounds = array<i64: 1, 80>}, {transform_indices = @transform_4, window_bounds = array<i64: 2, 80>}]} {
    %c0 = arith.constant 0 : index
    %c0_0 = arith.constant 0 : index
    %0 = vector.load %arg1[%c0, %c0_0] : memref<2x40xbf16, #tpu.memory_space<vmem>>, vector<2x40xbf16>
    %c0_1 = arith.constant 0 : index
    %c0_2 = arith.constant 0 : index
    %1 = vector.load %arg2[%c0_1, %c0_2] : memref<40x80xbf16, #tpu.memory_space<vmem>>, vector<40x80xbf16>
    %cst = arith.constant dense<0.000000e+00> : vector<2x80xf32>
    %2 = tpu.matmul %0, %1, %cst {dimension_numbers = #tpu.dot_dimension_numbers<[1], [0], [0], [1], [0, 0, 1, 1], [], []>} : vector<2x40xbf16>, vector<40x80xbf16>, vector<2x80xf32> -> vector<2x80xf32>
    %c0_3 = arith.constant 0 : index
    %c0_4 = arith.constant 0 : index
    %3 = vector.load %arg3[%c0_3, %c0_4] : memref<1x80xf32, #tpu.memory_space<vmem>>, vector<1x80xf32>
    %4 = vector.broadcast %3 : vector<1x80xf32> to vector<2x80xf32>
    %5 = arith.mulf %2, %4 : vector<2x80xf32>
    %c0_5 = arith.constant 0 : index
    %c0_6 = arith.constant 0 : index
    %6 = vector.load %arg4[%c0_5, %c0_6] : memref<1x80xf32, #tpu.memory_space<vmem>>, vector<1x80xf32>
    %7 = vector.broadcast %6 : vector<1x80xf32> to vector<2x80xf32>
    %8 = arith.addf %5, %7 : vector<2x80xf32>
    %cst_7 = arith.constant 0.000000e+00 : f32
    %9 = vector.broadcast %cst_7 : f32 to vector<2x80xf32>
    %10 = arith.maximumf %8, %9 : vector<2x80xf32>
    %11 = arith.truncf %10 : vector<2x80xf32> to vector<2x80xbf16>
    %c0_8 = arith.constant 0 : index
    %c0_9 = arith.constant 0 : index
    %12 = vector.load %arg5[%c0_8, %c0_9] : memref<2x80xbf16, #tpu.memory_space<vmem>>, vector<2x80xbf16>
    tpu.vector_store %arg5[%c0_8, %c0_9], %11 {strides = array<i32>} : memref<2x80xbf16, #tpu.memory_space<vmem>>, vector<2x80xbf16>,
    return
  }
  func.func @transform_0(%arg0: i32) -> (i32, i32) {
    %c0_i32 = arith.constant 0 : i32
    %c0_i32_0 = arith.constant 0 : i32
    return %arg0, %c0_i32 : i32, i32
  }
  func.func @transform_1(%arg0: i32) -> (i32, i32) {
    %c0_i32 = arith.constant 0 : i32
    %c0_i32_0 = arith.constant 0 : i32
    %c0_i32_1 = arith.constant 0 : i32
    return %c0_i32, %c0_i32_0 : i32, i32
  }
  func.func @transform_2(%arg0: i32) -> (i32, i32) {
    %c0_i32 = arith.constant 0 : i32
    %c0_i32_0 = arith.constant 0 : i32
    %c0_i32_1 = arith.constant 0 : i32
    return %c0_i32, %c0_i32_0 : i32, i32
  }
  func.func @transform_3(%arg0: i32) -> (i32, i32) {
    %c0_i32 = arith.constant 0 : i32
    %c0_i32_0 = arith.constant 0 : i32
    %c0_i32_1 = arith.constant 0 : i32
    return %c0_i32, %c0_i32_0 : i32, i32
  }
  func.func @transform_4(%arg0: i32) -> (i32, i32) {
    %c0_i32 = arith.constant 0 : i32
    %c0_i32_0 = arith.constant 0 : i32
    return %arg0, %c0_i32 : i32, i32
  }
}

module attributes {stable_mosaic.version = 11 : i64} {
  func.func @_pointwise_kernel(%arg0: i32, %arg1: memref<2x160xbf16, #tpu.memory_space<vmem>>, %arg2: memref<160x40xbf16, #tpu.memory_space<vmem>>, %arg3: memref<1x40xf32, #tpu.memory_space<vmem>>, %arg4: memref<1x40xf32, #tpu.memory_space<vmem>>, %arg5: memref<2x40xbf16, #tpu.memory_space<vmem>>) attributes {dimension_semantics = [#tpu.dimension_semantics<parallel>], iteration_bounds = array<i64: 1>, scalar_prefetch = 0 : i64, scratch_operands = 0 : i64, tpu.core_type = #tpu.core_type<tc>, window_params = [{transform_indices = @transform_0, window_bounds = array<i64: 2, 160>}, {pipeline_mode = #tpu.pipeline_mode<synchronous>, transform_indices = @transform_1, window_bounds = array<i64: 160, 40>}, {pipeline_mode = #tpu.pipeline_mode<synchronous>, transform_indices = @transform_2, window_bounds = array<i64: 1, 40>}, {pipeline_mode = #tpu.pipeline_mode<synchronous>, transform_indices = @transform_3, window_bounds = array<i64: 1, 40>}, {transform_indices = @transform_4, window_bounds = array<i64: 2, 40>}]} {
    %c0 = arith.constant 0 : index
    %c0_0 = arith.constant 0 : index
    %0 = vector.load %arg1[%c0, %c0_0] : memref<2x160xbf16, #tpu.memory_space<vmem>>, vector<2x160xbf16>
    %c0_1 = arith.constant 0 : index
    %c0_2 = arith.constant 0 : index
    %1 = vector.load %arg2[%c0_1, %c0_2] : memref<160x40xbf16, #tpu.memory_space<vmem>>, vector<160x40xbf16>
    %cst = arith.constant dense<0.000000e+00> : vector<2x40xf32>
    %2 = tpu.matmul %0, %1, %cst {dimension_numbers = #tpu.dot_dimension_numbers<[1], [0], [0], [1], [0, 0, 1, 1], [], []>} : vector<2x160xbf16>, vector<160x40xbf16>, vector<2x40xf32> -> vector<2x40xf32>
    %c0_3 = arith.constant 0 : index
    %c0_4 = arith.constant 0 : index
    %3 = vector.load %arg3[%c0_3, %c0_4] : memref<1x40xf32, #tpu.memory_space<vmem>>, vector<1x40xf32>
    %4 = vector.broadcast %3 : vector<1x40xf32> to vector<2x40xf32>
    %5 = arith.mulf %2, %4 : vector<2x40xf32>
    %c0_5 = arith.constant 0 : index
    %c0_6 = arith.constant 0 : index
    %6 = vector.load %arg4[%c0_5, %c0_6] : memref<1x40xf32, #tpu.memory_space<vmem>>, vector<1x40xf32>
    %7 = vector.broadcast %6 : vector<1x40xf32> to vector<2x40xf32>
    %8 = arith.addf %5, %7 : vector<2x40xf32>
    %cst_7 = arith.constant 0.000000e+00 : f32
    %9 = vector.broadcast %cst_7 : f32 to vector<2x40xf32>
    %10 = arith.maximumf %8, %9 : vector<2x40xf32>
    %11 = arith.truncf %10 : vector<2x40xf32> to vector<2x40xbf16>
    %c0_8 = arith.constant 0 : index
    %c0_9 = arith.constant 0 : index
    %12 = vector.load %arg5[%c0_8, %c0_9] : memref<2x40xbf16, #tpu.memory_space<vmem>>, vector<2x40xbf16>
    tpu.vector_store %arg5[%c0_8, %c0_9], %11 {strides = array<i32>} : memref<2x40xbf16, #tpu.memory_space<vmem>>, vector<2x40xbf16>,
    return
  }
  func.func @transform_0(%arg0: i32) -> (i32, i32) {
    %c0_i32 = arith.constant 0 : i32
    %c0_i32_0 = arith.constant 0 : i32
    return %arg0, %c0_i32 : i32, i32
  }
  func.func @transform_1(%arg0: i32) -> (i32, i32) {
    %c0_i32 = arith.constant 0 : i32
    %c0_i32_0 = arith.constant 0 : i32
    %c0_i32_1 = arith.constant 0 : i32
    return %c0_i32, %c0_i32_0 : i32, i32
  }
  func.func @transform_2(%arg0: i32) -> (i32, i32) {
    %c0_i32 = arith.constant 0 : i32
    %c0_i32_0 = arith.constant 0 : i32
    %c0_i32_1 = arith.constant 0 : i32
    return %c0_i32, %c0_i32_0 : i32, i32
  }
  func.func @transform_3(%arg0: i32) -> (i32, i32) {
    %c0_i32 = arith.constant 0 : i32
    %c0_i32_0 = arith.constant 0 : i32
    %c0_i32_1 = arith.constant 0 : i32
    return %c0_i32, %c0_i32_0 : i32, i32
  }
  func.func @transform_4(%arg0: i32) -> (i32, i32) {
    %c0_i32 = arith.constant 0 : i32
    %c0_i32_0 = arith.constant 0 : i32
    return %arg0, %c0_i32 : i32, i32
  }
}

module attributes {stable_mosaic.version = 11 : i64} {
  func.func @_pool_kernel(%arg0: i32, %arg1: memref<1x2x2x80xbf16, #tpu.memory_space<vmem>>, %arg2: memref<1x2x2x80xbf16, #tpu.memory_space<vmem>>, %arg3: memref<1x2x2x80xbf16, #tpu.memory_space<vmem>>, %arg4: memref<1x2x2x80xbf16, #tpu.memory_space<vmem>>, %arg5: memref<1x1x1x80xbf16, #tpu.memory_space<vmem>>) attributes {dimension_semantics = [#tpu.dimension_semantics<parallel>], iteration_bounds = array<i64: 2>, scalar_prefetch = 0 : i64, scratch_operands = 0 : i64, tpu.core_type = #tpu.core_type<tc>, window_params = [{transform_indices = @transform_0, window_bounds = array<i64: 1, 2, 2, 80>}, {transform_indices = @transform_1, window_bounds = array<i64: 1, 2, 2, 80>}, {transform_indices = @transform_2, window_bounds = array<i64: 1, 2, 2, 80>}, {transform_indices = @transform_3, window_bounds = array<i64: 1, 2, 2, 80>}, {transform_indices = @transform_4, window_bounds = array<i64: 1, 1, 1, 80>}]} {
    %c0 = arith.constant 0 : index
    %c0_0 = arith.constant 0 : index
    %c0_1 = arith.constant 0 : index
    %c0_2 = arith.constant 0 : index
    %0 = vector.load %arg1[%c0, %c0_0, %c0_1, %c0_2] : memref<1x2x2x80xbf16, #tpu.memory_space<vmem>>, vector<1x1x1x80xbf16>
    %1 = vector.shape_cast %0 : vector<1x1x1x80xbf16> to vector<1x1x80xbf16>
    %2 = arith.extf %1 : vector<1x1x80xbf16> to vector<1x1x80xf32>
    %c0_3 = arith.constant 0 : index
    %c0_4 = arith.constant 0 : index
    %c0_5 = arith.constant 0 : index
    %c0_6 = arith.constant 0 : index
    %3 = vector.load %arg2[%c0_3, %c0_4, %c0_5, %c0_6] : memref<1x2x2x80xbf16, #tpu.memory_space<vmem>>, vector<1x1x1x80xbf16>
    %4 = vector.shape_cast %3 : vector<1x1x1x80xbf16> to vector<1x1x80xbf16>
    %5 = arith.extf %4 : vector<1x1x80xbf16> to vector<1x1x80xf32>
    %c0_7 = arith.constant 0 : index
    %c0_8 = arith.constant 0 : index
    %c1 = arith.constant 1 : index
    %c0_9 = arith.constant 0 : index
    %6 = vector.load %arg1[%c0_7, %c0_8, %c1, %c0_9] : memref<1x2x2x80xbf16, #tpu.memory_space<vmem>>, vector<1x1x1x80xbf16>
    %7 = vector.shape_cast %6 : vector<1x1x1x80xbf16> to vector<1x1x80xbf16>
    %8 = arith.extf %7 : vector<1x1x80xbf16> to vector<1x1x80xf32>
    %c0_10 = arith.constant 0 : index
    %c0_11 = arith.constant 0 : index
    %c0_12 = arith.constant 0 : index
    %c0_13 = arith.constant 0 : index
    %9 = vector.load %arg3[%c0_10, %c0_11, %c0_12, %c0_13] : memref<1x2x2x80xbf16, #tpu.memory_space<vmem>>, vector<1x1x1x80xbf16>
    %10 = vector.shape_cast %9 : vector<1x1x1x80xbf16> to vector<1x1x80xbf16>
    %11 = arith.extf %10 : vector<1x1x80xbf16> to vector<1x1x80xf32>
    %c0_14 = arith.constant 0 : index
    %c0_15 = arith.constant 0 : index
    %c0_16 = arith.constant 0 : index
    %c0_17 = arith.constant 0 : index
    %12 = vector.load %arg4[%c0_14, %c0_15, %c0_16, %c0_17] : memref<1x2x2x80xbf16, #tpu.memory_space<vmem>>, vector<1x1x1x80xbf16>
    %13 = vector.shape_cast %12 : vector<1x1x1x80xbf16> to vector<1x1x80xbf16>
    %14 = arith.extf %13 : vector<1x1x80xbf16> to vector<1x1x80xf32>
    %c0_18 = arith.constant 0 : index
    %c0_19 = arith.constant 0 : index
    %c1_20 = arith.constant 1 : index
    %c0_21 = arith.constant 0 : index
    %15 = vector.load %arg3[%c0_18, %c0_19, %c1_20, %c0_21] : memref<1x2x2x80xbf16, #tpu.memory_space<vmem>>, vector<1x1x1x80xbf16>
    %16 = vector.shape_cast %15 : vector<1x1x1x80xbf16> to vector<1x1x80xbf16>
    %17 = arith.extf %16 : vector<1x1x80xbf16> to vector<1x1x80xf32>
    %c0_22 = arith.constant 0 : index
    %c1_23 = arith.constant 1 : index
    %c0_24 = arith.constant 0 : index
    %c0_25 = arith.constant 0 : index
    %18 = vector.load %arg1[%c0_22, %c1_23, %c0_24, %c0_25] : memref<1x2x2x80xbf16, #tpu.memory_space<vmem>>, vector<1x1x1x80xbf16>
    %19 = vector.shape_cast %18 : vector<1x1x1x80xbf16> to vector<1x1x80xbf16>
    %20 = arith.extf %19 : vector<1x1x80xbf16> to vector<1x1x80xf32>
    %c0_26 = arith.constant 0 : index
    %c1_27 = arith.constant 1 : index
    %c0_28 = arith.constant 0 : index
    %c0_29 = arith.constant 0 : index
    %21 = vector.load %arg2[%c0_26, %c1_27, %c0_28, %c0_29] : memref<1x2x2x80xbf16, #tpu.memory_space<vmem>>, vector<1x1x1x80xbf16>
    %22 = vector.shape_cast %21 : vector<1x1x1x80xbf16> to vector<1x1x80xbf16>
    %23 = arith.extf %22 : vector<1x1x80xbf16> to vector<1x1x80xf32>
    %c0_30 = arith.constant 0 : index
    %c1_31 = arith.constant 1 : index
    %c1_32 = arith.constant 1 : index
    %c0_33 = arith.constant 0 : index
    %24 = vector.load %arg1[%c0_30, %c1_31, %c1_32, %c0_33] : memref<1x2x2x80xbf16, #tpu.memory_space<vmem>>, vector<1x1x1x80xbf16>
    %25 = vector.shape_cast %24 : vector<1x1x1x80xbf16> to vector<1x1x80xbf16>
    %26 = arith.extf %25 : vector<1x1x80xbf16> to vector<1x1x80xf32>
    %27 = arith.addf %2, %5 : vector<1x1x80xf32>
    %28 = arith.addf %27, %8 : vector<1x1x80xf32>
    %29 = arith.addf %28, %11 : vector<1x1x80xf32>
    %30 = arith.addf %29, %14 : vector<1x1x80xf32>
    %31 = arith.addf %30, %17 : vector<1x1x80xf32>
    %32 = arith.addf %31, %20 : vector<1x1x80xf32>
    %33 = arith.addf %32, %23 : vector<1x1x80xf32>
    %34 = arith.addf %33, %26 : vector<1x1x80xf32>
    %cst = arith.constant 0.111111112 : f32
    %35 = vector.broadcast %cst : f32 to vector<1x1x80xf32>
    %36 = arith.mulf %34, %35 : vector<1x1x80xf32>
    %cst_34 = arith.constant 0.000000e+00 : f32
    %37 = vector.broadcast %cst_34 : f32 to vector<1x1x80xf32>
    %38 = arith.maximumf %36, %37 : vector<1x1x80xf32>
    %39 = arith.truncf %38 : vector<1x1x80xf32> to vector<1x1x80xbf16>
    %c0_35 = arith.constant 0 : index
    %c0_36 = arith.constant 0 : index
    %c0_37 = arith.constant 0 : index
    %c0_38 = arith.constant 0 : index
    %40 = vector.load %arg5[%c0_35, %c0_36, %c0_37, %c0_38] : memref<1x1x1x80xbf16, #tpu.memory_space<vmem>>, vector<1x1x1x80xbf16>
    %41 = vector.shape_cast %40 : vector<1x1x1x80xbf16> to vector<1x1x80xbf16>
    %42 = vector.shape_cast %39 : vector<1x1x80xbf16> to vector<1x1x1x80xbf16>
    tpu.vector_store %arg5[%c0_35, %c0_36, %c0_37, %c0_38], %42 {strides = array<i32>} : memref<1x1x1x80xbf16, #tpu.memory_space<vmem>>, vector<1x1x1x80xbf16>,
    return
  }
  func.func @transform_0(%arg0: i32) -> (i32, i32, i32, i32) {
    %c0_i32 = arith.constant 0 : i32
    %c0_i32_0 = arith.constant 0 : i32
    %c0_i32_1 = arith.constant 0 : i32
    %c0_i32_2 = arith.constant 0 : i32
    return %arg0, %c0_i32, %c0_i32_0, %c0_i32_1 : i32, i32, i32, i32
  }
  func.func @transform_1(%arg0: i32) -> (i32, i32, i32, i32) {
    %c0_i32 = arith.constant 0 : i32
    %c0_i32_0 = arith.constant 0 : i32
    %c0_i32_1 = arith.constant 0 : i32
    %c0_i32_2 = arith.constant 0 : i32
    return %arg0, %c0_i32, %c0_i32_0, %c0_i32_1 : i32, i32, i32, i32
  }
  func.func @transform_2(%arg0: i32) -> (i32, i32, i32, i32) {
    %c0_i32 = arith.constant 0 : i32
    %c0_i32_0 = arith.constant 0 : i32
    %c0_i32_1 = arith.constant 0 : i32
    %c0_i32_2 = arith.constant 0 : i32
    return %arg0, %c0_i32, %c0_i32_0, %c0_i32_1 : i32, i32, i32, i32
  }
  func.func @transform_3(%arg0: i32) -> (i32, i32, i32, i32) {
    %c0_i32 = arith.constant 0 : i32
    %c0_i32_0 = arith.constant 0 : i32
    %c0_i32_1 = arith.constant 0 : i32
    %c0_i32_2 = arith.constant 0 : i32
    return %arg0, %c0_i32, %c0_i32_0, %c0_i32_1 : i32, i32, i32, i32
  }
  func.func @transform_4(%arg0: i32) -> (i32, i32, i32, i32) {
    %c0_i32 = arith.constant 0 : i32
    %c0_i32_0 = arith.constant 0 : i32
    %c0_i32_1 = arith.constant 0 : i32
    %c0_i32_2 = arith.constant 0 : i32
    return %arg0, %c0_i32, %c0_i32_0, %c0_i32_1 : i32, i32, i32, i32
  }
}

module attributes {stable_mosaic.version = 11 : i64} {
  func.func @_dwconv_kernel(%arg0: i32, %arg1: memref<1x3x3x40xbf16, #tpu.memory_space<vmem>>, %arg2: memref<9x1x40xf32, #tpu.memory_space<vmem>>, %arg3: memref<1x1x40xf32, #tpu.memory_space<vmem>>, %arg4: memref<1x1x40xf32, #tpu.memory_space<vmem>>, %arg5: memref<1x1x1x40xbf16, #tpu.memory_space<vmem>>) attributes {dimension_semantics = [#tpu.dimension_semantics<parallel>], iteration_bounds = array<i64: 2>, scalar_prefetch = 0 : i64, scratch_operands = 0 : i64, tpu.core_type = #tpu.core_type<tc>, window_params = [{transform_indices = @transform_0, window_bounds = array<i64: 1, 3, 3, 40>}, {pipeline_mode = #tpu.pipeline_mode<synchronous>, transform_indices = @transform_1, window_bounds = array<i64: 9, 1, 40>}, {pipeline_mode = #tpu.pipeline_mode<synchronous>, transform_indices = @transform_2, window_bounds = array<i64: 1, 1, 40>}, {pipeline_mode = #tpu.pipeline_mode<synchronous>, transform_indices = @transform_3, window_bounds = array<i64: 1, 1, 40>}, {transform_indices = @transform_4, window_bounds = array<i64: 1, 1, 1, 40>}]} {
    %c0 = arith.constant 0 : index
    %c0_0 = arith.constant 0 : index
    %c0_1 = arith.constant 0 : index
    %c0_2 = arith.constant 0 : index
    %0 = vector.load %arg1[%c0, %c0_0, %c0_1, %c0_2] : memref<1x3x3x40xbf16, #tpu.memory_space<vmem>>, vector<1x1x1x40xbf16>
    %1 = vector.shape_cast %0 : vector<1x1x1x40xbf16> to vector<1x1x40xbf16>
    %2 = arith.extf %1 : vector<1x1x40xbf16> to vector<1x1x40xf32>
    %c0_3 = arith.constant 0 : index
    %c0_4 = arith.constant 0 : index
    %c1 = arith.constant 1 : index
    %c0_5 = arith.constant 0 : index
    %3 = vector.load %arg1[%c0_3, %c0_4, %c1, %c0_5] : memref<1x3x3x40xbf16, #tpu.memory_space<vmem>>, vector<1x1x1x40xbf16>
    %4 = vector.shape_cast %3 : vector<1x1x1x40xbf16> to vector<1x1x40xbf16>
    %5 = arith.extf %4 : vector<1x1x40xbf16> to vector<1x1x40xf32>
    %c0_6 = arith.constant 0 : index
    %c0_7 = arith.constant 0 : index
    %c2 = arith.constant 2 : index
    %c0_8 = arith.constant 0 : index
    %6 = vector.load %arg1[%c0_6, %c0_7, %c2, %c0_8] : memref<1x3x3x40xbf16, #tpu.memory_space<vmem>>, vector<1x1x1x40xbf16>
    %7 = vector.shape_cast %6 : vector<1x1x1x40xbf16> to vector<1x1x40xbf16>
    %8 = arith.extf %7 : vector<1x1x40xbf16> to vector<1x1x40xf32>
    %c0_9 = arith.constant 0 : index
    %c1_10 = arith.constant 1 : index
    %c0_11 = arith.constant 0 : index
    %c0_12 = arith.constant 0 : index
    %9 = vector.load %arg1[%c0_9, %c1_10, %c0_11, %c0_12] : memref<1x3x3x40xbf16, #tpu.memory_space<vmem>>, vector<1x1x1x40xbf16>
    %10 = vector.shape_cast %9 : vector<1x1x1x40xbf16> to vector<1x1x40xbf16>
    %11 = arith.extf %10 : vector<1x1x40xbf16> to vector<1x1x40xf32>
    %c0_13 = arith.constant 0 : index
    %c1_14 = arith.constant 1 : index
    %c1_15 = arith.constant 1 : index
    %c0_16 = arith.constant 0 : index
    %12 = vector.load %arg1[%c0_13, %c1_14, %c1_15, %c0_16] : memref<1x3x3x40xbf16, #tpu.memory_space<vmem>>, vector<1x1x1x40xbf16>
    %13 = vector.shape_cast %12 : vector<1x1x1x40xbf16> to vector<1x1x40xbf16>
    %14 = arith.extf %13 : vector<1x1x40xbf16> to vector<1x1x40xf32>
    %c0_17 = arith.constant 0 : index
    %c1_18 = arith.constant 1 : index
    %c2_19 = arith.constant 2 : index
    %c0_20 = arith.constant 0 : index
    %15 = vector.load %arg1[%c0_17, %c1_18, %c2_19, %c0_20] : memref<1x3x3x40xbf16, #tpu.memory_space<vmem>>, vector<1x1x1x40xbf16>
    %16 = vector.shape_cast %15 : vector<1x1x1x40xbf16> to vector<1x1x40xbf16>
    %17 = arith.extf %16 : vector<1x1x40xbf16> to vector<1x1x40xf32>
    %c0_21 = arith.constant 0 : index
    %c2_22 = arith.constant 2 : index
    %c0_23 = arith.constant 0 : index
    %c0_24 = arith.constant 0 : index
    %18 = vector.load %arg1[%c0_21, %c2_22, %c0_23, %c0_24] : memref<1x3x3x40xbf16, #tpu.memory_space<vmem>>, vector<1x1x1x40xbf16>
    %19 = vector.shape_cast %18 : vector<1x1x1x40xbf16> to vector<1x1x40xbf16>
    %20 = arith.extf %19 : vector<1x1x40xbf16> to vector<1x1x40xf32>
    %c0_25 = arith.constant 0 : index
    %c2_26 = arith.constant 2 : index
    %c1_27 = arith.constant 1 : index
    %c0_28 = arith.constant 0 : index
    %21 = vector.load %arg1[%c0_25, %c2_26, %c1_27, %c0_28] : memref<1x3x3x40xbf16, #tpu.memory_space<vmem>>, vector<1x1x1x40xbf16>
    %22 = vector.shape_cast %21 : vector<1x1x1x40xbf16> to vector<1x1x40xbf16>
    %23 = arith.extf %22 : vector<1x1x40xbf16> to vector<1x1x40xf32>
    %c0_29 = arith.constant 0 : index
    %c2_30 = arith.constant 2 : index
    %c2_31 = arith.constant 2 : index
    %c0_32 = arith.constant 0 : index
    %24 = vector.load %arg1[%c0_29, %c2_30, %c2_31, %c0_32] : memref<1x3x3x40xbf16, #tpu.memory_space<vmem>>, vector<1x1x1x40xbf16>
    %25 = vector.shape_cast %24 : vector<1x1x1x40xbf16> to vector<1x1x40xbf16>
    %26 = arith.extf %25 : vector<1x1x40xbf16> to vector<1x1x40xf32>
    %c0_33 = arith.constant 0 : index
    %c0_34 = arith.constant 0 : index
    %c0_35 = arith.constant 0 : index
    %27 = vector.load %arg2[%c0_33, %c0_34, %c0_35] : memref<9x1x40xf32, #tpu.memory_space<vmem>>, vector<1x1x40xf32>
    %28 = vector.shape_cast %27 : vector<1x1x40xf32> to vector<1x40xf32>
    %29 = vector.shape_cast %28 : vector<1x40xf32> to vector<1x1x40xf32>
    %30 = arith.mulf %2, %29 : vector<1x1x40xf32>
    %c1_36 = arith.constant 1 : index
    %c0_37 = arith.constant 0 : index
    %c0_38 = arith.constant 0 : index
    %31 = vector.load %arg2[%c1_36, %c0_37, %c0_38] : memref<9x1x40xf32, #tpu.memory_space<vmem>>, vector<1x1x40xf32>
    %32 = vector.shape_cast %31 : vector<1x1x40xf32> to vector<1x40xf32>
    %33 = vector.shape_cast %32 : vector<1x40xf32> to vector<1x1x40xf32>
    %34 = arith.mulf %5, %33 : vector<1x1x40xf32>
    %35 = arith.addf %30, %34 : vector<1x1x40xf32>
    %c2_39 = arith.constant 2 : index
    %c0_40 = arith.constant 0 : index
    %c0_41 = arith.constant 0 : index
    %36 = vector.load %arg2[%c2_39, %c0_40, %c0_41] : memref<9x1x40xf32, #tpu.memory_space<vmem>>, vector<1x1x40xf32>
    %37 = vector.shape_cast %36 : vector<1x1x40xf32> to vector<1x40xf32>
    %38 = vector.shape_cast %37 : vector<1x40xf32> to vector<1x1x40xf32>
    %39 = arith.mulf %8, %38 : vector<1x1x40xf32>
    %40 = arith.addf %35, %39 : vector<1x1x40xf32>
    %c3 = arith.constant 3 : index
    %c0_42 = arith.constant 0 : index
    %c0_43 = arith.constant 0 : index
    %41 = vector.load %arg2[%c3, %c0_42, %c0_43] : memref<9x1x40xf32, #tpu.memory_space<vmem>>, vector<1x1x40xf32>
    %42 = vector.shape_cast %41 : vector<1x1x40xf32> to vector<1x40xf32>
    %43 = vector.shape_cast %42 : vector<1x40xf32> to vector<1x1x40xf32>
    %44 = arith.mulf %11, %43 : vector<1x1x40xf32>
    %45 = arith.addf %40, %44 : vector<1x1x40xf32>
    %c4 = arith.constant 4 : index
    %c0_44 = arith.constant 0 : index
    %c0_45 = arith.constant 0 : index
    %46 = vector.load %arg2[%c4, %c0_44, %c0_45] : memref<9x1x40xf32, #tpu.memory_space<vmem>>, vector<1x1x40xf32>
    %47 = vector.shape_cast %46 : vector<1x1x40xf32> to vector<1x40xf32>
    %48 = vector.shape_cast %47 : vector<1x40xf32> to vector<1x1x40xf32>
    %49 = arith.mulf %14, %48 : vector<1x1x40xf32>
    %50 = arith.addf %45, %49 : vector<1x1x40xf32>
    %c5 = arith.constant 5 : index
    %c0_46 = arith.constant 0 : index
    %c0_47 = arith.constant 0 : index
    %51 = vector.load %arg2[%c5, %c0_46, %c0_47] : memref<9x1x40xf32, #tpu.memory_space<vmem>>, vector<1x1x40xf32>
    %52 = vector.shape_cast %51 : vector<1x1x40xf32> to vector<1x40xf32>
    %53 = vector.shape_cast %52 : vector<1x40xf32> to vector<1x1x40xf32>
    %54 = arith.mulf %17, %53 : vector<1x1x40xf32>
    %55 = arith.addf %50, %54 : vector<1x1x40xf32>
    %c6 = arith.constant 6 : index
    %c0_48 = arith.constant 0 : index
    %c0_49 = arith.constant 0 : index
    %56 = vector.load %arg2[%c6, %c0_48, %c0_49] : memref<9x1x40xf32, #tpu.memory_space<vmem>>, vector<1x1x40xf32>
    %57 = vector.shape_cast %56 : vector<1x1x40xf32> to vector<1x40xf32>
    %58 = vector.shape_cast %57 : vector<1x40xf32> to vector<1x1x40xf32>
    %59 = arith.mulf %20, %58 : vector<1x1x40xf32>
    %60 = arith.addf %55, %59 : vector<1x1x40xf32>
    %c7 = arith.constant 7 : index
    %c0_50 = arith.constant 0 : index
    %c0_51 = arith.constant 0 : index
    %61 = vector.load %arg2[%c7, %c0_50, %c0_51] : memref<9x1x40xf32, #tpu.memory_space<vmem>>, vector<1x1x40xf32>
    %62 = vector.shape_cast %61 : vector<1x1x40xf32> to vector<1x40xf32>
    %63 = vector.shape_cast %62 : vector<1x40xf32> to vector<1x1x40xf32>
    %64 = arith.mulf %23, %63 : vector<1x1x40xf32>
    %65 = arith.addf %60, %64 : vector<1x1x40xf32>
    %c8 = arith.constant 8 : index
    %c0_52 = arith.constant 0 : index
    %c0_53 = arith.constant 0 : index
    %66 = vector.load %arg2[%c8, %c0_52, %c0_53] : memref<9x1x40xf32, #tpu.memory_space<vmem>>, vector<1x1x40xf32>
    %67 = vector.shape_cast %66 : vector<1x1x40xf32> to vector<1x40xf32>
    %68 = vector.shape_cast %67 : vector<1x40xf32> to vector<1x1x40xf32>
    %69 = arith.mulf %26, %68 : vector<1x1x40xf32>
    %70 = arith.addf %65, %69 : vector<1x1x40xf32>
    %c0_54 = arith.constant 0 : index
    %c0_55 = arith.constant 0 : index
    %c0_56 = arith.constant 0 : index
    %71 = vector.load %arg3[%c0_54, %c0_55, %c0_56] : memref<1x1x40xf32, #tpu.memory_space<vmem>>, vector<1x1x40xf32>
    %72 = vector.shape_cast %71 : vector<1x1x40xf32> to vector<1x40xf32>
    %73 = vector.shape_cast %72 : vector<1x40xf32> to vector<1x1x40xf32>
    %74 = arith.mulf %70, %73 : vector<1x1x40xf32>
    %c0_57 = arith.constant 0 : index
    %c0_58 = arith.constant 0 : index
    %c0_59 = arith.constant 0 : index
    %75 = vector.load %arg4[%c0_57, %c0_58, %c0_59] : memref<1x1x40xf32, #tpu.memory_space<vmem>>, vector<1x1x40xf32>
    %76 = vector.shape_cast %75 : vector<1x1x40xf32> to vector<1x40xf32>
    %77 = vector.shape_cast %76 : vector<1x40xf32> to vector<1x1x40xf32>
    %78 = arith.addf %74, %77 : vector<1x1x40xf32>
    %79 = arith.truncf %78 : vector<1x1x40xf32> to vector<1x1x40xbf16>
    %c0_60 = arith.constant 0 : index
    %c0_61 = arith.constant 0 : index
    %c0_62 = arith.constant 0 : index
    %c0_63 = arith.constant 0 : index
    %80 = vector.load %arg5[%c0_60, %c0_61, %c0_62, %c0_63] : memref<1x1x1x40xbf16, #tpu.memory_space<vmem>>, vector<1x1x1x40xbf16>
    %81 = vector.shape_cast %80 : vector<1x1x1x40xbf16> to vector<1x1x40xbf16>
    %82 = vector.shape_cast %79 : vector<1x1x40xbf16> to vector<1x1x1x40xbf16>
    tpu.vector_store %arg5[%c0_60, %c0_61, %c0_62, %c0_63], %82 {strides = array<i32>} : memref<1x1x1x40xbf16, #tpu.memory_space<vmem>>, vector<1x1x1x40xbf16>,
    return
  }
  func.func @transform_0(%arg0: i32) -> (i32, i32, i32, i32) {
    %c0_i32 = arith.constant 0 : i32
    %c0_i32_0 = arith.constant 0 : i32
    %c0_i32_1 = arith.constant 0 : i32
    %c0_i32_2 = arith.constant 0 : i32
    return %arg0, %c0_i32, %c0_i32_0, %c0_i32_1 : i32, i32, i32, i32
  }
  func.func @transform_1(%arg0: i32) -> (i32, i32, i32) {
    %c0_i32 = arith.constant 0 : i32
    %c0_i32_0 = arith.constant 0 : i32
    %c0_i32_1 = arith.constant 0 : i32
    %c0_i32_2 = arith.constant 0 : i32
    return %c0_i32, %c0_i32_0, %c0_i32_1 : i32, i32, i32
  }
  func.func @transform_2(%arg0: i32) -> (i32, i32, i32) {
    %c0_i32 = arith.constant 0 : i32
    %c0_i32_0 = arith.constant 0 : i32
    %c0_i32_1 = arith.constant 0 : i32
    %c0_i32_2 = arith.constant 0 : i32
    return %c0_i32, %c0_i32_0, %c0_i32_1 : i32, i32, i32
  }
  func.func @transform_3(%arg0: i32) -> (i32, i32, i32) {
    %c0_i32 = arith.constant 0 : i32
    %c0_i32_0 = arith.constant 0 : i32
    %c0_i32_1 = arith.constant 0 : i32
    %c0_i32_2 = arith.constant 0 : i32
    return %c0_i32, %c0_i32_0, %c0_i32_1 : i32, i32, i32
  }
  func.func @transform_4(%arg0: i32) -> (i32, i32, i32, i32) {
    %c0_i32 = arith.constant 0 : i32
    %c0_i32_0 = arith.constant 0 : i32
    %c0_i32_1 = arith.constant 0 : i32
    %c0_i32_2 = arith.constant 0 : i32
    return %arg0, %c0_i32, %c0_i32_0, %c0_i32_1 : i32, i32, i32, i32
  }
}

module attributes {stable_mosaic.version = 11 : i64} {
  func.func @_pointwise_residual_kernel(%arg0: i32, %arg1: memref<2x40xbf16, #tpu.memory_space<vmem>>, %arg2: memref<40x160xbf16, #tpu.memory_space<vmem>>, %arg3: memref<1x160xf32, #tpu.memory_space<vmem>>, %arg4: memref<1x160xf32, #tpu.memory_space<vmem>>, %arg5: memref<2x160xbf16, #tpu.memory_space<vmem>>, %arg6: memref<2x160xbf16, #tpu.memory_space<vmem>>) attributes {dimension_semantics = [#tpu.dimension_semantics<parallel>], iteration_bounds = array<i64: 1>, scalar_prefetch = 0 : i64, scratch_operands = 0 : i64, tpu.core_type = #tpu.core_type<tc>, window_params = [{transform_indices = @transform_0, window_bounds = array<i64: 2, 40>}, {pipeline_mode = #tpu.pipeline_mode<synchronous>, transform_indices = @transform_1, window_bounds = array<i64: 40, 160>}, {pipeline_mode = #tpu.pipeline_mode<synchronous>, transform_indices = @transform_2, window_bounds = array<i64: 1, 160>}, {pipeline_mode = #tpu.pipeline_mode<synchronous>, transform_indices = @transform_3, window_bounds = array<i64: 1, 160>}, {transform_indices = @transform_4, window_bounds = array<i64: 2, 160>}, {transform_indices = @transform_5, window_bounds = array<i64: 2, 160>}]} {
    %c0 = arith.constant 0 : index
    %c0_0 = arith.constant 0 : index
    %0 = vector.load %arg1[%c0, %c0_0] : memref<2x40xbf16, #tpu.memory_space<vmem>>, vector<2x40xbf16>
    %c0_1 = arith.constant 0 : index
    %c0_2 = arith.constant 0 : index
    %1 = vector.load %arg2[%c0_1, %c0_2] : memref<40x160xbf16, #tpu.memory_space<vmem>>, vector<40x160xbf16>
    %cst = arith.constant dense<0.000000e+00> : vector<2x160xf32>
    %2 = tpu.matmul %0, %1, %cst {dimension_numbers = #tpu.dot_dimension_numbers<[1], [0], [0], [1], [0, 0, 1, 1], [], []>} : vector<2x40xbf16>, vector<40x160xbf16>, vector<2x160xf32> -> vector<2x160xf32>
    %c0_3 = arith.constant 0 : index
    %c0_4 = arith.constant 0 : index
    %3 = vector.load %arg3[%c0_3, %c0_4] : memref<1x160xf32, #tpu.memory_space<vmem>>, vector<1x160xf32>
    %4 = vector.broadcast %3 : vector<1x160xf32> to vector<2x160xf32>
    %5 = arith.mulf %2, %4 : vector<2x160xf32>
    %c0_5 = arith.constant 0 : index
    %c0_6 = arith.constant 0 : index
    %6 = vector.load %arg4[%c0_5, %c0_6] : memref<1x160xf32, #tpu.memory_space<vmem>>, vector<1x160xf32>
    %7 = vector.broadcast %6 : vector<1x160xf32> to vector<2x160xf32>
    %8 = arith.addf %5, %7 : vector<2x160xf32>
    %c0_7 = arith.constant 0 : index
    %c0_8 = arith.constant 0 : index
    %9 = vector.load %arg5[%c0_7, %c0_8] : memref<2x160xbf16, #tpu.memory_space<vmem>>, vector<2x160xbf16>
    %10 = arith.extf %9 : vector<2x160xbf16> to vector<2x160xf32>
    %11 = arith.addf %8, %10 : vector<2x160xf32>
    %cst_9 = arith.constant 0.000000e+00 : f32
    %12 = vector.broadcast %cst_9 : f32 to vector<2x160xf32>
    %13 = arith.maximumf %11, %12 : vector<2x160xf32>
    %14 = arith.truncf %13 : vector<2x160xf32> to vector<2x160xbf16>
    %c0_10 = arith.constant 0 : index
    %c0_11 = arith.constant 0 : index
    %15 = vector.load %arg6[%c0_10, %c0_11] : memref<2x160xbf16, #tpu.memory_space<vmem>>, vector<2x160xbf16>
    tpu.vector_store %arg6[%c0_10, %c0_11], %14 {strides = array<i32>} : memref<2x160xbf16, #tpu.memory_space<vmem>>, vector<2x160xbf16>,
    return
  }
  func.func @transform_0(%arg0: i32) -> (i32, i32) {
    %c0_i32 = arith.constant 0 : i32
    %c0_i32_0 = arith.constant 0 : i32
    return %arg0, %c0_i32 : i32, i32
  }
  func.func @transform_1(%arg0: i32) -> (i32, i32) {
    %c0_i32 = arith.constant 0 : i32
    %c0_i32_0 = arith.constant 0 : i32
    %c0_i32_1 = arith.constant 0 : i32
    return %c0_i32, %c0_i32_0 : i32, i32
  }
  func.func @transform_2(%arg0: i32) -> (i32, i32) {
    %c0_i32 = arith.constant 0 : i32
    %c0_i32_0 = arith.constant 0 : i32
    %c0_i32_1 = arith.constant 0 : i32
    return %c0_i32, %c0_i32_0 : i32, i32
  }
  func.func @transform_3(%arg0: i32) -> (i32, i32) {
    %c0_i32 = arith.constant 0 : i32
    %c0_i32_0 = arith.constant 0 : i32
    %c0_i32_1 = arith.constant 0 : i32
    return %c0_i32, %c0_i32_0 : i32, i32
  }
  func.func @transform_4(%arg0: i32) -> (i32, i32) {
    %c0_i32 = arith.constant 0 : i32
    %c0_i32_0 = arith.constant 0 : i32
    return %arg0, %c0_i32 : i32, i32
  }
  func.func @transform_5(%arg0: i32) -> (i32, i32) {
    %c0_i32 = arith.constant 0 : i32
    %c0_i32_0 = arith.constant 0 : i32
    return %arg0, %c0_i32 : i32, i32
  }
}

module attributes {stable_mosaic.version = 11 : i64} {
  func.func @_head_kernel(%arg0: memref<2x1x160xbf16, #tpu.memory_space<vmem>>, %arg1: memref<160x10xf32, #tpu.memory_space<vmem>>, %arg2: memref<1x10xf32, #tpu.memory_space<vmem>>, %arg3: memref<2x10xf32, #tpu.memory_space<vmem>>) attributes {dimension_semantics = [], scalar_prefetch = 0 : i64, scratch_operands = 0 : i64, tpu.core_type = #tpu.core_type<tc>} {
    %c0 = arith.constant 0 : index
    %c0_0 = arith.constant 0 : index
    %c0_1 = arith.constant 0 : index
    %0 = vector.load %arg0[%c0, %c0_0, %c0_1] : memref<2x1x160xbf16, #tpu.memory_space<vmem>>, vector<2x1x160xbf16>
    %1 = arith.extf %0 : vector<2x1x160xbf16> to vector<2x1x160xf32>
    %cst = arith.constant dense<0.000000e+00> : vector<2x160xf32>
    %2 = vector.multi_reduction <add>, %1, %cst [1] : vector<2x1x160xf32> to vector<2x160xf32>
    %cst_2 = arith.constant 1.000000e+00 : f32
    %3 = vector.broadcast %cst_2 : f32 to vector<2x160xf32>
    %4 = arith.divf %2, %3 : vector<2x160xf32>
    %c0_3 = arith.constant 0 : index
    %c0_4 = arith.constant 0 : index
    %5 = vector.load %arg1[%c0_3, %c0_4] : memref<160x10xf32, #tpu.memory_space<vmem>>, vector<160x10xf32>
    %cst_5 = arith.constant dense<0.000000e+00> : vector<2x10xf32>
    %6 = tpu.matmul %4, %5, %cst_5 {dimension_numbers = #tpu.dot_dimension_numbers<[1], [0], [0], [1], [0, 0, 1, 1], [], []>} : vector<2x160xf32>, vector<160x10xf32>, vector<2x10xf32> -> vector<2x10xf32>
    %c0_6 = arith.constant 0 : index
    %c0_7 = arith.constant 0 : index
    %7 = vector.load %arg2[%c0_6, %c0_7] : memref<1x10xf32, #tpu.memory_space<vmem>>, vector<1x10xf32>
    %8 = vector.broadcast %7 : vector<1x10xf32> to vector<2x10xf32>
    %9 = arith.addf %6, %8 : vector<2x10xf32>
    %c0_8 = arith.constant 0 : index
    %c0_9 = arith.constant 0 : index
    %10 = vector.load %arg3[%c0_8, %c0_9] : memref<2x10xf32, #tpu.memory_space<vmem>>, vector<2x10xf32>
    tpu.vector_store %arg3[%c0_8, %c0_9], %9 {strides = array<i32>} : memref<2x10xf32, #tpu.memory_space<vmem>>, vector<2x10xf32>,
    return
  }
}

</mosaic_0001>

<llo_original>
// kernel: _lambda_.54
$region0: #{_lambda_.54}
  #allocation0 [shape = 'u32[]', space=smem, size = 0x4, offset = 0x4, fixed_abs, tag = 'smem constant byte address 0x4 - core index']
  #allocation1 [shape = 'u32[144,128]{1,0:T(1,128)}', space=vmem, size = 0x12000, scoped, tag = 'internal scratch']
  %s0 = inlined_call_operand.vmem [shape: bf16[512,27], index: 0, kind: input, shape index: {}]
  %s1 = inlined_call_operand.vmem [shape: bf16[27,24], index: 1, kind: input, shape index: {}]
  %s2 = inlined_call_operand.vmem [shape: f32[1,24], index: 2, kind: input, shape index: {}]
  %s3 = inlined_call_operand.vmem [shape: f32[1,24], index: 3, kind: input, shape index: {}]
  %s4 = inlined_call_operand.vmem [shape: bf16[512,24], index: 4, kind: output, shape index: {}]
  %s5 = sld [smem:[#allocation0]]
  $region26: #{_lambda_.54} parent=0
    _
  %s7 = ssub.s32 1, %s5
  %s8 = scalar_select 0, %s7, %s5
  // Predicated region
  $region2: #{_lambda_.54} parent=0 // pred_check
    _
  $region3: #{_lambda_.54} parent=0 // pred_check_branch
    %10 = sbr.rel (0) target = $region5
  $region4: #{_lambda_.54} parent=0 // pred_region
    _
  $region5: #{_lambda_.54} parent=0 // pred_fallthru
    _
  // Predicated region
  $region6: #{_lambda_.54} parent=0 // pred_check
    _
  $region7: #{_lambda_.54} parent=0 // pred_check_branch
    %12 = sbr.rel (0) target = $region9
  $region8: #{_lambda_.54} parent=0 // pred_region
    _
  $region9: #{_lambda_.54} parent=0 // pred_fallthru
    _
  // Predicated region
  $region10: #{_lambda_.54} parent=0 // pred_check
    _
  $region11: #{_lambda_.54} parent=0 // pred_check_branch
    %14 = sbr.rel (0) target = $region13
  $region12: #{_lambda_.54} parent=0 // pred_region
    _
  $region13: #{_lambda_.54} parent=0 // pred_fallthru
    _
  // Predicated region
  $region14: #{_lambda_.54} parent=0 // pred_check
    _
  $region15: #{_lambda_.54} parent=0 // pred_check_branch
    %16 = sbr.rel (0) target = $region17
  $region16: #{_lambda_.54} parent=0 // pred_region
    _
  $region17: #{_lambda_.54} parent=0 // pred_fallthru
    _
  %v18 = vld [vmem:[%s0] sm:$0xf]
  %v19 = vld [vmem:[%s0 + $0x4] sm:$0xf]
  %v20 = vld [vmem:[%s0 + $0x8] sm:$0xf]
  %v21 = vld [vmem:[%s0 + $0xc] sm:$0xf]
  %v22 = vld [vmem:[%s0 + $0x10] sm:$0xf]
  %v23 = vld [vmem:[%s0 + $0x14] sm:$0xf]
  %v24 = vld [vmem:[%s0 + $0x18] sm:$0xf]
  %v25 = vld [vmem:[%s0 + $0x1c] sm:$0xf]
  %v26 = vld [vmem:[%s0 + $0x20] sm:$0xf]
  %v27 = vld [vmem:[%s0 + $0x24] sm:$0xf]
  %v28 = vld [vmem:[%s0 + $0x28] sm:$0xf]
  %v29 = vld [vmem:[%s0 + $0x2c] sm:$0xf]
  %v30 = vld [vmem:[%s0 + $0x30] sm:$0xf]
  %v31 = vld [vmem:[%s0 + $0x34] sm:$0xf]
  %v32 = vld [vmem:[%s0 + $0x38] sm:$0xf]
  %v33 = vld [vmem:[%s0 + $0x3c] sm:$0xf]
  %v34 = vld [vmem:[%s0 + $0x40] sm:$0xf]
  %v35 = vld [vmem:[%s0 + $0x44] sm:$0xf]
  %v36 = vld [vmem:[%s0 + $0x48] sm:$0xf]
  %v37 = vld [vmem:[%s0 + $0x4c] sm:$0xf]
  %v38 = vld [vmem:[%s0 + $0x50] sm:$0xf]
  %v39 = vld [vmem:[%s0 + $0x54] sm:$0xf]
  %v40 = vld [vmem:[%s0 + $0x58] sm:$0xf]
  %v41 = vld [vmem:[%s0 + $0x5c] sm:$0xf]
  %v42 = vld [vmem:[%s0 + $0x60] sm:$0xf]
  %v43 = vld [vmem:[%s0 + $0x64] sm:$0xf]
  %v44 = vld [vmem:[%s0 + $0x68] sm:$0xf]
  %v45 = vld [vmem:[%s0 + $0x6c] sm:$0xf]
  %v46 = vld [vmem:[%s0 + $0x70] sm:$0xf]
  %v47 = vld [vmem:[%s0 + $0x74] sm:$0xf]
  %v48 = vld [vmem:[%s0 + $0x78] sm:$0xf]
  %v49 = vld [vmem:[%s0 + $0x7c] sm:$0xf]
  %v50 = vld [vmem:[%s0 + $0x80] sm:$0xf]
  %v51 = vld [vmem:[%s0 + $0x84] sm:$0xf]
  %v52 = vld [vmem:[%s0 + $0x88] sm:$0xf]
  %v53 = vld [vmem:[%s0 + $0x8c] sm:$0xf]
  %v54 = vld [vmem:[%s0 + $0x90] sm:$0xf]
  %v55 = vld [vmem:[%s0 + $0x94] sm:$0xf]
  %v56 = vld [vmem:[%s0 + $0x98] sm:$0xf]
  %v57 = vld [vmem:[%s0 + $0x9c] sm:$0xf]
  %v58 = vld [vmem:[%s0 + $0xa0] sm:$0xf]
  %v59 = vld [vmem:[%s0 + $0xa4] sm:$0xf]
  %v60 = vld [vmem:[%s0 + $0xa8] sm:$0xf]
  %v61 = vld [vmem:[%s0 + $0xac] sm:$0xf]
  %v62 = vld [vmem:[%s0 + $0xb0] sm:$0xf]
  %v63 = vld [vmem:[%s0 + $0xb4] sm:$0xf]
  %v64 = vld [vmem:[%s0 + $0xb8] sm:$0xf]
  %v65 = vld [vmem:[%s0 + $0xbc] sm:$0xf]
  %v66 = vld [vmem:[%s0 + $0xc0] sm:$0xf]
  %v67 = vld [vmem:[%s0 + $0xc4] sm:$0xf]
  %v68 = vld [vmem:[%s0 + $0xc8] sm:$0xf]
  %v69 = vld [vmem:[%s0 + $0xcc] sm:$0xf]
  %v70 = vld [vmem:[%s0 + $0xd0] sm:$0xf]
  %v71 = vld [vmem:[%s0 + $0xd4] sm:$0xf]
  %v72 = vld [vmem:[%s0 + $0xd8] sm:$0xf]
  %v73 = vld [vmem:[%s0 + $0xdc] sm:$0xf]
  %v74 = vld [vmem:[%s0 + $0xe0] sm:$0xf]
  %v75 = vld [vmem:[%s0 + $0xe4] sm:$0xf]
  %v76 = vld [vmem:[%s0 + $0xe8] sm:$0xf]
  %v77 = vld [vmem:[%s0 + $0xec] sm:$0xf]
  %v78 = vld [vmem:[%s0 + $0xf0] sm:$0xf]
  %v79 = vld [vmem:[%s0 + $0xf4] sm:$0xf]
  %v80 = vld [vmem:[%s0 + $0xf8] sm:$0xf]
  %v81 = vld [vmem:[%s0 + $0xfc] sm:$0xf]
  %v82 = vld [vmem:[%s1] sm:$0xf]
  %v83 = vld [vmem:[%s1 + $0x4] sm:$0xf]
  %v84 = vld [vmem:[%s1 + $0x8] sm:$0xf]
  %v85 = vld [vmem:[%s1 + $0xc] sm:$0x3]
  %v150 = vunpack.c.l.b16 %v18
  %v151 = vunpack.c.l.b16 %v19
  %v152 = vunpack.c.l.b16 %v20
  %v153 = vunpack.c.l.b16 %v21
  %v154 = vunpack.c.l.b16 %v22
  %v155 = vunpack.c.l.b16 %v23
  %v156 = vunpack.c.l.b16 %v24
  %v157 = vunpack.c.l.b16 %v25
  %v158 = vunpack.c.l.b16 %v26
  %v159 = vunpack.c.l.b16 %v27
  %v160 = vunpack.c.l.b16 %v28
  %v161 = vunpack.c.l.b16 %v29
  %v162 = vunpack.c.l.b16 %v30
  %v163 = vunpack.c.l.b16 %v31
  %v164 = vunpack.c.l.b16 %v32
  %v165 = vunpack.c.l.b16 %v33
  %v166 = vunpack.c.l.b16 %v34
  %v167 = vunpack.c.l.b16 %v35
  %v168 = vunpack.c.l.b16 %v36
  %v169 = vunpack.c.l.b16 %v37
  %v170 = vunpack.c.l.b16 %v38
  %v171 = vunpack.c.l.b16 %v39
  %v172 = vunpack.c.l.b16 %v40
  %v173 = vunpack.c.l.b16 %v41
  %v174 = vunpack.c.l.b16 %v42
  %v175 = vunpack.c.l.b16 %v43
  %v176 = vunpack.c.l.b16 %v44
  %v177 = vunpack.c.l.b16 %v45
  %v178 = vunpack.c.l.b16 %v46
  %v179 = vunpack.c.l.b16 %v47
  %v180 = vunpack.c.l.b16 %v48
  %v181 = vunpack.c.l.b16 %v49
  %v182 = vunpack.c.l.b16 %v50
  %v183 = vunpack.c.l.b16 %v51
  %v184 = vunpack.c.l.b16 %v52
  %v185 = vunpack.c.l.b16 %v53
  %v186 = vunpack.c.l.b16 %v54
  %v187 = vunpack.c.l.b16 %v55
  %v188 = vunpack.c.l.b16 %v56
  %v189 = vunpack.c.l.b16 %v57
  %v190 = vunpack.c.l.b16 %v58
  %v191 = vunpack.c.l.b16 %v59
  %v192 = vunpack.c.l.b16 %v60
  %v193 = vunpack.c.l.b16 %v61
  %v194 = vunpack.c.l.b16 %v62
  %v195 = vunpack.c.l.b16 %v63
  %v196 = vunpack.c.l.b16 %v64
  %v197 = vunpack.c.l.b16 %v65
  %v198 = vunpack.c.l.b16 %v66
  %v199 = vunpack.c.l.b16 %v67
  %v200 = vunpack.c.l.b16 %v68
  %v201 = vunpack.c.l.b16 %v69
  %v202 = vunpack.c.l.b16 %v70
  %v203 = vunpack.c.l.b16 %v71
  %v204 = vunpack.c.l.b16 %v72
  %v205 = vunpack.c.l.b16 %v73
  %v206 = vunpack.c.l.b16 %v74
  %v207 = vunpack.c.l.b16 %v75
  %v208 = vunpack.c.l.b16 %v76
  %v209 = vunpack.c.l.b16 %v77
  %v210 = vunpack.c.l.b16 %v78
  %v211 = vunpack.c.l.b16 %v79
  %v212 = vunpack.c.l.b16 %v80
  %v213 = vunpack.c.l.b16 %v81
  %v214 = vpack.c.b16 %v151, %v150
  %v215 = vpack.c.b16 %v153, %v152
  %v216 = vpack.c.b16 %v155, %v154
  %v217 = vpack.c.b16 %v157, %v156
  %v218 = vpack.c.b16 %v159, %v158
  %v219 = vpack.c.b16 %v161, %v160
  %v220 = vpack.c.b16 %v163, %v162
  %v221 = vpack.c.b16 %v165, %v164
  %v222 = vpack.c.b16 %v167, %v166
  %v223 = vpack.c.b16 %v169, %v168
  %v224 = vpack.c.b16 %v171, %v170
  %v225 = vpack.c.b16 %v173, %v172
  %v226 = vpack.c.b16 %v175, %v174
  %v227 = vpack.c.b16 %v177, %v176
  %v228 = vpack.c.b16 %v179, %v178
  %v229 = vpack.c.b16 %v181, %v180
  %v230 = vpack.c.b16 %v183, %v182
  %v231 = vpack.c.b16 %v185, %v184
  %v232 = vpack.c.b16 %v187, %v186
  %v233 = vpack.c.b16 %v189, %v188
  %v234 = vpack.c.b16 %v191, %v190
  %v235 = vpack.c.b16 %v193, %v192
  %v236 = vpack.c.b16 %v195, %v194
  %v237 = vpack.c.b16 %v197, %v196
  %v238 = vpack.c.b16 %v199, %v198
  %v239 = vpack.c.b16 %v201, %v200
  %v240 = vpack.c.b16 %v203, %v202
  %v241 = vpack.c.b16 %v205, %v204
  %v242 = vpack.c.b16 %v207, %v206
  %v243 = vpack.c.b16 %v209, %v208
  %v244 = vpack.c.b16 %v211, %v210
  %v245 = vpack.c.b16 %v213, %v212
  %v250 = vunpack.c.l.b16 %v82
  %v251 = vunpack.c.l.b16 %v83
  %v252 = vunpack.c.l.b16 %v84
  %v253 = vunpack.c.l.b16 %v85
  %v254 = vpack.c.b16 %v251, %v250
  %v255 = vpack.c.b16 %v253, %v252
  %vm257 = vcmask 220160
  %v259 = vsel %vm257, %v214, 0
  %v262 = vsel %vm257, %v215, 0
  %v265 = vsel %vm257, %v216, 0
  %v268 = vsel %vm257, %v217, 0
  %v271 = vsel %vm257, %v218, 0
  %v274 = vsel %vm257, %v219, 0
  %v277 = vsel %vm257, %v220, 0
  %v280 = vsel %vm257, %v221, 0
  %v283 = vsel %vm257, %v222, 0
  %v286 = vsel %vm257, %v223, 0
  %v289 = vsel %vm257, %v224, 0
  %v292 = vsel %vm257, %v225, 0
  %v295 = vsel %vm257, %v226, 0
  %v298 = vsel %vm257, %v227, 0
  %v301 = vsel %vm257, %v228, 0
  %v304 = vsel %vm257, %v229, 0
  %v307 = vsel %vm257, %v230, 0
  %v310 = vsel %vm257, %v231, 0
  %v313 = vsel %vm257, %v232, 0
  %v316 = vsel %vm257, %v233, 0
  %v319 = vsel %vm257, %v234, 0
  %v322 = vsel %vm257, %v235, 0
  %v325 = vsel %vm257, %v236, 0
  %v328 = vsel %vm257, %v237, 0
  %v331 = vsel %vm257, %v238, 0
  %v334 = vsel %vm257, %v239, 0
  %v337 = vsel %vm257, %v240, 0
  %v340 = vsel %vm257, %v241, 0
  %v343 = vsel %vm257, %v242, 0
  %v346 = vsel %vm257, %v243, 0
  %v349 = vsel %vm257, %v244, 0
  %v352 = vsel %vm257, %v245, 0
  %vm354 = vcmask 1044480
  %vm355 = vcmask 1045504
  %v356 = vsel %vm354, 4294967295, 65535
  %v357 = vsel %vm355, %v356, 0
  %v359 = vand.u32 %v255, %v357
  %361 = vmatprep.subr.bf16.mxu0 0
  %362 = vmatpush1.bf16.msra.mxu0 0
  %363 = vmatprep.subr.bf16.mxu0 0
  %364 = vmatpush1.bf16.msra.mxu0 0
  %365 = vmatprep.subr.bf16.mxu0 0
  %366 = vmatpush1.bf16.msra.mxu0 0
  %367 = vmatprep.subr.bf16.mxu0 0
  %368 = vmatpush1.bf16.msra.mxu0 0
  %369 = vmatprep.subr.bf16.mxu0 0
  %370 = vmatpush1.bf16.msra.mxu0 0
  %371 = vmatprep.subr.bf16.mxu0 0
  %372 = vmatpush1.bf16.msra.mxu0 0
  %373 = vmatprep.subr.bf16.mxu0 0
  %374 = vmatpush1.bf16.msra.mxu0 %v359
  %375 = vmatprep.subr.bf16.mxu0 0
  %376 = vmatpush1.bf16.msra.mxu0 %v254
  %377 = vmatprep.subr.bf16.mxu0 0
  %378 = vmatpush2.bf16.msra.mxu0 0
  %379 = vmatprep.subr.bf16.mxu0 0
  %380 = vmatpush2.bf16.msra.mxu0 0
  %381 = vmatprep.subr.bf16.mxu0 0
  %382 = vmatpush2.bf16.msra.mxu0 0
  %383 = vmatprep.subr.bf16.mxu0 0
  %384 = vmatpush2.bf16.msra.mxu0 0
  %385 = vmatprep.subr.bf16.mxu0 0
  %386 = vmatpush2.bf16.msra.mxu0 0
  %387 = vmatprep.subr.bf16.mxu0 0
  %388 = vmatpush2.bf16.msra.mxu0 0
  %389 = vmatprep.subr.bf16.mxu0 0
  %390 = vmatpush2.bf16.msra.mxu0 0
  %391 = vmatprep.subr.bf16.mxu0 0
  %392 = vmatpush2.bf16.msra.mxu0 0
  %393 = vmatprep.mubr.bf16.mxu0 0
  %394 = vmatmul.mubr.bf16.gmra.mxu0 %v259
  %v395 = vpop.f32.mrf.mxu0
  %v396 = vadd.f32 0.0, %v395
  %v397 = vpop.f32.mrf.mxu0
  %v398 = vpop.f32.mrf.mxu0
  %v399 = vadd.f32 0.0, %v398
  %v400 = vpop.f32.mrf.mxu0
  %401 = vmatprep.mubr.bf16.mxu0 0
  %402 = vmatmul.mubr.bf16.gmra.mxu0 %v262
  %v403 = vpop.f32.mrf.mxu0
  %v404 = vadd.f32 0.0, %v403
  %v405 = vpop.f32.mrf.mxu0
  %v406 = vpop.f32.mrf.mxu0
  %v407 = vadd.f32 0.0, %v406
  %v408 = vpop.f32.mrf.mxu0
  %409 = vmatprep.mubr.bf16.mxu0 0
  %410 = vmatmul.mubr.bf16.gmra.mxu0 %v265
  %v411 = vpop.f32.mrf.mxu0
  %v412 = vadd.f32 0.0, %v411
  %v413 = vpop.f32.mrf.mxu0
  %v414 = vpop.f32.mrf.mxu0
  %v415 = vadd.f32 0.0, %v414
  %v416 = vpop.f32.mrf.mxu0
  %417 = vmatprep.mubr.bf16.mxu0 0
  %418 = vmatmul.mubr.bf16.gmra.mxu0 %v268
  %v419 = vpop.f32.mrf.mxu0
  %v420 = vadd.f32 0.0, %v419
  %v421 = vpop.f32.mrf.mxu0
  %v422 = vpop.f32.mrf.mxu0
  %v423 = vadd.f32 0.0, %v422
  %v424 = vpop.f32.mrf.mxu0
  %425 = vmatprep.mubr.bf16.mxu0 0
  %426 = vmatmul.mubr.bf16.gmra.mxu0 %v271
  %v427 = vpop.f32.mrf.mxu0
  %v428 = vadd.f32 0.0, %v427
  %v429 = vpop.f32.mrf.mxu0
  %v430 = vpop.f32.mrf.mxu0
  %v431 = vadd.f32 0.0, %v430
  %v432 = vpop.f32.mrf.mxu0
  %433 = vmatprep.mubr.bf16.mxu0 0
  %434 = vmatmul.mubr.bf16.gmra.mxu0 %v274
  %v435 = vpop.f32.mrf.mxu0
  %v436 = vadd.f32 0.0, %v435
  %v437 = vpop.f32.mrf.mxu0
  %v438 = vpop.f32.mrf.mxu0
  %v439 = vadd.f32 0.0, %v438
  %v440 = vpop.f32.mrf.mxu0
  %441 = vmatprep.mubr.bf16.mxu0 0
  %442 = vmatmul.mubr.bf16.gmra.mxu0 %v277
  %v443 = vpop.f32.mrf.mxu0
  %v444 = vadd.f32 0.0, %v443
  %v445 = vpop.f32.mrf.mxu0
  %v446 = vpop.f32.mrf.mxu0
  %v447 = vadd.f32 0.0, %v446
  %v448 = vpop.f32.mrf.mxu0
  %449 = vmatprep.mubr.bf16.mxu0 0
  %450 = vmatmul.mubr.bf16.gmra.mxu0 %v280
  %v451 = vpop.f32.mrf.mxu0
  %v452 = vadd.f32 0.0, %v451
  %v453 = vpop.f32.mrf.mxu0
  %v454 = vpop.f32.mrf.mxu0
  %v455 = vadd.f32 0.0, %v454
  %v456 = vpop.f32.mrf.mxu0
  %457 = vmatprep.mubr.bf16.mxu0 0
  %458 = vmatmul.mubr.bf16.gmra.mxu0 %v283
  %v459 = vpop.f32.mrf.mxu0
  %v460 = vadd.f32 0.0, %v459
  %v461 = vpop.f32.mrf.mxu0
  %v462 = vpop.f32.mrf.mxu0
  %v463 = vadd.f32 0.0, %v462
  %v464 = vpop.f32.mrf.mxu0
  %465 = vmatprep.mubr.bf16.mxu0 0
  %466 = vmatmul.mubr.bf16.gmra.mxu0 %v286
  %v467 = vpop.f32.mrf.mxu0
  %v468 = vadd.f32 0.0, %v467
  %v469 = vpop.f32.mrf.mxu0
  %v470 = vpop.f32.mrf.mxu0
  %v471 = vadd.f32 0.0, %v470
  %v472 = vpop.f32.mrf.mxu0
  %473 = vmatprep.mubr.bf16.mxu0 0
  %474 = vmatmul.mubr.bf16.gmra.mxu0 %v289
  %v475 = vpop.f32.mrf.mxu0
  %v476 = vadd.f32 0.0, %v475
  %v477 = vpop.f32.mrf.mxu0
  %v478 = vpop.f32.mrf.mxu0
  %v479 = vadd.f32 0.0, %v478
  %v480 = vpop.f32.mrf.mxu0
  %481 = vmatprep.mubr.bf16.mxu0 0
  %482 = vmatmul.mubr.bf16.gmra.mxu0 %v292
  %v483 = vpop.f32.mrf.mxu0
  %v484 = vadd.f32 0.0, %v483
  %v485 = vpop.f32.mrf.mxu0
  %v486 = vpop.f32.mrf.mxu0
  %v487 = vadd.f32 0.0, %v486
  %v488 = vpop.f32.mrf.mxu0
  %489 = vmatprep.mubr.bf16.mxu0 0
  %490 = vmatmul.mubr.bf16.gmra.mxu0 %v295
  %v491 = vpop.f32.mrf.mxu0
  %v492 = vadd.f32 0.0, %v491
  %v493 = vpop.f32.mrf.mxu0
  %v494 = vpop.f32.mrf.mxu0
  %v495 = vadd.f32 0.0, %v494
  %v496 = vpop.f32.mrf.mxu0
  %497 = vmatprep.mubr.bf16.mxu0 0
  %498 = vmatmul.mubr.bf16.gmra.mxu0 %v298
  %v499 = vpop.f32.mrf.mxu0
  %v500 = vadd.f32 0.0, %v499
  %v501 = vpop.f32.mrf.mxu0
  %v502 = vpop.f32.mrf.mxu0
  %v503 = vadd.f32 0.0, %v502
  %v504 = vpop.f32.mrf.mxu0
  %505 = vmatprep.mubr.bf16.mxu0 0
  %506 = vmatmul.mubr.bf16.gmra.mxu0 %v301
  %v507 = vpop.f32.mrf.mxu0
  %v508 = vadd.f32 0.0, %v507
  %v509 = vpop.f32.mrf.mxu0
  %v510 = vpop.f32.mrf.mxu0
  %v511 = vadd.f32 0.0, %v510
  %v512 = vpop.f32.mrf.mxu0
  %513 = vmatprep.mubr.bf16.mxu0 0
  %514 = vmatmul.mubr.bf16.gmra.mxu0 %v304
  %v515 = vpop.f32.mrf.mxu0
  %v516 = vadd.f32 0.0, %v515
  %v517 = vpop.f32.mrf.mxu0
  %v518 = vpop.f32.mrf.mxu0
  %v519 = vadd.f32 0.0, %v518
  %v520 = vpop.f32.mrf.mxu0
  %521 = vmatprep.mubr.bf16.mxu0 0
  %522 = vmatmul.mubr.bf16.gmra.mxu0 %v307
  %v523 = vpop.f32.mrf.mxu0
  %v524 = vadd.f32 0.0, %v523
  %v525 = vpop.f32.mrf.mxu0
  %v526 = vpop.f32.mrf.mxu0
  %v527 = vadd.f32 0.0, %v526
  %v528 = vpop.f32.mrf.mxu0
  %529 = vmatprep.mubr.bf16.mxu0 0
  %530 = vmatmul.mubr.bf16.gmra.mxu0 %v310
  %v531 = vpop.f32.mrf.mxu0
  %v532 = vadd.f32 0.0, %v531
  %v533 = vpop.f32.mrf.mxu0
  %v534 = vpop.f32.mrf.mxu0
  %v535 = vadd.f32 0.0, %v534
  %v536 = vpop.f32.mrf.mxu0
  %537 = vmatprep.mubr.bf16.mxu0 0
  %538 = vmatmul.mubr.bf16.gmra.mxu0 %v313
  %v539 = vpop.f32.mrf.mxu0
  %v540 = vadd.f32 0.0, %v539
  %v541 = vpop.f32.mrf.mxu0
  %v542 = vpop.f32.mrf.mxu0
  %v543 = vadd.f32 0.0, %v542
  %v544 = vpop.f32.mrf.mxu0
  %545 = vmatprep.mubr.bf16.mxu0 0
  %546 = vmatmul.mubr.bf16.gmra.mxu0 %v316
  %v547 = vpop.f32.mrf.mxu0
  %v548 = vadd.f32 0.0, %v547
  %v549 = vpop.f32.mrf.mxu0
  %v550 = vpop.f32.mrf.mxu0
  %v551 = vadd.f32 0.0, %v550
  %v552 = vpop.f32.mrf.mxu0
  %553 = vmatprep.mubr.bf16.mxu0 0
  %554 = vmatmul.mubr.bf16.gmra.mxu0 %v319
  %v555 = vpop.f32.mrf.mxu0
  %v556 = vadd.f32 0.0, %v555
  %v557 = vpop.f32.mrf.mxu0
  %v558 = vpop.f32.mrf.mxu0
  %v559 = vadd.f32 0.0, %v558
  %v560 = vpop.f32.mrf.mxu0
  %561 = vmatprep.mubr.bf16.mxu0 0
  %562 = vmatmul.mubr.bf16.gmra.mxu0 %v322
  %v563 = vpop.f32.mrf.mxu0
  %v564 = vadd.f32 0.0, %v563
  %v565 = vpop.f32.mrf.mxu0
  %v566 = vpop.f32.mrf.mxu0
  %v567 = vadd.f32 0.0, %v566
  %v568 = vpop.f32.mrf.mxu0
  %569 = vmatprep.mubr.bf16.mxu0 0
  %570 = vmatmul.mubr.bf16.gmra.mxu0 %v325
  %v571 = vpop.f32.mrf.mxu0
  %v572 = vadd.f32 0.0, %v571
  %v573 = vpop.f32.mrf.mxu0
  %v574 = vpop.f32.mrf.mxu0
  %v575 = vadd.f32 0.0, %v574
  %v576 = vpop.f32.mrf.mxu0
  %577 = vmatprep.mubr.bf16.mxu0 0
  %578 = vmatmul.mubr.bf16.gmra.mxu0 %v328
  %v579 = vpop.f32.mrf.mxu0
  %v580 = vadd.f32 0.0, %v579
  %v581 = vpop.f32.mrf.mxu0
  %v582 = vpop.f32.mrf.mxu0
  %v583 = vadd.f32 0.0, %v582
  %v584 = vpop.f32.mrf.mxu0
  %585 = vmatprep.mubr.bf16.mxu0 0
  %586 = vmatmul.mubr.bf16.gmra.mxu0 %v331
  %v587 = vpop.f32.mrf.mxu0
  %v588 = vadd.f32 0.0, %v587
  %v589 = vpop.f32.mrf.mxu0
  %v590 = vpop.f32.mrf.mxu0
  %v591 = vadd.f32 0.0, %v590
  %v592 = vpop.f32.mrf.mxu0
  %593 = vmatprep.mubr.bf16.mxu0 0
  %594 = vmatmul.mubr.bf16.gmra.mxu0 %v334
  %v595 = vpop.f32.mrf.mxu0
  %v596 = vadd.f32 0.0, %v595
  %v597 = vpop.f32.mrf.mxu0
  %v598 = vpop.f32.mrf.mxu0
  %v599 = vadd.f32 0.0, %v598
  %v600 = vpop.f32.mrf.mxu0
  %601 = vmatprep.mubr.bf16.mxu0 0
  %602 = vmatmul.mubr.bf16.gmra.mxu0 %v337
  %v603 = vpop.f32.mrf.mxu0
  %v604 = vadd.f32 0.0, %v603
  %v605 = vpop.f32.mrf.mxu0
  %v606 = vpop.f32.mrf.mxu0
  %v607 = vadd.f32 0.0, %v606
  %v608 = vpop.f32.mrf.mxu0
  %609 = vmatprep.mubr.bf16.mxu0 0
  %610 = vmatmul.mubr.bf16.gmra.mxu0 %v340
  %v611 = vpop.f32.mrf.mxu0
  %v612 = vadd.f32 0.0, %v611
  %v613 = vpop.f32.mrf.mxu0
  %v614 = vpop.f32.mrf.mxu0
  %v615 = vadd.f32 0.0, %v614
  %v616 = vpop.f32.mrf.mxu0
  %617 = vmatprep.mubr.bf16.mxu0 0
  %618 = vmatmul.mubr.bf16.gmra.mxu0 %v343
  %v619 = vpop.f32.mrf.mxu0
  %v620 = vadd.f32 0.0, %v619
  %v621 = vpop.f32.mrf.mxu0
  %v622 = vpop.f32.mrf.mxu0
  %v623 = vadd.f32 0.0, %v622
  %v624 = vpop.f32.mrf.mxu0
  %625 = vmatprep.mubr.bf16.mxu0 0
  %626 = vmatmul.mubr.bf16.gmra.mxu0 %v346
  %v627 = vpop.f32.mrf.mxu0
  %v628 = vadd.f32 0.0, %v627
  %v629 = vpop.f32.mrf.mxu0
  %v630 = vpop.f32.mrf.mxu0
  %v631 = vadd.f32 0.0, %v630
  %v632 = vpop.f32.mrf.mxu0
  %633 = vmatprep.mubr.bf16.mxu0 0
  %634 = vmatmul.mubr.bf16.gmra.mxu0 %v349
  %v635 = vpop.f32.mrf.mxu0
  %v636 = vadd.f32 0.0, %v635
  %v637 = vpop.f32.mrf.mxu0
  %v638 = vpop.f32.mrf.mxu0
  %v639 = vadd.f32 0.0, %v638
  %v640 = vpop.f32.mrf.mxu0
  %641 = vmatprep.mubr.bf16.mxu0 0
  %642 = vmatmul.mubr.bf16.gmra.mxu0 %v352
  %v643 = vpop.f32.mrf.mxu0
  %v644 = vadd.f32 0.0, %v643
  %v645 = vpop.f32.mrf.mxu0
  %v646 = vpop.f32.mrf.mxu0
  %v647 = vadd.f32 0.0, %v646
  %v648 = vpop.f32.mrf.mxu0
  %649 = vdwg.mxu0
  %v650 = vld [vmem:[%s2] sm:$0x1]
  %v652 = vlaneseq
  %v653 = vshrl.u32 %v652, 7
  %v654 = vsub.s32 0, %v653
  %v655 = vrot.slane %v650, %v654
  %v657 = vmul.f32 %v396, %v655
  %v658 = vmul.f32 %v399, %v655
  %v659 = vmul.f32 %v404, %v655
  %v660 = vmul.f32 %v407, %v655
  %v661 = vmul.f32 %v412, %v655
  %v662 = vmul.f32 %v415, %v655
  %v663 = vmul.f32 %v420, %v655
  %v664 = vmul.f32 %v423, %v655
  %v665 = vmul.f32 %v428, %v655
  %v666 = vmul.f32 %v431, %v655
  %v667 = vmul.f32 %v436, %v655
  %v668 = vmul.f32 %v439, %v655
  %v669 = vmul.f32 %v444, %v655
  %v670 = vmul.f32 %v447, %v655
  %v671 = vmul.f32 %v452, %v655
  %v672 = vmul.f32 %v455, %v655
  %v673 = vmul.f32 %v460, %v655
  %v674 = vmul.f32 %v463, %v655
  %v675 = vmul.f32 %v468, %v655
  %v676 = vmul.f32 %v471, %v655
  %v677 = vmul.f32 %v476, %v655
  %v678 = vmul.f32 %v479, %v655
  %v679 = vmul.f32 %v484, %v655
  %v680 = vmul.f32 %v487, %v655
  %v681 = vmul.f32 %v492, %v655
  %v682 = vmul.f32 %v495, %v655
  %v683 = vmul.f32 %v500, %v655
  %v684 = vmul.f32 %v503, %v655
  %v685 = vmul.f32 %v508, %v655
  %v686 = vmul.f32 %v511, %v655
  %v687 = vmul.f32 %v516, %v655
  %v688 = vmul.f32 %v519, %v655
  %v689 = vmul.f32 %v524, %v655
  %v690 = vmul.f32 %v527, %v655
  %v691 = vmul.f32 %v532, %v655
  %v692 = vmul.f32 %v535, %v655
  %v693 = vmul.f32 %v540, %v655
  %v694 = vmul.f32 %v543, %v655
  %v695 = vmul.f32 %v548, %v655
  %v696 = vmul.f32 %v551, %v655
  %v697 = vmul.f32 %v556, %v655
  %v698 = vmul.f32 %v559, %v655
  %v699 = vmul.f32 %v564, %v655
  %v700 = vmul.f32 %v567, %v655
  %v701 = vmul.f32 %v572, %v655
  %v702 = vmul.f32 %v575, %v655
  %v703 = vmul.f32 %v580, %v655
  %v704 = vmul.f32 %v583, %v655
  %v705 = vmul.f32 %v588, %v655
  %v706 = vmul.f32 %v591, %v655
  %v707 = vmul.f32 %v596, %v655
  %v708 = vmul.f32 %v599, %v655
  %v709 = vmul.f32 %v604, %v655
  %v710 = vmul.f32 %v607, %v655
  %v711 = vmul.f32 %v612, %v655
  %v712 = vmul.f32 %v615, %v655
  %v713 = vmul.f32 %v620, %v655
  %v714 = vmul.f32 %v623, %v655
  %v715 = vmul.f32 %v628, %v655
  %v716 = vmul.f32 %v631, %v655
  %v717 = vmul.f32 %v636, %v655
  %v718 = vmul.f32 %v639, %v655
  %v719 = vmul.f32 %v644, %v655
  %v720 = vmul.f32 %v647, %v655
  %v721 = vld [vmem:[%s3] sm:$0x1]
  %v723 = vlaneseq
  %v724 = vshrl.u32 %v723, 7
  %v725 = vsub.s32 0, %v724
  %v726 = vrot.slane %v721, %v725
  %v728 = vadd.f32 %v657, %v726
  %v729 = vadd.f32 %v658, %v726
  %v730 = vadd.f32 %v659, %v726
  %v731 = vadd.f32 %v660, %v726
  %v732 = vadd.f32 %v661, %v726
  %v733 = vadd.f32 %v662, %v726
  %v734 = vadd.f32 %v663, %v726
  %v735 = vadd.f32 %v664, %v726
  %v736 = vadd.f32 %v665, %v726
  %v737 = vadd.f32 %v666, %v726
  %v738 = vadd.f32 %v667, %v726
  %v739 = vadd.f32 %v668, %v726
  %v740 = vadd.f32 %v669, %v726
  %v741 = vadd.f32 %v670, %v726
  %v742 = vadd.f32 %v671, %v726
  %v743 = vadd.f32 %v672, %v726
  %v744 = vadd.f32 %v673, %v726
  %v745 = vadd.f32 %v674, %v726
  %v746 = vadd.f32 %v675, %v726
  %v747 = vadd.f32 %v676, %v726
  %v748 = vadd.f32 %v677, %v726
  %v749 = vadd.f32 %v678, %v726
  %v750 = vadd.f32 %v679, %v726
  %v751 = vadd.f32 %v680, %v726
  %v752 = vadd.f32 %v681, %v726
  %v753 = vadd.f32 %v682, %v726
  %v754 = vadd.f32 %v683, %v726
  %v755 = vadd.f32 %v684, %v726
  %v756 = vadd.f32 %v685, %v726
  %v757 = vadd.f32 %v686, %v726
  %v758 = vadd.f32 %v687, %v726
  %v759 = vadd.f32 %v688, %v726
  %v760 = vadd.f32 %v689, %v726
  %v761 = vadd.f32 %v690, %v726
  %v762 = vadd.f32 %v691, %v726
  %v763 = vadd.f32 %v692, %v726
  %v764 = vadd.f32 %v693, %v726
  %v765 = vadd.f32 %v694, %v726
  %v766 = vadd.f32 %v695, %v726
  %v767 = vadd.f32 %v696, %v726
  %v768 = vadd.f32 %v697, %v726
  %v769 = vadd.f32 %v698, %v726
  %v770 = vadd.f32 %v699, %v726
  %v771 = vadd.f32 %v700, %v726
  %v772 = vadd.f32 %v701, %v726
  %v773 = vadd.f32 %v702, %v726
  %v774 = vadd.f32 %v703, %v726
  %v775 = vadd.f32 %v704, %v726
  %v776 = vadd.f32 %v705, %v726
  %v777 = vadd.f32 %v706, %v726
  %v778 = vadd.f32 %v707, %v726
  %v779 = vadd.f32 %v708, %v726
  %v780 = vadd.f32 %v709, %v726
  %v781 = vadd.f32 %v710, %v726
  %v782 = vadd.f32 %v711, %v726
  %v783 = vadd.f32 %v712, %v726
  %v784 = vadd.f32 %v713, %v726
  %v785 = vadd.f32 %v714, %v726
  %v786 = vadd.f32 %v715, %v726
  %v787 = vadd.f32 %v716, %v726
  %v788 = vadd.f32 %v717, %v726
  %v789 = vadd.f32 %v718, %v726
  %v790 = vadd.f32 %v719, %v726
  %v791 = vadd.f32 %v720, %v726
  %v792 = vmax.f32 %v728, 0.0
  %v793 = vmax.f32 %v729, 0.0
  %v794 = vmax.f32 %v730, 0.0
  %v795 = vmax.f32 %v731, 0.0
  %v796 = vmax.f32 %v732, 0.0
  %v797 = vmax.f32 %v733, 0.0
  %v798 = vmax.f32 %v734, 0.0
  %v799 = vmax.f32 %v735, 0.0
  %v800 = vmax.f32 %v736, 0.0
  %v801 = vmax.f32 %v737, 0.0
  %v802 = vmax.f32 %v738, 0.0
  %v803 = vmax.f32 %v739, 0.0
  %v804 = vmax.f32 %v740, 0.0
  %v805 = vmax.f32 %v741, 0.0
  %v806 = vmax.f32 %v742, 0.0
  %v807 = vmax.f32 %v743, 0.0
  %v808 = vmax.f32 %v744, 0.0
  %v809 = vmax.f32 %v745, 0.0
  %v810 = vmax.f32 %v746, 0.0
  %v811 = vmax.f32 %v747, 0.0
  %v812 = vmax.f32 %v748, 0.0
  %v813 = vmax.f32 %v749, 0.0
  %v814 = vmax.f32 %v750, 0.0
  %v815 = vmax.f32 %v751, 0.0
  %v816 = vmax.f32 %v752, 0.0
  %v817 = vmax.f32 %v753, 0.0
  %v818 = vmax.f32 %v754, 0.0
  %v819 = vmax.f32 %v755, 0.0
  %v820 = vmax.f32 %v756, 0.0
  %v821 = vmax.f32 %v757, 0.0
  %v822 = vmax.f32 %v758, 0.0
  %v823 = vmax.f32 %v759, 0.0
  %v824 = vmax.f32 %v760, 0.0
  %v825 = vmax.f32 %v761, 0.0
  %v826 = vmax.f32 %v762, 0.0
  %v827 = vmax.f32 %v763, 0.0
  %v828 = vmax.f32 %v764, 0.0
  %v829 = vmax.f32 %v765, 0.0
  %v830 = vmax.f32 %v766, 0.0
  %v831 = vmax.f32 %v767, 0.0
  %v832 = vmax.f32 %v768, 0.0
  %v833 = vmax.f32 %v769, 0.0
  %v834 = vmax.f32 %v770, 0.0
  %v835 = vmax.f32 %v771, 0.0
  %v836 = vmax.f32 %v772, 0.0
  %v837 = vmax.f32 %v773, 0.0
  %v838 = vmax.f32 %v774, 0.0
  %v839 = vmax.f32 %v775, 0.0
  %v840 = vmax.f32 %v776, 0.0
  %v841 = vmax.f32 %v777, 0.0
  %v842 = vmax.f32 %v778, 0.0
  %v843 = vmax.f32 %v779, 0.0
  %v844 = vmax.f32 %v780, 0.0
  %v845 = vmax.f32 %v781, 0.0
  %v846 = vmax.f32 %v782, 0.0
  %v847 = vmax.f32 %v783, 0.0
  %v848 = vmax.f32 %v784, 0.0
  %v849 = vmax.f32 %v785, 0.0
  %v850 = vmax.f32 %v786, 0.0
  %v851 = vmax.f32 %v787, 0.0
  %v852 = vmax.f32 %v788, 0.0
  %v853 = vmax.f32 %v789, 0.0
  %v854 = vmax.f32 %v790, 0.0
  %v855 = vmax.f32 %v791, 0.0
  %v856 = vpack.c.bf16 %v793, %v792
  %v857 = vpack.c.bf16 %v795, %v794
  %v858 = vpack.c.bf16 %v797, %v796
  %v859 = vpack.c.bf16 %v799, %v798
  %v860 = vpack.c.bf16 %v801, %v800
  %v861 = vpack.c.bf16 %v803, %v802
  %v862 = vpack.c.bf16 %v805, %v804
  %v863 = vpack.c.bf16 %v807, %v806
  %v864 = vpack.c.bf16 %v809, %v808
  %v865 = vpack.c.bf16 %v811, %v810
  %v866 = vpack.c.bf16 %v813, %v812
  %v867 = vpack.c.bf16 %v815, %v814
  %v868 = vpack.c.bf16 %v817, %v816
  %v869 = vpack.c.bf16 %v819, %v818
  %v870 = vpack.c.bf16 %v821, %v820
  %v871 = vpack.c.bf16 %v823, %v822
  %v872 = vpack.c.bf16 %v825, %v824
  %v873 = vpack.c.bf16 %v827, %v826
  %v874 = vpack.c.bf16 %v829, %v828
  %v875 = vpack.c.bf16 %v831, %v830
  %v876 = vpack.c.bf16 %v833, %v832
  %v877 = vpack.c.bf16 %v835, %v834
  %v878 = vpack.c.bf16 %v837, %v836
  %v879 = vpack.c.bf16 %v839, %v838
  %v880 = vpack.c.bf16 %v841, %v840
  %v881 = vpack.c.bf16 %v843, %v842
  %v882 = vpack.c.bf16 %v845, %v844
  %v883 = vpack.c.bf16 %v847, %v846
  %v884 = vpack.c.bf16 %v849, %v848
  %v885 = vpack.c.bf16 %v851, %v850
  %v886 = vpack.c.bf16 %v853, %v852
  %v887 = vpack.c.bf16 %v855, %v854
  %v920 = vunpack.c.l.b16 %v856
  %v921 = vunpack.c.h.b16 %v856
  %v922 = vunpack.c.l.b16 %v857
  %v923 = vunpack.c.h.b16 %v857
  %v924 = vunpack.c.l.b16 %v858
  %v925 = vunpack.c.h.b16 %v858
  %v926 = vunpack.c.l.b16 %v859
  %v927 = vunpack.c.h.b16 %v859
  %v928 = vunpack.c.l.b16 %v860
  %v929 = vunpack.c.h.b16 %v860
  %v930 = vunpack.c.l.b16 %v861
  %v931 = vunpack.c.h.b16 %v861
  %v932 = vunpack.c.l.b16 %v862
  %v933 = vunpack.c.h.b16 %v862
  %v934 = vunpack.c.l.b16 %v863
  %v935 = vunpack.c.h.b16 %v863
  %v936 = vunpack.c.l.b16 %v864
  %v937 = vunpack.c.h.b16 %v864
  %v938 = vunpack.c.l.b16 %v865
  %v939 = vunpack.c.h.b16 %v865
  %v940 = vunpack.c.l.b16 %v866
  %v941 = vunpack.c.h.b16 %v866
  %v942 = vunpack.c.l.b16 %v867
  %v943 = vunpack.c.h.b16 %v867
  %v944 = vunpack.c.l.b16 %v868
  %v945 = vunpack.c.h.b16 %v868
  %v946 = vunpack.c.l.b16 %v869
  %v947 = vunpack.c.h.b16 %v869
  %v948 = vunpack.c.l.b16 %v870
  %v949 = vunpack.c.h.b16 %v870
  %v950 = vunpack.c.l.b16 %v871
  %v951 = vunpack.c.h.b16 %v871
  %v952 = vunpack.c.l.b16 %v872
  %v953 = vunpack.c.h.b16 %v872
  %v954 = vunpack.c.l.b16 %v873
  %v955 = vunpack.c.h.b16 %v873
  %v956 = vunpack.c.l.b16 %v874
  %v957 = vunpack.c.h.b16 %v874
  %v958 = vunpack.c.l.b16 %v875
  %v959 = vunpack.c.h.b16 %v875
  %v960 = vunpack.c.l.b16 %v876
  %v961 = vunpack.c.h.b16 %v876
  %v962 = vunpack.c.l.b16 %v877
  %v963 = vunpack.c.h.b16 %v877
  %v964 = vunpack.c.l.b16 %v878
  %v965 = vunpack.c.h.b16 %v878
  %v966 = vunpack.c.l.b16 %v879
  %v967 = vunpack.c.h.b16 %v879
  %v968 = vunpack.c.l.b16 %v880
  %v969 = vunpack.c.h.b16 %v880
  %v970 = vunpack.c.l.b16 %v881
  %v971 = vunpack.c.h.b16 %v881
  %v972 = vunpack.c.l.b16 %v882
  %v973 = vunpack.c.h.b16 %v882
  %v974 = vunpack.c.l.b16 %v883
  %v975 = vunpack.c.h.b16 %v883
  %v976 = vunpack.c.l.b16 %v884
  %v977 = vunpack.c.h.b16 %v884
  %v978 = vunpack.c.l.b16 %v885
  %v979 = vunpack.c.h.b16 %v885
  %v980 = vunpack.c.l.b16 %v886
  %v981 = vunpack.c.h.b16 %v886
  %v982 = vunpack.c.l.b16 %v887
  %v983 = vunpack.c.h.b16 %v887
  %v984 = vpack.c.b16 %v920, %v920
  %v985 = vpack.c.b16 %v921, %v921
  %v986 = vpack.c.b16 %v922, %v922
  %v987 = vpack.c.b16 %v923, %v923
  %v988 = vpack.c.b16 %v924, %v924
  %v989 = vpack.c.b16 %v925, %v925
  %v990 = vpack.c.b16 %v926, %v926
  %v991 = vpack.c.b16 %v927, %v927
  %v992 = vpack.c.b16 %v928, %v928
  %v993 = vpack.c.b16 %v929, %v929
  %v994 = vpack.c.b16 %v930, %v930
  %v995 = vpack.c.b16 %v931, %v931
  %v996 = vpack.c.b16 %v932, %v932
  %v997 = vpack.c.b16 %v933, %v933
  %v998 = vpack.c.b16 %v934, %v934
  %v999 = vpack.c.b16 %v935, %v935
  %v1000 = vpack.c.b16 %v936, %v936
  %v1001 = vpack.c.b16 %v937, %v937
  %v1002 = vpack.c.b16 %v938, %v938
  %v1003 = vpack.c.b16 %v939, %v939
  %v1004 = vpack.c.b16 %v940, %v940
  %v1005 = vpack.c.b16 %v941, %v941
  %v1006 = vpack.c.b16 %v942, %v942
  %v1007 = vpack.c.b16 %v943, %v943
  %v1008 = vpack.c.b16 %v944, %v944
  %v1009 = vpack.c.b16 %v945, %v945
  %v1010 = vpack.c.b16 %v946, %v946
  %v1011 = vpack.c.b16 %v947, %v947
  %v1012 = vpack.c.b16 %v948, %v948
  %v1013 = vpack.c.b16 %v949, %v949
  %v1014 = vpack.c.b16 %v950, %v950
  %v1015 = vpack.c.b16 %v951, %v951
  %v1016 = vpack.c.b16 %v952, %v952
  %v1017 = vpack.c.b16 %v953, %v953
  %v1018 = vpack.c.b16 %v954, %v954
  %v1019 = vpack.c.b16 %v955, %v955
  %v1020 = vpack.c.b16 %v956, %v956
  %v1021 = vpack.c.b16 %v957, %v957
  %v1022 = vpack.c.b16 %v958, %v958
  %v1023 = vpack.c.b16 %v959, %v959
  %v1024 = vpack.c.b16 %v960, %v960
  %v1025 = vpack.c.b16 %v961, %v961
  %v1026 = vpack.c.b16 %v962, %v962
  %v1027 = vpack.c.b16 %v963, %v963
  %v1028 = vpack.c.b16 %v964, %v964
  %v1029 = vpack.c.b16 %v965, %v965
  %v1030 = vpack.c.b16 %v966, %v966
  %v1031 = vpack.c.b16 %v967, %v967
  %v1032 = vpack.c.b16 %v968, %v968
  %v1033 = vpack.c.b16 %v969, %v969
  %v1034 = vpack.c.b16 %v970, %v970
  %v1035 = vpack.c.b16 %v971, %v971
  %v1036 = vpack.c.b16 %v972, %v972
  %v1037 = vpack.c.b16 %v973, %v973
  %v1038 = vpack.c.b16 %v974, %v974
  %v1039 = vpack.c.b16 %v975, %v975
  %v1040 = vpack.c.b16 %v976, %v976
  %v1041 = vpack.c.b16 %v977, %v977
  %v1042 = vpack.c.b16 %v978, %v978
  %v1043 = vpack.c.b16 %v979, %v979
  %v1044 = vpack.c.b16 %v980, %v980
  %v1045 = vpack.c.b16 %v981, %v981
  %v1046 = vpack.c.b16 %v982, %v982
  %v1047 = vpack.c.b16 %v983, %v983
  %vm1112 = vcmask 191488
  %1113 = vst.msk [vmem:[%s4] sm:$0xf] %vm1112, %v984
  %1114 = vst.msk [vmem:[%s4 + $0x4] sm:$0xf] %vm1112, %v985
  %1115 = vst.msk [vmem:[%s4 + $0x8] sm:$0xf] %vm1112, %v986
  %1116 = vst.msk [vmem:[%s4 + $0xc] sm:$0xf] %vm1112, %v987
  %1117 = vst.msk [vmem:[%s4 + $0x10] sm:$0xf] %vm1112, %v988
  %1118 = vst.msk [vmem:[%s4 + $0x14] sm:$0xf] %vm1112, %v989
  %1119 = vst.msk [vmem:[%s4 + $0x18] sm:$0xf] %vm1112, %v990
  %1120 = vst.msk [vmem:[%s4 + $0x1c] sm:$0xf] %vm1112, %v991
  %1121 = vst.msk [vmem:[%s4 + $0x20] sm:$0xf] %vm1112, %v992
  %1122 = vst.msk [vmem:[%s4 + $0x24] sm:$0xf] %vm1112, %v993
  %1123 = vst.msk [vmem:[%s4 + $0x28] sm:$0xf] %vm1112, %v994
  %1124 = vst.msk [vmem:[%s4 + $0x2c] sm:$0xf] %vm1112, %v995
  %1125 = vst.msk [vmem:[%s4 + $0x30] sm:$0xf] %vm1112, %v996
  %1126 = vst.msk [vmem:[%s4 + $0x34] sm:$0xf] %vm1112, %v997
  %1127 = vst.msk [vmem:[%s4 + $0x38] sm:$0xf] %vm1112, %v998
  %1128 = vst.msk [vmem:[%s4 + $0x3c] sm:$0xf] %vm1112, %v999
  %1129 = vst.msk [vmem:[%s4 + $0x40] sm:$0xf] %vm1112, %v1000
  %1130 = vst.msk [vmem:[%s4 + $0x44] sm:$0xf] %vm1112, %v1001
  %1131 = vst.msk [vmem:[%s4 + $0x48] sm:$0xf] %vm1112, %v1002
  %1132 = vst.msk [vmem:[%s4 + $0x4c] sm:$0xf] %vm1112, %v1003
  %1133 = vst.msk [vmem:[%s4 + $0x50] sm:$0xf] %vm1112, %v1004
  %1134 = vst.msk [vmem:[%s4 + $0x54] sm:$0xf] %vm1112, %v1005
  %1135 = vst.msk [vmem:[%s4 + $0x58] sm:$0xf] %vm1112, %v1006
  %1136 = vst.msk [vmem:[%s4 + $0x5c] sm:$0xf] %vm1112, %v1007
  %1137 = vst.msk [vmem:[%s4 + $0x60] sm:$0xf] %vm1112, %v1008
  %1138 = vst.msk [vmem:[%s4 + $0x64] sm:$0xf] %vm1112, %v1009
  %1139 = vst.msk [vmem:[%s4 + $0x68] sm:$0xf] %vm1112, %v1010
  %1140 = vst.msk [vmem:[%s4 + $0x6c] sm:$0xf] %vm1112, %v1011
  %1141 = vst.msk [vmem:[%s4 + $0x70] sm:$0xf] %vm1112, %v1012
  %1142 = vst.msk [vmem:[%s4 + $0x74] sm:$0xf] %vm1112, %v1013
  %1143 = vst.msk [vmem:[%s4 + $0x78] sm:$0xf] %vm1112, %v1014
  %1144 = vst.msk [vmem:[%s4 + $0x7c] sm:$0xf] %vm1112, %v1015
  %1145 = vst.msk [vmem:[%s4 + $0x80] sm:$0xf] %vm1112, %v1016
  %1146 = vst.msk [vmem:[%s4 + $0x84] sm:$0xf] %vm1112, %v1017
  %1147 = vst.msk [vmem:[%s4 + $0x88] sm:$0xf] %vm1112, %v1018
  %1148 = vst.msk [vmem:[%s4 + $0x8c] sm:$0xf] %vm1112, %v1019
  %1149 = vst.msk [vmem:[%s4 + $0x90] sm:$0xf] %vm1112, %v1020
  %1150 = vst.msk [vmem:[%s4 + $0x94] sm:$0xf] %vm1112, %v1021
  %1151 = vst.msk [vmem:[%s4 + $0x98] sm:$0xf] %vm1112, %v1022
  %1152 = vst.msk [vmem:[%s4 + $0x9c] sm:$0xf] %vm1112, %v1023
  %1153 = vst.msk [vmem:[%s4 + $0xa0] sm:$0xf] %vm1112, %v1024
  %1154 = vst.msk [vmem:[%s4 + $0xa4] sm:$0xf] %vm1112, %v1025
  %1155 = vst.msk [vmem:[%s4 + $0xa8] sm:$0xf] %vm1112, %v1026
  %1156 = vst.msk [vmem:[%s4 + $0xac] sm:$0xf] %vm1112, %v1027
  %1157 = vst.msk [vmem:[%s4 + $0xb0] sm:$0xf] %vm1112, %v1028
  %1158 = vst.msk [vmem:[%s4 + $0xb4] sm:$0xf] %vm1112, %v1029
  %1159 = vst.msk [vmem:[%s4 + $0xb8] sm:$0xf] %vm1112, %v1030
  %1160 = vst.msk [vmem:[%s4 + $0xbc] sm:$0xf] %vm1112, %v1031
  %1161 = vst.msk [vmem:[%s4 + $0xc0] sm:$0xf] %vm1112, %v1032
  %1162 = vst.msk [vmem:[%s4 + $0xc4] sm:$0xf] %vm1112, %v1033
  %1163 = vst.msk [vmem:[%s4 + $0xc8] sm:$0xf] %vm1112, %v1034
  %1164 = vst.msk [vmem:[%s4 + $0xcc] sm:$0xf] %vm1112, %v1035
  %1165 = vst.msk [vmem:[%s4 + $0xd0] sm:$0xf] %vm1112, %v1036
  %1166 = vst.msk [vmem:[%s4 + $0xd4] sm:$0xf] %vm1112, %v1037
  %1167 = vst.msk [vmem:[%s4 + $0xd8] sm:$0xf] %vm1112, %v1038
  %1168 = vst.msk [vmem:[%s4 + $0xdc] sm:$0xf] %vm1112, %v1039
  %1169 = vst.msk [vmem:[%s4 + $0xe0] sm:$0xf] %vm1112, %v1040
  %1170 = vst.msk [vmem:[%s4 + $0xe4] sm:$0xf] %vm1112, %v1041
  %1171 = vst.msk [vmem:[%s4 + $0xe8] sm:$0xf] %vm1112, %v1042
  %1172 = vst.msk [vmem:[%s4 + $0xec] sm:$0xf] %vm1112, %v1043
  %1173 = vst.msk [vmem:[%s4 + $0xf0] sm:$0xf] %vm1112, %v1044
  %1174 = vst.msk [vmem:[%s4 + $0xf4] sm:$0xf] %vm1112, %v1045
  %1175 = vst.msk [vmem:[%s4 + $0xf8] sm:$0xf] %vm1112, %v1046
  %1176 = vst.msk [vmem:[%s4 + $0xfc] sm:$0xf] %vm1112, %v1047
  // Predicated region
  $region18: #{_lambda_.54} parent=0 // pred_check
    _
  $region19: #{_lambda_.54} parent=0 // pred_check_branch
    %1178 = sbr.rel (0) target = $region21
  $region20: #{_lambda_.54} parent=0 // pred_region
    _
  $region21: #{_lambda_.54} parent=0 // pred_fallthru
    _
  // Predicated region
  $region22: #{_lambda_.54} parent=0 // pred_check
    _
  $region23: #{_lambda_.54} parent=0 // pred_check_branch
    %1180 = sbr.rel (0) target = $region25
  $region24: #{_lambda_.54} parent=0 // pred_region
    _
  $region25: #{_lambda_.54} parent=0 // pred_fallthru
    _

// kernel: _lambda_.55
$region0: #{_lambda_.55}
  #allocation0 [shape = 'u32[]', space=smem, size = 0x4, offset = 0x4, fixed_abs, tag = 'smem constant byte address 0x4 - core index']
  #allocation1 [shape = 'u32[144,128]{1,0:T(1,128)}', space=vmem, size = 0x12000, scoped, tag = 'internal scratch']
  %s0 = inlined_call_operand.vmem [shape: bf16[2,9,9,24], index: 0, kind: input, shape index: {}]
  %s1 = inlined_call_operand.vmem [shape: bf16[2,9,9,24], index: 1, kind: input, shape index: {}]
  %s2 = inlined_call_operand.vmem [shape: bf16[2,9,9,24], index: 2, kind: input, shape index: {}]
  %s3 = inlined_call_operand.vmem [shape: bf16[2,9,9,24], index: 3, kind: input, shape index: {}]
  %s4 = inlined_call_operand.vmem [shape: bf16[2,8,8,24], index: 4, kind: output, shape index: {}]
  %s5 = sld [smem:[#allocation0]]
  $region49: #{_lambda_.55} parent=0
    _
  %s7 = ssub.s32 1, %s5
  %s8 = scalar_select 0, %s7, %s5
  loop: start=0, step=1, limit=4
  $region2: #{_lambda_.55} parent=0 // loop_pre_header
    _
  $region3: #{_lambda_.55} parent=0 // loop_header
    %s10 = sphi 0, %s14
    %p11 = scmp.ge.s32.totalorder %s10, 4
    %s20 = sphi 0, %s22
    %s23 = sphi 0, %s20
    %s24 = sphi 0, %s23
    %s40 = sphi 0, %s24
    %s46 = sphi 0, %s48
    %s49 = sphi 0, %s46
    %s50 = sphi 0, %s49
    %s66 = sphi 0, %s50
    %s72 = sphi 0, %s74
    %s75 = sphi 0, %s72
    %s76 = sphi 0, %s75
    %s92 = sphi 0, %s76
    %s98 = sphi 0, %s100
    %s101 = sphi 0, %s98
    %s102 = sphi 0, %s101
    %s118 = sphi 0, %s102
    %s124 = sphi 0, %s126
    %s127 = sphi 0, %s124
    %s128 = sphi 0, %s127
    %s144 = sphi 0, %s128
  $region4: #{_lambda_.55} parent=0 // loop_header_branch
    %13 = sbr.rel (%p11) target = $region8
  $region5: #{_lambda_.55} parent=0 // loop_body
    %s15 = ssub.s32 %s10, 1
    %s16 = ssub.s32 %s10, 2
    %s17 = sadd.s32 %s10, 1
    %s18 = ssub.s32 %s10, %s17
    %p19 = scmp.eq.s32.totalorder %s18, 0
    %s21 = sadd.s32 %s20, 1
    %s22 = scalar_select %p19, %s20, %s21
    %p25 = pneg %p19
    %p26 = scmp.eq.s32.totalorder %s10, 1
    %p27 = por %p25, %p26
    %p28 = scmp.ne.s32.totalorder %s20, %s23
    %p29 = scmp.eq.s32.totalorder %s10, 0
    %p30 = por %p28, %p29
    %p31 = scmp.ne.s32.totalorder %s20, %s23
    %p32 = scmp.eq.s32.totalorder %s15, 1
    %p33 = por %p31, %p32
    %p34 = scmp.ne.s32.totalorder %s23, %s24
    %p35 = scmp.eq.s32.totalorder %s15, 0
    %p36 = por %p34, %p35
    %p37 = scmp.ne.s32.totalorder %s23, %s24
    %p38 = scmp.eq.s32.totalorder %s16, 1
    %p39 = por %p37, %p38
    %p41 = scmp.ne.s32.totalorder %s24, %s40
    %p42 = scmp.eq.s32.totalorder %s16, 0
    %p43 = por %p41, %p42
    %s44 = ssub.s32 %s10, %s17
    %p45 = scmp.eq.s32.totalorder %s44, 0
    %s47 = sadd.s32 %s46, 1
    %s48 = scalar_select %p45, %s46, %s47
    %p51 = pneg %p45
    %p52 = scmp.eq.s32.totalorder %s10, 1
    %p53 = por %p51, %p52
    %p54 = scmp.ne.s32.totalorder %s46, %s49
    %p55 = scmp.eq.s32.totalorder %s10, 0
    %p56 = por %p54, %p55
    %p57 = scmp.ne.s32.totalorder %s46, %s49
    %p58 = scmp.eq.s32.totalorder %s15, 1
    %p59 = por %p57, %p58
    %p60 = scmp.ne.s32.totalorder %s49, %s50
    %p61 = scmp.eq.s32.totalorder %s15, 0
    %p62 = por %p60, %p61
    %p63 = scmp.ne.s32.totalorder %s49, %s50
    %p64 = scmp.eq.s32.totalorder %s16, 1
    %p65 = por %p63, %p64
    %p67 = scmp.ne.s32.totalorder %s50, %s66
    %p68 = scmp.eq.s32.totalorder %s16, 0
    %p69 = por %p67, %p68
    %s70 = ssub.s32 %s10, %s17
    %p71 = scmp.eq.s32.totalorder %s70, 0
    %s73 = sadd.s32 %s72, 1
    %s74 = scalar_select %p71, %s72, %s73
    %p77 = pneg %p71
    %p78 = scmp.eq.s32.totalorder %s10, 1
    %p79 = por %p77, %p78
    %p80 = scmp.ne.s32.totalorder %s72, %s75
    %p81 = scmp.eq.s32.totalorder %s10, 0
    %p82 = por %p80, %p81
    %p83 = scmp.ne.s32.totalorder %s72, %s75
    %p84 = scmp.eq.s32.totalorder %s15, 1
    %p85 = por %p83, %p84
    %p86 = scmp.ne.s32.totalorder %s75, %s76
    %p87 = scmp.eq.s32.totalorder %s15, 0
    %p88 = por %p86, %p87
    %p89 = scmp.ne.s32.totalorder %s75, %s76
    %p90 = scmp.eq.s32.totalorder %s16, 1
    %p91 = por %p89, %p90
    %p93 = scmp.ne.s32.totalorder %s76, %s92
    %p94 = scmp.eq.s32.totalorder %s16, 0
    %p95 = por %p93, %p94
    %s96 = ssub.s32 %s10, %s17
    %p97 = scmp.eq.s32.totalorder %s96, 0
    %s99 = sadd.s32 %s98, 1
    %s100 = scalar_select %p97, %s98, %s99
    %p103 = pneg %p97
    %p104 = scmp.eq.s32.totalorder %s10, 1
    %p105 = por %p103, %p104
    %p106 = scmp.ne.s32.totalorder %s98, %s101
    %p107 = scmp.eq.s32.totalorder %s10, 0
    %p108 = por %p106, %p107
    %p109 = scmp.ne.s32.totalorder %s98, %s101
    %p110 = scmp.eq.s32.totalorder %s15, 1
    %p111 = por %p109, %p110
    %p112 = scmp.ne.s32.totalorder %s101, %s102
    %p113 = scmp.eq.s32.totalorder %s15, 0
    %p114 = por %p112, %p113
    %p115 = scmp.ne.s32.totalorder %s101, %s102
    %p116 = scmp.eq.s32.totalorder %s16, 1
    %p117 = por %p115, %p116
    %p119 = scmp.ne.s32.totalorder %s102, %s118
    %p120 = scmp.eq.s32.totalorder %s16, 0
    %p121 = por %p119, %p120
    %s122 = ssub.s32 %s10, %s17
    %p123 = scmp.eq.s32.totalorder %s122, 0
    %s125 = sadd.s32 %s124, 1
    %s126 = scalar_select %p123, %s124, %s125
    %p129 = pneg %p123
    %p130 = scmp.eq.s32.totalorder %s10, 1
    %p131 = por %p129, %p130
    %p132 = scmp.ne.s32.totalorder %s124, %s127
    %p133 = scmp.eq.s32.totalorder %s10, 0
    %p134 = por %p132, %p133
    %p135 = scmp.ne.s32.totalorder %s124, %s127
    %p136 = scmp.eq.s32.totalorder %s15, 1
    %p137 = por %p135, %p136
    %p138 = scmp.ne.s32.totalorder %s127, %s128
    %p139 = scmp.eq.s32.totalorder %s15, 0
    %p140 = por %p138, %p139
    %p141 = scmp.ne.s32.totalorder %s127, %s128
    %p142 = scmp.eq.s32.totalorder %s16, 1
    %p143 = por %p141, %p142
    %p145 = scmp.ne.s32.totalorder %s128, %s144
    %p146 = scmp.eq.s32.totalorder %s16, 0
    %p147 = por %p145, %p146
    %p148 = scmp.le.s32.totalorder 1, %s10
    %p149 = scmp.lt.s32.totalorder %s10, 3
    %p150 = pnand %p148, %p149
    %p151 = pneg %p150
    // Predicated region
    $region9: #{_lambda_.55} parent=5 // pred_check
      _
    $region10: #{_lambda_.55} parent=5 // pred_check_branch
      %153 = sbr.rel (%p150) target = $region12
    $region11: #{_lambda_.55} parent=5 // pred_region
      %s154 = ssub.s32 %s10, 1
    $region12: #{_lambda_.55} parent=5 // pred_fallthru
      _
    %p155 = scmp.lt.s32.totalorder %s10, 2
    // Predicated region
    $region13: #{_lambda_.55} parent=5 // pred_check
      %p156 = pneg %p155
    $region14: #{_lambda_.55} parent=5 // pred_check_branch
      %158 = sbr.rel (%p156) target = $region16
    $region15: #{_lambda_.55} parent=5 // pred_region
      // Predicated region
      $region17: #{_lambda_.55} parent=15 // pred_check
        %p159 = pneg %p30
      $region18: #{_lambda_.55} parent=15 // pred_check_branch
        %161 = sbr.rel (%p159) target = $region20
      $region19: #{_lambda_.55} parent=15 // pred_region
        %p162 = scmp.lt.s32.totalorder %s10, 1
        %s163 = scalar_select %p162, %s10, 1
        %s164 = smul.addr %s163, 18
        %s165 = smul.addr %s164, 4
        %s166 = scalar_lea.vmem %s0, %s165
      $region20: #{_lambda_.55} parent=15 // pred_fallthru
        _
      // Predicated region
      $region21: #{_lambda_.55} parent=15 // pred_check
        %p167 = pneg %p56
      $region22: #{_lambda_.55} parent=15 // pred_check_branch
        %169 = sbr.rel (%p167) target = $region24
      $region23: #{_lambda_.55} parent=15 // pred_region
        %p170 = scmp.lt.s32.totalorder %s10, 1
        %s171 = scalar_select %p170, %s10, 1
        %s172 = smul.addr %s171, 18
        %s173 = smul.addr %s172, 4
        %s174 = scalar_lea.vmem %s1, %s173
      $region24: #{_lambda_.55} parent=15 // pred_fallthru
        _
      // Predicated region
      $region25: #{_lambda_.55} parent=15 // pred_check
        %p175 = pneg %p82
      $region26: #{_lambda_.55} parent=15 // pred_check_branch
        %177 = sbr.rel (%p175) target = $region28
      $region27: #{_lambda_.55} parent=15 // pred_region
        %p178 = scmp.lt.s32.totalorder %s10, 1
        %s179 = scalar_select %p178, %s10, 1
        %s180 = smul.addr %s179, 18
        %s181 = smul.addr %s180, 4
        %s182 = scalar_lea.vmem %s2, %s181
      $region28: #{_lambda_.55} parent=15 // pred_fallthru
        _
      // Predicated region
      $region29: #{_lambda_.55} parent=15 // pred_check
        %p183 = pneg %p108
      $region30: #{_lambda_.55} parent=15 // pred_check_branch
        %185 = sbr.rel (%p183) target = $region32
      $region31: #{_lambda_.55} parent=15 // pred_region
        %p186 = scmp.lt.s32.totalorder %s10, 1
        %s187 = scalar_select %p186, %s10, 1
        %s188 = smul.addr %s187, 18
        %s189 = smul.addr %s188, 4
        %s190 = scalar_lea.vmem %s3, %s189
      $region32: #{_lambda_.55} parent=15 // pred_fallthru
        _
    $region16: #{_lambda_.55} parent=5 // pred_fallthru
      _
    %p191 = scmp.le.s32.totalorder 1, %s10
    %p192 = scmp.lt.s32.totalorder %s10, 3
    %p193 = pnand %p191, %p192
    %p194 = pneg %p193
    // Predicated region
    $region33: #{_lambda_.55} parent=5 // pred_check
      _
    $region34: #{_lambda_.55} parent=5 // pred_check_branch
      %196 = sbr.rel (%p193) target = $region36
    $region35: #{_lambda_.55} parent=5 // pred_region
      %s197 = ssub.s32 %s10, 1
      %p198 = scmp.lt.s32.totalorder %s15, 1
      %s199 = scalar_select %p198, %s15, 1
      %s200 = smul.addr %s199, 18
      %s201 = smul.addr %s200, 4
      %s202 = scalar_lea.vmem %s0, %s201
      %p203 = pneg %p36
      %p204 = pneg %p33
      %p205 = scmp.lt.s32.totalorder %s15, 1
      %s206 = scalar_select %p205, %s15, 1
      %s207 = smul.addr %s206, 18
      %s208 = smul.addr %s207, 4
      %s209 = scalar_lea.vmem %s1, %s208
      %p210 = pneg %p62
      %p211 = pneg %p59
      %p212 = scmp.lt.s32.totalorder %s15, 1
      %s213 = scalar_select %p212, %s15, 1
      %s214 = smul.addr %s213, 18
      %s215 = smul.addr %s214, 4
      %s216 = scalar_lea.vmem %s2, %s215
      %p217 = pneg %p88
      %p218 = pneg %p85
      %p219 = scmp.lt.s32.totalorder %s15, 1
      %s220 = scalar_select %p219, %s15, 1
      %s221 = smul.addr %s220, 18
      %s222 = smul.addr %s221, 4
      %s223 = scalar_lea.vmem %s3, %s222
      %p224 = pneg %p114
      %p225 = pneg %p111
      %p226 = pneg %p140
      %p227 = pneg %p137
      %p228 = scmp.lt.s32.totalorder %s15, 1
      %s229 = scalar_select %p228, %s15, 1
      %s230 = smul.addr %s229, 8
      %s231 = smul.addr %s230, 4
      %s232 = scalar_lea.vmem %s4, %s231
      %p233 = scmp.lt.s32.totalorder %s15, 1
      %s234 = scalar_select %p233, %s15, 1
      %s235 = smul.addr %s234, 18
      %s236 = smul.addr %s235, 4
      %s237 = scalar_lea.vmem %s0, %s236
      %p238 = scmp.lt.s32.totalorder %s15, 1
      %s239 = scalar_select %p238, %s15, 1
      %s240 = smul.addr %s239, 18
      %s241 = smul.addr %s240, 4
      %s242 = scalar_lea.vmem %s1, %s241
      %p243 = scmp.lt.s32.totalorder %s15, 1
      %s244 = scalar_select %p243, %s15, 1
      %s245 = smul.addr %s244, 18
      %s246 = smul.addr %s245, 4
      %s247 = scalar_lea.vmem %s2, %s246
      %p248 = scmp.lt.s32.totalorder %s15, 1
      %s249 = scalar_select %p248, %s15, 1
      %s250 = smul.addr %s249, 18
      %s251 = smul.addr %s250, 4
      %s252 = scalar_lea.vmem %s3, %s251
      %p253 = scmp.lt.s32.totalorder %s15, 1
      %s254 = scalar_select %p253, %s15, 1
      %s255 = smul.addr %s254, 8
      %s256 = smul.addr %s255, 4
      %s257 = scalar_lea.vmem %s4, %s256
      %v258 = vld [vmem:[%s237] sm:$0xf]
      %v259 = vld [vmem:[%s237 + $0x8] sm:$0xf]
      %v260 = vld [vmem:[%s237 + $0x10] sm:$0xf]
      %v261 = vld [vmem:[%s237 + $0x18] sm:$0xf]
      %v262 = vld [vmem:[%s237 + $0x20] sm:$0xf]
      %v263 = vld [vmem:[%s237 + $0x28] sm:$0xf]
      %v264 = vld [vmem:[%s237 + $0x30] sm:$0xf]
      %v265 = vld [vmem:[%s237 + $0x38] sm:$0xf]
      %v266 = vunpack.c.l.bf16 %v258
      %v267 = vunpack.c.l.bf16 %v259
      %v268 = vunpack.c.l.bf16 %v260
      %v269 = vunpack.c.l.bf16 %v261
      %v270 = vunpack.c.l.bf16 %v262
      %v271 = vunpack.c.l.bf16 %v263
      %v272 = vunpack.c.l.bf16 %v264
      %v273 = vunpack.c.l.bf16 %v265
      %v274 = vld [vmem:[%s242] sm:$0xf]
      %v275 = vld [vmem:[%s242 + $0x8] sm:$0xf]
      %v276 = vld [vmem:[%s242 + $0x10] sm:$0xf]
      %v277 = vld [vmem:[%s242 + $0x18] sm:$0xf]
      %v278 = vld [vmem:[%s242 + $0x20] sm:$0xf]
      %v279 = vld [vmem:[%s242 + $0x28] sm:$0xf]
      %v280 = vld [vmem:[%s242 + $0x30] sm:$0xf]
      %v281 = vld [vmem:[%s242 + $0x38] sm:$0xf]
      %v282 = vunpack.c.l.bf16 %v274
      %v283 = vunpack.c.l.bf16 %v275
      %v284 = vunpack.c.l.bf16 %v276
      %v285 = vunpack.c.l.bf16 %v277
      %v286 = vunpack.c.l.bf16 %v278
      %v287 = vunpack.c.l.bf16 %v279
      %v288 = vunpack.c.l.bf16 %v280
      %v289 = vunpack.c.l.bf16 %v281
      %v290 = vld [vmem:[%s237 + $0x4] sm:$0x1]
      %v291 = vld [vmem:[%s237 + $0xc] sm:$0x1]
      %v292 = vld [vmem:[%s237 + $0x14] sm:$0x1]
      %v293 = vld [vmem:[%s237 + $0x1c] sm:$0x1]
      %v294 = vld [vmem:[%s237 + $0x24] sm:$0x1]
      %v295 = vld [vmem:[%s237 + $0x2c] sm:$0x1]
      %v296 = vld [vmem:[%s237 + $0x34] sm:$0x1]
      %v297 = vld [vmem:[%s237 + $0x3c] sm:$0x1]
      %v298 = vunpack.c.l.bf16 %v290
      %v299 = vunpack.c.l.bf16 %v291
      %v300 = vunpack.c.l.bf16 %v292
      %v301 = vunpack.c.l.bf16 %v293
      %v302 = vunpack.c.l.bf16 %v294
      %v303 = vunpack.c.l.bf16 %v295
      %v304 = vunpack.c.l.bf16 %v296
      %v305 = vunpack.c.l.bf16 %v297
      %v306 = vld [vmem:[%s247] sm:$0xf]
      %v307 = vld [vmem:[%s247 + $0x8] sm:$0xf]
      %v308 = vld [vmem:[%s247 + $0x10] sm:$0xf]
      %v309 = vld [vmem:[%s247 + $0x18] sm:$0xf]
      %v310 = vld [vmem:[%s247 + $0x20] sm:$0xf]
      %v311 = vld [vmem:[%s247 + $0x28] sm:$0xf]
      %v312 = vld [vmem:[%s247 + $0x30] sm:$0xf]
      %v313 = vld [vmem:[%s247 + $0x38] sm:$0xf]
      %v314 = vunpack.c.l.bf16 %v306
      %v315 = vunpack.c.l.bf16 %v307
      %v316 = vunpack.c.l.bf16 %v308
      %v317 = vunpack.c.l.bf16 %v309
      %v318 = vunpack.c.l.bf16 %v310
      %v319 = vunpack.c.l.bf16 %v311
      %v320 = vunpack.c.l.bf16 %v312
      %v321 = vunpack.c.l.bf16 %v313
      %v322 = vld [vmem:[%s252] sm:$0xf]
      %v323 = vld [vmem:[%s252 + $0x8] sm:$0xf]
      %v324 = vld [vmem:[%s252 + $0x10] sm:$0xf]
      %v325 = vld [vmem:[%s252 + $0x18] sm:$0xf]
      %v326 = vld [vmem:[%s252 + $0x20] sm:$0xf]
      %v327 = vld [vmem:[%s252 + $0x28] sm:$0xf]
      %v328 = vld [vmem:[%s252 + $0x30] sm:$0xf]
      %v329 = vld [vmem:[%s252 + $0x38] sm:$0xf]
      %v330 = vunpack.c.l.bf16 %v322
      %v331 = vunpack.c.l.bf16 %v323
      %v332 = vunpack.c.l.bf16 %v324
      %v333 = vunpack.c.l.bf16 %v325
      %v334 = vunpack.c.l.bf16 %v326
      %v335 = vunpack.c.l.bf16 %v327
      %v336 = vunpack.c.l.bf16 %v328
      %v337 = vunpack.c.l.bf16 %v329
      %v338 = vld [vmem:[%s247 + $0x4] sm:$0x1]
      %v339 = vld [vmem:[%s247 + $0xc] sm:$0x1]
      %v340 = vld [vmem:[%s247 + $0x14] sm:$0x1]
      %v341 = vld [vmem:[%s247 + $0x1c] sm:$0x1]
      %v342 = vld [vmem:[%s247 + $0x24] sm:$0x1]
      %v343 = vld [vmem:[%s247 + $0x2c] sm:$0x1]
      %v344 = vld [vmem:[%s247 + $0x34] sm:$0x1]
      %v345 = vld [vmem:[%s247 + $0x3c] sm:$0x1]
      %v346 = vunpack.c.l.bf16 %v338
      %v347 = vunpack.c.l.bf16 %v339
      %v348 = vunpack.c.l.bf16 %v340
      %v349 = vunpack.c.l.bf16 %v341
      %v350 = vunpack.c.l.bf16 %v342
      %v351 = vunpack.c.l.bf16 %v343
      %v352 = vunpack.c.l.bf16 %v344
      %v353 = vunpack.c.l.bf16 %v345
      %s354 = scalar_lea.vmem %s237, 8
      %v355 = vld [vmem:[%s354] sm:$0xf]
      %v356 = vld [vmem:[%s354 + $0x8] sm:$0xf]
      %v357 = vld [vmem:[%s354 + $0x10] sm:$0xf]
      %v358 = vld [vmem:[%s354 + $0x18] sm:$0xf]
      %v359 = vld [vmem:[%s354 + $0x20] sm:$0xf]
      %v360 = vld [vmem:[%s354 + $0x28] sm:$0xf]
      %v361 = vld [vmem:[%s354 + $0x30] sm:$0xf]
      %v362 = vld [vmem:[%s354 + $0x38] sm:$0xf]
      %v363 = vunpack.c.l.bf16 %v355
      %v364 = vunpack.c.l.bf16 %v356
      %v365 = vunpack.c.l.bf16 %v357
      %v366 = vunpack.c.l.bf16 %v358
      %v367 = vunpack.c.l.bf16 %v359
      %v368 = vunpack.c.l.bf16 %v360
      %v369 = vunpack.c.l.bf16 %v361
      %v370 = vunpack.c.l.bf16 %v362
      %s371 = scalar_lea.vmem %s242, 8
      %v372 = vld [vmem:[%s371] sm:$0xf]
      %v373 = vld [vmem:[%s371 + $0x8] sm:$0xf]
      %v374 = vld [vmem:[%s371 + $0x10] sm:$0xf]
      %v375 = vld [vmem:[%s371 + $0x18] sm:$0xf]
      %v376 = vld [vmem:[%s371 + $0x20] sm:$0xf]
      %v377 = vld [vmem:[%s371 + $0x28] sm:$0xf]
      %v378 = vld [vmem:[%s371 + $0x30] sm:$0xf]
      %v379 = vld [vmem:[%s371 + $0x38] sm:$0xf]
      %v380 = vunpack.c.l.bf16 %v372
      %v381 = vunpack.c.l.bf16 %v373
      %v382 = vunpack.c.l.bf16 %v374
      %v383 = vunpack.c.l.bf16 %v375
      %v384 = vunpack.c.l.bf16 %v376
      %v385 = vunpack.c.l.bf16 %v377
      %v386 = vunpack.c.l.bf16 %v378
      %v387 = vunpack.c.l.bf16 %v379
      %v388 = vld [vmem:[%s354 + $0x4] sm:$0x1]
      %v389 = vld [vmem:[%s354 + $0xc] sm:$0x1]
      %v390 = vld [vmem:[%s354 + $0x14] sm:$0x1]
      %v391 = vld [vmem:[%s354 + $0x1c] sm:$0x1]
      %v392 = vld [vmem:[%s354 + $0x24] sm:$0x1]
      %v393 = vld [vmem:[%s354 + $0x2c] sm:$0x1]
      %v394 = vld [vmem:[%s354 + $0x34] sm:$0x1]
      %v395 = vld [vmem:[%s354 + $0x3c] sm:$0x1]
      %v396 = vunpack.c.l.bf16 %v388
      %v397 = vunpack.c.l.bf16 %v389
      %v398 = vunpack.c.l.bf16 %v390
      %v399 = vunpack.c.l.bf16 %v391
      %v400 = vunpack.c.l.bf16 %v392
      %v401 = vunpack.c.l.bf16 %v393
      %v402 = vunpack.c.l.bf16 %v394
      %v403 = vunpack.c.l.bf16 %v395
      %v404 = vmax.f32 %v266, %v282
      %v405 = vmax.f32 %v267, %v283
      %v406 = vmax.f32 %v268, %v284
      %v407 = vmax.f32 %v269, %v285
      %v408 = vmax.f32 %v270, %v286
      %v409 = vmax.f32 %v271, %v287
      %v410 = vmax.f32 %v272, %v288
      %v411 = vmax.f32 %v273, %v289
      %vm428 = vcmask 1046528
      %v429 = vrot.slane %v266, 1
      %v430 = vrot.slane %v298, 1
      %v431 = vsel %vm428, %v429, %v430
      %v432 = vrot.slane %v267, 1
      %v433 = vrot.slane %v299, 1
      %v434 = vsel %vm428, %v432, %v433
      %v435 = vrot.slane %v268, 1
      %v436 = vrot.slane %v300, 1
      %v437 = vsel %vm428, %v435, %v436
      %v438 = vrot.slane %v269, 1
      %v439 = vrot.slane %v301, 1
      %v440 = vsel %vm428, %v438, %v439
      %v441 = vrot.slane %v270, 1
      %v442 = vrot.slane %v302, 1
      %v443 = vsel %vm428, %v441, %v442
      %v444 = vrot.slane %v271, 1
      %v445 = vrot.slane %v303, 1
      %v446 = vsel %vm428, %v444, %v445
      %v447 = vrot.slane %v272, 1
      %v448 = vrot.slane %v304, 1
      %v449 = vsel %vm428, %v447, %v448
      %v450 = vrot.slane %v273, 1
      %v451 = vrot.slane %v305, 1
      %v452 = vsel %vm428, %v450, %v451
      %v461 = vmax.f32 %v404, %v431
      %v462 = vmax.f32 %v405, %v434
      %v463 = vmax.f32 %v406, %v437
      %v464 = vmax.f32 %v407, %v440
      %v465 = vmax.f32 %v408, %v443
      %v466 = vmax.f32 %v409, %v446
      %v467 = vmax.f32 %v410, %v449
      %v468 = vmax.f32 %v411, %v452
      %v469 = vmax.f32 %v461, %v314
      %v470 = vmax.f32 %v462, %v315
      %v471 = vmax.f32 %v463, %v316
      %v472 = vmax.f32 %v464, %v317
      %v473 = vmax.f32 %v465, %v318
      %v474 = vmax.f32 %v466, %v319
      %v475 = vmax.f32 %v467, %v320
      %v476 = vmax.f32 %v468, %v321
      %v477 = vmax.f32 %v469, %v330
      %v478 = vmax.f32 %v470, %v331
      %v479 = vmax.f32 %v471, %v332
      %v480 = vmax.f32 %v472, %v333
      %v481 = vmax.f32 %v473, %v334
      %v482 = vmax.f32 %v474, %v335
      %v483 = vmax.f32 %v475, %v336
      %v484 = vmax.f32 %v476, %v337
      %v501 = vrot.slane %v314, 1
      %v502 = vrot.slane %v346, 1
      %v503 = vsel %vm428, %v501, %v502
      %v504 = vrot.slane %v315, 1
      %v505 = vrot.slane %v347, 1
      %v506 = vsel %vm428, %v504, %v505
      %v507 = vrot.slane %v316, 1
      %v508 = vrot.slane %v348, 1
      %v509 = vsel %vm428, %v507, %v508
      %v510 = vrot.slane %v317, 1
      %v511 = vrot.slane %v349, 1
      %v512 = vsel %vm428, %v510, %v511
      %v513 = vrot.slane %v318, 1
      %v514 = vrot.slane %v350, 1
      %v515 = vsel %vm428, %v513, %v514
      %v516 = vrot.slane %v319, 1
      %v517 = vrot.slane %v351, 1
      %v518 = vsel %vm428, %v516, %v517
      %v519 = vrot.slane %v320, 1
      %v520 = vrot.slane %v352, 1
      %v521 = vsel %vm428, %v519, %v520
      %v522 = vrot.slane %v321, 1
      %v523 = vrot.slane %v353, 1
      %v524 = vsel %vm428, %v522, %v523
      %v533 = vmax.f32 %v477, %v503
      %v534 = vmax.f32 %v478, %v506
      %v535 = vmax.f32 %v479, %v509
      %v536 = vmax.f32 %v480, %v512
      %v537 = vmax.f32 %v481, %v515
      %v538 = vmax.f32 %v482, %v518
      %v539 = vmax.f32 %v483, %v521
      %v540 = vmax.f32 %v484, %v524
      %v541 = vmax.f32 %v533, %v363
      %v542 = vmax.f32 %v534, %v364
      %v543 = vmax.f32 %v535, %v365
      %v544 = vmax.f32 %v536, %v366
      %v545 = vmax.f32 %v537, %v367
      %v546 = vmax.f32 %v538, %v368
      %v547 = vmax.f32 %v539, %v369
      %v548 = vmax.f32 %v540, %v370
      %v549 = vmax.f32 %v541, %v380
      %v550 = vmax.f32 %v542, %v381
      %v551 = vmax.f32 %v543, %v382
      %v552 = vmax.f32 %v544, %v383
      %v553 = vmax.f32 %v545, %v384
      %v554 = vmax.f32 %v546, %v385
      %v555 = vmax.f32 %v547, %v386
      %v556 = vmax.f32 %v548, %v387
      %v573 = vrot.slane %v363, 1
      %v574 = vrot.slane %v396, 1
      %v575 = vsel %vm428, %v573, %v574
      %v576 = vrot.slane %v364, 1
      %v577 = vrot.slane %v397, 1
      %v578 = vsel %vm428, %v576, %v577
      %v579 = vrot.slane %v365, 1
      %v580 = vrot.slane %v398, 1
      %v581 = vsel %vm428, %v579, %v580
      %v582 = vrot.slane %v366, 1
      %v583 = vrot.slane %v399, 1
      %v584 = vsel %vm428, %v582, %v583
      %v585 = vrot.slane %v367, 1
      %v586 = vrot.slane %v400, 1
      %v587 = vsel %vm428, %v585, %v586
      %v588 = vrot.slane %v368, 1
      %v589 = vrot.slane %v401, 1
      %v590 = vsel %vm428, %v588, %v589
      %v591 = vrot.slane %v369, 1
      %v592 = vrot.slane %v402, 1
      %v593 = vsel %vm428, %v591, %v592
      %v594 = vrot.slane %v370, 1
      %v595 = vrot.slane %v403, 1
      %v596 = vsel %vm428, %v594, %v595
      %v605 = vmax.f32 %v549, %v575
      %v606 = vmax.f32 %v550, %v578
      %v607 = vmax.f32 %v551, %v581
      %v608 = vmax.f32 %v552, %v584
      %v609 = vmax.f32 %v553, %v587
      %v610 = vmax.f32 %v554, %v590
      %v611 = vmax.f32 %v555, %v593
      %v612 = vmax.f32 %v556, %v596
      %v613 = vpack.c.bf16 %v605, %v605
      %v614 = vpack.c.bf16 %v606, %v606
      %v615 = vpack.c.bf16 %v607, %v607
      %v616 = vpack.c.bf16 %v608, %v608
      %v617 = vpack.c.bf16 %v609, %v609
      %v618 = vpack.c.bf16 %v610, %v610
      %v619 = vpack.c.bf16 %v611, %v611
      %v620 = vpack.c.bf16 %v612, %v612
      %vm621 = vcmask 191488
      %622 = vst.msk [vmem:[%s257] sm:$0xf] %vm621, %v613
      %623 = vst.msk [vmem:[%s257 + $0x4] sm:$0xf] %vm621, %v614
      %624 = vst.msk [vmem:[%s257 + $0x8] sm:$0xf] %vm621, %v615
      %625 = vst.msk [vmem:[%s257 + $0xc] sm:$0xf] %vm621, %v616
      %626 = vst.msk [vmem:[%s257 + $0x10] sm:$0xf] %vm621, %v617
      %627 = vst.msk [vmem:[%s257 + $0x14] sm:$0xf] %vm621, %v618
      %628 = vst.msk [vmem:[%s257 + $0x18] sm:$0xf] %vm621, %v619
      %629 = vst.msk [vmem:[%s257 + $0x1c] sm:$0xf] %vm621, %v620
      %p630 = scmp.lt.s32.totalorder %s15, 1
      %s631 = scalar_select %p630, %s15, 1
      %s632 = smul.addr %s631, 8
      %s633 = smul.addr %s632, 4
      %s634 = scalar_lea.vmem %s4, %s633
      // Predicated region
      $region37: #{_lambda_.55} parent=35 // pred_check
        %p635 = pneg %p137
      $region38: #{_lambda_.55} parent=35 // pred_check_branch
        %637 = sbr.rel (%p635) target = $region40
      $region39: #{_lambda_.55} parent=35 // pred_region
        _
      $region40: #{_lambda_.55} parent=35 // pred_fallthru
        _
    $region36: #{_lambda_.55} parent=5 // pred_fallthru
      _
    %p638 = scmp.le.s32.totalorder 2, %s10
    // Predicated region
    $region41: #{_lambda_.55} parent=5 // pred_check
      %p639 = pneg %p638
    $region42: #{_lambda_.55} parent=5 // pred_check_branch
      %641 = sbr.rel (%p639) target = $region44
    $region43: #{_lambda_.55} parent=5 // pred_region
      %s642 = ssub.s32 %s10, 2
      // Predicated region
      $region45: #{_lambda_.55} parent=43 // pred_check
        %p643 = pneg %p143
      $region46: #{_lambda_.55} parent=43 // pred_check_branch
        %645 = sbr.rel (%p643) target = $region48
      $region47: #{_lambda_.55} parent=43 // pred_region
        %p646 = scmp.lt.s32.totalorder %s16, 1
        %s647 = scalar_select %p646, %s16, 1
        %s648 = smul.addr %s647, 8
        %s649 = smul.addr %s648, 4
        %s650 = scalar_lea.vmem %s4, %s649
      $region48: #{_lambda_.55} parent=43 // pred_fallthru
        _
    $region44: #{_lambda_.55} parent=5 // pred_fallthru
      _
  $region6: #{_lambda_.55} parent=0 // loop_footer
    %s14 = sadd.s32 1, %s10
  $region7: #{_lambda_.55} parent=0 // loop_footer_branch
    %9 = sbr.rel target = $region3
  $region8: #{_lambda_.55} parent=0 // loop_exit
    _

// kernel: _lambda_.56
$region0: #{_lambda_.56}
  #allocation0 [shape = 'u32[]', space=smem, size = 0x4, offset = 0x4, fixed_abs, tag = 'smem constant byte address 0x4 - core index']
  #allocation1 [shape = 'u32[144,128]{1,0:T(1,128)}', space=vmem, size = 0x12000, scoped, tag = 'internal scratch']
  %s0 = inlined_call_operand.vmem [shape: bf16[128,24], index: 0, kind: input, shape index: {}]
  %s1 = inlined_call_operand.vmem [shape: bf16[24,10], index: 1, kind: input, shape index: {}]
  %s2 = inlined_call_operand.vmem [shape: f32[1,10], index: 2, kind: input, shape index: {}]
  %s3 = inlined_call_operand.vmem [shape: f32[1,10], index: 3, kind: input, shape index: {}]
  %s4 = inlined_call_operand.vmem [shape: bf16[128,10], index: 4, kind: output, shape index: {}]
  %s5 = sld [smem:[#allocation0]]
  $region26: #{_lambda_.56} parent=0
    _
  %s7 = ssub.s32 1, %s5
  %s8 = scalar_select 0, %s7, %s5
  // Predicated region
  $region2: #{_lambda_.56} parent=0 // pred_check
    _
  $region3: #{_lambda_.56} parent=0 // pred_check_branch
    %10 = sbr.rel (0) target = $region5
  $region4: #{_lambda_.56} parent=0 // pred_region
    _
  $region5: #{_lambda_.56} parent=0 // pred_fallthru
    _
  // Predicated region
  $region6: #{_lambda_.56} parent=0 // pred_check
    _
  $region7: #{_lambda_.56} parent=0 // pred_check_branch
    %12 = sbr.rel (0) target = $region9
  $region8: #{_lambda_.56} parent=0 // pred_region
    _
  $region9: #{_lambda_.56} parent=0 // pred_fallthru
    _
  // Predicated region
  $region10: #{_lambda_.56} parent=0 // pred_check
    _
  $region11: #{_lambda_.56} parent=0 // pred_check_branch
    %14 = sbr.rel (0) target = $region13
  $region12: #{_lambda_.56} parent=0 // pred_region
    _
  $region13: #{_lambda_.56} parent=0 // pred_fallthru
    _
  // Predicated region
  $region14: #{_lambda_.56} parent=0 // pred_check
    _
  $region15: #{_lambda_.56} parent=0 // pred_check_branch
    %16 = sbr.rel (0) target = $region17
  $region16: #{_lambda_.56} parent=0 // pred_region
    _
  $region17: #{_lambda_.56} parent=0 // pred_fallthru
    _
  %v18 = vld [vmem:[%s0] sm:$0xf]
  %v19 = vld [vmem:[%s0 + $0x4] sm:$0xf]
  %v20 = vld [vmem:[%s0 + $0x8] sm:$0xf]
  %v21 = vld [vmem:[%s0 + $0xc] sm:$0xf]
  %v22 = vld [vmem:[%s0 + $0x10] sm:$0xf]
  %v23 = vld [vmem:[%s0 + $0x14] sm:$0xf]
  %v24 = vld [vmem:[%s0 + $0x18] sm:$0xf]
  %v25 = vld [vmem:[%s0 + $0x1c] sm:$0xf]
  %v26 = vld [vmem:[%s0 + $0x20] sm:$0xf]
  %v27 = vld [vmem:[%s0 + $0x24] sm:$0xf]
  %v28 = vld [vmem:[%s0 + $0x28] sm:$0xf]
  %v29 = vld [vmem:[%s0 + $0x2c] sm:$0xf]
  %v30 = vld [vmem:[%s0 + $0x30] sm:$0xf]
  %v31 = vld [vmem:[%s0 + $0x34] sm:$0xf]
  %v32 = vld [vmem:[%s0 + $0x38] sm:$0xf]
  %v33 = vld [vmem:[%s0 + $0x3c] sm:$0xf]
  %v34 = vld [vmem:[%s1] sm:$0xf]
  %v35 = vld [vmem:[%s1 + $0x4] sm:$0xf]
  %v36 = vld [vmem:[%s1 + $0x8] sm:$0xf]
  %v53 = vunpack.c.l.b16 %v18
  %v54 = vunpack.c.l.b16 %v19
  %v55 = vunpack.c.l.b16 %v20
  %v56 = vunpack.c.l.b16 %v21
  %v57 = vunpack.c.l.b16 %v22
  %v58 = vunpack.c.l.b16 %v23
  %v59 = vunpack.c.l.b16 %v24
  %v60 = vunpack.c.l.b16 %v25
  %v61 = vunpack.c.l.b16 %v26
  %v62 = vunpack.c.l.b16 %v27
  %v63 = vunpack.c.l.b16 %v28
  %v64 = vunpack.c.l.b16 %v29
  %v65 = vunpack.c.l.b16 %v30
  %v66 = vunpack.c.l.b16 %v31
  %v67 = vunpack.c.l.b16 %v32
  %v68 = vunpack.c.l.b16 %v33
  %v69 = vpack.c.b16 %v54, %v53
  %v70 = vpack.c.b16 %v56, %v55
  %v71 = vpack.c.b16 %v58, %v57
  %v72 = vpack.c.b16 %v60, %v59
  %v73 = vpack.c.b16 %v62, %v61
  %v74 = vpack.c.b16 %v64, %v63
  %v75 = vpack.c.b16 %v66, %v65
  %v76 = vpack.c.b16 %v68, %v67
  %v80 = vunpack.c.l.b16 %v34
  %v81 = vunpack.c.l.b16 %v35
  %v82 = vunpack.c.l.b16 %v36
  %v83 = vpack.c.b16 %v81, %v80
  %v84 = vpack.c.b16 %v82, %v82
  %vm86 = vcmask 195584
  %v88 = vsel %vm86, %v69, 0
  %v91 = vsel %vm86, %v70, 0
  %v94 = vsel %vm86, %v71, 0
  %v97 = vsel %vm86, %v72, 0
  %v100 = vsel %vm86, %v73, 0
  %v103 = vsel %vm86, %v74, 0
  %v106 = vsel %vm86, %v75, 0
  %v109 = vsel %vm86, %v76, 0
  %vm111 = vcmask 1043456
  %v113 = vsel %vm111, %v84, 0
  %115 = vmatprep.subr.bf16.mxu0 0
  %116 = vmatpush1.bf16.msra.mxu0 0
  %117 = vmatprep.subr.bf16.mxu0 0
  %118 = vmatpush1.bf16.msra.mxu0 0
  %119 = vmatprep.subr.bf16.mxu0 0
  %120 = vmatpush1.bf16.msra.mxu0 0
  %121 = vmatprep.subr.bf16.mxu0 0
  %122 = vmatpush1.bf16.msra.mxu0 0
  %123 = vmatprep.subr.bf16.mxu0 0
  %124 = vmatpush1.bf16.msra.mxu0 0
  %125 = vmatprep.subr.bf16.mxu0 0
  %126 = vmatpush1.bf16.msra.mxu0 0
  %127 = vmatprep.subr.bf16.mxu0 0
  %128 = vmatpush1.bf16.msra.mxu0 %v113
  %129 = vmatprep.subr.bf16.mxu0 0
  %130 = vmatpush1.bf16.msra.mxu0 %v83
  %131 = vmatprep.subr.bf16.mxu0 0
  %132 = vmatpush2.bf16.msra.mxu0 0
  %133 = vmatprep.subr.bf16.mxu0 0
  %134 = vmatpush2.bf16.msra.mxu0 0
  %135 = vmatprep.subr.bf16.mxu0 0
  %136 = vmatpush2.bf16.msra.mxu0 0
  %137 = vmatprep.subr.bf16.mxu0 0
  %138 = vmatpush2.bf16.msra.mxu0 0
  %139 = vmatprep.subr.bf16.mxu0 0
  %140 = vmatpush2.bf16.msra.mxu0 0
  %141 = vmatprep.subr.bf16.mxu0 0
  %142 = vmatpush2.bf16.msra.mxu0 0
  %143 = vmatprep.subr.bf16.mxu0 0
  %144 = vmatpush2.bf16.msra.mxu0 0
  %145 = vmatprep.subr.bf16.mxu0 0
  %146 = vmatpush2.bf16.msra.mxu0 0
  %147 = vmatprep.mubr.bf16.mxu0 0
  %148 = vmatmul.mubr.bf16.gmra.mxu0 %v88
  %v149 = vpop.f32.mrf.mxu0
  %v150 = vadd.f32 0.0, %v149
  %v151 = vpop.f32.mrf.mxu0
  %v152 = vpop.f32.mrf.mxu0
  %v153 = vadd.f32 0.0, %v152
  %v154 = vpop.f32.mrf.mxu0
  %155 = vmatprep.mubr.bf16.mxu0 0
  %156 = vmatmul.mubr.bf16.gmra.mxu0 %v91
  %v157 = vpop.f32.mrf.mxu0
  %v158 = vadd.f32 0.0, %v157
  %v159 = vpop.f32.mrf.mxu0
  %v160 = vpop.f32.mrf.mxu0
  %v161 = vadd.f32 0.0, %v160
  %v162 = vpop.f32.mrf.mxu0
  %163 = vmatprep.mubr.bf16.mxu0 0
  %164 = vmatmul.mubr.bf16.gmra.mxu0 %v94
  %v165 = vpop.f32.mrf.mxu0
  %v166 = vadd.f32 0.0, %v165
  %v167 = vpop.f32.mrf.mxu0
  %v168 = vpop.f32.mrf.mxu0
  %v169 = vadd.f32 0.0, %v168
  %v170 = vpop.f32.mrf.mxu0
  %171 = vmatprep.mubr.bf16.mxu0 0
  %172 = vmatmul.mubr.bf16.gmra.mxu0 %v97
  %v173 = vpop.f32.mrf.mxu0
  %v174 = vadd.f32 0.0, %v173
  %v175 = vpop.f32.mrf.mxu0
  %v176 = vpop.f32.mrf.mxu0
  %v177 = vadd.f32 0.0, %v176
  %v178 = vpop.f32.mrf.mxu0
  %179 = vmatprep.mubr.bf16.mxu0 0
  %180 = vmatmul.mubr.bf16.gmra.mxu0 %v100
  %v181 = vpop.f32.mrf.mxu0
  %v182 = vadd.f32 0.0, %v181
  %v183 = vpop.f32.mrf.mxu0
  %v184 = vpop.f32.mrf.mxu0
  %v185 = vadd.f32 0.0, %v184
  %v186 = vpop.f32.mrf.mxu0
  %187 = vmatprep.mubr.bf16.mxu0 0
  %188 = vmatmul.mubr.bf16.gmra.mxu0 %v103
  %v189 = vpop.f32.mrf.mxu0
  %v190 = vadd.f32 0.0, %v189
  %v191 = vpop.f32.mrf.mxu0
  %v192 = vpop.f32.mrf.mxu0
  %v193 = vadd.f32 0.0, %v192
  %v194 = vpop.f32.mrf.mxu0
  %195 = vmatprep.mubr.bf16.mxu0 0
  %196 = vmatmul.mubr.bf16.gmra.mxu0 %v106
  %v197 = vpop.f32.mrf.mxu0
  %v198 = vadd.f32 0.0, %v197
  %v199 = vpop.f32.mrf.mxu0
  %v200 = vpop.f32.mrf.mxu0
  %v201 = vadd.f32 0.0, %v200
  %v202 = vpop.f32.mrf.mxu0
  %203 = vmatprep.mubr.bf16.mxu0 0
  %204 = vmatmul.mubr.bf16.gmra.mxu0 %v109
  %v205 = vpop.f32.mrf.mxu0
  %v206 = vadd.f32 0.0, %v205
  %v207 = vpop.f32.mrf.mxu0
  %v208 = vpop.f32.mrf.mxu0
  %v209 = vadd.f32 0.0, %v208
  %v210 = vpop.f32.mrf.mxu0
  %211 = vdwg.mxu0
  %v212 = vld [vmem:[%s2] sm:$0x1]
  %v214 = vlaneseq
  %v215 = vshrl.u32 %v214, 7
  %v216 = vsub.s32 0, %v215
  %v217 = vrot.slane %v212, %v216
  %v219 = vmul.f32 %v150, %v217
  %v220 = vmul.f32 %v153, %v217
  %v221 = vmul.f32 %v158, %v217
  %v222 = vmul.f32 %v161, %v217
  %v223 = vmul.f32 %v166, %v217
  %v224 = vmul.f32 %v169, %v217
  %v225 = vmul.f32 %v174, %v217
  %v226 = vmul.f32 %v177, %v217
  %v227 = vmul.f32 %v182, %v217
  %v228 = vmul.f32 %v185, %v217
  %v229 = vmul.f32 %v190, %v217
  %v230 = vmul.f32 %v193, %v217
  %v231 = vmul.f32 %v198, %v217
  %v232 = vmul.f32 %v201, %v217
  %v233 = vmul.f32 %v206, %v217
  %v234 = vmul.f32 %v209, %v217
  %v235 = vld [vmem:[%s3] sm:$0x1]
  %v237 = vlaneseq
  %v238 = vshrl.u32 %v237, 7
  %v239 = vsub.s32 0, %v238
  %v240 = vrot.slane %v235, %v239
  %v242 = vadd.f32 %v219, %v240
  %v243 = vadd.f32 %v220, %v240
  %v244 = vadd.f32 %v221, %v240
  %v245 = vadd.f32 %v222, %v240
  %v246 = vadd.f32 %v223, %v240
  %v247 = vadd.f32 %v224, %v240
  %v248 = vadd.f32 %v225, %v240
  %v249 = vadd.f32 %v226, %v240
  %v250 = vadd.f32 %v227, %v240
  %v251 = vadd.f32 %v228, %v240
  %v252 = vadd.f32 %v229, %v240
  %v253 = vadd.f32 %v230, %v240
  %v254 = vadd.f32 %v231, %v240
  %v255 = vadd.f32 %v232, %v240
  %v256 = vadd.f32 %v233, %v240
  %v257 = vadd.f32 %v234, %v240
  %v258 = vmax.f32 %v242, 0.0
  %v259 = vmax.f32 %v243, 0.0
  %v260 = vmax.f32 %v244, 0.0
  %v261 = vmax.f32 %v245, 0.0
  %v262 = vmax.f32 %v246, 0.0
  %v263 = vmax.f32 %v247, 0.0
  %v264 = vmax.f32 %v248, 0.0
  %v265 = vmax.f32 %v249, 0.0
  %v266 = vmax.f32 %v250, 0.0
  %v267 = vmax.f32 %v251, 0.0
  %v268 = vmax.f32 %v252, 0.0
  %v269 = vmax.f32 %v253, 0.0
  %v270 = vmax.f32 %v254, 0.0
  %v271 = vmax.f32 %v255, 0.0
  %v272 = vmax.f32 %v256, 0.0
  %v273 = vmax.f32 %v257, 0.0
  %v274 = vpack.c.bf16 %v259, %v258
  %v275 = vpack.c.bf16 %v261, %v260
  %v276 = vpack.c.bf16 %v263, %v262
  %v277 = vpack.c.bf16 %v265, %v264
  %v278 = vpack.c.bf16 %v267, %v266
  %v279 = vpack.c.bf16 %v269, %v268
  %v280 = vpack.c.bf16 %v271, %v270
  %v281 = vpack.c.bf16 %v273, %v272
  %v290 = vunpack.c.l.b16 %v274
  %v291 = vunpack.c.h.b16 %v274
  %v292 = vunpack.c.l.b16 %v275
  %v293 = vunpack.c.h.b16 %v275
  %v294 = vunpack.c.l.b16 %v276
  %v295 = vunpack.c.h.b16 %v276
  %v296 = vunpack.c.l.b16 %v277
  %v297 = vunpack.c.h.b16 %v277
  %v298 = vunpack.c.l.b16 %v278
  %v299 = vunpack.c.h.b16 %v278
  %v300 = vunpack.c.l.b16 %v279
  %v301 = vunpack.c.h.b16 %v279
  %v302 = vunpack.c.l.b16 %v280
  %v303 = vunpack.c.h.b16 %v280
  %v304 = vunpack.c.l.b16 %v281
  %v305 = vunpack.c.h.b16 %v281
  %v306 = vpack.c.b16 %v290, %v290
  %v307 = vpack.c.b16 %v291, %v291
  %v308 = vpack.c.b16 %v292, %v292
  %v309 = vpack.c.b16 %v293, %v293
  %v310 = vpack.c.b16 %v294, %v294
  %v311 = vpack.c.b16 %v295, %v295
  %v312 = vpack.c.b16 %v296, %v296
  %v313 = vpack.c.b16 %v297, %v297
  %v314 = vpack.c.b16 %v298, %v298
  %v315 = vpack.c.b16 %v299, %v299
  %v316 = vpack.c.b16 %v300, %v300
  %v317 = vpack.c.b16 %v301, %v301
  %v318 = vpack.c.b16 %v302, %v302
  %v319 = vpack.c.b16 %v303, %v303
  %v320 = vpack.c.b16 %v304, %v304
  %v321 = vpack.c.b16 %v305, %v305
  %vm338 = vcmask 76800
  %339 = vst.msk [vmem:[%s4] sm:$0xf] %vm338, %v306
  %340 = vst.msk [vmem:[%s4 + $0x4] sm:$0xf] %vm338, %v307
  %341 = vst.msk [vmem:[%s4 + $0x8] sm:$0xf] %vm338, %v308
  %342 = vst.msk [vmem:[%s4 + $0xc] sm:$0xf] %vm338, %v309
  %343 = vst.msk [vmem:[%s4 + $0x10] sm:$0xf] %vm338, %v310
  %344 = vst.msk [vmem:[%s4 + $0x14] sm:$0xf] %vm338, %v311
  %345 = vst.msk [vmem:[%s4 + $0x18] sm:$0xf] %vm338, %v312
  %346 = vst.msk [vmem:[%s4 + $0x1c] sm:$0xf] %vm338, %v313
  %347 = vst.msk [vmem:[%s4 + $0x20] sm:$0xf] %vm338, %v314
  %348 = vst.msk [vmem:[%s4 + $0x24] sm:$0xf] %vm338, %v315
  %349 = vst.msk [vmem:[%s4 + $0x28] sm:$0xf] %vm338, %v316
  %350 = vst.msk [vmem:[%s4 + $0x2c] sm:$0xf] %vm338, %v317
  %351 = vst.msk [vmem:[%s4 + $0x30] sm:$0xf] %vm338, %v318
  %352 = vst.msk [vmem:[%s4 + $0x34] sm:$0xf] %vm338, %v319
  %353 = vst.msk [vmem:[%s4 + $0x38] sm:$0xf] %vm338, %v320
  %354 = vst.msk [vmem:[%s4 + $0x3c] sm:$0xf] %vm338, %v321
  // Predicated region
  $region18: #{_lambda_.56} parent=0 // pred_check
    _
  $region19: #{_lambda_.56} parent=0 // pred_check_branch
    %356 = sbr.rel (0) target = $region21
  $region20: #{_lambda_.56} parent=0 // pred_region
    _
  $region21: #{_lambda_.56} parent=0 // pred_fallthru
    _
  // Predicated region
  $region22: #{_lambda_.56} parent=0 // pred_check
    _
  $region23: #{_lambda_.56} parent=0 // pred_check_branch
    %358 = sbr.rel (0) target = $region25
  $region24: #{_lambda_.56} parent=0 // pred_region
    _
  $region25: #{_lambda_.56} parent=0 // pred_fallthru
    _

// kernel: _lambda_.58
$region0: #{_lambda_.58}
  #allocation0 [shape = 'u32[]', space=smem, size = 0x4, offset = 0x4, fixed_abs, tag = 'smem constant byte address 0x4 - core index']
  #allocation1 [shape = 'u32[144,128]{1,0:T(1,128)}', space=vmem, size = 0x12000, scoped, tag = 'internal scratch']
  %s0 = inlined_call_operand.vmem [shape: bf16[32,10], index: 0, kind: input, shape index: {}]
  %s1 = inlined_call_operand.vmem [shape: bf16[10,16], index: 1, kind: input, shape index: {}]
  %s2 = inlined_call_operand.vmem [shape: f32[1,16], index: 2, kind: input, shape index: {}]
  %s3 = inlined_call_operand.vmem [shape: f32[1,16], index: 3, kind: input, shape index: {}]
  %s4 = inlined_call_operand.vmem [shape: bf16[32,16], index: 4, kind: output, shape index: {}]
  %s5 = sld [smem:[#allocation0]]
  $region26: #{_lambda_.58} parent=0
    _
  %s7 = ssub.s32 1, %s5
  %s8 = scalar_select 0, %s7, %s5
  // Predicated region
  $region2: #{_lambda_.58} parent=0 // pred_check
    _
  $region3: #{_lambda_.58} parent=0 // pred_check_branch
    %10 = sbr.rel (0) target = $region5
  $region4: #{_lambda_.58} parent=0 // pred_region
    _
  $region5: #{_lambda_.58} parent=0 // pred_fallthru
    _
  // Predicated region
  $region6: #{_lambda_.58} parent=0 // pred_check
    _
  $region7: #{_lambda_.58} parent=0 // pred_check_branch
    %12 = sbr.rel (0) target = $region9
  $region8: #{_lambda_.58} parent=0 // pred_region
    _
  $region9: #{_lambda_.58} parent=0 // pred_fallthru
    _
  // Predicated region
  $region10: #{_lambda_.58} parent=0 // pred_check
    _
  $region11: #{_lambda_.58} parent=0 // pred_check_branch
    %14 = sbr.rel (0) target = $region13
  $region12: #{_lambda_.58} parent=0 // pred_region
    _
  $region13: #{_lambda_.58} parent=0 // pred_fallthru
    _
  // Predicated region
  $region14: #{_lambda_.58} parent=0 // pred_check
    _
  $region15: #{_lambda_.58} parent=0 // pred_check_branch
    %16 = sbr.rel (0) target = $region17
  $region16: #{_lambda_.58} parent=0 // pred_region
    _
  $region17: #{_lambda_.58} parent=0 // pred_fallthru
    _
  %v18 = vld [vmem:[%s0] sm:$0xf]
  %v19 = vld [vmem:[%s0 + $0x4] sm:$0xf]
  %v20 = vld [vmem:[%s0 + $0x8] sm:$0xf]
  %v21 = vld [vmem:[%s0 + $0xc] sm:$0xf]
  %v22 = vld [vmem:[%s1] sm:$0xf]
  %v23 = vld [vmem:[%s1 + $0x4] sm:$0x1]
  %v28 = vunpack.c.l.b16 %v18
  %v29 = vunpack.c.l.b16 %v19
  %v30 = vunpack.c.l.b16 %v20
  %v31 = vunpack.c.l.b16 %v21
  %v32 = vpack.c.b16 %v29, %v28
  %v33 = vpack.c.b16 %v31, %v30
  %v36 = vunpack.c.l.b16 %v22
  %v37 = vunpack.c.l.b16 %v23
  %v38 = vpack.c.b16 %v37, %v36
  %vm39 = vcmask 80896
  %v41 = vsel %vm39, %v32, 0
  %v44 = vsel %vm39, %v33, 0
  %vm46 = vcmask 1044480
  %v48 = vsel %vm46, %v38, 0
  %50 = vmatprep.subr.bf16.mxu0 0
  %51 = vmatpush1.bf16.msra.mxu0 0
  %52 = vmatprep.subr.bf16.mxu0 0
  %53 = vmatpush1.bf16.msra.mxu0 0
  %54 = vmatprep.subr.bf16.mxu0 0
  %55 = vmatpush1.bf16.msra.mxu0 0
  %56 = vmatprep.subr.bf16.mxu0 0
  %57 = vmatpush1.bf16.msra.mxu0 0
  %58 = vmatprep.subr.bf16.mxu0 0
  %59 = vmatpush1.bf16.msra.mxu0 0
  %60 = vmatprep.subr.bf16.mxu0 0
  %61 = vmatpush1.bf16.msra.mxu0 0
  %62 = vmatprep.subr.bf16.mxu0 0
  %63 = vmatpush1.bf16.msra.mxu0 0
  %64 = vmatprep.subr.bf16.mxu0 0
  %65 = vmatpush1.bf16.msra.mxu0 %v48
  %66 = vmatprep.subr.bf16.mxu0 0
  %67 = vmatpush2.bf16.msra.mxu0 0
  %68 = vmatprep.subr.bf16.mxu0 0
  %69 = vmatpush2.bf16.msra.mxu0 0
  %70 = vmatprep.subr.bf16.mxu0 0
  %71 = vmatpush2.bf16.msra.mxu0 0
  %72 = vmatprep.subr.bf16.mxu0 0
  %73 = vmatpush2.bf16.msra.mxu0 0
  %74 = vmatprep.subr.bf16.mxu0 0
  %75 = vmatpush2.bf16.msra.mxu0 0
  %76 = vmatprep.subr.bf16.mxu0 0
  %77 = vmatpush2.bf16.msra.mxu0 0
  %78 = vmatprep.subr.bf16.mxu0 0
  %79 = vmatpush2.bf16.msra.mxu0 0
  %80 = vmatprep.subr.bf16.mxu0 0
  %81 = vmatpush2.bf16.msra.mxu0 0
  %82 = vmatprep.mubr.bf16.mxu0 0
  %83 = vmatmul.mubr.bf16.gmra.mxu0 %v41
  %v84 = vpop.f32.mrf.mxu0
  %v85 = vadd.f32 0.0, %v84
  %v86 = vpop.f32.mrf.mxu0
  %v87 = vpop.f32.mrf.mxu0
  %v88 = vadd.f32 0.0, %v87
  %v89 = vpop.f32.mrf.mxu0
  %90 = vmatprep.mubr.bf16.mxu0 0
  %91 = vmatmul.mubr.bf16.gmra.mxu0 %v44
  %v92 = vpop.f32.mrf.mxu0
  %v93 = vadd.f32 0.0, %v92
  %v94 = vpop.f32.mrf.mxu0
  %v95 = vpop.f32.mrf.mxu0
  %v96 = vadd.f32 0.0, %v95
  %v97 = vpop.f32.mrf.mxu0
  %98 = vdwg.mxu0
  %v99 = vld [vmem:[%s2] sm:$0x1]
  %v101 = vlaneseq
  %v102 = vshrl.u32 %v101, 7
  %v103 = vsub.s32 0, %v102
  %v104 = vrot.slane %v99, %v103
  %v106 = vmul.f32 %v85, %v104
  %v107 = vmul.f32 %v88, %v104
  %v108 = vmul.f32 %v93, %v104
  %v109 = vmul.f32 %v96, %v104
  %v110 = vld [vmem:[%s3] sm:$0x1]
  %v112 = vlaneseq
  %v113 = vshrl.u32 %v112, 7
  %v114 = vsub.s32 0, %v113
  %v115 = vrot.slane %v110, %v114
  %v117 = vadd.f32 %v106, %v115
  %v118 = vadd.f32 %v107, %v115
  %v119 = vadd.f32 %v108, %v115
  %v120 = vadd.f32 %v109, %v115
  %v121 = vmax.f32 %v117, 0.0
  %v122 = vmax.f32 %v118, 0.0
  %v123 = vmax.f32 %v119, 0.0
  %v124 = vmax.f32 %v120, 0.0
  %v125 = vpack.c.bf16 %v122, %v121
  %v126 = vpack.c.bf16 %v124, %v123
  %v129 = vunpack.c.l.b16 %v125
  %v130 = vunpack.c.h.b16 %v125
  %v131 = vunpack.c.l.b16 %v126
  %v132 = vunpack.c.h.b16 %v126
  %v133 = vpack.c.b16 %v129, %v129
  %v134 = vpack.c.b16 %v130, %v130
  %v135 = vpack.c.b16 %v131, %v131
  %v136 = vpack.c.b16 %v132, %v132
  %vm141 = vcmask 125952
  %142 = vst.msk [vmem:[%s4] sm:$0xf] %vm141, %v133
  %143 = vst.msk [vmem:[%s4 + $0x4] sm:$0xf] %vm141, %v134
  %144 = vst.msk [vmem:[%s4 + $0x8] sm:$0xf] %vm141, %v135
  %145 = vst.msk [vmem:[%s4 + $0xc] sm:$0xf] %vm141, %v136
  // Predicated region
  $region18: #{_lambda_.58} parent=0 // pred_check
    _
  $region19: #{_lambda_.58} parent=0 // pred_check_branch
    %147 = sbr.rel (0) target = $region21
  $region20: #{_lambda_.58} parent=0 // pred_region
    _
  $region21: #{_lambda_.58} parent=0 // pred_fallthru
    _
  // Predicated region
  $region22: #{_lambda_.58} parent=0 // pred_check
    _
  $region23: #{_lambda_.58} parent=0 // pred_check_branch
    %149 = sbr.rel (0) target = $region25
  $region24: #{_lambda_.58} parent=0 // pred_region
    _
  $region25: #{_lambda_.58} parent=0 // pred_fallthru
    _

// kernel: _lambda_.57
$region0: #{_lambda_.57}
  #allocation0 [shape = 'u32[]', space=smem, size = 0x4, offset = 0x4, fixed_abs, tag = 'smem constant byte address 0x4 - core index']
  #allocation1 [shape = 'u32[144,128]{1,0:T(1,128)}', space=vmem, size = 0x12000, scoped, tag = 'internal scratch']
  %s0 = inlined_call_operand.vmem [shape: bf16[2,5,5,10], index: 0, kind: input, shape index: {}]
  %s1 = inlined_call_operand.vmem [shape: bf16[2,5,5,10], index: 1, kind: input, shape index: {}]
  %s2 = inlined_call_operand.vmem [shape: bf16[2,5,5,10], index: 2, kind: input, shape index: {}]
  %s3 = inlined_call_operand.vmem [shape: bf16[2,5,5,10], index: 3, kind: input, shape index: {}]
  %s4 = inlined_call_operand.vmem [shape: f32[9,1,10], index: 4, kind: input, shape index: {}]
  %s5 = inlined_call_operand.vmem [shape: f32[1,1,10], index: 5, kind: input, shape index: {}]
  %s6 = inlined_call_operand.vmem [shape: f32[1,1,10], index: 6, kind: input, shape index: {}]
  %s7 = inlined_call_operand.vmem [shape: bf16[2,4,4,10], index: 7, kind: output, shape index: {}]
  %s8 = sld [smem:[#allocation0]]
  $region61: #{_lambda_.57} parent=0
    _
  %s10 = ssub.s32 1, %s8
  %s11 = scalar_select 0, %s10, %s8
  loop: start=0, step=1, limit=4
  $region2: #{_lambda_.57} parent=0 // loop_pre_header
    _
  $region3: #{_lambda_.57} parent=0 // loop_header
    %s13 = sphi 0, %s17
    %p14 = scmp.ge.s32.totalorder %s13, 4
    %s23 = sphi 0, %s25
    %s26 = sphi 0, %s23
    %s27 = sphi 0, %s26
    %s43 = sphi 0, %s27
    %s49 = sphi 0, %s51
    %s52 = sphi 0, %s49
    %s53 = sphi 0, %s52
    %s69 = sphi 0, %s53
    %s75 = sphi 0, %s77
    %s78 = sphi 0, %s75
    %s79 = sphi 0, %s78
    %s95 = sphi 0, %s79
    %s101 = sphi 0, %s103
    %s104 = sphi 0, %s101
    %s105 = sphi 0, %s104
    %s121 = sphi 0, %s105
    %s125 = sphi 0, %s125
    %s127 = sphi 0, %s125
    %s128 = sphi 0, %s127
    %s142 = sphi 0, %s128
    %s146 = sphi 0, %s146
    %s148 = sphi 0, %s146
    %s149 = sphi 0, %s148
    %s163 = sphi 0, %s149
    %s167 = sphi 0, %s167
    %s169 = sphi 0, %s167
    %s170 = sphi 0, %s169
    %s184 = sphi 0, %s170
    %s190 = sphi 0, %s192
    %s193 = sphi 0, %s190
    %s194 = sphi 0, %s193
    %s210 = sphi 0, %s194
  $region4: #{_lambda_.57} parent=0 // loop_header_branch
    %16 = sbr.rel (%p14) target = $region8
  $region5: #{_lambda_.57} parent=0 // loop_body
    %s18 = ssub.s32 %s13, 1
    %s19 = ssub.s32 %s13, 2
    %s20 = sadd.s32 %s13, 1
    %s21 = ssub.s32 %s13, %s20
    %p22 = scmp.eq.s32.totalorder %s21, 0
    %s24 = sadd.s32 %s23, 1
    %s25 = scalar_select %p22, %s23, %s24
    %p28 = pneg %p22
    %p29 = scmp.eq.s32.totalorder %s13, 1
    %p30 = por %p28, %p29
    %p31 = scmp.ne.s32.totalorder %s23, %s26
    %p32 = scmp.eq.s32.totalorder %s13, 0
    %p33 = por %p31, %p32
    %p34 = scmp.ne.s32.totalorder %s23, %s26
    %p35 = scmp.eq.s32.totalorder %s18, 1
    %p36 = por %p34, %p35
    %p37 = scmp.ne.s32.totalorder %s26, %s27
    %p38 = scmp.eq.s32.totalorder %s18, 0
    %p39 = por %p37, %p38
    %p40 = scmp.ne.s32.totalorder %s26, %s27
    %p41 = scmp.eq.s32.totalorder %s19, 1
    %p42 = por %p40, %p41
    %p44 = scmp.ne.s32.totalorder %s27, %s43
    %p45 = scmp.eq.s32.totalorder %s19, 0
    %p46 = por %p44, %p45
    %s47 = ssub.s32 %s13, %s20
    %p48 = scmp.eq.s32.totalorder %s47, 0
    %s50 = sadd.s32 %s49, 1
    %s51 = scalar_select %p48, %s49, %s50
    %p54 = pneg %p48
    %p55 = scmp.eq.s32.totalorder %s13, 1
    %p56 = por %p54, %p55
    %p57 = scmp.ne.s32.totalorder %s49, %s52
    %p58 = scmp.eq.s32.totalorder %s13, 0
    %p59 = por %p57, %p58
    %p60 = scmp.ne.s32.totalorder %s49, %s52
    %p61 = scmp.eq.s32.totalorder %s18, 1
    %p62 = por %p60, %p61
    %p63 = scmp.ne.s32.totalorder %s52, %s53
    %p64 = scmp.eq.s32.totalorder %s18, 0
    %p65 = por %p63, %p64
    %p66 = scmp.ne.s32.totalorder %s52, %s53
    %p67 = scmp.eq.s32.totalorder %s19, 1
    %p68 = por %p66, %p67
    %p70 = scmp.ne.s32.totalorder %s53, %s69
    %p71 = scmp.eq.s32.totalorder %s19, 0
    %p72 = por %p70, %p71
    %s73 = ssub.s32 %s13, %s20
    %p74 = scmp.eq.s32.totalorder %s73, 0
    %s76 = sadd.s32 %s75, 1
    %s77 = scalar_select %p74, %s75, %s76
    %p80 = pneg %p74
    %p81 = scmp.eq.s32.totalorder %s13, 1
    %p82 = por %p80, %p81
    %p83 = scmp.ne.s32.totalorder %s75, %s78
    %p84 = scmp.eq.s32.totalorder %s13, 0
    %p85 = por %p83, %p84
    %p86 = scmp.ne.s32.totalorder %s75, %s78
    %p87 = scmp.eq.s32.totalorder %s18, 1
    %p88 = por %p86, %p87
    %p89 = scmp.ne.s32.totalorder %s78, %s79
    %p90 = scmp.eq.s32.totalorder %s18, 0
    %p91 = por %p89, %p90
    %p92 = scmp.ne.s32.totalorder %s78, %s79
    %p93 = scmp.eq.s32.totalorder %s19, 1
    %p94 = por %p92, %p93
    %p96 = scmp.ne.s32.totalorder %s79, %s95
    %p97 = scmp.eq.s32.totalorder %s19, 0
    %p98 = por %p96, %p97
    %s99 = ssub.s32 %s13, %s20
    %p100 = scmp.eq.s32.totalorder %s99, 0
    %s102 = sadd.s32 %s101, 1
    %s103 = scalar_select %p100, %s101, %s102
    %p106 = pneg %p100
    %p107 = scmp.eq.s32.totalorder %s13, 1
    %p108 = por %p106, %p107
    %p109 = scmp.ne.s32.totalorder %s101, %s104
    %p110 = scmp.eq.s32.totalorder %s13, 0
    %p111 = por %p109, %p110
    %p112 = scmp.ne.s32.totalorder %s101, %s104
    %p113 = scmp.eq.s32.totalorder %s18, 1
    %p114 = por %p112, %p113
    %p115 = scmp.ne.s32.totalorder %s104, %s105
    %p116 = scmp.eq.s32.totalorder %s18, 0
    %p117 = por %p115, %p116
    %p118 = scmp.ne.s32.totalorder %s104, %s105
    %p119 = scmp.eq.s32.totalorder %s19, 1
    %p120 = por %p118, %p119
    %p122 = scmp.ne.s32.totalorder %s105, %s121
    %p123 = scmp.eq.s32.totalorder %s19, 0
    %p124 = por %p122, %p123
    %s126 = sadd.s32 %s125, 1
    %p129 = scmp.eq.s32.totalorder %s13, 1
    %p130 = scmp.ne.s32.totalorder %s125, %s127
    %p131 = scmp.eq.s32.totalorder %s13, 0
    %p132 = por %p130, %p131
    %p133 = scmp.ne.s32.totalorder %s125, %s127
    %p134 = scmp.eq.s32.totalorder %s18, 1
    %p135 = por %p133, %p134
    %p136 = scmp.ne.s32.totalorder %s127, %s128
    %p137 = scmp.eq.s32.totalorder %s18, 0
    %p138 = por %p136, %p137
    %p139 = scmp.ne.s32.totalorder %s127, %s128
    %p140 = scmp.eq.s32.totalorder %s19, 1
    %p141 = por %p139, %p140
    %p143 = scmp.ne.s32.totalorder %s128, %s142
    %p144 = scmp.eq.s32.totalorder %s19, 0
    %p145 = por %p143, %p144
    %s147 = sadd.s32 %s146, 1
    %p150 = scmp.eq.s32.totalorder %s13, 1
    %p151 = scmp.ne.s32.totalorder %s146, %s148
    %p152 = scmp.eq.s32.totalorder %s13, 0
    %p153 = por %p151, %p152
    %p154 = scmp.ne.s32.totalorder %s146, %s148
    %p155 = scmp.eq.s32.totalorder %s18, 1
    %p156 = por %p154, %p155
    %p157 = scmp.ne.s32.totalorder %s148, %s149
    %p158 = scmp.eq.s32.totalorder %s18, 0
    %p159 = por %p157, %p158
    %p160 = scmp.ne.s32.totalorder %s148, %s149
    %p161 = scmp.eq.s32.totalorder %s19, 1
    %p162 = por %p160, %p161
    %p164 = scmp.ne.s32.totalorder %s149, %s163
    %p165 = scmp.eq.s32.totalorder %s19, 0
    %p166 = por %p164, %p165
    %s168 = sadd.s32 %s167, 1
    %p171 = scmp.eq.s32.totalorder %s13, 1
    %p172 = scmp.ne.s32.totalorder %s167, %s169
    %p173 = scmp.eq.s32.totalorder %s13, 0
    %p174 = por %p172, %p173
    %p175 = scmp.ne.s32.totalorder %s167, %s169
    %p176 = scmp.eq.s32.totalorder %s18, 1
    %p177 = por %p175, %p176
    %p178 = scmp.ne.s32.totalorder %s169, %s170
    %p179 = scmp.eq.s32.totalorder %s18, 0
    %p180 = por %p178, %p179
    %p181 = scmp.ne.s32.totalorder %s169, %s170
    %p182 = scmp.eq.s32.totalorder %s19, 1
    %p183 = por %p181, %p182
    %p185 = scmp.ne.s32.totalorder %s170, %s184
    %p186 = scmp.eq.s32.totalorder %s19, 0
    %p187 = por %p185, %p186
    %s188 = ssub.s32 %s13, %s20
    %p189 = scmp.eq.s32.totalorder %s188, 0
    %s191 = sadd.s32 %s190, 1
    %s192 = scalar_select %p189, %s190, %s191
    %p195 = pneg %p189
    %p196 = scmp.eq.s32.totalorder %s13, 1
    %p197 = por %p195, %p196
    %p198 = scmp.ne.s32.totalorder %s190, %s193
    %p199 = scmp.eq.s32.totalorder %s13, 0
    %p200 = por %p198, %p199
    %p201 = scmp.ne.s32.totalorder %s190, %s193
    %p202 = scmp.eq.s32.totalorder %s18, 1
    %p203 = por %p201, %p202
    %p204 = scmp.ne.s32.totalorder %s193, %s194
    %p205 = scmp.eq.s32.totalorder %s18, 0
    %p206 = por %p204, %p205
    %p207 = scmp.ne.s32.totalorder %s193, %s194
    %p208 = scmp.eq.s32.totalorder %s19, 1
    %p209 = por %p207, %p208
    %p211 = scmp.ne.s32.totalorder %s194, %s210
    %p212 = scmp.eq.s32.totalorder %s19, 0
    %p213 = por %p211, %p212
    %p214 = scmp.le.s32.totalorder 1, %s13
    %p215 = scmp.lt.s32.totalorder %s13, 3
    %p216 = pnand %p214, %p215
    %p217 = pneg %p216
    // Predicated region
    $region9: #{_lambda_.57} parent=5 // pred_check
      _
    $region10: #{_lambda_.57} parent=5 // pred_check_branch
      %219 = sbr.rel (%p216) target = $region12
    $region11: #{_lambda_.57} parent=5 // pred_region
      %s220 = ssub.s32 %s13, 1
      // Predicated region
      $region13: #{_lambda_.57} parent=11 // pred_check
        %p221 = pneg %p138
      $region14: #{_lambda_.57} parent=11 // pred_check_branch
        %223 = sbr.rel (%p221) target = $region16
      $region15: #{_lambda_.57} parent=11 // pred_region
        _
      $region16: #{_lambda_.57} parent=11 // pred_fallthru
        _
      // Predicated region
      $region17: #{_lambda_.57} parent=11 // pred_check
        %p224 = pneg %p159
      $region18: #{_lambda_.57} parent=11 // pred_check_branch
        %226 = sbr.rel (%p224) target = $region20
      $region19: #{_lambda_.57} parent=11 // pred_region
        _
      $region20: #{_lambda_.57} parent=11 // pred_fallthru
        _
      // Predicated region
      $region21: #{_lambda_.57} parent=11 // pred_check
        %p227 = pneg %p180
      $region22: #{_lambda_.57} parent=11 // pred_check_branch
        %229 = sbr.rel (%p227) target = $region24
      $region23: #{_lambda_.57} parent=11 // pred_region
        _
      $region24: #{_lambda_.57} parent=11 // pred_fallthru
        _
    $region12: #{_lambda_.57} parent=5 // pred_fallthru
      _
    %p230 = scmp.lt.s32.totalorder %s13, 2
    // Predicated region
    $region25: #{_lambda_.57} parent=5 // pred_check
      %p231 = pneg %p230
    $region26: #{_lambda_.57} parent=5 // pred_check_branch
      %233 = sbr.rel (%p231) target = $region28
    $region27: #{_lambda_.57} parent=5 // pred_region
      // Predicated region
      $region29: #{_lambda_.57} parent=27 // pred_check
        %p234 = pneg %p33
      $region30: #{_lambda_.57} parent=27 // pred_check_branch
        %236 = sbr.rel (%p234) target = $region32
      $region31: #{_lambda_.57} parent=27 // pred_region
        %p237 = scmp.lt.s32.totalorder %s13, 1
        %s238 = scalar_select %p237, %s13, 1
        %s239 = smul.addr %s238, 5
        %s240 = smul.addr %s239, 4
        %s241 = scalar_lea.vmem %s0, %s240
      $region32: #{_lambda_.57} parent=27 // pred_fallthru
        _
      // Predicated region
      $region33: #{_lambda_.57} parent=27 // pred_check
        %p242 = pneg %p59
      $region34: #{_lambda_.57} parent=27 // pred_check_branch
        %244 = sbr.rel (%p242) target = $region36
      $region35: #{_lambda_.57} parent=27 // pred_region
        %p245 = scmp.lt.s32.totalorder %s13, 1
        %s246 = scalar_select %p245, %s13, 1
        %s247 = smul.addr %s246, 5
        %s248 = smul.addr %s247, 4
        %s249 = scalar_lea.vmem %s1, %s248
      $region36: #{_lambda_.57} parent=27 // pred_fallthru
        _
      // Predicated region
      $region37: #{_lambda_.57} parent=27 // pred_check
        %p250 = pneg %p85
      $region38: #{_lambda_.57} parent=27 // pred_check_branch
        %252 = sbr.rel (%p250) target = $region40
      $region39: #{_lambda_.57} parent=27 // pred_region
        %p253 = scmp.lt.s32.totalorder %s13, 1
        %s254 = scalar_select %p253, %s13, 1
        %s255 = smul.addr %s254, 5
        %s256 = smul.addr %s255, 4
        %s257 = scalar_lea.vmem %s2, %s256
      $region40: #{_lambda_.57} parent=27 // pred_fallthru
        _
      // Predicated region
      $region41: #{_lambda_.57} parent=27 // pred_check
        %p258 = pneg %p111
      $region42: #{_lambda_.57} parent=27 // pred_check_branch
        %260 = sbr.rel (%p258) target = $region44
      $region43: #{_lambda_.57} parent=27 // pred_region
        %p261 = scmp.lt.s32.totalorder %s13, 1
        %s262 = scalar_select %p261, %s13, 1
        %s263 = smul.addr %s262, 5
        %s264 = smul.addr %s263, 4
        %s265 = scalar_lea.vmem %s3, %s264
      $region44: #{_lambda_.57} parent=27 // pred_fallthru
        _
    $region28: #{_lambda_.57} parent=5 // pred_fallthru
      _
    %p266 = scmp.le.s32.totalorder 1, %s13
    %p267 = scmp.lt.s32.totalorder %s13, 3
    %p268 = pnand %p266, %p267
    %p269 = pneg %p268
    // Predicated region
    $region45: #{_lambda_.57} parent=5 // pred_check
      _
    $region46: #{_lambda_.57} parent=5 // pred_check_branch
      %271 = sbr.rel (%p268) target = $region48
    $region47: #{_lambda_.57} parent=5 // pred_region
      %s272 = ssub.s32 %s13, 1
      %p273 = scmp.lt.s32.totalorder %s18, 1
      %s274 = scalar_select %p273, %s18, 1
      %s275 = smul.addr %s274, 5
      %s276 = smul.addr %s275, 4
      %s277 = scalar_lea.vmem %s0, %s276
      %p278 = pneg %p39
      %p279 = pneg %p36
      %p280 = scmp.lt.s32.totalorder %s18, 1
      %s281 = scalar_select %p280, %s18, 1
      %s282 = smul.addr %s281, 5
      %s283 = smul.addr %s282, 4
      %s284 = scalar_lea.vmem %s1, %s283
      %p285 = pneg %p65
      %p286 = pneg %p62
      %p287 = scmp.lt.s32.totalorder %s18, 1
      %s288 = scalar_select %p287, %s18, 1
      %s289 = smul.addr %s288, 5
      %s290 = smul.addr %s289, 4
      %s291 = scalar_lea.vmem %s2, %s290
      %p292 = pneg %p91
      %p293 = pneg %p88
      %p294 = scmp.lt.s32.totalorder %s18, 1
      %s295 = scalar_select %p294, %s18, 1
      %s296 = smul.addr %s295, 5
      %s297 = smul.addr %s296, 4
      %s298 = scalar_lea.vmem %s3, %s297
      %p299 = pneg %p117
      %p300 = pneg %p114
      %p301 = pneg %p138
      %p302 = pneg %p135
      %p303 = pneg %p159
      %p304 = pneg %p156
      %p305 = pneg %p180
      %p306 = pneg %p177
      %p307 = pneg %p206
      %p308 = pneg %p203
      %p309 = scmp.lt.s32.totalorder %s18, 1
      %s310 = scalar_select %p309, %s18, 1
      %s311 = smul.addr %s310, 4
      %s312 = smul.addr %s311, 2
      %s313 = scalar_lea.vmem %s7, %s312
      %p314 = scmp.lt.s32.totalorder %s18, 1
      %s315 = scalar_select %p314, %s18, 1
      %s316 = smul.addr %s315, 5
      %s317 = smul.addr %s316, 4
      %s318 = scalar_lea.vmem %s0, %s317
      %p319 = scmp.lt.s32.totalorder %s18, 1
      %s320 = scalar_select %p319, %s18, 1
      %s321 = smul.addr %s320, 5
      %s322 = smul.addr %s321, 4
      %s323 = scalar_lea.vmem %s1, %s322
      %p324 = scmp.lt.s32.totalorder %s18, 1
      %s325 = scalar_select %p324, %s18, 1
      %s326 = smul.addr %s325, 5
      %s327 = smul.addr %s326, 4
      %s328 = scalar_lea.vmem %s2, %s327
      %p329 = scmp.lt.s32.totalorder %s18, 1
      %s330 = scalar_select %p329, %s18, 1
      %s331 = smul.addr %s330, 5
      %s332 = smul.addr %s331, 4
      %s333 = scalar_lea.vmem %s3, %s332
      %p334 = scmp.lt.s32.totalorder %s18, 1
      %s335 = scalar_select %p334, %s18, 1
      %s336 = smul.addr %s335, 4
      %s337 = smul.addr %s336, 2
      %s338 = scalar_lea.vmem %s7, %s337
      %v339 = vld [vmem:[%s318] sm:$0x3]
      %v340 = vld [vmem:[%s318 + $0x4] sm:$0x3]
      %v341 = vld [vmem:[%s318 + $0x8] sm:$0x3]
      %v342 = vld [vmem:[%s318 + $0xc] sm:$0x3]
      %v343 = vunpack.c.l.bf16 %v339
      %v344 = vunpack.c.l.bf16 %v340
      %v345 = vunpack.c.l.bf16 %v341
      %v346 = vunpack.c.l.bf16 %v342
      %v347 = vld [vmem:[%s323] sm:$0x3]
      %v348 = vld [vmem:[%s323 + $0x4] sm:$0x3]
      %v349 = vld [vmem:[%s323 + $0x8] sm:$0x3]
      %v350 = vld [vmem:[%s323 + $0xc] sm:$0x3]
      %v351 = vunpack.c.l.bf16 %v347
      %v352 = vunpack.c.l.bf16 %v348
      %v353 = vunpack.c.l.bf16 %v349
      %v354 = vunpack.c.l.bf16 %v350
      %v355 = vld [vmem:[%s318] sm:$0x7]
      %v356 = vld [vmem:[%s318 + $0x4] sm:$0x7]
      %v357 = vld [vmem:[%s318 + $0x8] sm:$0x7]
      %v358 = vld [vmem:[%s318 + $0xc] sm:$0x7]
      %v359 = vunpack.c.l.bf16 %v355
      %v360 = vunpack.c.l.bf16 %v356
      %v361 = vunpack.c.l.bf16 %v357
      %v362 = vunpack.c.l.bf16 %v358
      %v363 = vld [vmem:[%s328] sm:$0x3]
      %v364 = vld [vmem:[%s328 + $0x4] sm:$0x3]
      %v365 = vld [vmem:[%s328 + $0x8] sm:$0x3]
      %v366 = vld [vmem:[%s328 + $0xc] sm:$0x3]
      %v367 = vunpack.c.l.bf16 %v363
      %v368 = vunpack.c.l.bf16 %v364
      %v369 = vunpack.c.l.bf16 %v365
      %v370 = vunpack.c.l.bf16 %v366
      %v371 = vld [vmem:[%s333] sm:$0x3]
      %v372 = vld [vmem:[%s333 + $0x4] sm:$0x3]
      %v373 = vld [vmem:[%s333 + $0x8] sm:$0x3]
      %v374 = vld [vmem:[%s333 + $0xc] sm:$0x3]
      %v375 = vunpack.c.l.bf16 %v371
      %v376 = vunpack.c.l.bf16 %v372
      %v377 = vunpack.c.l.bf16 %v373
      %v378 = vunpack.c.l.bf16 %v374
      %v379 = vld [vmem:[%s328] sm:$0x7]
      %v380 = vld [vmem:[%s328 + $0x4] sm:$0x7]
      %v381 = vld [vmem:[%s328 + $0x8] sm:$0x7]
      %v382 = vld [vmem:[%s328 + $0xc] sm:$0x7]
      %v383 = vunpack.c.l.bf16 %v379
      %v384 = vunpack.c.l.bf16 %v380
      %v385 = vunpack.c.l.bf16 %v381
      %v386 = vunpack.c.l.bf16 %v382
      %s387 = scalar_lea.vmem %s318, 4
      %v388 = vld [vmem:[%s387] sm:$0x3]
      %v389 = vld [vmem:[%s387 + $0x4] sm:$0x3]
      %v390 = vld [vmem:[%s387 + $0x8] sm:$0x3]
      %v391 = vld [vmem:[%s387 + $0xc] sm:$0x3]
      %v392 = vunpack.c.l.bf16 %v388
      %v393 = vunpack.c.l.bf16 %v389
      %v394 = vunpack.c.l.bf16 %v390
      %v395 = vunpack.c.l.bf16 %v391
      %s396 = scalar_lea.vmem %s323, 4
      %v397 = vld [vmem:[%s396] sm:$0x3]
      %v398 = vld [vmem:[%s396 + $0x4] sm:$0x3]
      %v399 = vld [vmem:[%s396 + $0x8] sm:$0x3]
      %v400 = vld [vmem:[%s396 + $0xc] sm:$0x3]
      %v401 = vunpack.c.l.bf16 %v397
      %v402 = vunpack.c.l.bf16 %v398
      %v403 = vunpack.c.l.bf16 %v399
      %v404 = vunpack.c.l.bf16 %v400
      %v405 = vld [vmem:[%s387] sm:$0x7]
      %v406 = vld [vmem:[%s387 + $0x4] sm:$0x7]
      %v407 = vld [vmem:[%s387 + $0x8] sm:$0x7]
      %v408 = vld [vmem:[%s387 + $0xc] sm:$0x7]
      %v409 = vunpack.c.l.bf16 %v405
      %v410 = vunpack.c.l.bf16 %v406
      %v411 = vunpack.c.l.bf16 %v407
      %v412 = vunpack.c.l.bf16 %v408
      %v413 = vld [vmem:[%s4] sm:$0x1]
      %v415 = vlaneseq
      %v416 = vshrl.u32 %v415, 7
      %v417 = vsub.s32 0, %v416
      %v418 = vrot.slane %v413, %v417
      %v420 = vmul.f32 %v343, %v418
      %v421 = vmul.f32 %v344, %v418
      %v422 = vmul.f32 %v345, %v418
      %v423 = vmul.f32 %v346, %v418
      %s424 = scalar_lea.vmem %s4, 1
      %v425 = vld [vmem:[%s424] sm:$0x1]
      %v427 = vlaneseq
      %v428 = vshrl.u32 %v427, 7
      %v429 = vsub.s32 0, %v428
      %v430 = vrot.slane %v425, %v429
      %v432 = vmul.f32 %v351, %v430
      %v433 = vmul.f32 %v352, %v430
      %v434 = vmul.f32 %v353, %v430
      %v435 = vmul.f32 %v354, %v430
      %v436 = vadd.f32 %v420, %v432
      %v437 = vadd.f32 %v421, %v433
      %v438 = vadd.f32 %v422, %v434
      %v439 = vadd.f32 %v423, %v435
      %s440 = scalar_lea.vmem %s4, 2
      %v441 = vld [vmem:[%s440] sm:$0x1]
      %v443 = vlaneseq
      %v444 = vshrl.u32 %v443, 7
      %v445 = vsub.s32 0, %v444
      %v446 = vrot.slane %v441, %v445
      %v448 = vmul.f32 %v359, %v446
      %v449 = vmul.f32 %v360, %v446
      %v450 = vmul.f32 %v361, %v446
      %v451 = vmul.f32 %v362, %v446
      %v456 = vrot.slane %v448, 1
      %v457 = vrot.slane %v449, 1
      %v458 = vrot.slane %v450, 1
      %v459 = vrot.slane %v451, 1
      %v464 = vadd.f32 %v436, %v456
      %v465 = vadd.f32 %v437, %v457
      %v466 = vadd.f32 %v438, %v458
      %v467 = vadd.f32 %v439, %v459
      %s468 = scalar_lea.vmem %s4, 3
      %v469 = vld [vmem:[%s468] sm:$0x1]
      %v471 = vlaneseq
      %v472 = vshrl.u32 %v471, 7
      %v473 = vsub.s32 0, %v472
      %v474 = vrot.slane %v469, %v473
      %v476 = vmul.f32 %v367, %v474
      %v477 = vmul.f32 %v368, %v474
      %v478 = vmul.f32 %v369, %v474
      %v479 = vmul.f32 %v370, %v474
      %v480 = vadd.f32 %v464, %v476
      %v481 = vadd.f32 %v465, %v477
      %v482 = vadd.f32 %v466, %v478
      %v483 = vadd.f32 %v467, %v479
      %s484 = scalar_lea.vmem %s4, 4
      %v485 = vld [vmem:[%s484] sm:$0x1]
      %v487 = vlaneseq
      %v488 = vshrl.u32 %v487, 7
      %v489 = vsub.s32 0, %v488
      %v490 = vrot.slane %v485, %v489
      %v492 = vmul.f32 %v375, %v490
      %v493 = vmul.f32 %v376, %v490
      %v494 = vmul.f32 %v377, %v490
      %v495 = vmul.f32 %v378, %v490
      %v496 = vadd.f32 %v480, %v492
      %v497 = vadd.f32 %v481, %v493
      %v498 = vadd.f32 %v482, %v494
      %v499 = vadd.f32 %v483, %v495
      %s500 = scalar_lea.vmem %s4, 5
      %v501 = vld [vmem:[%s500] sm:$0x1]
      %v503 = vlaneseq
      %v504 = vshrl.u32 %v503, 7
      %v505 = vsub.s32 0, %v504
      %v506 = vrot.slane %v501, %v505
      %v508 = vmul.f32 %v383, %v506
      %v509 = vmul.f32 %v384, %v506
      %v510 = vmul.f32 %v385, %v506
      %v511 = vmul.f32 %v386, %v506
      %v516 = vrot.slane %v508, 1
      %v517 = vrot.slane %v509, 1
      %v518 = vrot.slane %v510, 1
      %v519 = vrot.slane %v511, 1
      %v524 = vadd.f32 %v496, %v516
      %v525 = vadd.f32 %v497, %v517
      %v526 = vadd.f32 %v498, %v518
      %v527 = vadd.f32 %v499, %v519
      %s528 = scalar_lea.vmem %s4, 6
      %v529 = vld [vmem:[%s528] sm:$0x1]
      %v531 = vlaneseq
      %v532 = vshrl.u32 %v531, 7
      %v533 = vsub.s32 0, %v532
      %v534 = vrot.slane %v529, %v533
      %v536 = vmul.f32 %v392, %v534
      %v537 = vmul.f32 %v393, %v534
      %v538 = vmul.f32 %v394, %v534
      %v539 = vmul.f32 %v395, %v534
      %v540 = vadd.f32 %v524, %v536
      %v541 = vadd.f32 %v525, %v537
      %v542 = vadd.f32 %v526, %v538
      %v543 = vadd.f32 %v527, %v539
      %s544 = scalar_lea.vmem %s4, 7
      %v545 = vld [vmem:[%s544] sm:$0x1]
      %v547 = vlaneseq
      %v548 = vshrl.u32 %v547, 7
      %v549 = vsub.s32 0, %v548
      %v550 = vrot.slane %v545, %v549
      %v552 = vmul.f32 %v401, %v550
      %v553 = vmul.f32 %v402, %v550
      %v554 = vmul.f32 %v403, %v550
      %v555 = vmul.f32 %v404, %v550
      %v556 = vadd.f32 %v540, %v552
      %v557 = vadd.f32 %v541, %v553
      %v558 = vadd.f32 %v542, %v554
      %v559 = vadd.f32 %v543, %v555
      %s560 = scalar_lea.vmem %s4, 8
      %v561 = vld [vmem:[%s560] sm:$0x1]
      %v563 = vlaneseq
      %v564 = vshrl.u32 %v563, 7
      %v565 = vsub.s32 0, %v564
      %v566 = vrot.slane %v561, %v565
      %v568 = vmul.f32 %v409, %v566
      %v569 = vmul.f32 %v410, %v566
      %v570 = vmul.f32 %v411, %v566
      %v571 = vmul.f32 %v412, %v566
      %v576 = vrot.slane %v568, 1
      %v577 = vrot.slane %v569, 1
      %v578 = vrot.slane %v570, 1
      %v579 = vrot.slane %v571, 1
      %v584 = vadd.f32 %v556, %v576
      %v585 = vadd.f32 %v557, %v577
      %v586 = vadd.f32 %v558, %v578
      %v587 = vadd.f32 %v559, %v579
      %v588 = vld [vmem:[%s5] sm:$0x1]
      %v590 = vlaneseq
      %v591 = vshrl.u32 %v590, 7
      %v592 = vsub.s32 0, %v591
      %v593 = vrot.slane %v588, %v592
      %v595 = vmul.f32 %v584, %v593
      %v596 = vmul.f32 %v585, %v593
      %v597 = vmul.f32 %v586, %v593
      %v598 = vmul.f32 %v587, %v593
      %v599 = vld [vmem:[%s6] sm:$0x1]
      %v601 = vlaneseq
      %v602 = vshrl.u32 %v601, 7
      %v603 = vsub.s32 0, %v602
      %v604 = vrot.slane %v599, %v603
      %v606 = vadd.f32 %v595, %v604
      %v607 = vadd.f32 %v596, %v604
      %v608 = vadd.f32 %v597, %v604
      %v609 = vadd.f32 %v598, %v604
      %v610 = vpack.c.bf16 %v606, %v606
      %v611 = vpack.c.bf16 %v607, %v607
      %v612 = vpack.c.bf16 %v608, %v608
      %v613 = vpack.c.bf16 %v609, %v609
      %vm614 = vcmask 74752
      %615 = vst.msk [vmem:[%s338] sm:$0x3] %vm614, %v610
      %616 = vst.msk [vmem:[%s338 + $0x2] sm:$0x3] %vm614, %v611
      %617 = vst.msk [vmem:[%s338 + $0x4] sm:$0x3] %vm614, %v612
      %618 = vst.msk [vmem:[%s338 + $0x6] sm:$0x3] %vm614, %v613
      %p619 = scmp.lt.s32.totalorder %s18, 1
      %s620 = scalar_select %p619, %s18, 1
      %s621 = smul.addr %s620, 4
      %s622 = smul.addr %s621, 2
      %s623 = scalar_lea.vmem %s7, %s622
      // Predicated region
      $region49: #{_lambda_.57} parent=47 // pred_check
        %p624 = pneg %p203
      $region50: #{_lambda_.57} parent=47 // pred_check_branch
        %626 = sbr.rel (%p624) target = $region52
      $region51: #{_lambda_.57} parent=47 // pred_region
        _
      $region52: #{_lambda_.57} parent=47 // pred_fallthru
        _
    $region48: #{_lambda_.57} parent=5 // pred_fallthru
      _
    %p627 = scmp.le.s32.totalorder 2, %s13
    // Predicated region
    $region53: #{_lambda_.57} parent=5 // pred_check
      %p628 = pneg %p627
    $region54: #{_lambda_.57} parent=5 // pred_check_branch
      %630 = sbr.rel (%p628) target = $region56
    $region55: #{_lambda_.57} parent=5 // pred_region
      %s631 = ssub.s32 %s13, 2
      // Predicated region
      $region57: #{_lambda_.57} parent=55 // pred_check
        %p632 = pneg %p209
      $region58: #{_lambda_.57} parent=55 // pred_check_branch
        %634 = sbr.rel (%p632) target = $region60
      $region59: #{_lambda_.57} parent=55 // pred_region
        %p635 = scmp.lt.s32.totalorder %s19, 1
        %s636 = scalar_select %p635, %s19, 1
        %s637 = smul.addr %s636, 4
        %s638 = smul.addr %s637, 2
        %s639 = scalar_lea.vmem %s7, %s638
      $region60: #{_lambda_.57} parent=55 // pred_fallthru
        _
    $region56: #{_lambda_.57} parent=5 // pred_fallthru
      _
  $region6: #{_lambda_.57} parent=0 // loop_footer
    %s17 = sadd.s32 1, %s13
  $region7: #{_lambda_.57} parent=0 // loop_footer_branch
    %12 = sbr.rel target = $region3
  $region8: #{_lambda_.57} parent=0 // loop_exit
    _

// kernel: _lambda_.60
$region0: #{_lambda_.60}
  #allocation0 [shape = 'u32[]', space=smem, size = 0x4, offset = 0x4, fixed_abs, tag = 'smem constant byte address 0x4 - core index']
  #allocation1 [shape = 'u32[144,128]{1,0:T(1,128)}', space=vmem, size = 0x12000, scoped, tag = 'internal scratch']
  %s0 = inlined_call_operand.vmem [shape: bf16[32,40], index: 0, kind: input, shape index: {}]
  %s1 = inlined_call_operand.vmem [shape: bf16[40,10], index: 1, kind: input, shape index: {}]
  %s2 = inlined_call_operand.vmem [shape: f32[1,10], index: 2, kind: input, shape index: {}]
  %s3 = inlined_call_operand.vmem [shape: f32[1,10], index: 3, kind: input, shape index: {}]
  %s4 = inlined_call_operand.vmem [shape: bf16[32,10], index: 4, kind: output, shape index: {}]
  %s5 = sld [smem:[#allocation0]]
  $region26: #{_lambda_.60} parent=0
    _
  %s7 = ssub.s32 1, %s5
  %s8 = scalar_select 0, %s7, %s5
  // Predicated region
  $region2: #{_lambda_.60} parent=0 // pred_check
    _
  $region3: #{_lambda_.60} parent=0 // pred_check_branch
    %10 = sbr.rel (0) target = $region5
  $region4: #{_lambda_.60} parent=0 // pred_region
    _
  $region5: #{_lambda_.60} parent=0 // pred_fallthru
    _
  // Predicated region
  $region6: #{_lambda_.60} parent=0 // pred_check
    _
  $region7: #{_lambda_.60} parent=0 // pred_check_branch
    %12 = sbr.rel (0) target = $region9
  $region8: #{_lambda_.60} parent=0 // pred_region
    _
  $region9: #{_lambda_.60} parent=0 // pred_fallthru
    _
  // Predicated region
  $region10: #{_lambda_.60} parent=0 // pred_check
    _
  $region11: #{_lambda_.60} parent=0 // pred_check_branch
    %14 = sbr.rel (0) target = $region13
  $region12: #{_lambda_.60} parent=0 // pred_region
    _
  $region13: #{_lambda_.60} parent=0 // pred_fallthru
    _
  // Predicated region
  $region14: #{_lambda_.60} parent=0 // pred_check
    _
  $region15: #{_lambda_.60} parent=0 // pred_check_branch
    %16 = sbr.rel (0) target = $region17
  $region16: #{_lambda_.60} parent=0 // pred_region
    _
  $region17: #{_lambda_.60} parent=0 // pred_fallthru
    _
  %v18 = vld [vmem:[%s0] sm:$0xf]
  %v19 = vld [vmem:[%s0 + $0x4] sm:$0xf]
  %v20 = vld [vmem:[%s0 + $0x8] sm:$0xf]
  %v21 = vld [vmem:[%s0 + $0xc] sm:$0xf]
  %v22 = vld [vmem:[%s1] sm:$0xf]
  %v23 = vld [vmem:[%s1 + $0x4] sm:$0xf]
  %v24 = vld [vmem:[%s1 + $0x8] sm:$0xf]
  %v25 = vld [vmem:[%s1 + $0xc] sm:$0xf]
  %v26 = vld [vmem:[%s1 + $0x10] sm:$0xf]
  %v31 = vunpack.c.l.b16 %v18
  %v32 = vunpack.c.l.b16 %v19
  %v33 = vunpack.c.l.b16 %v20
  %v34 = vunpack.c.l.b16 %v21
  %v35 = vpack.c.b16 %v32, %v31
  %v36 = vpack.c.b16 %v34, %v33
  %v42 = vunpack.c.l.b16 %v22
  %v43 = vunpack.c.l.b16 %v23
  %v44 = vunpack.c.l.b16 %v24
  %v45 = vunpack.c.l.b16 %v25
  %v46 = vunpack.c.l.b16 %v26
  %v47 = vpack.c.b16 %v43, %v42
  %v48 = vpack.c.b16 %v45, %v44
  %v49 = vpack.c.b16 %v46, %v46
  %vm52 = vcmask 326656
  %v54 = vsel %vm52, %v35, 0
  %v57 = vsel %vm52, %v36, 0
  %vm59 = vcmask 1043456
  %v61 = vsel %vm59, %v49, 0
  %63 = vmatprep.subr.bf16.mxu0 0
  %64 = vmatpush1.bf16.msra.mxu0 0
  %65 = vmatprep.subr.bf16.mxu0 0
  %66 = vmatpush1.bf16.msra.mxu0 0
  %67 = vmatprep.subr.bf16.mxu0 0
  %68 = vmatpush1.bf16.msra.mxu0 0
  %69 = vmatprep.subr.bf16.mxu0 0
  %70 = vmatpush1.bf16.msra.mxu0 0
  %71 = vmatprep.subr.bf16.mxu0 0
  %72 = vmatpush1.bf16.msra.mxu0 0
  %73 = vmatprep.subr.bf16.mxu0 0
  %74 = vmatpush1.bf16.msra.mxu0 %v61
  %75 = vmatprep.subr.bf16.mxu0 0
  %76 = vmatpush1.bf16.msra.mxu0 %v48
  %77 = vmatprep.subr.bf16.mxu0 0
  %78 = vmatpush1.bf16.msra.mxu0 %v47
  %79 = vmatprep.subr.bf16.mxu0 0
  %80 = vmatpush2.bf16.msra.mxu0 0
  %81 = vmatprep.subr.bf16.mxu0 0
  %82 = vmatpush2.bf16.msra.mxu0 0
  %83 = vmatprep.subr.bf16.mxu0 0
  %84 = vmatpush2.bf16.msra.mxu0 0
  %85 = vmatprep.subr.bf16.mxu0 0
  %86 = vmatpush2.bf16.msra.mxu0 0
  %87 = vmatprep.subr.bf16.mxu0 0
  %88 = vmatpush2.bf16.msra.mxu0 0
  %89 = vmatprep.subr.bf16.mxu0 0
  %90 = vmatpush2.bf16.msra.mxu0 0
  %91 = vmatprep.subr.bf16.mxu0 0
  %92 = vmatpush2.bf16.msra.mxu0 0
  %93 = vmatprep.subr.bf16.mxu0 0
  %94 = vmatpush2.bf16.msra.mxu0 0
  %95 = vmatprep.mubr.bf16.mxu0 0
  %96 = vmatmul.mubr.bf16.gmra.mxu0 %v54
  %v97 = vpop.f32.mrf.mxu0
  %v98 = vadd.f32 0.0, %v97
  %v99 = vpop.f32.mrf.mxu0
  %v100 = vpop.f32.mrf.mxu0
  %v101 = vadd.f32 0.0, %v100
  %v102 = vpop.f32.mrf.mxu0
  %103 = vmatprep.mubr.bf16.mxu0 0
  %104 = vmatmul.mubr.bf16.gmra.mxu0 %v57
  %v105 = vpop.f32.mrf.mxu0
  %v106 = vadd.f32 0.0, %v105
  %v107 = vpop.f32.mrf.mxu0
  %v108 = vpop.f32.mrf.mxu0
  %v109 = vadd.f32 0.0, %v108
  %v110 = vpop.f32.mrf.mxu0
  %111 = vdwg.mxu0
  %v112 = vld [vmem:[%s2] sm:$0x1]
  %v114 = vlaneseq
  %v115 = vshrl.u32 %v114, 7
  %v116 = vsub.s32 0, %v115
  %v117 = vrot.slane %v112, %v116
  %v119 = vmul.f32 %v98, %v117
  %v120 = vmul.f32 %v101, %v117
  %v121 = vmul.f32 %v106, %v117
  %v122 = vmul.f32 %v109, %v117
  %v123 = vld [vmem:[%s3] sm:$0x1]
  %v125 = vlaneseq
  %v126 = vshrl.u32 %v125, 7
  %v127 = vsub.s32 0, %v126
  %v128 = vrot.slane %v123, %v127
  %v130 = vadd.f32 %v119, %v128
  %v131 = vadd.f32 %v120, %v128
  %v132 = vadd.f32 %v121, %v128
  %v133 = vadd.f32 %v122, %v128
  %v134 = vmax.f32 %v130, 0.0
  %v135 = vmax.f32 %v131, 0.0
  %v136 = vmax.f32 %v132, 0.0
  %v137 = vmax.f32 %v133, 0.0
  %v138 = vpack.c.bf16 %v135, %v134
  %v139 = vpack.c.bf16 %v137, %v136
  %v142 = vunpack.c.l.b16 %v138
  %v143 = vunpack.c.h.b16 %v138
  %v144 = vunpack.c.l.b16 %v139
  %v145 = vunpack.c.h.b16 %v139
  %v146 = vpack.c.b16 %v142, %v142
  %v147 = vpack.c.b16 %v143, %v143
  %v148 = vpack.c.b16 %v144, %v144
  %v149 = vpack.c.b16 %v145, %v145
  %vm154 = vcmask 76800
  %155 = vst.msk [vmem:[%s4] sm:$0xf] %vm154, %v146
  %156 = vst.msk [vmem:[%s4 + $0x4] sm:$0xf] %vm154, %v147
  %157 = vst.msk [vmem:[%s4 + $0x8] sm:$0xf] %vm154, %v148
  %158 = vst.msk [vmem:[%s4 + $0xc] sm:$0xf] %vm154, %v149
  // Predicated region
  $region18: #{_lambda_.60} parent=0 // pred_check
    _
  $region19: #{_lambda_.60} parent=0 // pred_check_branch
    %160 = sbr.rel (0) target = $region21
  $region20: #{_lambda_.60} parent=0 // pred_region
    _
  $region21: #{_lambda_.60} parent=0 // pred_fallthru
    _
  // Predicated region
  $region22: #{_lambda_.60} parent=0 // pred_check
    _
  $region23: #{_lambda_.60} parent=0 // pred_check_branch
    %162 = sbr.rel (0) target = $region25
  $region24: #{_lambda_.60} parent=0 // pred_region
    _
  $region25: #{_lambda_.60} parent=0 // pred_fallthru
    _

// kernel: _lambda_.59
$region0: #{_lambda_.59}
  #allocation0 [shape = 'u32[]', space=smem, size = 0x4, offset = 0x4, fixed_abs, tag = 'smem constant byte address 0x4 - core index']
  #allocation1 [shape = 'u32[144,128]{1,0:T(1,128)}', space=vmem, size = 0x12000, scoped, tag = 'internal scratch']
  %s0 = inlined_call_operand.vmem [shape: bf16[2,5,5,24], index: 0, kind: input, shape index: {}]
  %s1 = inlined_call_operand.vmem [shape: bf16[2,5,5,24], index: 1, kind: input, shape index: {}]
  %s2 = inlined_call_operand.vmem [shape: bf16[2,5,5,24], index: 2, kind: input, shape index: {}]
  %s3 = inlined_call_operand.vmem [shape: bf16[2,5,5,24], index: 3, kind: input, shape index: {}]
  %s4 = inlined_call_operand.vmem [shape: bf16[2,4,4,24], index: 4, kind: output, shape index: {}]
  %s5 = sld [smem:[#allocation0]]
  $region49: #{_lambda_.59} parent=0
    _
  %s7 = ssub.s32 1, %s5
  %s8 = scalar_select 0, %s7, %s5
  loop: start=0, step=1, limit=4
  $region2: #{_lambda_.59} parent=0 // loop_pre_header
    _
  $region3: #{_lambda_.59} parent=0 // loop_header
    %s10 = sphi 0, %s14
    %p11 = scmp.ge.s32.totalorder %s10, 4
    %s20 = sphi 0, %s22
    %s23 = sphi 0, %s20
    %s24 = sphi 0, %s23
    %s40 = sphi 0, %s24
    %s46 = sphi 0, %s48
    %s49 = sphi 0, %s46
    %s50 = sphi 0, %s49
    %s66 = sphi 0, %s50
    %s72 = sphi 0, %s74
    %s75 = sphi 0, %s72
    %s76 = sphi 0, %s75
    %s92 = sphi 0, %s76
    %s98 = sphi 0, %s100
    %s101 = sphi 0, %s98
    %s102 = sphi 0, %s101
    %s118 = sphi 0, %s102
    %s124 = sphi 0, %s126
    %s127 = sphi 0, %s124
    %s128 = sphi 0, %s127
    %s144 = sphi 0, %s128
  $region4: #{_lambda_.59} parent=0 // loop_header_branch
    %13 = sbr.rel (%p11) target = $region8
  $region5: #{_lambda_.59} parent=0 // loop_body
    %s15 = ssub.s32 %s10, 1
    %s16 = ssub.s32 %s10, 2
    %s17 = sadd.s32 %s10, 1
    %s18 = ssub.s32 %s10, %s17
    %p19 = scmp.eq.s32.totalorder %s18, 0
    %s21 = sadd.s32 %s20, 1
    %s22 = scalar_select %p19, %s20, %s21
    %p25 = pneg %p19
    %p26 = scmp.eq.s32.totalorder %s10, 1
    %p27 = por %p25, %p26
    %p28 = scmp.ne.s32.totalorder %s20, %s23
    %p29 = scmp.eq.s32.totalorder %s10, 0
    %p30 = por %p28, %p29
    %p31 = scmp.ne.s32.totalorder %s20, %s23
    %p32 = scmp.eq.s32.totalorder %s15, 1
    %p33 = por %p31, %p32
    %p34 = scmp.ne.s32.totalorder %s23, %s24
    %p35 = scmp.eq.s32.totalorder %s15, 0
    %p36 = por %p34, %p35
    %p37 = scmp.ne.s32.totalorder %s23, %s24
    %p38 = scmp.eq.s32.totalorder %s16, 1
    %p39 = por %p37, %p38
    %p41 = scmp.ne.s32.totalorder %s24, %s40
    %p42 = scmp.eq.s32.totalorder %s16, 0
    %p43 = por %p41, %p42
    %s44 = ssub.s32 %s10, %s17
    %p45 = scmp.eq.s32.totalorder %s44, 0
    %s47 = sadd.s32 %s46, 1
    %s48 = scalar_select %p45, %s46, %s47
    %p51 = pneg %p45
    %p52 = scmp.eq.s32.totalorder %s10, 1
    %p53 = por %p51, %p52
    %p54 = scmp.ne.s32.totalorder %s46, %s49
    %p55 = scmp.eq.s32.totalorder %s10, 0
    %p56 = por %p54, %p55
    %p57 = scmp.ne.s32.totalorder %s46, %s49
    %p58 = scmp.eq.s32.totalorder %s15, 1
    %p59 = por %p57, %p58
    %p60 = scmp.ne.s32.totalorder %s49, %s50
    %p61 = scmp.eq.s32.totalorder %s15, 0
    %p62 = por %p60, %p61
    %p63 = scmp.ne.s32.totalorder %s49, %s50
    %p64 = scmp.eq.s32.totalorder %s16, 1
    %p65 = por %p63, %p64
    %p67 = scmp.ne.s32.totalorder %s50, %s66
    %p68 = scmp.eq.s32.totalorder %s16, 0
    %p69 = por %p67, %p68
    %s70 = ssub.s32 %s10, %s17
    %p71 = scmp.eq.s32.totalorder %s70, 0
    %s73 = sadd.s32 %s72, 1
    %s74 = scalar_select %p71, %s72, %s73
    %p77 = pneg %p71
    %p78 = scmp.eq.s32.totalorder %s10, 1
    %p79 = por %p77, %p78
    %p80 = scmp.ne.s32.totalorder %s72, %s75
    %p81 = scmp.eq.s32.totalorder %s10, 0
    %p82 = por %p80, %p81
    %p83 = scmp.ne.s32.totalorder %s72, %s75
    %p84 = scmp.eq.s32.totalorder %s15, 1
    %p85 = por %p83, %p84
    %p86 = scmp.ne.s32.totalorder %s75, %s76
    %p87 = scmp.eq.s32.totalorder %s15, 0
    %p88 = por %p86, %p87
    %p89 = scmp.ne.s32.totalorder %s75, %s76
    %p90 = scmp.eq.s32.totalorder %s16, 1
    %p91 = por %p89, %p90
    %p93 = scmp.ne.s32.totalorder %s76, %s92
    %p94 = scmp.eq.s32.totalorder %s16, 0
    %p95 = por %p93, %p94
    %s96 = ssub.s32 %s10, %s17
    %p97 = scmp.eq.s32.totalorder %s96, 0
    %s99 = sadd.s32 %s98, 1
    %s100 = scalar_select %p97, %s98, %s99
    %p103 = pneg %p97
    %p104 = scmp.eq.s32.totalorder %s10, 1
    %p105 = por %p103, %p104
    %p106 = scmp.ne.s32.totalorder %s98, %s101
    %p107 = scmp.eq.s32.totalorder %s10, 0
    %p108 = por %p106, %p107
    %p109 = scmp.ne.s32.totalorder %s98, %s101
    %p110 = scmp.eq.s32.totalorder %s15, 1
    %p111 = por %p109, %p110
    %p112 = scmp.ne.s32.totalorder %s101, %s102
    %p113 = scmp.eq.s32.totalorder %s15, 0
    %p114 = por %p112, %p113
    %p115 = scmp.ne.s32.totalorder %s101, %s102
    %p116 = scmp.eq.s32.totalorder %s16, 1
    %p117 = por %p115, %p116
    %p119 = scmp.ne.s32.totalorder %s102, %s118
    %p120 = scmp.eq.s32.totalorder %s16, 0
    %p121 = por %p119, %p120
    %s122 = ssub.s32 %s10, %s17
    %p123 = scmp.eq.s32.totalorder %s122, 0
    %s125 = sadd.s32 %s124, 1
    %s126 = scalar_select %p123, %s124, %s125
    %p129 = pneg %p123
    %p130 = scmp.eq.s32.totalorder %s10, 1
    %p131 = por %p129, %p130
    %p132 = scmp.ne.s32.totalorder %s124, %s127
    %p133 = scmp.eq.s32.totalorder %s10, 0
    %p134 = por %p132, %p133
    %p135 = scmp.ne.s32.totalorder %s124, %s127
    %p136 = scmp.eq.s32.totalorder %s15, 1
    %p137 = por %p135, %p136
    %p138 = scmp.ne.s32.totalorder %s127, %s128
    %p139 = scmp.eq.s32.totalorder %s15, 0
    %p140 = por %p138, %p139
    %p141 = scmp.ne.s32.totalorder %s127, %s128
    %p142 = scmp.eq.s32.totalorder %s16, 1
    %p143 = por %p141, %p142
    %p145 = scmp.ne.s32.totalorder %s128, %s144
    %p146 = scmp.eq.s32.totalorder %s16, 0
    %p147 = por %p145, %p146
    %p148 = scmp.le.s32.totalorder 1, %s10
    %p149 = scmp.lt.s32.totalorder %s10, 3
    %p150 = pnand %p148, %p149
    %p151 = pneg %p150
    // Predicated region
    $region9: #{_lambda_.59} parent=5 // pred_check
      _
    $region10: #{_lambda_.59} parent=5 // pred_check_branch
      %153 = sbr.rel (%p150) target = $region12
    $region11: #{_lambda_.59} parent=5 // pred_region
      %s154 = ssub.s32 %s10, 1
    $region12: #{_lambda_.59} parent=5 // pred_fallthru
      _
    %p155 = scmp.lt.s32.totalorder %s10, 2
    // Predicated region
    $region13: #{_lambda_.59} parent=5 // pred_check
      %p156 = pneg %p155
    $region14: #{_lambda_.59} parent=5 // pred_check_branch
      %158 = sbr.rel (%p156) target = $region16
    $region15: #{_lambda_.59} parent=5 // pred_region
      // Predicated region
      $region17: #{_lambda_.59} parent=15 // pred_check
        %p159 = pneg %p30
      $region18: #{_lambda_.59} parent=15 // pred_check_branch
        %161 = sbr.rel (%p159) target = $region20
      $region19: #{_lambda_.59} parent=15 // pred_region
        %p162 = scmp.lt.s32.totalorder %s10, 1
        %s163 = scalar_select %p162, %s10, 1
        %s164 = smul.addr %s163, 5
        %s165 = smul.addr %s164, 4
        %s166 = scalar_lea.vmem %s0, %s165
      $region20: #{_lambda_.59} parent=15 // pred_fallthru
        _
      // Predicated region
      $region21: #{_lambda_.59} parent=15 // pred_check
        %p167 = pneg %p56
      $region22: #{_lambda_.59} parent=15 // pred_check_branch
        %169 = sbr.rel (%p167) target = $region24
      $region23: #{_lambda_.59} parent=15 // pred_region
        %p170 = scmp.lt.s32.totalorder %s10, 1
        %s171 = scalar_select %p170, %s10, 1
        %s172 = smul.addr %s171, 5
        %s173 = smul.addr %s172, 4
        %s174 = scalar_lea.vmem %s1, %s173
      $region24: #{_lambda_.59} parent=15 // pred_fallthru
        _
      // Predicated region
      $region25: #{_lambda_.59} parent=15 // pred_check
        %p175 = pneg %p82
      $region26: #{_lambda_.59} parent=15 // pred_check_branch
        %177 = sbr.rel (%p175) target = $region28
      $region27: #{_lambda_.59} parent=15 // pred_region
        %p178 = scmp.lt.s32.totalorder %s10, 1
        %s179 = scalar_select %p178, %s10, 1
        %s180 = smul.addr %s179, 5
        %s181 = smul.addr %s180, 4
        %s182 = scalar_lea.vmem %s2, %s181
      $region28: #{_lambda_.59} parent=15 // pred_fallthru
        _
      // Predicated region
      $region29: #{_lambda_.59} parent=15 // pred_check
        %p183 = pneg %p108
      $region30: #{_lambda_.59} parent=15 // pred_check_branch
        %185 = sbr.rel (%p183) target = $region32
      $region31: #{_lambda_.59} parent=15 // pred_region
        %p186 = scmp.lt.s32.totalorder %s10, 1
        %s187 = scalar_select %p186, %s10, 1
        %s188 = smul.addr %s187, 5
        %s189 = smul.addr %s188, 4
        %s190 = scalar_lea.vmem %s3, %s189
      $region32: #{_lambda_.59} parent=15 // pred_fallthru
        _
    $region16: #{_lambda_.59} parent=5 // pred_fallthru
      _
    %p191 = scmp.le.s32.totalorder 1, %s10
    %p192 = scmp.lt.s32.totalorder %s10, 3
    %p193 = pnand %p191, %p192
    %p194 = pneg %p193
    // Predicated region
    $region33: #{_lambda_.59} parent=5 // pred_check
      _
    $region34: #{_lambda_.59} parent=5 // pred_check_branch
      %196 = sbr.rel (%p193) target = $region36
    $region35: #{_lambda_.59} parent=5 // pred_region
      %s197 = ssub.s32 %s10, 1
      %p198 = scmp.lt.s32.totalorder %s15, 1
      %s199 = scalar_select %p198, %s15, 1
      %s200 = smul.addr %s199, 5
      %s201 = smul.addr %s200, 4
      %s202 = scalar_lea.vmem %s0, %s201
      %p203 = pneg %p36
      %p204 = pneg %p33
      %p205 = scmp.lt.s32.totalorder %s15, 1
      %s206 = scalar_select %p205, %s15, 1
      %s207 = smul.addr %s206, 5
      %s208 = smul.addr %s207, 4
      %s209 = scalar_lea.vmem %s1, %s208
      %p210 = pneg %p62
      %p211 = pneg %p59
      %p212 = scmp.lt.s32.totalorder %s15, 1
      %s213 = scalar_select %p212, %s15, 1
      %s214 = smul.addr %s213, 5
      %s215 = smul.addr %s214, 4
      %s216 = scalar_lea.vmem %s2, %s215
      %p217 = pneg %p88
      %p218 = pneg %p85
      %p219 = scmp.lt.s32.totalorder %s15, 1
      %s220 = scalar_select %p219, %s15, 1
      %s221 = smul.addr %s220, 5
      %s222 = smul.addr %s221, 4
      %s223 = scalar_lea.vmem %s3, %s222
      %p224 = pneg %p114
      %p225 = pneg %p111
      %p226 = pneg %p140
      %p227 = pneg %p137
      %p228 = scmp.lt.s32.totalorder %s15, 1
      %s229 = scalar_select %p228, %s15, 1
      %s230 = smul.addr %s229, 4
      %s231 = smul.addr %s230, 2
      %s232 = scalar_lea.vmem %s4, %s231
      %p233 = scmp.lt.s32.totalorder %s15, 1
      %s234 = scalar_select %p233, %s15, 1
      %s235 = smul.addr %s234, 5
      %s236 = smul.addr %s235, 4
      %s237 = scalar_lea.vmem %s0, %s236
      %p238 = scmp.lt.s32.totalorder %s15, 1
      %s239 = scalar_select %p238, %s15, 1
      %s240 = smul.addr %s239, 5
      %s241 = smul.addr %s240, 4
      %s242 = scalar_lea.vmem %s1, %s241
      %p243 = scmp.lt.s32.totalorder %s15, 1
      %s244 = scalar_select %p243, %s15, 1
      %s245 = smul.addr %s244, 5
      %s246 = smul.addr %s245, 4
      %s247 = scalar_lea.vmem %s2, %s246
      %p248 = scmp.lt.s32.totalorder %s15, 1
      %s249 = scalar_select %p248, %s15, 1
      %s250 = smul.addr %s249, 5
      %s251 = smul.addr %s250, 4
      %s252 = scalar_lea.vmem %s3, %s251
      %p253 = scmp.lt.s32.totalorder %s15, 1
      %s254 = scalar_select %p253, %s15, 1
      %s255 = smul.addr %s254, 4
      %s256 = smul.addr %s255, 2
      %s257 = scalar_lea.vmem %s4, %s256
      %v258 = vld [vmem:[%s237] sm:$0x3]
      %v259 = vld [vmem:[%s237 + $0x4] sm:$0x3]
      %v260 = vld [vmem:[%s237 + $0x8] sm:$0x3]
      %v261 = vld [vmem:[%s237 + $0xc] sm:$0x3]
      %v262 = vunpack.c.l.bf16 %v258
      %v263 = vunpack.c.l.bf16 %v259
      %v264 = vunpack.c.l.bf16 %v260
      %v265 = vunpack.c.l.bf16 %v261
      %v266 = vld [vmem:[%s242] sm:$0x3]
      %v267 = vld [vmem:[%s242 + $0x4] sm:$0x3]
      %v268 = vld [vmem:[%s242 + $0x8] sm:$0x3]
      %v269 = vld [vmem:[%s242 + $0xc] sm:$0x3]
      %v270 = vunpack.c.l.bf16 %v266
      %v271 = vunpack.c.l.bf16 %v267
      %v272 = vunpack.c.l.bf16 %v268
      %v273 = vunpack.c.l.bf16 %v269
      %v274 = vld [vmem:[%s237] sm:$0x7]
      %v275 = vld [vmem:[%s237 + $0x4] sm:$0x7]
      %v276 = vld [vmem:[%s237 + $0x8] sm:$0x7]
      %v277 = vld [vmem:[%s237 + $0xc] sm:$0x7]
      %v278 = vunpack.c.l.bf16 %v274
      %v279 = vunpack.c.l.bf16 %v275
      %v280 = vunpack.c.l.bf16 %v276
      %v281 = vunpack.c.l.bf16 %v277
      %v282 = vld [vmem:[%s247] sm:$0x3]
      %v283 = vld [vmem:[%s247 + $0x4] sm:$0x3]
      %v284 = vld [vmem:[%s247 + $0x8] sm:$0x3]
      %v285 = vld [vmem:[%s247 + $0xc] sm:$0x3]
      %v286 = vunpack.c.l.bf16 %v282
      %v287 = vunpack.c.l.bf16 %v283
      %v288 = vunpack.c.l.bf16 %v284
      %v289 = vunpack.c.l.bf16 %v285
      %v290 = vld [vmem:[%s252] sm:$0x3]
      %v291 = vld [vmem:[%s252 + $0x4] sm:$0x3]
      %v292 = vld [vmem:[%s252 + $0x8] sm:$0x3]
      %v293 = vld [vmem:[%s252 + $0xc] sm:$0x3]
      %v294 = vunpack.c.l.bf16 %v290
      %v295 = vunpack.c.l.bf16 %v291
      %v296 = vunpack.c.l.bf16 %v292
      %v297 = vunpack.c.l.bf16 %v293
      %v298 = vld [vmem:[%s247] sm:$0x7]
      %v299 = vld [vmem:[%s247 + $0x4] sm:$0x7]
      %v300 = vld [vmem:[%s247 + $0x8] sm:$0x7]
      %v301 = vld [vmem:[%s247 + $0xc] sm:$0x7]
      %v302 = vunpack.c.l.bf16 %v298
      %v303 = vunpack.c.l.bf16 %v299
      %v304 = vunpack.c.l.bf16 %v300
      %v305 = vunpack.c.l.bf16 %v301
      %s306 = scalar_lea.vmem %s237, 4
      %v307 = vld [vmem:[%s306] sm:$0x3]
      %v308 = vld [vmem:[%s306 + $0x4] sm:$0x3]
      %v309 = vld [vmem:[%s306 + $0x8] sm:$0x3]
      %v310 = vld [vmem:[%s306 + $0xc] sm:$0x3]
      %v311 = vunpack.c.l.bf16 %v307
      %v312 = vunpack.c.l.bf16 %v308
      %v313 = vunpack.c.l.bf16 %v309
      %v314 = vunpack.c.l.bf16 %v310
      %s315 = scalar_lea.vmem %s242, 4
      %v316 = vld [vmem:[%s315] sm:$0x3]
      %v317 = vld [vmem:[%s315 + $0x4] sm:$0x3]
      %v318 = vld [vmem:[%s315 + $0x8] sm:$0x3]
      %v319 = vld [vmem:[%s315 + $0xc] sm:$0x3]
      %v320 = vunpack.c.l.bf16 %v316
      %v321 = vunpack.c.l.bf16 %v317
      %v322 = vunpack.c.l.bf16 %v318
      %v323 = vunpack.c.l.bf16 %v319
      %v324 = vld [vmem:[%s306] sm:$0x7]
      %v325 = vld [vmem:[%s306 + $0x4] sm:$0x7]
      %v326 = vld [vmem:[%s306 + $0x8] sm:$0x7]
      %v327 = vld [vmem:[%s306 + $0xc] sm:$0x7]
      %v328 = vunpack.c.l.bf16 %v324
      %v329 = vunpack.c.l.bf16 %v325
      %v330 = vunpack.c.l.bf16 %v326
      %v331 = vunpack.c.l.bf16 %v327
      %v332 = vadd.f32 %v262, %v270
      %v333 = vadd.f32 %v263, %v271
      %v334 = vadd.f32 %v264, %v272
      %v335 = vadd.f32 %v265, %v273
      %v340 = vrot.slane %v278, 1
      %v341 = vrot.slane %v279, 1
      %v342 = vrot.slane %v280, 1
      %v343 = vrot.slane %v281, 1
      %v348 = vadd.f32 %v332, %v340
      %v349 = vadd.f32 %v333, %v341
      %v350 = vadd.f32 %v334, %v342
      %v351 = vadd.f32 %v335, %v343
      %v352 = vadd.f32 %v348, %v286
      %v353 = vadd.f32 %v349, %v287
      %v354 = vadd.f32 %v350, %v288
      %v355 = vadd.f32 %v351, %v289
      %v356 = vadd.f32 %v352, %v294
      %v357 = vadd.f32 %v353, %v295
      %v358 = vadd.f32 %v354, %v296
      %v359 = vadd.f32 %v355, %v297
      %v364 = vrot.slane %v302, 1
      %v365 = vrot.slane %v303, 1
      %v366 = vrot.slane %v304, 1
      %v367 = vrot.slane %v305, 1
      %v372 = vadd.f32 %v356, %v364
      %v373 = vadd.f32 %v357, %v365
      %v374 = vadd.f32 %v358, %v366
      %v375 = vadd.f32 %v359, %v367
      %v376 = vadd.f32 %v372, %v311
      %v377 = vadd.f32 %v373, %v312
      %v378 = vadd.f32 %v374, %v313
      %v379 = vadd.f32 %v375, %v314
      %v380 = vadd.f32 %v376, %v320
      %v381 = vadd.f32 %v377, %v321
      %v382 = vadd.f32 %v378, %v322
      %v383 = vadd.f32 %v379, %v323
      %v388 = vrot.slane %v328, 1
      %v389 = vrot.slane %v329, 1
      %v390 = vrot.slane %v330, 1
      %v391 = vrot.slane %v331, 1
      %v396 = vadd.f32 %v380, %v388
      %v397 = vadd.f32 %v381, %v389
      %v398 = vadd.f32 %v382, %v390
      %v399 = vadd.f32 %v383, %v391
      %v400 = vmul.f32 %v396, 0.11111111
      %v401 = vmul.f32 %v397, 0.11111111
      %v402 = vmul.f32 %v398, 0.11111111
      %v403 = vmul.f32 %v399, 0.11111111
      %v404 = vmax.f32 %v400, 0.0
      %v405 = vmax.f32 %v401, 0.0
      %v406 = vmax.f32 %v402, 0.0
      %v407 = vmax.f32 %v403, 0.0
      %v408 = vpack.c.bf16 %v404, %v404
      %v409 = vpack.c.bf16 %v405, %v405
      %v410 = vpack.c.bf16 %v406, %v406
      %v411 = vpack.c.bf16 %v407, %v407
      %vm412 = vcmask 189440
      %413 = vst.msk [vmem:[%s257] sm:$0x3] %vm412, %v408
      %414 = vst.msk [vmem:[%s257 + $0x2] sm:$0x3] %vm412, %v409
      %415 = vst.msk [vmem:[%s257 + $0x4] sm:$0x3] %vm412, %v410
      %416 = vst.msk [vmem:[%s257 + $0x6] sm:$0x3] %vm412, %v411
      %p417 = scmp.lt.s32.totalorder %s15, 1
      %s418 = scalar_select %p417, %s15, 1
      %s419 = smul.addr %s418, 4
      %s420 = smul.addr %s419, 2
      %s421 = scalar_lea.vmem %s4, %s420
      // Predicated region
      $region37: #{_lambda_.59} parent=35 // pred_check
        %p422 = pneg %p137
      $region38: #{_lambda_.59} parent=35 // pred_check_branch
        %424 = sbr.rel (%p422) target = $region40
      $region39: #{_lambda_.59} parent=35 // pred_region
        _
      $region40: #{_lambda_.59} parent=35 // pred_fallthru
        _
    $region36: #{_lambda_.59} parent=5 // pred_fallthru
      _
    %p425 = scmp.le.s32.totalorder 2, %s10
    // Predicated region
    $region41: #{_lambda_.59} parent=5 // pred_check
      %p426 = pneg %p425
    $region42: #{_lambda_.59} parent=5 // pred_check_branch
      %428 = sbr.rel (%p426) target = $region44
    $region43: #{_lambda_.59} parent=5 // pred_region
      %s429 = ssub.s32 %s10, 2
      // Predicated region
      $region45: #{_lambda_.59} parent=43 // pred_check
        %p430 = pneg %p143
      $region46: #{_lambda_.59} parent=43 // pred_check_branch
        %432 = sbr.rel (%p430) target = $region48
      $region47: #{_lambda_.59} parent=43 // pred_region
        %p433 = scmp.lt.s32.totalorder %s16, 1
        %s434 = scalar_select %p433, %s16, 1
        %s435 = smul.addr %s434, 4
        %s436 = smul.addr %s435, 2
        %s437 = scalar_lea.vmem %s4, %s436
      $region48: #{_lambda_.59} parent=43 // pred_fallthru
        _
    $region44: #{_lambda_.59} parent=5 // pred_fallthru
      _
  $region6: #{_lambda_.59} parent=0 // loop_footer
    %s14 = sadd.s32 1, %s10
  $region7: #{_lambda_.59} parent=0 // loop_footer_branch
    %9 = sbr.rel target = $region3
  $region8: #{_lambda_.59} parent=0 // loop_exit
    _

// kernel: _lambda_.62
$region0: #{_lambda_.62}
  #allocation0 [shape = 'u32[]', space=smem, size = 0x4, offset = 0x4, fixed_abs, tag = 'smem constant byte address 0x4 - core index']
  #allocation1 [shape = 'u32[144,128]{1,0:T(1,128)}', space=vmem, size = 0x12000, scoped, tag = 'internal scratch']
  %s0 = inlined_call_operand.vmem [shape: bf16[32,10], index: 0, kind: input, shape index: {}]
  %s1 = inlined_call_operand.vmem [shape: bf16[10,40], index: 1, kind: input, shape index: {}]
  %s2 = inlined_call_operand.vmem [shape: f32[1,40], index: 2, kind: input, shape index: {}]
  %s3 = inlined_call_operand.vmem [shape: f32[1,40], index: 3, kind: input, shape index: {}]
  %s4 = inlined_call_operand.vmem [shape: bf16[32,40], index: 4, kind: input, shape index: {}, may-alias: {4,5}]
  %s5 = inlined_call_operand.vmem [shape: bf16[32,40], index: 5, kind: output, shape index: {}, may-alias: {4,5}]
  %s6 = sld [smem:[#allocation0]]
  $region30: #{_lambda_.62} parent=0
    _
  %s8 = ssub.s32 1, %s6
  %s9 = scalar_select 0, %s8, %s6
  // Predicated region
  $region2: #{_lambda_.62} parent=0 // pred_check
    _
  $region3: #{_lambda_.62} parent=0 // pred_check_branch
    %11 = sbr.rel (0) target = $region5
  $region4: #{_lambda_.62} parent=0 // pred_region
    _
  $region5: #{_lambda_.62} parent=0 // pred_fallthru
    _
  // Predicated region
  $region6: #{_lambda_.62} parent=0 // pred_check
    _
  $region7: #{_lambda_.62} parent=0 // pred_check_branch
    %13 = sbr.rel (0) target = $region9
  $region8: #{_lambda_.62} parent=0 // pred_region
    _
  $region9: #{_lambda_.62} parent=0 // pred_fallthru
    _
  // Predicated region
  $region10: #{_lambda_.62} parent=0 // pred_check
    _
  $region11: #{_lambda_.62} parent=0 // pred_check_branch
    %15 = sbr.rel (0) target = $region13
  $region12: #{_lambda_.62} parent=0 // pred_region
    _
  $region13: #{_lambda_.62} parent=0 // pred_fallthru
    _
  // Predicated region
  $region14: #{_lambda_.62} parent=0 // pred_check
    _
  $region15: #{_lambda_.62} parent=0 // pred_check_branch
    %17 = sbr.rel (0) target = $region17
  $region16: #{_lambda_.62} parent=0 // pred_region
    _
  $region17: #{_lambda_.62} parent=0 // pred_fallthru
    _
  // Predicated region
  $region18: #{_lambda_.62} parent=0 // pred_check
    _
  $region19: #{_lambda_.62} parent=0 // pred_check_branch
    %19 = sbr.rel (0) target = $region21
  $region20: #{_lambda_.62} parent=0 // pred_region
    _
  $region21: #{_lambda_.62} parent=0 // pred_fallthru
    _
  %v21 = vld [vmem:[%s0] sm:$0xf]
  %v22 = vld [vmem:[%s0 + $0x4] sm:$0xf]
  %v23 = vld [vmem:[%s0 + $0x8] sm:$0xf]
  %v24 = vld [vmem:[%s0 + $0xc] sm:$0xf]
  %v25 = vld [vmem:[%s1] sm:$0xf]
  %v26 = vld [vmem:[%s1 + $0x4] sm:$0x1]
  %v31 = vunpack.c.l.b16 %v21
  %v32 = vunpack.c.l.b16 %v22
  %v33 = vunpack.c.l.b16 %v23
  %v34 = vunpack.c.l.b16 %v24
  %v35 = vpack.c.b16 %v32, %v31
  %v36 = vpack.c.b16 %v34, %v33
  %v39 = vunpack.c.l.b16 %v25
  %v40 = vunpack.c.l.b16 %v26
  %v41 = vpack.c.b16 %v40, %v39
  %vm42 = vcmask 80896
  %v44 = vsel %vm42, %v35, 0
  %v47 = vsel %vm42, %v36, 0
  %vm49 = vcmask 1044480
  %v51 = vsel %vm49, %v41, 0
  %53 = vmatprep.subr.bf16.mxu0 0
  %54 = vmatpush1.bf16.msra.mxu0 0
  %55 = vmatprep.subr.bf16.mxu0 0
  %56 = vmatpush1.bf16.msra.mxu0 0
  %57 = vmatprep.subr.bf16.mxu0 0
  %58 = vmatpush1.bf16.msra.mxu0 0
  %59 = vmatprep.subr.bf16.mxu0 0
  %60 = vmatpush1.bf16.msra.mxu0 0
  %61 = vmatprep.subr.bf16.mxu0 0
  %62 = vmatpush1.bf16.msra.mxu0 0
  %63 = vmatprep.subr.bf16.mxu0 0
  %64 = vmatpush1.bf16.msra.mxu0 0
  %65 = vmatprep.subr.bf16.mxu0 0
  %66 = vmatpush1.bf16.msra.mxu0 0
  %67 = vmatprep.subr.bf16.mxu0 0
  %68 = vmatpush1.bf16.msra.mxu0 %v51
  %69 = vmatprep.subr.bf16.mxu0 0
  %70 = vmatpush2.bf16.msra.mxu0 0
  %71 = vmatprep.subr.bf16.mxu0 0
  %72 = vmatpush2.bf16.msra.mxu0 0
  %73 = vmatprep.subr.bf16.mxu0 0
  %74 = vmatpush2.bf16.msra.mxu0 0
  %75 = vmatprep.subr.bf16.mxu0 0
  %76 = vmatpush2.bf16.msra.mxu0 0
  %77 = vmatprep.subr.bf16.mxu0 0
  %78 = vmatpush2.bf16.msra.mxu0 0
  %79 = vmatprep.subr.bf16.mxu0 0
  %80 = vmatpush2.bf16.msra.mxu0 0
  %81 = vmatprep.subr.bf16.mxu0 0
  %82 = vmatpush2.bf16.msra.mxu0 0
  %83 = vmatprep.subr.bf16.mxu0 0
  %84 = vmatpush2.bf16.msra.mxu0 0
  %85 = vmatprep.mubr.bf16.mxu0 0
  %86 = vmatmul.mubr.bf16.gmra.mxu0 %v44
  %v87 = vpop.f32.mrf.mxu0
  %v88 = vadd.f32 0.0, %v87
  %v89 = vpop.f32.mrf.mxu0
  %v90 = vpop.f32.mrf.mxu0
  %v91 = vadd.f32 0.0, %v90
  %v92 = vpop.f32.mrf.mxu0
  %93 = vmatprep.mubr.bf16.mxu0 0
  %94 = vmatmul.mubr.bf16.gmra.mxu0 %v47
  %v95 = vpop.f32.mrf.mxu0
  %v96 = vadd.f32 0.0, %v95
  %v97 = vpop.f32.mrf.mxu0
  %v98 = vpop.f32.mrf.mxu0
  %v99 = vadd.f32 0.0, %v98
  %v100 = vpop.f32.mrf.mxu0
  %101 = vdwg.mxu0
  %v102 = vld [vmem:[%s2] sm:$0x1]
  %v104 = vlaneseq
  %v105 = vshrl.u32 %v104, 7
  %v106 = vsub.s32 0, %v105
  %v107 = vrot.slane %v102, %v106
  %v109 = vmul.f32 %v88, %v107
  %v110 = vmul.f32 %v91, %v107
  %v111 = vmul.f32 %v96, %v107
  %v112 = vmul.f32 %v99, %v107
  %v113 = vld [vmem:[%s3] sm:$0x1]
  %v115 = vlaneseq
  %v116 = vshrl.u32 %v115, 7
  %v117 = vsub.s32 0, %v116
  %v118 = vrot.slane %v113, %v117
  %v120 = vadd.f32 %v109, %v118
  %v121 = vadd.f32 %v110, %v118
  %v122 = vadd.f32 %v111, %v118
  %v123 = vadd.f32 %v112, %v118
  %v124 = vld [vmem:[%s4] sm:$0xf]
  %v125 = vld [vmem:[%s4 + $0x4] sm:$0xf]
  %v126 = vld [vmem:[%s4 + $0x8] sm:$0xf]
  %v127 = vld [vmem:[%s4 + $0xc] sm:$0xf]
  %v128 = vunpack.c.l.bf16 %v124
  %v129 = vunpack.c.l.bf16 %v125
  %v130 = vunpack.c.l.bf16 %v126
  %v131 = vunpack.c.l.bf16 %v127
  %v132 = vadd.f32 %v120, %v128
  %v133 = vadd.f32 %v121, %v129
  %v134 = vadd.f32 %v122, %v130
  %v135 = vadd.f32 %v123, %v131
  %v136 = vmax.f32 %v132, 0.0
  %v137 = vmax.f32 %v133, 0.0
  %v138 = vmax.f32 %v134, 0.0
  %v139 = vmax.f32 %v135, 0.0
  %v140 = vpack.c.bf16 %v137, %v136
  %v141 = vpack.c.bf16 %v139, %v138
  %v144 = vunpack.c.l.b16 %v140
  %v145 = vunpack.c.h.b16 %v140
  %v146 = vunpack.c.l.b16 %v141
  %v147 = vunpack.c.h.b16 %v141
  %v148 = vpack.c.b16 %v144, %v144
  %v149 = vpack.c.b16 %v145, %v145
  %v150 = vpack.c.b16 %v146, %v146
  %v151 = vpack.c.b16 %v147, %v147
  %vm156 = vcmask 322560
  %157 = vst.msk [vmem:[%s5] sm:$0xf] %vm156, %v148
  %158 = vst.msk [vmem:[%s5 + $0x4] sm:$0xf] %vm156, %v149
  %159 = vst.msk [vmem:[%s5 + $0x8] sm:$0xf] %vm156, %v150
  %160 = vst.msk [vmem:[%s5 + $0xc] sm:$0xf] %vm156, %v151
  // Predicated region
  $region22: #{_lambda_.62} parent=0 // pred_check
    _
  $region23: #{_lambda_.62} parent=0 // pred_check_branch
    %162 = sbr.rel (0) target = $region25
  $region24: #{_lambda_.62} parent=0 // pred_region
    _
  $region25: #{_lambda_.62} parent=0 // pred_fallthru
    _
  // Predicated region
  $region26: #{_lambda_.62} parent=0 // pred_check
    _
  $region27: #{_lambda_.62} parent=0 // pred_check_branch
    %164 = sbr.rel (0) target = $region29
  $region28: #{_lambda_.62} parent=0 // pred_region
    _
  $region29: #{_lambda_.62} parent=0 // pred_fallthru
    _

// kernel: _lambda_.61
$region0: #{_lambda_.61}
  #allocation0 [shape = 'u32[]', space=smem, size = 0x4, offset = 0x4, fixed_abs, tag = 'smem constant byte address 0x4 - core index']
  #allocation1 [shape = 'u32[144,128]{1,0:T(1,128)}', space=vmem, size = 0x12000, scoped, tag = 'internal scratch']
  %s0 = inlined_call_operand.vmem [shape: bf16[2,6,6,10], index: 0, kind: input, shape index: {}]
  %s1 = inlined_call_operand.vmem [shape: f32[9,1,10], index: 1, kind: input, shape index: {}]
  %s2 = inlined_call_operand.vmem [shape: f32[1,1,10], index: 2, kind: input, shape index: {}]
  %s3 = inlined_call_operand.vmem [shape: f32[1,1,10], index: 3, kind: input, shape index: {}]
  %s4 = inlined_call_operand.vmem [shape: bf16[2,4,4,10], index: 4, kind: output, shape index: {}]
  %s5 = sld [smem:[#allocation0]]
  $region49: #{_lambda_.61} parent=0
    _
  %s7 = ssub.s32 1, %s5
  %s8 = scalar_select 0, %s7, %s5
  loop: start=0, step=1, limit=4
  $region2: #{_lambda_.61} parent=0 // loop_pre_header
    _
  $region3: #{_lambda_.61} parent=0 // loop_header
    %s10 = sphi 0, %s14
    %p11 = scmp.ge.s32.totalorder %s10, 4
    %s20 = sphi 0, %s22
    %s23 = sphi 0, %s20
    %s24 = sphi 0, %s23
    %s40 = sphi 0, %s24
    %s44 = sphi 0, %s44
    %s46 = sphi 0, %s44
    %s47 = sphi 0, %s46
    %s61 = sphi 0, %s47
    %s65 = sphi 0, %s65
    %s67 = sphi 0, %s65
    %s68 = sphi 0, %s67
    %s82 = sphi 0, %s68
    %s86 = sphi 0, %s86
    %s88 = sphi 0, %s86
    %s89 = sphi 0, %s88
    %s103 = sphi 0, %s89
    %s109 = sphi 0, %s111
    %s112 = sphi 0, %s109
    %s113 = sphi 0, %s112
    %s129 = sphi 0, %s113
  $region4: #{_lambda_.61} parent=0 // loop_header_branch
    %13 = sbr.rel (%p11) target = $region8
  $region5: #{_lambda_.61} parent=0 // loop_body
    %s15 = ssub.s32 %s10, 1
    %s16 = ssub.s32 %s10, 2
    %s17 = sadd.s32 %s10, 1
    %s18 = ssub.s32 %s10, %s17
    %p19 = scmp.eq.s32.totalorder %s18, 0
    %s21 = sadd.s32 %s20, 1
    %s22 = scalar_select %p19, %s20, %s21
    %p25 = pneg %p19
    %p26 = scmp.eq.s32.totalorder %s10, 1
    %p27 = por %p25, %p26
    %p28 = scmp.ne.s32.totalorder %s20, %s23
    %p29 = scmp.eq.s32.totalorder %s10, 0
    %p30 = por %p28, %p29
    %p31 = scmp.ne.s32.totalorder %s20, %s23
    %p32 = scmp.eq.s32.totalorder %s15, 1
    %p33 = por %p31, %p32
    %p34 = scmp.ne.s32.totalorder %s23, %s24
    %p35 = scmp.eq.s32.totalorder %s15, 0
    %p36 = por %p34, %p35
    %p37 = scmp.ne.s32.totalorder %s23, %s24
    %p38 = scmp.eq.s32.totalorder %s16, 1
    %p39 = por %p37, %p38
    %p41 = scmp.ne.s32.totalorder %s24, %s40
    %p42 = scmp.eq.s32.totalorder %s16, 0
    %p43 = por %p41, %p42
    %s45 = sadd.s32 %s44, 1
    %p48 = scmp.eq.s32.totalorder %s10, 1
    %p49 = scmp.ne.s32.totalorder %s44, %s46
    %p50 = scmp.eq.s32.totalorder %s10, 0
    %p51 = por %p49, %p50
    %p52 = scmp.ne.s32.totalorder %s44, %s46
    %p53 = scmp.eq.s32.totalorder %s15, 1
    %p54 = por %p52, %p53
    %p55 = scmp.ne.s32.totalorder %s46, %s47
    %p56 = scmp.eq.s32.totalorder %s15, 0
    %p57 = por %p55, %p56
    %p58 = scmp.ne.s32.totalorder %s46, %s47
    %p59 = scmp.eq.s32.totalorder %s16, 1
    %p60 = por %p58, %p59
    %p62 = scmp.ne.s32.totalorder %s47, %s61
    %p63 = scmp.eq.s32.totalorder %s16, 0
    %p64 = por %p62, %p63
    %s66 = sadd.s32 %s65, 1
    %p69 = scmp.eq.s32.totalorder %s10, 1
    %p70 = scmp.ne.s32.totalorder %s65, %s67
    %p71 = scmp.eq.s32.totalorder %s10, 0
    %p72 = por %p70, %p71
    %p73 = scmp.ne.s32.totalorder %s65, %s67
    %p74 = scmp.eq.s32.totalorder %s15, 1
    %p75 = por %p73, %p74
    %p76 = scmp.ne.s32.totalorder %s67, %s68
    %p77 = scmp.eq.s32.totalorder %s15, 0
    %p78 = por %p76, %p77
    %p79 = scmp.ne.s32.totalorder %s67, %s68
    %p80 = scmp.eq.s32.totalorder %s16, 1
    %p81 = por %p79, %p80
    %p83 = scmp.ne.s32.totalorder %s68, %s82
    %p84 = scmp.eq.s32.totalorder %s16, 0
    %p85 = por %p83, %p84
    %s87 = sadd.s32 %s86, 1
    %p90 = scmp.eq.s32.totalorder %s10, 1
    %p91 = scmp.ne.s32.totalorder %s86, %s88
    %p92 = scmp.eq.s32.totalorder %s10, 0
    %p93 = por %p91, %p92
    %p94 = scmp.ne.s32.totalorder %s86, %s88
    %p95 = scmp.eq.s32.totalorder %s15, 1
    %p96 = por %p94, %p95
    %p97 = scmp.ne.s32.totalorder %s88, %s89
    %p98 = scmp.eq.s32.totalorder %s15, 0
    %p99 = por %p97, %p98
    %p100 = scmp.ne.s32.totalorder %s88, %s89
    %p101 = scmp.eq.s32.totalorder %s16, 1
    %p102 = por %p100, %p101
    %p104 = scmp.ne.s32.totalorder %s89, %s103
    %p105 = scmp.eq.s32.totalorder %s16, 0
    %p106 = por %p104, %p105
    %s107 = ssub.s32 %s10, %s17
    %p108 = scmp.eq.s32.totalorder %s107, 0
    %s110 = sadd.s32 %s109, 1
    %s111 = scalar_select %p108, %s109, %s110
    %p114 = pneg %p108
    %p115 = scmp.eq.s32.totalorder %s10, 1
    %p116 = por %p114, %p115
    %p117 = scmp.ne.s32.totalorder %s109, %s112
    %p118 = scmp.eq.s32.totalorder %s10, 0
    %p119 = por %p117, %p118
    %p120 = scmp.ne.s32.totalorder %s109, %s112
    %p121 = scmp.eq.s32.totalorder %s15, 1
    %p122 = por %p120, %p121
    %p123 = scmp.ne.s32.totalorder %s112, %s113
    %p124 = scmp.eq.s32.totalorder %s15, 0
    %p125 = por %p123, %p124
    %p126 = scmp.ne.s32.totalorder %s112, %s113
    %p127 = scmp.eq.s32.totalorder %s16, 1
    %p128 = por %p126, %p127
    %p130 = scmp.ne.s32.totalorder %s113, %s129
    %p131 = scmp.eq.s32.totalorder %s16, 0
    %p132 = por %p130, %p131
    %p133 = scmp.le.s32.totalorder 1, %s10
    %p134 = scmp.lt.s32.totalorder %s10, 3
    %p135 = pnand %p133, %p134
    %p136 = pneg %p135
    // Predicated region
    $region9: #{_lambda_.61} parent=5 // pred_check
      _
    $region10: #{_lambda_.61} parent=5 // pred_check_branch
      %138 = sbr.rel (%p135) target = $region12
    $region11: #{_lambda_.61} parent=5 // pred_region
      %s139 = ssub.s32 %s10, 1
      // Predicated region
      $region13: #{_lambda_.61} parent=11 // pred_check
        %p140 = pneg %p57
      $region14: #{_lambda_.61} parent=11 // pred_check_branch
        %142 = sbr.rel (%p140) target = $region16
      $region15: #{_lambda_.61} parent=11 // pred_region
        _
      $region16: #{_lambda_.61} parent=11 // pred_fallthru
        _
      // Predicated region
      $region17: #{_lambda_.61} parent=11 // pred_check
        %p143 = pneg %p78
      $region18: #{_lambda_.61} parent=11 // pred_check_branch
        %145 = sbr.rel (%p143) target = $region20
      $region19: #{_lambda_.61} parent=11 // pred_region
        _
      $region20: #{_lambda_.61} parent=11 // pred_fallthru
        _
      // Predicated region
      $region21: #{_lambda_.61} parent=11 // pred_check
        %p146 = pneg %p99
      $region22: #{_lambda_.61} parent=11 // pred_check_branch
        %148 = sbr.rel (%p146) target = $region24
      $region23: #{_lambda_.61} parent=11 // pred_region
        _
      $region24: #{_lambda_.61} parent=11 // pred_fallthru
        _
    $region12: #{_lambda_.61} parent=5 // pred_fallthru
      _
    %p149 = scmp.lt.s32.totalorder %s10, 2
    // Predicated region
    $region25: #{_lambda_.61} parent=5 // pred_check
      %p150 = pneg %p149
    $region26: #{_lambda_.61} parent=5 // pred_check_branch
      %152 = sbr.rel (%p150) target = $region28
    $region27: #{_lambda_.61} parent=5 // pred_region
      // Predicated region
      $region29: #{_lambda_.61} parent=27 // pred_check
        %p153 = pneg %p30
      $region30: #{_lambda_.61} parent=27 // pred_check_branch
        %155 = sbr.rel (%p153) target = $region32
      $region31: #{_lambda_.61} parent=27 // pred_region
        %p156 = scmp.lt.s32.totalorder %s10, 1
        %s157 = scalar_select %p156, %s10, 1
        %s158 = smul.addr %s157, 6
        %s159 = smul.addr %s158, 4
        %s160 = scalar_lea.vmem %s0, %s159
      $region32: #{_lambda_.61} parent=27 // pred_fallthru
        _
    $region28: #{_lambda_.61} parent=5 // pred_fallthru
      _
    %p161 = scmp.le.s32.totalorder 1, %s10
    %p162 = scmp.lt.s32.totalorder %s10, 3
    %p163 = pnand %p161, %p162
    %p164 = pneg %p163
    // Predicated region
    $region33: #{_lambda_.61} parent=5 // pred_check
      _
    $region34: #{_lambda_.61} parent=5 // pred_check_branch
      %166 = sbr.rel (%p163) target = $region36
    $region35: #{_lambda_.61} parent=5 // pred_region
      %s167 = ssub.s32 %s10, 1
      %p168 = scmp.lt.s32.totalorder %s15, 1
      %s169 = scalar_select %p168, %s15, 1
      %s170 = smul.addr %s169, 6
      %s171 = smul.addr %s170, 4
      %s172 = scalar_lea.vmem %s0, %s171
      %p173 = pneg %p36
      %p174 = pneg %p33
      %p175 = pneg %p57
      %p176 = pneg %p54
      %p177 = pneg %p78
      %p178 = pneg %p75
      %p179 = pneg %p99
      %p180 = pneg %p96
      %p181 = pneg %p125
      %p182 = pneg %p122
      %p183 = scmp.lt.s32.totalorder %s15, 1
      %s184 = scalar_select %p183, %s15, 1
      %s185 = smul.addr %s184, 4
      %s186 = smul.addr %s185, 2
      %s187 = scalar_lea.vmem %s4, %s186
      %p188 = scmp.lt.s32.totalorder %s15, 1
      %s189 = scalar_select %p188, %s15, 1
      %s190 = smul.addr %s189, 6
      %s191 = smul.addr %s190, 4
      %s192 = scalar_lea.vmem %s0, %s191
      %p193 = scmp.lt.s32.totalorder %s15, 1
      %s194 = scalar_select %p193, %s15, 1
      %s195 = smul.addr %s194, 4
      %s196 = smul.addr %s195, 2
      %s197 = scalar_lea.vmem %s4, %s196
      %v198 = vld [vmem:[%s192] sm:$0x3]
      %v199 = vld [vmem:[%s192 + $0x4] sm:$0x3]
      %v200 = vld [vmem:[%s192 + $0x8] sm:$0x3]
      %v201 = vld [vmem:[%s192 + $0xc] sm:$0x3]
      %v202 = vunpack.c.l.bf16 %v198
      %v203 = vunpack.c.l.bf16 %v199
      %v204 = vunpack.c.l.bf16 %v200
      %v205 = vunpack.c.l.bf16 %v201
      %v206 = vld [vmem:[%s192] sm:$0x7]
      %v207 = vld [vmem:[%s192 + $0x4] sm:$0x7]
      %v208 = vld [vmem:[%s192 + $0x8] sm:$0x7]
      %v209 = vld [vmem:[%s192 + $0xc] sm:$0x7]
      %v210 = vunpack.c.l.bf16 %v206
      %v211 = vunpack.c.l.bf16 %v207
      %v212 = vunpack.c.l.bf16 %v208
      %v213 = vunpack.c.l.bf16 %v209
      %v214 = vld [vmem:[%s192] sm:$0x6]
      %v215 = vld [vmem:[%s192 + $0x4] sm:$0x6]
      %v216 = vld [vmem:[%s192 + $0x8] sm:$0x6]
      %v217 = vld [vmem:[%s192 + $0xc] sm:$0x6]
      %v218 = vunpack.c.l.bf16 %v214
      %v219 = vunpack.c.l.bf16 %v215
      %v220 = vunpack.c.l.bf16 %v216
      %v221 = vunpack.c.l.bf16 %v217
      %s222 = scalar_lea.vmem %s192, 4
      %v223 = vld [vmem:[%s222] sm:$0x3]
      %v224 = vld [vmem:[%s222 + $0x4] sm:$0x3]
      %v225 = vld [vmem:[%s222 + $0x8] sm:$0x3]
      %v226 = vld [vmem:[%s222 + $0xc] sm:$0x3]
      %v227 = vunpack.c.l.bf16 %v223
      %v228 = vunpack.c.l.bf16 %v224
      %v229 = vunpack.c.l.bf16 %v225
      %v230 = vunpack.c.l.bf16 %v226
      %v231 = vld [vmem:[%s222] sm:$0x7]
      %v232 = vld [vmem:[%s222 + $0x4] sm:$0x7]
      %v233 = vld [vmem:[%s222 + $0x8] sm:$0x7]
      %v234 = vld [vmem:[%s222 + $0xc] sm:$0x7]
      %v235 = vunpack.c.l.bf16 %v231
      %v236 = vunpack.c.l.bf16 %v232
      %v237 = vunpack.c.l.bf16 %v233
      %v238 = vunpack.c.l.bf16 %v234
      %v239 = vld [vmem:[%s222] sm:$0x6]
      %v240 = vld [vmem:[%s222 + $0x4] sm:$0x6]
      %v241 = vld [vmem:[%s222 + $0x8] sm:$0x6]
      %v242 = vld [vmem:[%s222 + $0xc] sm:$0x6]
      %v243 = vunpack.c.l.bf16 %v239
      %v244 = vunpack.c.l.bf16 %v240
      %v245 = vunpack.c.l.bf16 %v241
      %v246 = vunpack.c.l.bf16 %v242
      %s247 = scalar_lea.vmem %s192, 8
      %v248 = vld [vmem:[%s247] sm:$0x3]
      %v249 = vld [vmem:[%s247 + $0x4] sm:$0x3]
      %v250 = vld [vmem:[%s247 + $0x8] sm:$0x3]
      %v251 = vld [vmem:[%s247 + $0xc] sm:$0x3]
      %v252 = vunpack.c.l.bf16 %v248
      %v253 = vunpack.c.l.bf16 %v249
      %v254 = vunpack.c.l.bf16 %v250
      %v255 = vunpack.c.l.bf16 %v251
      %v256 = vld [vmem:[%s247] sm:$0x7]
      %v257 = vld [vmem:[%s247 + $0x4] sm:$0x7]
      %v258 = vld [vmem:[%s247 + $0x8] sm:$0x7]
      %v259 = vld [vmem:[%s247 + $0xc] sm:$0x7]
      %v260 = vunpack.c.l.bf16 %v256
      %v261 = vunpack.c.l.bf16 %v257
      %v262 = vunpack.c.l.bf16 %v258
      %v263 = vunpack.c.l.bf16 %v259
      %v264 = vld [vmem:[%s247] sm:$0x6]
      %v265 = vld [vmem:[%s247 + $0x4] sm:$0x6]
      %v266 = vld [vmem:[%s247 + $0x8] sm:$0x6]
      %v267 = vld [vmem:[%s247 + $0xc] sm:$0x6]
      %v268 = vunpack.c.l.bf16 %v264
      %v269 = vunpack.c.l.bf16 %v265
      %v270 = vunpack.c.l.bf16 %v266
      %v271 = vunpack.c.l.bf16 %v267
      %v272 = vld [vmem:[%s1] sm:$0x1]
      %v274 = vlaneseq
      %v275 = vshrl.u32 %v274, 7
      %v276 = vsub.s32 0, %v275
      %v277 = vrot.slane %v272, %v276
      %v279 = vmul.f32 %v202, %v277
      %v280 = vmul.f32 %v203, %v277
      %v281 = vmul.f32 %v204, %v277
      %v282 = vmul.f32 %v205, %v277
      %s283 = scalar_lea.vmem %s1, 1
      %v284 = vld [vmem:[%s283] sm:$0x1]
      %v286 = vlaneseq
      %v287 = vshrl.u32 %v286, 7
      %v288 = vsub.s32 0, %v287
      %v289 = vrot.slane %v284, %v288
      %v291 = vmul.f32 %v210, %v289
      %v292 = vmul.f32 %v211, %v289
      %v293 = vmul.f32 %v212, %v289
      %v294 = vmul.f32 %v213, %v289
      %v299 = vrot.slane %v291, 1
      %v300 = vrot.slane %v292, 1
      %v301 = vrot.slane %v293, 1
      %v302 = vrot.slane %v294, 1
      %v307 = vadd.f32 %v279, %v299
      %v308 = vadd.f32 %v280, %v300
      %v309 = vadd.f32 %v281, %v301
      %v310 = vadd.f32 %v282, %v302
      %s311 = scalar_lea.vmem %s1, 2
      %v312 = vld [vmem:[%s311] sm:$0x1]
      %v314 = vlaneseq
      %v315 = vshrl.u32 %v314, 7
      %v316 = vsub.s32 0, %v315
      %v317 = vrot.slane %v312, %v316
      %v319 = vmul.f32 %v218, %v317
      %v320 = vmul.f32 %v219, %v317
      %v321 = vmul.f32 %v220, %v317
      %v322 = vmul.f32 %v221, %v317
      %v327 = vrot.slane %v319, 2
      %v328 = vrot.slane %v320, 2
      %v329 = vrot.slane %v321, 2
      %v330 = vrot.slane %v322, 2
      %v335 = vadd.f32 %v307, %v327
      %v336 = vadd.f32 %v308, %v328
      %v337 = vadd.f32 %v309, %v329
      %v338 = vadd.f32 %v310, %v330
      %s339 = scalar_lea.vmem %s1, 3
      %v340 = vld [vmem:[%s339] sm:$0x1]
      %v342 = vlaneseq
      %v343 = vshrl.u32 %v342, 7
      %v344 = vsub.s32 0, %v343
      %v345 = vrot.slane %v340, %v344
      %v347 = vmul.f32 %v227, %v345
      %v348 = vmul.f32 %v228, %v345
      %v349 = vmul.f32 %v229, %v345
      %v350 = vmul.f32 %v230, %v345
      %v351 = vadd.f32 %v335, %v347
      %v352 = vadd.f32 %v336, %v348
      %v353 = vadd.f32 %v337, %v349
      %v354 = vadd.f32 %v338, %v350
      %s355 = scalar_lea.vmem %s1, 4
      %v356 = vld [vmem:[%s355] sm:$0x1]
      %v358 = vlaneseq
      %v359 = vshrl.u32 %v358, 7
      %v360 = vsub.s32 0, %v359
      %v361 = vrot.slane %v356, %v360
      %v363 = vmul.f32 %v235, %v361
      %v364 = vmul.f32 %v236, %v361
      %v365 = vmul.f32 %v237, %v361
      %v366 = vmul.f32 %v238, %v361
      %v371 = vrot.slane %v363, 1
      %v372 = vrot.slane %v364, 1
      %v373 = vrot.slane %v365, 1
      %v374 = vrot.slane %v366, 1
      %v379 = vadd.f32 %v351, %v371
      %v380 = vadd.f32 %v352, %v372
      %v381 = vadd.f32 %v353, %v373
      %v382 = vadd.f32 %v354, %v374
      %s383 = scalar_lea.vmem %s1, 5
      %v384 = vld [vmem:[%s383] sm:$0x1]
      %v386 = vlaneseq
      %v387 = vshrl.u32 %v386, 7
      %v388 = vsub.s32 0, %v387
      %v389 = vrot.slane %v384, %v388
      %v391 = vmul.f32 %v243, %v389
      %v392 = vmul.f32 %v244, %v389
      %v393 = vmul.f32 %v245, %v389
      %v394 = vmul.f32 %v246, %v389
      %v399 = vrot.slane %v391, 2
      %v400 = vrot.slane %v392, 2
      %v401 = vrot.slane %v393, 2
      %v402 = vrot.slane %v394, 2
      %v407 = vadd.f32 %v379, %v399
      %v408 = vadd.f32 %v380, %v400
      %v409 = vadd.f32 %v381, %v401
      %v410 = vadd.f32 %v382, %v402
      %s411 = scalar_lea.vmem %s1, 6
      %v412 = vld [vmem:[%s411] sm:$0x1]
      %v414 = vlaneseq
      %v415 = vshrl.u32 %v414, 7
      %v416 = vsub.s32 0, %v415
      %v417 = vrot.slane %v412, %v416
      %v419 = vmul.f32 %v252, %v417
      %v420 = vmul.f32 %v253, %v417
      %v421 = vmul.f32 %v254, %v417
      %v422 = vmul.f32 %v255, %v417
      %v423 = vadd.f32 %v407, %v419
      %v424 = vadd.f32 %v408, %v420
      %v425 = vadd.f32 %v409, %v421
      %v426 = vadd.f32 %v410, %v422
      %s427 = scalar_lea.vmem %s1, 7
      %v428 = vld [vmem:[%s427] sm:$0x1]
      %v430 = vlaneseq
      %v431 = vshrl.u32 %v430, 7
      %v432 = vsub.s32 0, %v431
      %v433 = vrot.slane %v428, %v432
      %v435 = vmul.f32 %v260, %v433
      %v436 = vmul.f32 %v261, %v433
      %v437 = vmul.f32 %v262, %v433
      %v438 = vmul.f32 %v263, %v433
      %v443 = vrot.slane %v435, 1
      %v444 = vrot.slane %v436, 1
      %v445 = vrot.slane %v437, 1
      %v446 = vrot.slane %v438, 1
      %v451 = vadd.f32 %v423, %v443
      %v452 = vadd.f32 %v424, %v444
      %v453 = vadd.f32 %v425, %v445
      %v454 = vadd.f32 %v426, %v446
      %s455 = scalar_lea.vmem %s1, 8
      %v456 = vld [vmem:[%s455] sm:$0x1]
      %v458 = vlaneseq
      %v459 = vshrl.u32 %v458, 7
      %v460 = vsub.s32 0, %v459
      %v461 = vrot.slane %v456, %v460
      %v463 = vmul.f32 %v268, %v461
      %v464 = vmul.f32 %v269, %v461
      %v465 = vmul.f32 %v270, %v461
      %v466 = vmul.f32 %v271, %v461
      %v471 = vrot.slane %v463, 2
      %v472 = vrot.slane %v464, 2
      %v473 = vrot.slane %v465, 2
      %v474 = vrot.slane %v466, 2
      %v479 = vadd.f32 %v451, %v471
      %v480 = vadd.f32 %v452, %v472
      %v481 = vadd.f32 %v453, %v473
      %v482 = vadd.f32 %v454, %v474
      %v483 = vld [vmem:[%s2] sm:$0x1]
      %v485 = vlaneseq
      %v486 = vshrl.u32 %v485, 7
      %v487 = vsub.s32 0, %v486
      %v488 = vrot.slane %v483, %v487
      %v490 = vmul.f32 %v479, %v488
      %v491 = vmul.f32 %v480, %v488
      %v492 = vmul.f32 %v481, %v488
      %v493 = vmul.f32 %v482, %v488
      %v494 = vld [vmem:[%s3] sm:$0x1]
      %v496 = vlaneseq
      %v497 = vshrl.u32 %v496, 7
      %v498 = vsub.s32 0, %v497
      %v499 = vrot.slane %v494, %v498
      %v501 = vadd.f32 %v490, %v499
      %v502 = vadd.f32 %v491, %v499
      %v503 = vadd.f32 %v492, %v499
      %v504 = vadd.f32 %v493, %v499
      %v505 = vpack.c.bf16 %v501, %v501
      %v506 = vpack.c.bf16 %v502, %v502
      %v507 = vpack.c.bf16 %v503, %v503
      %v508 = vpack.c.bf16 %v504, %v504
      %vm509 = vcmask 74752
      %510 = vst.msk [vmem:[%s197] sm:$0x3] %vm509, %v505
      %511 = vst.msk [vmem:[%s197 + $0x2] sm:$0x3] %vm509, %v506
      %512 = vst.msk [vmem:[%s197 + $0x4] sm:$0x3] %vm509, %v507
      %513 = vst.msk [vmem:[%s197 + $0x6] sm:$0x3] %vm509, %v508
      %p514 = scmp.lt.s32.totalorder %s15, 1
      %s515 = scalar_select %p514, %s15, 1
      %s516 = smul.addr %s515, 4
      %s517 = smul.addr %s516, 2
      %s518 = scalar_lea.vmem %s4, %s517
      // Predicated region
      $region37: #{_lambda_.61} parent=35 // pred_check
        %p519 = pneg %p122
      $region38: #{_lambda_.61} parent=35 // pred_check_branch
        %521 = sbr.rel (%p519) target = $region40
      $region39: #{_lambda_.61} parent=35 // pred_region
        _
      $region40: #{_lambda_.61} parent=35 // pred_fallthru
        _
    $region36: #{_lambda_.61} parent=5 // pred_fallthru
      _
    %p522 = scmp.le.s32.totalorder 2, %s10
    // Predicated region
    $region41: #{_lambda_.61} parent=5 // pred_check
      %p523 = pneg %p522
    $region42: #{_lambda_.61} parent=5 // pred_check_branch
      %525 = sbr.rel (%p523) target = $region44
    $region43: #{_lambda_.61} parent=5 // pred_region
      %s526 = ssub.s32 %s10, 2
      // Predicated region
      $region45: #{_lambda_.61} parent=43 // pred_check
        %p527 = pneg %p128
      $region46: #{_lambda_.61} parent=43 // pred_check_branch
        %529 = sbr.rel (%p527) target = $region48
      $region47: #{_lambda_.61} parent=43 // pred_region
        %p530 = scmp.lt.s32.totalorder %s16, 1
        %s531 = scalar_select %p530, %s16, 1
        %s532 = smul.addr %s531, 4
        %s533 = smul.addr %s532, 2
        %s534 = scalar_lea.vmem %s4, %s533
      $region48: #{_lambda_.61} parent=43 // pred_fallthru
        _
    $region44: #{_lambda_.61} parent=5 // pred_fallthru
      _
  $region6: #{_lambda_.61} parent=0 // loop_footer
    %s14 = sadd.s32 1, %s10
  $region7: #{_lambda_.61} parent=0 // loop_footer_branch
    %9 = sbr.rel target = $region3
  $region8: #{_lambda_.61} parent=0 // loop_exit
    _

// kernel: _lambda_.69
$region0: #{_lambda_.69}
  #allocation0 [shape = 'u32[]', space=smem, size = 0x4, offset = 0x4, fixed_abs, tag = 'smem constant byte address 0x4 - core index']
  #allocation1 [shape = 'u32[144,128]{1,0:T(1,128)}', space=vmem, size = 0x12000, scoped, tag = 'internal scratch']
  %s0 = inlined_call_operand.vmem [shape: bf16[32,40], index: 0, kind: input, shape index: {}]
  %s1 = inlined_call_operand.vmem [shape: bf16[40,20], index: 1, kind: input, shape index: {}]
  %s2 = inlined_call_operand.vmem [shape: f32[1,20], index: 2, kind: input, shape index: {}]
  %s3 = inlined_call_operand.vmem [shape: f32[1,20], index: 3, kind: input, shape index: {}]
  %s4 = inlined_call_operand.vmem [shape: bf16[32,20], index: 4, kind: output, shape index: {}]
  %s5 = sld [smem:[#allocation0]]
  $region26: #{_lambda_.69} parent=0
    _
  %s7 = ssub.s32 1, %s5
  %s8 = scalar_select 0, %s7, %s5
  // Predicated region
  $region2: #{_lambda_.69} parent=0 // pred_check
    _
  $region3: #{_lambda_.69} parent=0 // pred_check_branch
    %10 = sbr.rel (0) target = $region5
  $region4: #{_lambda_.69} parent=0 // pred_region
    _
  $region5: #{_lambda_.69} parent=0 // pred_fallthru
    _
  // Predicated region
  $region6: #{_lambda_.69} parent=0 // pred_check
    _
  $region7: #{_lambda_.69} parent=0 // pred_check_branch
    %12 = sbr.rel (0) target = $region9
  $region8: #{_lambda_.69} parent=0 // pred_region
    _
  $region9: #{_lambda_.69} parent=0 // pred_fallthru
    _
  // Predicated region
  $region10: #{_lambda_.69} parent=0 // pred_check
    _
  $region11: #{_lambda_.69} parent=0 // pred_check_branch
    %14 = sbr.rel (0) target = $region13
  $region12: #{_lambda_.69} parent=0 // pred_region
    _
  $region13: #{_lambda_.69} parent=0 // pred_fallthru
    _
  // Predicated region
  $region14: #{_lambda_.69} parent=0 // pred_check
    _
  $region15: #{_lambda_.69} parent=0 // pred_check_branch
    %16 = sbr.rel (0) target = $region17
  $region16: #{_lambda_.69} parent=0 // pred_region
    _
  $region17: #{_lambda_.69} parent=0 // pred_fallthru
    _
  %v18 = vld [vmem:[%s0] sm:$0xf]
  %v19 = vld [vmem:[%s0 + $0x4] sm:$0xf]
  %v20 = vld [vmem:[%s0 + $0x8] sm:$0xf]
  %v21 = vld [vmem:[%s0 + $0xc] sm:$0xf]
  %v22 = vld [vmem:[%s1] sm:$0xf]
  %v23 = vld [vmem:[%s1 + $0x4] sm:$0xf]
  %v24 = vld [vmem:[%s1 + $0x8] sm:$0xf]
  %v25 = vld [vmem:[%s1 + $0xc] sm:$0xf]
  %v26 = vld [vmem:[%s1 + $0x10] sm:$0xf]
  %v31 = vunpack.c.l.b16 %v18
  %v32 = vunpack.c.l.b16 %v19
  %v33 = vunpack.c.l.b16 %v20
  %v34 = vunpack.c.l.b16 %v21
  %v35 = vpack.c.b16 %v32, %v31
  %v36 = vpack.c.b16 %v34, %v33
  %v42 = vunpack.c.l.b16 %v22
  %v43 = vunpack.c.l.b16 %v23
  %v44 = vunpack.c.l.b16 %v24
  %v45 = vunpack.c.l.b16 %v25
  %v46 = vunpack.c.l.b16 %v26
  %v47 = vpack.c.b16 %v43, %v42
  %v48 = vpack.c.b16 %v45, %v44
  %v49 = vpack.c.b16 %v46, %v46
  %vm52 = vcmask 326656
  %v54 = vsel %vm52, %v35, 0
  %v57 = vsel %vm52, %v36, 0
  %vm59 = vcmask 1043456
  %v61 = vsel %vm59, %v49, 0
  %63 = vmatprep.subr.bf16.mxu0 0
  %64 = vmatpush1.bf16.msra.mxu0 0
  %65 = vmatprep.subr.bf16.mxu0 0
  %66 = vmatpush1.bf16.msra.mxu0 0
  %67 = vmatprep.subr.bf16.mxu0 0
  %68 = vmatpush1.bf16.msra.mxu0 0
  %69 = vmatprep.subr.bf16.mxu0 0
  %70 = vmatpush1.bf16.msra.mxu0 0
  %71 = vmatprep.subr.bf16.mxu0 0
  %72 = vmatpush1.bf16.msra.mxu0 0
  %73 = vmatprep.subr.bf16.mxu0 0
  %74 = vmatpush1.bf16.msra.mxu0 %v61
  %75 = vmatprep.subr.bf16.mxu0 0
  %76 = vmatpush1.bf16.msra.mxu0 %v48
  %77 = vmatprep.subr.bf16.mxu0 0
  %78 = vmatpush1.bf16.msra.mxu0 %v47
  %79 = vmatprep.subr.bf16.mxu0 0
  %80 = vmatpush2.bf16.msra.mxu0 0
  %81 = vmatprep.subr.bf16.mxu0 0
  %82 = vmatpush2.bf16.msra.mxu0 0
  %83 = vmatprep.subr.bf16.mxu0 0
  %84 = vmatpush2.bf16.msra.mxu0 0
  %85 = vmatprep.subr.bf16.mxu0 0
  %86 = vmatpush2.bf16.msra.mxu0 0
  %87 = vmatprep.subr.bf16.mxu0 0
  %88 = vmatpush2.bf16.msra.mxu0 0
  %89 = vmatprep.subr.bf16.mxu0 0
  %90 = vmatpush2.bf16.msra.mxu0 0
  %91 = vmatprep.subr.bf16.mxu0 0
  %92 = vmatpush2.bf16.msra.mxu0 0
  %93 = vmatprep.subr.bf16.mxu0 0
  %94 = vmatpush2.bf16.msra.mxu0 0
  %95 = vmatprep.mubr.bf16.mxu0 0
  %96 = vmatmul.mubr.bf16.gmra.mxu0 %v54
  %v97 = vpop.f32.mrf.mxu0
  %v98 = vadd.f32 0.0, %v97
  %v99 = vpop.f32.mrf.mxu0
  %v100 = vpop.f32.mrf.mxu0
  %v101 = vadd.f32 0.0, %v100
  %v102 = vpop.f32.mrf.mxu0
  %103 = vmatprep.mubr.bf16.mxu0 0
  %104 = vmatmul.mubr.bf16.gmra.mxu0 %v57
  %v105 = vpop.f32.mrf.mxu0
  %v106 = vadd.f32 0.0, %v105
  %v107 = vpop.f32.mrf.mxu0
  %v108 = vpop.f32.mrf.mxu0
  %v109 = vadd.f32 0.0, %v108
  %v110 = vpop.f32.mrf.mxu0
  %111 = vdwg.mxu0
  %v112 = vld [vmem:[%s2] sm:$0x1]
  %v114 = vlaneseq
  %v115 = vshrl.u32 %v114, 7
  %v116 = vsub.s32 0, %v115
  %v117 = vrot.slane %v112, %v116
  %v119 = vmul.f32 %v98, %v117
  %v120 = vmul.f32 %v101, %v117
  %v121 = vmul.f32 %v106, %v117
  %v122 = vmul.f32 %v109, %v117
  %v123 = vld [vmem:[%s3] sm:$0x1]
  %v125 = vlaneseq
  %v126 = vshrl.u32 %v125, 7
  %v127 = vsub.s32 0, %v126
  %v128 = vrot.slane %v123, %v127
  %v130 = vadd.f32 %v119, %v128
  %v131 = vadd.f32 %v120, %v128
  %v132 = vadd.f32 %v121, %v128
  %v133 = vadd.f32 %v122, %v128
  %v134 = vmax.f32 %v130, 0.0
  %v135 = vmax.f32 %v131, 0.0
  %v136 = vmax.f32 %v132, 0.0
  %v137 = vmax.f32 %v133, 0.0
  %v138 = vpack.c.bf16 %v135, %v134
  %v139 = vpack.c.bf16 %v137, %v136
  %v142 = vunpack.c.l.b16 %v138
  %v143 = vunpack.c.h.b16 %v138
  %v144 = vunpack.c.l.b16 %v139
  %v145 = vunpack.c.h.b16 %v139
  %v146 = vpack.c.b16 %v142, %v142
  %v147 = vpack.c.b16 %v143, %v143
  %v148 = vpack.c.b16 %v144, %v144
  %v149 = vpack.c.b16 %v145, %v145
  %vm154 = vcmask 158720
  %155 = vst.msk [vmem:[%s4] sm:$0xf] %vm154, %v146
  %156 = vst.msk [vmem:[%s4 + $0x4] sm:$0xf] %vm154, %v147
  %157 = vst.msk [vmem:[%s4 + $0x8] sm:$0xf] %vm154, %v148
  %158 = vst.msk [vmem:[%s4 + $0xc] sm:$0xf] %vm154, %v149
  // Predicated region
  $region18: #{_lambda_.69} parent=0 // pred_check
    _
  $region19: #{_lambda_.69} parent=0 // pred_check_branch
    %160 = sbr.rel (0) target = $region21
  $region20: #{_lambda_.69} parent=0 // pred_region
    _
  $region21: #{_lambda_.69} parent=0 // pred_fallthru
    _
  // Predicated region
  $region22: #{_lambda_.69} parent=0 // pred_check
    _
  $region23: #{_lambda_.69} parent=0 // pred_check_branch
    %162 = sbr.rel (0) target = $region25
  $region24: #{_lambda_.69} parent=0 // pred_region
    _
  $region25: #{_lambda_.69} parent=0 // pred_fallthru
    _

// kernel: _lambda_.70
$region0: #{_lambda_.70}
  #allocation0 [shape = 'u32[]', space=smem, size = 0x4, offset = 0x4, fixed_abs, tag = 'smem constant byte address 0x4 - core index']
  #allocation1 [shape = 'u32[144,128]{1,0:T(1,128)}', space=vmem, size = 0x12000, scoped, tag = 'internal scratch']
  %s0 = inlined_call_operand.vmem [shape: bf16[2,3,3,20], index: 0, kind: input, shape index: {}]
  %s1 = inlined_call_operand.vmem [shape: bf16[2,3,3,20], index: 1, kind: input, shape index: {}]
  %s2 = inlined_call_operand.vmem [shape: bf16[2,3,3,20], index: 2, kind: input, shape index: {}]
  %s3 = inlined_call_operand.vmem [shape: bf16[2,3,3,20], index: 3, kind: input, shape index: {}]
  %s4 = inlined_call_operand.vmem [shape: f32[9,1,20], index: 4, kind: input, shape index: {}]
  %s5 = inlined_call_operand.vmem [shape: f32[1,1,20], index: 5, kind: input, shape index: {}]
  %s6 = inlined_call_operand.vmem [shape: f32[1,1,20], index: 6, kind: input, shape index: {}]
  %s7 = inlined_call_operand.vmem [shape: bf16[2,2,2,20], index: 7, kind: output, shape index: {}]
  %s8 = sld [smem:[#allocation0]]
  $region61: #{_lambda_.70} parent=0
    _
  %s10 = ssub.s32 1, %s8
  %s11 = scalar_select 0, %s10, %s8
  loop: start=0, step=1, limit=4
  $region2: #{_lambda_.70} parent=0 // loop_pre_header
    _
  $region3: #{_lambda_.70} parent=0 // loop_header
    %s13 = sphi 0, %s17
    %p14 = scmp.ge.s32.totalorder %s13, 4
    %s23 = sphi 0, %s25
    %s26 = sphi 0, %s23
    %s27 = sphi 0, %s26
    %s43 = sphi 0, %s27
    %s49 = sphi 0, %s51
    %s52 = sphi 0, %s49
    %s53 = sphi 0, %s52
    %s69 = sphi 0, %s53
    %s75 = sphi 0, %s77
    %s78 = sphi 0, %s75
    %s79 = sphi 0, %s78
    %s95 = sphi 0, %s79
    %s101 = sphi 0, %s103
    %s104 = sphi 0, %s101
    %s105 = sphi 0, %s104
    %s121 = sphi 0, %s105
    %s125 = sphi 0, %s125
    %s127 = sphi 0, %s125
    %s128 = sphi 0, %s127
    %s142 = sphi 0, %s128
    %s146 = sphi 0, %s146
    %s148 = sphi 0, %s146
    %s149 = sphi 0, %s148
    %s163 = sphi 0, %s149
    %s167 = sphi 0, %s167
    %s169 = sphi 0, %s167
    %s170 = sphi 0, %s169
    %s184 = sphi 0, %s170
    %s190 = sphi 0, %s192
    %s193 = sphi 0, %s190
    %s194 = sphi 0, %s193
    %s210 = sphi 0, %s194
  $region4: #{_lambda_.70} parent=0 // loop_header_branch
    %16 = sbr.rel (%p14) target = $region8
  $region5: #{_lambda_.70} parent=0 // loop_body
    %s18 = ssub.s32 %s13, 1
    %s19 = ssub.s32 %s13, 2
    %s20 = sadd.s32 %s13, 1
    %s21 = ssub.s32 %s13, %s20
    %p22 = scmp.eq.s32.totalorder %s21, 0
    %s24 = sadd.s32 %s23, 1
    %s25 = scalar_select %p22, %s23, %s24
    %p28 = pneg %p22
    %p29 = scmp.eq.s32.totalorder %s13, 1
    %p30 = por %p28, %p29
    %p31 = scmp.ne.s32.totalorder %s23, %s26
    %p32 = scmp.eq.s32.totalorder %s13, 0
    %p33 = por %p31, %p32
    %p34 = scmp.ne.s32.totalorder %s23, %s26
    %p35 = scmp.eq.s32.totalorder %s18, 1
    %p36 = por %p34, %p35
    %p37 = scmp.ne.s32.totalorder %s26, %s27
    %p38 = scmp.eq.s32.totalorder %s18, 0
    %p39 = por %p37, %p38
    %p40 = scmp.ne.s32.totalorder %s26, %s27
    %p41 = scmp.eq.s32.totalorder %s19, 1
    %p42 = por %p40, %p41
    %p44 = scmp.ne.s32.totalorder %s27, %s43
    %p45 = scmp.eq.s32.totalorder %s19, 0
    %p46 = por %p44, %p45
    %s47 = ssub.s32 %s13, %s20
    %p48 = scmp.eq.s32.totalorder %s47, 0
    %s50 = sadd.s32 %s49, 1
    %s51 = scalar_select %p48, %s49, %s50
    %p54 = pneg %p48
    %p55 = scmp.eq.s32.totalorder %s13, 1
    %p56 = por %p54, %p55
    %p57 = scmp.ne.s32.totalorder %s49, %s52
    %p58 = scmp.eq.s32.totalorder %s13, 0
    %p59 = por %p57, %p58
    %p60 = scmp.ne.s32.totalorder %s49, %s52
    %p61 = scmp.eq.s32.totalorder %s18, 1
    %p62 = por %p60, %p61
    %p63 = scmp.ne.s32.totalorder %s52, %s53
    %p64 = scmp.eq.s32.totalorder %s18, 0
    %p65 = por %p63, %p64
    %p66 = scmp.ne.s32.totalorder %s52, %s53
    %p67 = scmp.eq.s32.totalorder %s19, 1
    %p68 = por %p66, %p67
    %p70 = scmp.ne.s32.totalorder %s53, %s69
    %p71 = scmp.eq.s32.totalorder %s19, 0
    %p72 = por %p70, %p71
    %s73 = ssub.s32 %s13, %s20
    %p74 = scmp.eq.s32.totalorder %s73, 0
    %s76 = sadd.s32 %s75, 1
    %s77 = scalar_select %p74, %s75, %s76
    %p80 = pneg %p74
    %p81 = scmp.eq.s32.totalorder %s13, 1
    %p82 = por %p80, %p81
    %p83 = scmp.ne.s32.totalorder %s75, %s78
    %p84 = scmp.eq.s32.totalorder %s13, 0
    %p85 = por %p83, %p84
    %p86 = scmp.ne.s32.totalorder %s75, %s78
    %p87 = scmp.eq.s32.totalorder %s18, 1
    %p88 = por %p86, %p87
    %p89 = scmp.ne.s32.totalorder %s78, %s79
    %p90 = scmp.eq.s32.totalorder %s18, 0
    %p91 = por %p89, %p90
    %p92 = scmp.ne.s32.totalorder %s78, %s79
    %p93 = scmp.eq.s32.totalorder %s19, 1
    %p94 = por %p92, %p93
    %p96 = scmp.ne.s32.totalorder %s79, %s95
    %p97 = scmp.eq.s32.totalorder %s19, 0
    %p98 = por %p96, %p97
    %s99 = ssub.s32 %s13, %s20
    %p100 = scmp.eq.s32.totalorder %s99, 0
    %s102 = sadd.s32 %s101, 1
    %s103 = scalar_select %p100, %s101, %s102
    %p106 = pneg %p100
    %p107 = scmp.eq.s32.totalorder %s13, 1
    %p108 = por %p106, %p107
    %p109 = scmp.ne.s32.totalorder %s101, %s104
    %p110 = scmp.eq.s32.totalorder %s13, 0
    %p111 = por %p109, %p110
    %p112 = scmp.ne.s32.totalorder %s101, %s104
    %p113 = scmp.eq.s32.totalorder %s18, 1
    %p114 = por %p112, %p113
    %p115 = scmp.ne.s32.totalorder %s104, %s105
    %p116 = scmp.eq.s32.totalorder %s18, 0
    %p117 = por %p115, %p116
    %p118 = scmp.ne.s32.totalorder %s104, %s105
    %p119 = scmp.eq.s32.totalorder %s19, 1
    %p120 = por %p118, %p119
    %p122 = scmp.ne.s32.totalorder %s105, %s121
    %p123 = scmp.eq.s32.totalorder %s19, 0
    %p124 = por %p122, %p123
    %s126 = sadd.s32 %s125, 1
    %p129 = scmp.eq.s32.totalorder %s13, 1
    %p130 = scmp.ne.s32.totalorder %s125, %s127
    %p131 = scmp.eq.s32.totalorder %s13, 0
    %p132 = por %p130, %p131
    %p133 = scmp.ne.s32.totalorder %s125, %s127
    %p134 = scmp.eq.s32.totalorder %s18, 1
    %p135 = por %p133, %p134
    %p136 = scmp.ne.s32.totalorder %s127, %s128
    %p137 = scmp.eq.s32.totalorder %s18, 0
    %p138 = por %p136, %p137
    %p139 = scmp.ne.s32.totalorder %s127, %s128
    %p140 = scmp.eq.s32.totalorder %s19, 1
    %p141 = por %p139, %p140
    %p143 = scmp.ne.s32.totalorder %s128, %s142
    %p144 = scmp.eq.s32.totalorder %s19, 0
    %p145 = por %p143, %p144
    %s147 = sadd.s32 %s146, 1
    %p150 = scmp.eq.s32.totalorder %s13, 1
    %p151 = scmp.ne.s32.totalorder %s146, %s148
    %p152 = scmp.eq.s32.totalorder %s13, 0
    %p153 = por %p151, %p152
    %p154 = scmp.ne.s32.totalorder %s146, %s148
    %p155 = scmp.eq.s32.totalorder %s18, 1
    %p156 = por %p154, %p155
    %p157 = scmp.ne.s32.totalorder %s148, %s149
    %p158 = scmp.eq.s32.totalorder %s18, 0
    %p159 = por %p157, %p158
    %p160 = scmp.ne.s32.totalorder %s148, %s149
    %p161 = scmp.eq.s32.totalorder %s19, 1
    %p162 = por %p160, %p161
    %p164 = scmp.ne.s32.totalorder %s149, %s163
    %p165 = scmp.eq.s32.totalorder %s19, 0
    %p166 = por %p164, %p165
    %s168 = sadd.s32 %s167, 1
    %p171 = scmp.eq.s32.totalorder %s13, 1
    %p172 = scmp.ne.s32.totalorder %s167, %s169
    %p173 = scmp.eq.s32.totalorder %s13, 0
    %p174 = por %p172, %p173
    %p175 = scmp.ne.s32.totalorder %s167, %s169
    %p176 = scmp.eq.s32.totalorder %s18, 1
    %p177 = por %p175, %p176
    %p178 = scmp.ne.s32.totalorder %s169, %s170
    %p179 = scmp.eq.s32.totalorder %s18, 0
    %p180 = por %p178, %p179
    %p181 = scmp.ne.s32.totalorder %s169, %s170
    %p182 = scmp.eq.s32.totalorder %s19, 1
    %p183 = por %p181, %p182
    %p185 = scmp.ne.s32.totalorder %s170, %s184
    %p186 = scmp.eq.s32.totalorder %s19, 0
    %p187 = por %p185, %p186
    %s188 = ssub.s32 %s13, %s20
    %p189 = scmp.eq.s32.totalorder %s188, 0
    %s191 = sadd.s32 %s190, 1
    %s192 = scalar_select %p189, %s190, %s191
    %p195 = pneg %p189
    %p196 = scmp.eq.s32.totalorder %s13, 1
    %p197 = por %p195, %p196
    %p198 = scmp.ne.s32.totalorder %s190, %s193
    %p199 = scmp.eq.s32.totalorder %s13, 0
    %p200 = por %p198, %p199
    %p201 = scmp.ne.s32.totalorder %s190, %s193
    %p202 = scmp.eq.s32.totalorder %s18, 1
    %p203 = por %p201, %p202
    %p204 = scmp.ne.s32.totalorder %s193, %s194
    %p205 = scmp.eq.s32.totalorder %s18, 0
    %p206 = por %p204, %p205
    %p207 = scmp.ne.s32.totalorder %s193, %s194
    %p208 = scmp.eq.s32.totalorder %s19, 1
    %p209 = por %p207, %p208
    %p211 = scmp.ne.s32.totalorder %s194, %s210
    %p212 = scmp.eq.s32.totalorder %s19, 0
    %p213 = por %p211, %p212
    %p214 = scmp.le.s32.totalorder 1, %s13
    %p215 = scmp.lt.s32.totalorder %s13, 3
    %p216 = pnand %p214, %p215
    %p217 = pneg %p216
    // Predicated region
    $region9: #{_lambda_.70} parent=5 // pred_check
      _
    $region10: #{_lambda_.70} parent=5 // pred_check_branch
      %219 = sbr.rel (%p216) target = $region12
    $region11: #{_lambda_.70} parent=5 // pred_region
      %s220 = ssub.s32 %s13, 1
      // Predicated region
      $region13: #{_lambda_.70} parent=11 // pred_check
        %p221 = pneg %p138
      $region14: #{_lambda_.70} parent=11 // pred_check_branch
        %223 = sbr.rel (%p221) target = $region16
      $region15: #{_lambda_.70} parent=11 // pred_region
        _
      $region16: #{_lambda_.70} parent=11 // pred_fallthru
        _
      // Predicated region
      $region17: #{_lambda_.70} parent=11 // pred_check
        %p224 = pneg %p159
      $region18: #{_lambda_.70} parent=11 // pred_check_branch
        %226 = sbr.rel (%p224) target = $region20
      $region19: #{_lambda_.70} parent=11 // pred_region
        _
      $region20: #{_lambda_.70} parent=11 // pred_fallthru
        _
      // Predicated region
      $region21: #{_lambda_.70} parent=11 // pred_check
        %p227 = pneg %p180
      $region22: #{_lambda_.70} parent=11 // pred_check_branch
        %229 = sbr.rel (%p227) target = $region24
      $region23: #{_lambda_.70} parent=11 // pred_region
        _
      $region24: #{_lambda_.70} parent=11 // pred_fallthru
        _
    $region12: #{_lambda_.70} parent=5 // pred_fallthru
      _
    %p230 = scmp.lt.s32.totalorder %s13, 2
    // Predicated region
    $region25: #{_lambda_.70} parent=5 // pred_check
      %p231 = pneg %p230
    $region26: #{_lambda_.70} parent=5 // pred_check_branch
      %233 = sbr.rel (%p231) target = $region28
    $region27: #{_lambda_.70} parent=5 // pred_region
      // Predicated region
      $region29: #{_lambda_.70} parent=27 // pred_check
        %p234 = pneg %p33
      $region30: #{_lambda_.70} parent=27 // pred_check_branch
        %236 = sbr.rel (%p234) target = $region32
      $region31: #{_lambda_.70} parent=27 // pred_region
        %p237 = scmp.lt.s32.totalorder %s13, 1
        %s238 = scalar_select %p237, %s13, 1
        %s239 = smul.addr %s238, 3
        %s240 = smul.addr %s239, 2
        %s241 = scalar_lea.vmem %s0, %s240
      $region32: #{_lambda_.70} parent=27 // pred_fallthru
        _
      // Predicated region
      $region33: #{_lambda_.70} parent=27 // pred_check
        %p242 = pneg %p59
      $region34: #{_lambda_.70} parent=27 // pred_check_branch
        %244 = sbr.rel (%p242) target = $region36
      $region35: #{_lambda_.70} parent=27 // pred_region
        %p245 = scmp.lt.s32.totalorder %s13, 1
        %s246 = scalar_select %p245, %s13, 1
        %s247 = smul.addr %s246, 3
        %s248 = smul.addr %s247, 2
        %s249 = scalar_lea.vmem %s1, %s248
      $region36: #{_lambda_.70} parent=27 // pred_fallthru
        _
      // Predicated region
      $region37: #{_lambda_.70} parent=27 // pred_check
        %p250 = pneg %p85
      $region38: #{_lambda_.70} parent=27 // pred_check_branch
        %252 = sbr.rel (%p250) target = $region40
      $region39: #{_lambda_.70} parent=27 // pred_region
        %p253 = scmp.lt.s32.totalorder %s13, 1
        %s254 = scalar_select %p253, %s13, 1
        %s255 = smul.addr %s254, 3
        %s256 = smul.addr %s255, 2
        %s257 = scalar_lea.vmem %s2, %s256
      $region40: #{_lambda_.70} parent=27 // pred_fallthru
        _
      // Predicated region
      $region41: #{_lambda_.70} parent=27 // pred_check
        %p258 = pneg %p111
      $region42: #{_lambda_.70} parent=27 // pred_check_branch
        %260 = sbr.rel (%p258) target = $region44
      $region43: #{_lambda_.70} parent=27 // pred_region
        %p261 = scmp.lt.s32.totalorder %s13, 1
        %s262 = scalar_select %p261, %s13, 1
        %s263 = smul.addr %s262, 3
        %s264 = smul.addr %s263, 2
        %s265 = scalar_lea.vmem %s3, %s264
      $region44: #{_lambda_.70} parent=27 // pred_fallthru
        _
    $region28: #{_lambda_.70} parent=5 // pred_fallthru
      _
    %p266 = scmp.le.s32.totalorder 1, %s13
    %p267 = scmp.lt.s32.totalorder %s13, 3
    %p268 = pnand %p266, %p267
    %p269 = pneg %p268
    // Predicated region
    $region45: #{_lambda_.70} parent=5 // pred_check
      _
    $region46: #{_lambda_.70} parent=5 // pred_check_branch
      %271 = sbr.rel (%p268) target = $region48
    $region47: #{_lambda_.70} parent=5 // pred_region
      %s272 = ssub.s32 %s13, 1
      %p273 = scmp.lt.s32.totalorder %s18, 1
      %s274 = scalar_select %p273, %s18, 1
      %s275 = smul.addr %s274, 3
      %s276 = smul.addr %s275, 2
      %s277 = scalar_lea.vmem %s0, %s276
      %p278 = pneg %p39
      %p279 = pneg %p36
      %p280 = scmp.lt.s32.totalorder %s18, 1
      %s281 = scalar_select %p280, %s18, 1
      %s282 = smul.addr %s281, 3
      %s283 = smul.addr %s282, 2
      %s284 = scalar_lea.vmem %s1, %s283
      %p285 = pneg %p65
      %p286 = pneg %p62
      %p287 = scmp.lt.s32.totalorder %s18, 1
      %s288 = scalar_select %p287, %s18, 1
      %s289 = smul.addr %s288, 3
      %s290 = smul.addr %s289, 2
      %s291 = scalar_lea.vmem %s2, %s290
      %p292 = pneg %p91
      %p293 = pneg %p88
      %p294 = scmp.lt.s32.totalorder %s18, 1
      %s295 = scalar_select %p294, %s18, 1
      %s296 = smul.addr %s295, 3
      %s297 = smul.addr %s296, 2
      %s298 = scalar_lea.vmem %s3, %s297
      %p299 = pneg %p117
      %p300 = pneg %p114
      %p301 = pneg %p138
      %p302 = pneg %p135
      %p303 = pneg %p159
      %p304 = pneg %p156
      %p305 = pneg %p180
      %p306 = pneg %p177
      %p307 = pneg %p206
      %p308 = pneg %p203
      %p309 = scmp.lt.s32.totalorder %s18, 1
      %s310 = scalar_select %p309, %s18, 1
      %s311 = smul.addr %s310, 2
      %s312 = scalar_lea.vmem %s7, %s311
      %p313 = scmp.lt.s32.totalorder %s18, 1
      %s314 = scalar_select %p313, %s18, 1
      %s315 = smul.addr %s314, 3
      %s316 = smul.addr %s315, 2
      %s317 = scalar_lea.vmem %s0, %s316
      %p318 = scmp.lt.s32.totalorder %s18, 1
      %s319 = scalar_select %p318, %s18, 1
      %s320 = smul.addr %s319, 3
      %s321 = smul.addr %s320, 2
      %s322 = scalar_lea.vmem %s1, %s321
      %p323 = scmp.lt.s32.totalorder %s18, 1
      %s324 = scalar_select %p323, %s18, 1
      %s325 = smul.addr %s324, 3
      %s326 = smul.addr %s325, 2
      %s327 = scalar_lea.vmem %s2, %s326
      %p328 = scmp.lt.s32.totalorder %s18, 1
      %s329 = scalar_select %p328, %s18, 1
      %s330 = smul.addr %s329, 3
      %s331 = smul.addr %s330, 2
      %s332 = scalar_lea.vmem %s3, %s331
      %p333 = scmp.lt.s32.totalorder %s18, 1
      %s334 = scalar_select %p333, %s18, 1
      %s335 = smul.addr %s334, 2
      %s336 = scalar_lea.vmem %s7, %s335
      %v337 = vld [vmem:[%s317] sm:$0x1]
      %v338 = vld [vmem:[%s317 + $0x2] sm:$0x1]
      %v339 = vunpack.c.l.bf16 %v337
      %v340 = vunpack.c.l.bf16 %v338
      %v341 = vld [vmem:[%s322] sm:$0x1]
      %v342 = vld [vmem:[%s322 + $0x2] sm:$0x1]
      %v343 = vunpack.c.l.bf16 %v341
      %v344 = vunpack.c.l.bf16 %v342
      %v345 = vld [vmem:[%s317] sm:$0x3]
      %v346 = vld [vmem:[%s317 + $0x2] sm:$0x3]
      %v347 = vunpack.c.l.bf16 %v345
      %v348 = vunpack.c.l.bf16 %v346
      %v349 = vld [vmem:[%s327] sm:$0x1]
      %v350 = vld [vmem:[%s327 + $0x2] sm:$0x1]
      %v351 = vunpack.c.l.bf16 %v349
      %v352 = vunpack.c.l.bf16 %v350
      %v353 = vld [vmem:[%s332] sm:$0x1]
      %v354 = vld [vmem:[%s332 + $0x2] sm:$0x1]
      %v355 = vunpack.c.l.bf16 %v353
      %v356 = vunpack.c.l.bf16 %v354
      %v357 = vld [vmem:[%s327] sm:$0x3]
      %v358 = vld [vmem:[%s327 + $0x2] sm:$0x3]
      %v359 = vunpack.c.l.bf16 %v357
      %v360 = vunpack.c.l.bf16 %v358
      %s361 = scalar_lea.vmem %s317, 2
      %v362 = vld [vmem:[%s361] sm:$0x1]
      %v363 = vld [vmem:[%s361 + $0x2] sm:$0x1]
      %v364 = vunpack.c.l.bf16 %v362
      %v365 = vunpack.c.l.bf16 %v363
      %s366 = scalar_lea.vmem %s322, 2
      %v367 = vld [vmem:[%s366] sm:$0x1]
      %v368 = vld [vmem:[%s366 + $0x2] sm:$0x1]
      %v369 = vunpack.c.l.bf16 %v367
      %v370 = vunpack.c.l.bf16 %v368
      %v371 = vld [vmem:[%s361] sm:$0x3]
      %v372 = vld [vmem:[%s361 + $0x2] sm:$0x3]
      %v373 = vunpack.c.l.bf16 %v371
      %v374 = vunpack.c.l.bf16 %v372
      %v375 = vld [vmem:[%s4] sm:$0x1]
      %v377 = vlaneseq
      %v378 = vshrl.u32 %v377, 7
      %v379 = vsub.s32 0, %v378
      %v380 = vrot.slane %v375, %v379
      %v382 = vmul.f32 %v339, %v380
      %v383 = vmul.f32 %v340, %v380
      %s384 = scalar_lea.vmem %s4, 1
      %v385 = vld [vmem:[%s384] sm:$0x1]
      %v387 = vlaneseq
      %v388 = vshrl.u32 %v387, 7
      %v389 = vsub.s32 0, %v388
      %v390 = vrot.slane %v385, %v389
      %v392 = vmul.f32 %v343, %v390
      %v393 = vmul.f32 %v344, %v390
      %v394 = vadd.f32 %v382, %v392
      %v395 = vadd.f32 %v383, %v393
      %s396 = scalar_lea.vmem %s4, 2
      %v397 = vld [vmem:[%s396] sm:$0x1]
      %v399 = vlaneseq
      %v400 = vshrl.u32 %v399, 7
      %v401 = vsub.s32 0, %v400
      %v402 = vrot.slane %v397, %v401
      %v404 = vmul.f32 %v347, %v402
      %v405 = vmul.f32 %v348, %v402
      %v408 = vrot.slane %v404, 5
      %v409 = vrot.slane %v408, 4
      %v410 = vrot.slane %v405, 5
      %v411 = vrot.slane %v410, 4
      %v414 = vadd.f32 %v394, %v409
      %v415 = vadd.f32 %v395, %v411
      %s416 = scalar_lea.vmem %s4, 3
      %v417 = vld [vmem:[%s416] sm:$0x1]
      %v419 = vlaneseq
      %v420 = vshrl.u32 %v419, 7
      %v421 = vsub.s32 0, %v420
      %v422 = vrot.slane %v417, %v421
      %v424 = vmul.f32 %v351, %v422
      %v425 = vmul.f32 %v352, %v422
      %v426 = vadd.f32 %v414, %v424
      %v427 = vadd.f32 %v415, %v425
      %s428 = scalar_lea.vmem %s4, 4
      %v429 = vld [vmem:[%s428] sm:$0x1]
      %v431 = vlaneseq
      %v432 = vshrl.u32 %v431, 7
      %v433 = vsub.s32 0, %v432
      %v434 = vrot.slane %v429, %v433
      %v436 = vmul.f32 %v355, %v434
      %v437 = vmul.f32 %v356, %v434
      %v438 = vadd.f32 %v426, %v436
      %v439 = vadd.f32 %v427, %v437
      %s440 = scalar_lea.vmem %s4, 5
      %v441 = vld [vmem:[%s440] sm:$0x1]
      %v443 = vlaneseq
      %v444 = vshrl.u32 %v443, 7
      %v445 = vsub.s32 0, %v444
      %v446 = vrot.slane %v441, %v445
      %v448 = vmul.f32 %v359, %v446
      %v449 = vmul.f32 %v360, %v446
      %v452 = vrot.slane %v448, 5
      %v453 = vrot.slane %v452, 4
      %v454 = vrot.slane %v449, 5
      %v455 = vrot.slane %v454, 4
      %v458 = vadd.f32 %v438, %v453
      %v459 = vadd.f32 %v439, %v455
      %s460 = scalar_lea.vmem %s4, 6
      %v461 = vld [vmem:[%s460] sm:$0x1]
      %v463 = vlaneseq
      %v464 = vshrl.u32 %v463, 7
      %v465 = vsub.s32 0, %v464
      %v466 = vrot.slane %v461, %v465
      %v468 = vmul.f32 %v364, %v466
      %v469 = vmul.f32 %v365, %v466
      %v470 = vadd.f32 %v458, %v468
      %v471 = vadd.f32 %v459, %v469
      %s472 = scalar_lea.vmem %s4, 7
      %v473 = vld [vmem:[%s472] sm:$0x1]
      %v475 = vlaneseq
      %v476 = vshrl.u32 %v475, 7
      %v477 = vsub.s32 0, %v476
      %v478 = vrot.slane %v473, %v477
      %v480 = vmul.f32 %v369, %v478
      %v481 = vmul.f32 %v370, %v478
      %v482 = vadd.f32 %v470, %v480
      %v483 = vadd.f32 %v471, %v481
      %s484 = scalar_lea.vmem %s4, 8
      %v485 = vld [vmem:[%s484] sm:$0x1]
      %v487 = vlaneseq
      %v488 = vshrl.u32 %v487, 7
      %v489 = vsub.s32 0, %v488
      %v490 = vrot.slane %v485, %v489
      %v492 = vmul.f32 %v373, %v490
      %v493 = vmul.f32 %v374, %v490
      %v496 = vrot.slane %v492, 5
      %v497 = vrot.slane %v496, 4
      %v498 = vrot.slane %v493, 5
      %v499 = vrot.slane %v498, 4
      %v502 = vadd.f32 %v482, %v497
      %v503 = vadd.f32 %v483, %v499
      %v504 = vld [vmem:[%s5] sm:$0x1]
      %v506 = vlaneseq
      %v507 = vshrl.u32 %v506, 7
      %v508 = vsub.s32 0, %v507
      %v509 = vrot.slane %v504, %v508
      %v511 = vmul.f32 %v502, %v509
      %v512 = vmul.f32 %v503, %v509
      %v513 = vld [vmem:[%s6] sm:$0x1]
      %v515 = vlaneseq
      %v516 = vshrl.u32 %v515, 7
      %v517 = vsub.s32 0, %v516
      %v518 = vrot.slane %v513, %v517
      %v520 = vadd.f32 %v511, %v518
      %v521 = vadd.f32 %v512, %v518
      %v522 = vpack.c.bf16 %v520, %v520
      %v523 = vpack.c.bf16 %v521, %v521
      %vm524 = vcmask 155648
      %525 = vst.msk [vmem:[%s336] sm:$0x1] %vm524, %v522
      %526 = vst.msk [vmem:[%s336 + $0x1] sm:$0x1] %vm524, %v523
      %p527 = scmp.lt.s32.totalorder %s18, 1
      %s528 = scalar_select %p527, %s18, 1
      %s529 = smul.addr %s528, 2
      %s530 = scalar_lea.vmem %s7, %s529
      // Predicated region
      $region49: #{_lambda_.70} parent=47 // pred_check
        %p531 = pneg %p203
      $region50: #{_lambda_.70} parent=47 // pred_check_branch
        %533 = sbr.rel (%p531) target = $region52
      $region51: #{_lambda_.70} parent=47 // pred_region
        _
      $region52: #{_lambda_.70} parent=47 // pred_fallthru
        _
    $region48: #{_lambda_.70} parent=5 // pred_fallthru
      _
    %p534 = scmp.le.s32.totalorder 2, %s13
    // Predicated region
    $region53: #{_lambda_.70} parent=5 // pred_check
      %p535 = pneg %p534
    $region54: #{_lambda_.70} parent=5 // pred_check_branch
      %537 = sbr.rel (%p535) target = $region56
    $region55: #{_lambda_.70} parent=5 // pred_region
      %s538 = ssub.s32 %s13, 2
      // Predicated region
      $region57: #{_lambda_.70} parent=55 // pred_check
        %p539 = pneg %p209
      $region58: #{_lambda_.70} parent=55 // pred_check_branch
        %541 = sbr.rel (%p539) target = $region60
      $region59: #{_lambda_.70} parent=55 // pred_region
        %p542 = scmp.lt.s32.totalorder %s19, 1
        %s543 = scalar_select %p542, %s19, 1
        %s544 = smul.addr %s543, 2
        %s545 = scalar_lea.vmem %s7, %s544
      $region60: #{_lambda_.70} parent=55 // pred_fallthru
        _
    $region56: #{_lambda_.70} parent=5 // pred_fallthru
      _
  $region6: #{_lambda_.70} parent=0 // loop_footer
    %s17 = sadd.s32 1, %s13
  $region7: #{_lambda_.70} parent=0 // loop_footer_branch
    %12 = sbr.rel target = $region3
  $region8: #{_lambda_.70} parent=0 // loop_exit
    _

// kernel: _lambda_.71
$region0: #{_lambda_.71}
  #allocation0 [shape = 'u32[]', space=smem, size = 0x4, offset = 0x4, fixed_abs, tag = 'smem constant byte address 0x4 - core index']
  #allocation1 [shape = 'u32[144,128]{1,0:T(1,128)}', space=vmem, size = 0x12000, scoped, tag = 'internal scratch']
  %s0 = inlined_call_operand.vmem [shape: bf16[8,20], index: 0, kind: input, shape index: {}]
  %s1 = inlined_call_operand.vmem [shape: bf16[20,40], index: 1, kind: input, shape index: {}]
  %s2 = inlined_call_operand.vmem [shape: f32[1,40], index: 2, kind: input, shape index: {}]
  %s3 = inlined_call_operand.vmem [shape: f32[1,40], index: 3, kind: input, shape index: {}]
  %s4 = inlined_call_operand.vmem [shape: bf16[8,40], index: 4, kind: output, shape index: {}]
  %s5 = sld [smem:[#allocation0]]
  $region26: #{_lambda_.71} parent=0
    _
  %s7 = ssub.s32 1, %s5
  %s8 = scalar_select 0, %s7, %s5
  // Predicated region
  $region2: #{_lambda_.71} parent=0 // pred_check
    _
  $region3: #{_lambda_.71} parent=0 // pred_check_branch
    %10 = sbr.rel (0) target = $region5
  $region4: #{_lambda_.71} parent=0 // pred_region
    _
  $region5: #{_lambda_.71} parent=0 // pred_fallthru
    _
  // Predicated region
  $region6: #{_lambda_.71} parent=0 // pred_check
    _
  $region7: #{_lambda_.71} parent=0 // pred_check_branch
    %12 = sbr.rel (0) target = $region9
  $region8: #{_lambda_.71} parent=0 // pred_region
    _
  $region9: #{_lambda_.71} parent=0 // pred_fallthru
    _
  // Predicated region
  $region10: #{_lambda_.71} parent=0 // pred_check
    _
  $region11: #{_lambda_.71} parent=0 // pred_check_branch
    %14 = sbr.rel (0) target = $region13
  $region12: #{_lambda_.71} parent=0 // pred_region
    _
  $region13: #{_lambda_.71} parent=0 // pred_fallthru
    _
  // Predicated region
  $region14: #{_lambda_.71} parent=0 // pred_check
    _
  $region15: #{_lambda_.71} parent=0 // pred_check_branch
    %16 = sbr.rel (0) target = $region17
  $region16: #{_lambda_.71} parent=0 // pred_region
    _
  $region17: #{_lambda_.71} parent=0 // pred_fallthru
    _
  %v18 = vld [vmem:[%s0] sm:$0xf]
  %v19 = vld [vmem:[%s1] sm:$0xf]
  %v20 = vld [vmem:[%s1 + $0x4] sm:$0xf]
  %v21 = vld [vmem:[%s1 + $0x8] sm:$0x3]
  %v25 = vunpack.c.l.b16 %v19
  %v26 = vunpack.c.l.b16 %v20
  %v27 = vunpack.c.l.b16 %v21
  %v28 = vpack.c.b16 %v26, %v25
  %v29 = vpack.c.b16 %v27, %v27
  %vm31 = vcmask 162816
  %v33 = vsel %vm31, %v18, 0
  %vm35 = vcmask 1041408
  %v37 = vsel %vm35, %v29, 0
  %39 = vmatprep.subr.bf16.mxu0 0
  %40 = vmatpush1.bf16.msra.mxu0 0
  %41 = vmatprep.subr.bf16.mxu0 0
  %42 = vmatpush1.bf16.msra.mxu0 0
  %43 = vmatprep.subr.bf16.mxu0 0
  %44 = vmatpush1.bf16.msra.mxu0 0
  %45 = vmatprep.subr.bf16.mxu0 0
  %46 = vmatpush1.bf16.msra.mxu0 0
  %47 = vmatprep.subr.bf16.mxu0 0
  %48 = vmatpush1.bf16.msra.mxu0 0
  %49 = vmatprep.subr.bf16.mxu0 0
  %50 = vmatpush1.bf16.msra.mxu0 0
  %51 = vmatprep.subr.bf16.mxu0 0
  %52 = vmatpush1.bf16.msra.mxu0 %v37
  %53 = vmatprep.subr.bf16.mxu0 0
  %54 = vmatpush1.bf16.msra.mxu0 %v28
  %55 = vmatprep.subr.bf16.mxu0 0
  %56 = vmatpush2.bf16.msra.mxu0 0
  %57 = vmatprep.subr.bf16.mxu0 0
  %58 = vmatpush2.bf16.msra.mxu0 0
  %59 = vmatprep.subr.bf16.mxu0 0
  %60 = vmatpush2.bf16.msra.mxu0 0
  %61 = vmatprep.subr.bf16.mxu0 0
  %62 = vmatpush2.bf16.msra.mxu0 0
  %63 = vmatprep.subr.bf16.mxu0 0
  %64 = vmatpush2.bf16.msra.mxu0 0
  %65 = vmatprep.subr.bf16.mxu0 0
  %66 = vmatpush2.bf16.msra.mxu0 0
  %67 = vmatprep.subr.bf16.mxu0 0
  %68 = vmatpush2.bf16.msra.mxu0 0
  %69 = vmatprep.subr.bf16.mxu0 0
  %70 = vmatpush2.bf16.msra.mxu0 0
  %71 = vmatprep.mubr.bf16.mxu0 0
  %72 = vmatmul.mubr.bf16.gmra.mxu0 %v33
  %v73 = vpop.f32.mrf.mxu0
  %v74 = vadd.f32 0.0, %v73
  %v75 = vpop.f32.mrf.mxu0
  %v76 = vpop.f32.mrf.mxu0
  %v77 = vpop.f32.mrf.mxu0
  %78 = vdwg.mxu0
  %v79 = vld [vmem:[%s2] sm:$0x1]
  %v81 = vlaneseq
  %v82 = vshrl.u32 %v81, 7
  %v83 = vsub.s32 0, %v82
  %v84 = vrot.slane %v79, %v83
  %v86 = vmul.f32 %v74, %v84
  %v87 = vld [vmem:[%s3] sm:$0x1]
  %v89 = vlaneseq
  %v90 = vshrl.u32 %v89, 7
  %v91 = vsub.s32 0, %v90
  %v92 = vrot.slane %v87, %v91
  %v94 = vadd.f32 %v86, %v92
  %v95 = vmax.f32 %v94, 0.0
  %v96 = vpack.c.bf16 %v95, %v95
  %vm97 = vcmask 322560
  %98 = vst.msk [vmem:[%s4] sm:$0xf] %vm97, %v96
  // Predicated region
  $region18: #{_lambda_.71} parent=0 // pred_check
    _
  $region19: #{_lambda_.71} parent=0 // pred_check_branch
    %100 = sbr.rel (0) target = $region21
  $region20: #{_lambda_.71} parent=0 // pred_region
    _
  $region21: #{_lambda_.71} parent=0 // pred_fallthru
    _
  // Predicated region
  $region22: #{_lambda_.71} parent=0 // pred_check
    _
  $region23: #{_lambda_.71} parent=0 // pred_check_branch
    %102 = sbr.rel (0) target = $region25
  $region24: #{_lambda_.71} parent=0 // pred_region
    _
  $region25: #{_lambda_.71} parent=0 // pred_fallthru
    _

// kernel: _lambda_.72
$region0: #{_lambda_.72}
  #allocation0 [shape = 'u32[]', space=smem, size = 0x4, offset = 0x4, fixed_abs, tag = 'smem constant byte address 0x4 - core index']
  #allocation1 [shape = 'u32[144,128]{1,0:T(1,128)}', space=vmem, size = 0x12000, scoped, tag = 'internal scratch']
  %s0 = inlined_call_operand.vmem [shape: bf16[2,3,3,40], index: 0, kind: input, shape index: {}]
  %s1 = inlined_call_operand.vmem [shape: bf16[2,3,3,40], index: 1, kind: input, shape index: {}]
  %s2 = inlined_call_operand.vmem [shape: bf16[2,3,3,40], index: 2, kind: input, shape index: {}]
  %s3 = inlined_call_operand.vmem [shape: bf16[2,3,3,40], index: 3, kind: input, shape index: {}]
  %s4 = inlined_call_operand.vmem [shape: bf16[2,2,2,40], index: 4, kind: output, shape index: {}]
  %s5 = sld [smem:[#allocation0]]
  $region49: #{_lambda_.72} parent=0
    _
  %s7 = ssub.s32 1, %s5
  %s8 = scalar_select 0, %s7, %s5
  loop: start=0, step=1, limit=4
  $region2: #{_lambda_.72} parent=0 // loop_pre_header
    _
  $region3: #{_lambda_.72} parent=0 // loop_header
    %s10 = sphi 0, %s14
    %p11 = scmp.ge.s32.totalorder %s10, 4
    %s20 = sphi 0, %s22
    %s23 = sphi 0, %s20
    %s24 = sphi 0, %s23
    %s40 = sphi 0, %s24
    %s46 = sphi 0, %s48
    %s49 = sphi 0, %s46
    %s50 = sphi 0, %s49
    %s66 = sphi 0, %s50
    %s72 = sphi 0, %s74
    %s75 = sphi 0, %s72
    %s76 = sphi 0, %s75
    %s92 = sphi 0, %s76
    %s98 = sphi 0, %s100
    %s101 = sphi 0, %s98
    %s102 = sphi 0, %s101
    %s118 = sphi 0, %s102
    %s124 = sphi 0, %s126
    %s127 = sphi 0, %s124
    %s128 = sphi 0, %s127
    %s144 = sphi 0, %s128
  $region4: #{_lambda_.72} parent=0 // loop_header_branch
    %13 = sbr.rel (%p11) target = $region8
  $region5: #{_lambda_.72} parent=0 // loop_body
    %s15 = ssub.s32 %s10, 1
    %s16 = ssub.s32 %s10, 2
    %s17 = sadd.s32 %s10, 1
    %s18 = ssub.s32 %s10, %s17
    %p19 = scmp.eq.s32.totalorder %s18, 0
    %s21 = sadd.s32 %s20, 1
    %s22 = scalar_select %p19, %s20, %s21
    %p25 = pneg %p19
    %p26 = scmp.eq.s32.totalorder %s10, 1
    %p27 = por %p25, %p26
    %p28 = scmp.ne.s32.totalorder %s20, %s23
    %p29 = scmp.eq.s32.totalorder %s10, 0
    %p30 = por %p28, %p29
    %p31 = scmp.ne.s32.totalorder %s20, %s23
    %p32 = scmp.eq.s32.totalorder %s15, 1
    %p33 = por %p31, %p32
    %p34 = scmp.ne.s32.totalorder %s23, %s24
    %p35 = scmp.eq.s32.totalorder %s15, 0
    %p36 = por %p34, %p35
    %p37 = scmp.ne.s32.totalorder %s23, %s24
    %p38 = scmp.eq.s32.totalorder %s16, 1
    %p39 = por %p37, %p38
    %p41 = scmp.ne.s32.totalorder %s24, %s40
    %p42 = scmp.eq.s32.totalorder %s16, 0
    %p43 = por %p41, %p42
    %s44 = ssub.s32 %s10, %s17
    %p45 = scmp.eq.s32.totalorder %s44, 0
    %s47 = sadd.s32 %s46, 1
    %s48 = scalar_select %p45, %s46, %s47
    %p51 = pneg %p45
    %p52 = scmp.eq.s32.totalorder %s10, 1
    %p53 = por %p51, %p52
    %p54 = scmp.ne.s32.totalorder %s46, %s49
    %p55 = scmp.eq.s32.totalorder %s10, 0
    %p56 = por %p54, %p55
    %p57 = scmp.ne.s32.totalorder %s46, %s49
    %p58 = scmp.eq.s32.totalorder %s15, 1
    %p59 = por %p57, %p58
    %p60 = scmp.ne.s32.totalorder %s49, %s50
    %p61 = scmp.eq.s32.totalorder %s15, 0
    %p62 = por %p60, %p61
    %p63 = scmp.ne.s32.totalorder %s49, %s50
    %p64 = scmp.eq.s32.totalorder %s16, 1
    %p65 = por %p63, %p64
    %p67 = scmp.ne.s32.totalorder %s50, %s66
    %p68 = scmp.eq.s32.totalorder %s16, 0
    %p69 = por %p67, %p68
    %s70 = ssub.s32 %s10, %s17
    %p71 = scmp.eq.s32.totalorder %s70, 0
    %s73 = sadd.s32 %s72, 1
    %s74 = scalar_select %p71, %s72, %s73
    %p77 = pneg %p71
    %p78 = scmp.eq.s32.totalorder %s10, 1
    %p79 = por %p77, %p78
    %p80 = scmp.ne.s32.totalorder %s72, %s75
    %p81 = scmp.eq.s32.totalorder %s10, 0
    %p82 = por %p80, %p81
    %p83 = scmp.ne.s32.totalorder %s72, %s75
    %p84 = scmp.eq.s32.totalorder %s15, 1
    %p85 = por %p83, %p84
    %p86 = scmp.ne.s32.totalorder %s75, %s76
    %p87 = scmp.eq.s32.totalorder %s15, 0
    %p88 = por %p86, %p87
    %p89 = scmp.ne.s32.totalorder %s75, %s76
    %p90 = scmp.eq.s32.totalorder %s16, 1
    %p91 = por %p89, %p90
    %p93 = scmp.ne.s32.totalorder %s76, %s92
    %p94 = scmp.eq.s32.totalorder %s16, 0
    %p95 = por %p93, %p94
    %s96 = ssub.s32 %s10, %s17
    %p97 = scmp.eq.s32.totalorder %s96, 0
    %s99 = sadd.s32 %s98, 1
    %s100 = scalar_select %p97, %s98, %s99
    %p103 = pneg %p97
    %p104 = scmp.eq.s32.totalorder %s10, 1
    %p105 = por %p103, %p104
    %p106 = scmp.ne.s32.totalorder %s98, %s101
    %p107 = scmp.eq.s32.totalorder %s10, 0
    %p108 = por %p106, %p107
    %p109 = scmp.ne.s32.totalorder %s98, %s101
    %p110 = scmp.eq.s32.totalorder %s15, 1
    %p111 = por %p109, %p110
    %p112 = scmp.ne.s32.totalorder %s101, %s102
    %p113 = scmp.eq.s32.totalorder %s15, 0
    %p114 = por %p112, %p113
    %p115 = scmp.ne.s32.totalorder %s101, %s102
    %p116 = scmp.eq.s32.totalorder %s16, 1
    %p117 = por %p115, %p116
    %p119 = scmp.ne.s32.totalorder %s102, %s118
    %p120 = scmp.eq.s32.totalorder %s16, 0
    %p121 = por %p119, %p120
    %s122 = ssub.s32 %s10, %s17
    %p123 = scmp.eq.s32.totalorder %s122, 0
    %s125 = sadd.s32 %s124, 1
    %s126 = scalar_select %p123, %s124, %s125
    %p129 = pneg %p123
    %p130 = scmp.eq.s32.totalorder %s10, 1
    %p131 = por %p129, %p130
    %p132 = scmp.ne.s32.totalorder %s124, %s127
    %p133 = scmp.eq.s32.totalorder %s10, 0
    %p134 = por %p132, %p133
    %p135 = scmp.ne.s32.totalorder %s124, %s127
    %p136 = scmp.eq.s32.totalorder %s15, 1
    %p137 = por %p135, %p136
    %p138 = scmp.ne.s32.totalorder %s127, %s128
    %p139 = scmp.eq.s32.totalorder %s15, 0
    %p140 = por %p138, %p139
    %p141 = scmp.ne.s32.totalorder %s127, %s128
    %p142 = scmp.eq.s32.totalorder %s16, 1
    %p143 = por %p141, %p142
    %p145 = scmp.ne.s32.totalorder %s128, %s144
    %p146 = scmp.eq.s32.totalorder %s16, 0
    %p147 = por %p145, %p146
    %p148 = scmp.le.s32.totalorder 1, %s10
    %p149 = scmp.lt.s32.totalorder %s10, 3
    %p150 = pnand %p148, %p149
    %p151 = pneg %p150
    // Predicated region
    $region9: #{_lambda_.72} parent=5 // pred_check
      _
    $region10: #{_lambda_.72} parent=5 // pred_check_branch
      %153 = sbr.rel (%p150) target = $region12
    $region11: #{_lambda_.72} parent=5 // pred_region
      %s154 = ssub.s32 %s10, 1
    $region12: #{_lambda_.72} parent=5 // pred_fallthru
      _
    %p155 = scmp.lt.s32.totalorder %s10, 2
    // Predicated region
    $region13: #{_lambda_.72} parent=5 // pred_check
      %p156 = pneg %p155
    $region14: #{_lambda_.72} parent=5 // pred_check_branch
      %158 = sbr.rel (%p156) target = $region16
    $region15: #{_lambda_.72} parent=5 // pred_region
      // Predicated region
      $region17: #{_lambda_.72} parent=15 // pred_check
        %p159 = pneg %p30
      $region18: #{_lambda_.72} parent=15 // pred_check_branch
        %161 = sbr.rel (%p159) target = $region20
      $region19: #{_lambda_.72} parent=15 // pred_region
        %p162 = scmp.lt.s32.totalorder %s10, 1
        %s163 = scalar_select %p162, %s10, 1
        %s164 = smul.addr %s163, 3
        %s165 = smul.addr %s164, 2
        %s166 = scalar_lea.vmem %s0, %s165
      $region20: #{_lambda_.72} parent=15 // pred_fallthru
        _
      // Predicated region
      $region21: #{_lambda_.72} parent=15 // pred_check
        %p167 = pneg %p56
      $region22: #{_lambda_.72} parent=15 // pred_check_branch
        %169 = sbr.rel (%p167) target = $region24
      $region23: #{_lambda_.72} parent=15 // pred_region
        %p170 = scmp.lt.s32.totalorder %s10, 1
        %s171 = scalar_select %p170, %s10, 1
        %s172 = smul.addr %s171, 3
        %s173 = smul.addr %s172, 2
        %s174 = scalar_lea.vmem %s1, %s173
      $region24: #{_lambda_.72} parent=15 // pred_fallthru
        _
      // Predicated region
      $region25: #{_lambda_.72} parent=15 // pred_check
        %p175 = pneg %p82
      $region26: #{_lambda_.72} parent=15 // pred_check_branch
        %177 = sbr.rel (%p175) target = $region28
      $region27: #{_lambda_.72} parent=15 // pred_region
        %p178 = scmp.lt.s32.totalorder %s10, 1
        %s179 = scalar_select %p178, %s10, 1
        %s180 = smul.addr %s179, 3
        %s181 = smul.addr %s180, 2
        %s182 = scalar_lea.vmem %s2, %s181
      $region28: #{_lambda_.72} parent=15 // pred_fallthru
        _
      // Predicated region
      $region29: #{_lambda_.72} parent=15 // pred_check
        %p183 = pneg %p108
      $region30: #{_lambda_.72} parent=15 // pred_check_branch
        %185 = sbr.rel (%p183) target = $region32
      $region31: #{_lambda_.72} parent=15 // pred_region
        %p186 = scmp.lt.s32.totalorder %s10, 1
        %s187 = scalar_select %p186, %s10, 1
        %s188 = smul.addr %s187, 3
        %s189 = smul.addr %s188, 2
        %s190 = scalar_lea.vmem %s3, %s189
      $region32: #{_lambda_.72} parent=15 // pred_fallthru
        _
    $region16: #{_lambda_.72} parent=5 // pred_fallthru
      _
    %p191 = scmp.le.s32.totalorder 1, %s10
    %p192 = scmp.lt.s32.totalorder %s10, 3
    %p193 = pnand %p191, %p192
    %p194 = pneg %p193
    // Predicated region
    $region33: #{_lambda_.72} parent=5 // pred_check
      _
    $region34: #{_lambda_.72} parent=5 // pred_check_branch
      %196 = sbr.rel (%p193) target = $region36
    $region35: #{_lambda_.72} parent=5 // pred_region
      %s197 = ssub.s32 %s10, 1
      %p198 = scmp.lt.s32.totalorder %s15, 1
      %s199 = scalar_select %p198, %s15, 1
      %s200 = smul.addr %s199, 3
      %s201 = smul.addr %s200, 2
      %s202 = scalar_lea.vmem %s0, %s201
      %p203 = pneg %p36
      %p204 = pneg %p33
      %p205 = scmp.lt.s32.totalorder %s15, 1
      %s206 = scalar_select %p205, %s15, 1
      %s207 = smul.addr %s206, 3
      %s208 = smul.addr %s207, 2
      %s209 = scalar_lea.vmem %s1, %s208
      %p210 = pneg %p62
      %p211 = pneg %p59
      %p212 = scmp.lt.s32.totalorder %s15, 1
      %s213 = scalar_select %p212, %s15, 1
      %s214 = smul.addr %s213, 3
      %s215 = smul.addr %s214, 2
      %s216 = scalar_lea.vmem %s2, %s215
      %p217 = pneg %p88
      %p218 = pneg %p85
      %p219 = scmp.lt.s32.totalorder %s15, 1
      %s220 = scalar_select %p219, %s15, 1
      %s221 = smul.addr %s220, 3
      %s222 = smul.addr %s221, 2
      %s223 = scalar_lea.vmem %s3, %s222
      %p224 = pneg %p114
      %p225 = pneg %p111
      %p226 = pneg %p140
      %p227 = pneg %p137
      %p228 = scmp.lt.s32.totalorder %s15, 1
      %s229 = scalar_select %p228, %s15, 1
      %s230 = smul.addr %s229, 2
      %s231 = scalar_lea.vmem %s4, %s230
      %p232 = scmp.lt.s32.totalorder %s15, 1
      %s233 = scalar_select %p232, %s15, 1
      %s234 = smul.addr %s233, 3
      %s235 = smul.addr %s234, 2
      %s236 = scalar_lea.vmem %s0, %s235
      %p237 = scmp.lt.s32.totalorder %s15, 1
      %s238 = scalar_select %p237, %s15, 1
      %s239 = smul.addr %s238, 3
      %s240 = smul.addr %s239, 2
      %s241 = scalar_lea.vmem %s1, %s240
      %p242 = scmp.lt.s32.totalorder %s15, 1
      %s243 = scalar_select %p242, %s15, 1
      %s244 = smul.addr %s243, 3
      %s245 = smul.addr %s244, 2
      %s246 = scalar_lea.vmem %s2, %s245
      %p247 = scmp.lt.s32.totalorder %s15, 1
      %s248 = scalar_select %p247, %s15, 1
      %s249 = smul.addr %s248, 3
      %s250 = smul.addr %s249, 2
      %s251 = scalar_lea.vmem %s3, %s250
      %p252 = scmp.lt.s32.totalorder %s15, 1
      %s253 = scalar_select %p252, %s15, 1
      %s254 = smul.addr %s253, 2
      %s255 = scalar_lea.vmem %s4, %s254
      %v256 = vld [vmem:[%s236] sm:$0x1]
      %v257 = vld [vmem:[%s236 + $0x2] sm:$0x1]
      %v258 = vunpack.c.l.bf16 %v256
      %v259 = vunpack.c.l.bf16 %v257
      %v260 = vld [vmem:[%s241] sm:$0x1]
      %v261 = vld [vmem:[%s241 + $0x2] sm:$0x1]
      %v262 = vunpack.c.l.bf16 %v260
      %v263 = vunpack.c.l.bf16 %v261
      %v264 = vld [vmem:[%s236] sm:$0x3]
      %v265 = vld [vmem:[%s236 + $0x2] sm:$0x3]
      %v266 = vunpack.c.l.bf16 %v264
      %v267 = vunpack.c.l.bf16 %v265
      %v268 = vld [vmem:[%s246] sm:$0x1]
      %v269 = vld [vmem:[%s246 + $0x2] sm:$0x1]
      %v270 = vunpack.c.l.bf16 %v268
      %v271 = vunpack.c.l.bf16 %v269
      %v272 = vld [vmem:[%s251] sm:$0x1]
      %v273 = vld [vmem:[%s251 + $0x2] sm:$0x1]
      %v274 = vunpack.c.l.bf16 %v272
      %v275 = vunpack.c.l.bf16 %v273
      %v276 = vld [vmem:[%s246] sm:$0x3]
      %v277 = vld [vmem:[%s246 + $0x2] sm:$0x3]
      %v278 = vunpack.c.l.bf16 %v276
      %v279 = vunpack.c.l.bf16 %v277
      %s280 = scalar_lea.vmem %s236, 2
      %v281 = vld [vmem:[%s280] sm:$0x1]
      %v282 = vld [vmem:[%s280 + $0x2] sm:$0x1]
      %v283 = vunpack.c.l.bf16 %v281
      %v284 = vunpack.c.l.bf16 %v282
      %s285 = scalar_lea.vmem %s241, 2
      %v286 = vld [vmem:[%s285] sm:$0x1]
      %v287 = vld [vmem:[%s285 + $0x2] sm:$0x1]
      %v288 = vunpack.c.l.bf16 %v286
      %v289 = vunpack.c.l.bf16 %v287
      %v290 = vld [vmem:[%s280] sm:$0x3]
      %v291 = vld [vmem:[%s280 + $0x2] sm:$0x3]
      %v292 = vunpack.c.l.bf16 %v290
      %v293 = vunpack.c.l.bf16 %v291
      %v294 = vadd.f32 %v258, %v262
      %v295 = vadd.f32 %v259, %v263
      %v298 = vrot.slane %v266, 5
      %v299 = vrot.slane %v298, 4
      %v300 = vrot.slane %v267, 5
      %v301 = vrot.slane %v300, 4
      %v304 = vadd.f32 %v294, %v299
      %v305 = vadd.f32 %v295, %v301
      %v306 = vadd.f32 %v304, %v270
      %v307 = vadd.f32 %v305, %v271
      %v308 = vadd.f32 %v306, %v274
      %v309 = vadd.f32 %v307, %v275
      %v312 = vrot.slane %v278, 5
      %v313 = vrot.slane %v312, 4
      %v314 = vrot.slane %v279, 5
      %v315 = vrot.slane %v314, 4
      %v318 = vadd.f32 %v308, %v313
      %v319 = vadd.f32 %v309, %v315
      %v320 = vadd.f32 %v318, %v283
      %v321 = vadd.f32 %v319, %v284
      %v322 = vadd.f32 %v320, %v288
      %v323 = vadd.f32 %v321, %v289
      %v326 = vrot.slane %v292, 5
      %v327 = vrot.slane %v326, 4
      %v328 = vrot.slane %v293, 5
      %v329 = vrot.slane %v328, 4
      %v332 = vadd.f32 %v322, %v327
      %v333 = vadd.f32 %v323, %v329
      %v334 = vmul.f32 %v332, 0.11111111
      %v335 = vmul.f32 %v333, 0.11111111
      %v336 = vmax.f32 %v334, 0.0
      %v337 = vmax.f32 %v335, 0.0
      %v338 = vpack.c.bf16 %v336, %v336
      %v339 = vpack.c.bf16 %v337, %v337
      %vm340 = vcmask 319488
      %341 = vst.msk [vmem:[%s255] sm:$0x1] %vm340, %v338
      %342 = vst.msk [vmem:[%s255 + $0x1] sm:$0x1] %vm340, %v339
      %p343 = scmp.lt.s32.totalorder %s15, 1
      %s344 = scalar_select %p343, %s15, 1
      %s345 = smul.addr %s344, 2
      %s346 = scalar_lea.vmem %s4, %s345
      // Predicated region
      $region37: #{_lambda_.72} parent=35 // pred_check
        %p347 = pneg %p137
      $region38: #{_lambda_.72} parent=35 // pred_check_branch
        %349 = sbr.rel (%p347) target = $region40
      $region39: #{_lambda_.72} parent=35 // pred_region
        _
      $region40: #{_lambda_.72} parent=35 // pred_fallthru
        _
    $region36: #{_lambda_.72} parent=5 // pred_fallthru
      _
    %p350 = scmp.le.s32.totalorder 2, %s10
    // Predicated region
    $region41: #{_lambda_.72} parent=5 // pred_check
      %p351 = pneg %p350
    $region42: #{_lambda_.72} parent=5 // pred_check_branch
      %353 = sbr.rel (%p351) target = $region44
    $region43: #{_lambda_.72} parent=5 // pred_region
      %s354 = ssub.s32 %s10, 2
      // Predicated region
      $region45: #{_lambda_.72} parent=43 // pred_check
        %p355 = pneg %p143
      $region46: #{_lambda_.72} parent=43 // pred_check_branch
        %357 = sbr.rel (%p355) target = $region48
      $region47: #{_lambda_.72} parent=43 // pred_region
        %p358 = scmp.lt.s32.totalorder %s16, 1
        %s359 = scalar_select %p358, %s16, 1
        %s360 = smul.addr %s359, 2
        %s361 = scalar_lea.vmem %s4, %s360
      $region48: #{_lambda_.72} parent=43 // pred_fallthru
        _
    $region44: #{_lambda_.72} parent=5 // pred_fallthru
      _
  $region6: #{_lambda_.72} parent=0 // loop_footer
    %s14 = sadd.s32 1, %s10
  $region7: #{_lambda_.72} parent=0 // loop_footer_branch
    %9 = sbr.rel target = $region3
  $region8: #{_lambda_.72} parent=0 // loop_exit
    _

// kernel: _lambda_.73
$region0: #{_lambda_.73}
  #allocation0 [shape = 'u32[]', space=smem, size = 0x4, offset = 0x4, fixed_abs, tag = 'smem constant byte address 0x4 - core index']
  #allocation1 [shape = 'u32[144,128]{1,0:T(1,128)}', space=vmem, size = 0x12000, scoped, tag = 'internal scratch']
  %s0 = inlined_call_operand.vmem [shape: bf16[8,80], index: 0, kind: input, shape index: {}]
  %s1 = inlined_call_operand.vmem [shape: bf16[80,20], index: 1, kind: input, shape index: {}]
  %s2 = inlined_call_operand.vmem [shape: f32[1,20], index: 2, kind: input, shape index: {}]
  %s3 = inlined_call_operand.vmem [shape: f32[1,20], index: 3, kind: input, shape index: {}]
  %s4 = inlined_call_operand.vmem [shape: bf16[8,20], index: 4, kind: output, shape index: {}]
  %s5 = sld [smem:[#allocation0]]
  $region26: #{_lambda_.73} parent=0
    _
  %s7 = ssub.s32 1, %s5
  %s8 = scalar_select 0, %s7, %s5
  // Predicated region
  $region2: #{_lambda_.73} parent=0 // pred_check
    _
  $region3: #{_lambda_.73} parent=0 // pred_check_branch
    %10 = sbr.rel (0) target = $region5
  $region4: #{_lambda_.73} parent=0 // pred_region
    _
  $region5: #{_lambda_.73} parent=0 // pred_fallthru
    _
  // Predicated region
  $region6: #{_lambda_.73} parent=0 // pred_check
    _
  $region7: #{_lambda_.73} parent=0 // pred_check_branch
    %12 = sbr.rel (0) target = $region9
  $region8: #{_lambda_.73} parent=0 // pred_region
    _
  $region9: #{_lambda_.73} parent=0 // pred_fallthru
    _
  // Predicated region
  $region10: #{_lambda_.73} parent=0 // pred_check
    _
  $region11: #{_lambda_.73} parent=0 // pred_check_branch
    %14 = sbr.rel (0) target = $region13
  $region12: #{_lambda_.73} parent=0 // pred_region
    _
  $region13: #{_lambda_.73} parent=0 // pred_fallthru
    _
  // Predicated region
  $region14: #{_lambda_.73} parent=0 // pred_check
    _
  $region15: #{_lambda_.73} parent=0 // pred_check_branch
    %16 = sbr.rel (0) target = $region17
  $region16: #{_lambda_.73} parent=0 // pred_region
    _
  $region17: #{_lambda_.73} parent=0 // pred_fallthru
    _
  %v18 = vld [vmem:[%s0] sm:$0xf]
  %v19 = vld [vmem:[%s1] sm:$0xf]
  %v20 = vld [vmem:[%s1 + $0x4] sm:$0xf]
  %v21 = vld [vmem:[%s1 + $0x8] sm:$0xf]
  %v22 = vld [vmem:[%s1 + $0xc] sm:$0xf]
  %v23 = vld [vmem:[%s1 + $0x10] sm:$0xf]
  %v24 = vld [vmem:[%s1 + $0x14] sm:$0xf]
  %v25 = vld [vmem:[%s1 + $0x18] sm:$0xf]
  %v26 = vld [vmem:[%s1 + $0x1c] sm:$0xf]
  %v27 = vld [vmem:[%s1 + $0x20] sm:$0xf]
  %v28 = vld [vmem:[%s1 + $0x24] sm:$0xf]
  %v39 = vunpack.c.l.b16 %v19
  %v40 = vunpack.c.l.b16 %v20
  %v41 = vunpack.c.l.b16 %v21
  %v42 = vunpack.c.l.b16 %v22
  %v43 = vunpack.c.l.b16 %v23
  %v44 = vunpack.c.l.b16 %v24
  %v45 = vunpack.c.l.b16 %v25
  %v46 = vunpack.c.l.b16 %v26
  %v47 = vunpack.c.l.b16 %v27
  %v48 = vunpack.c.l.b16 %v28
  %v49 = vpack.c.b16 %v40, %v39
  %v50 = vpack.c.b16 %v42, %v41
  %v51 = vpack.c.b16 %v44, %v43
  %v52 = vpack.c.b16 %v46, %v45
  %v53 = vpack.c.b16 %v48, %v47
  %vm59 = vcmask 654336
  %v61 = vsel %vm59, %v18, 0
  %63 = vmatprep.subr.bf16.mxu0 0
  %64 = vmatpush1.bf16.msra.mxu0 0
  %65 = vmatprep.subr.bf16.mxu0 0
  %66 = vmatpush1.bf16.msra.mxu0 0
  %67 = vmatprep.subr.bf16.mxu0 0
  %68 = vmatpush1.bf16.msra.mxu0 0
  %69 = vmatprep.subr.bf16.mxu0 0
  %70 = vmatpush1.bf16.msra.mxu0 %v53
  %71 = vmatprep.subr.bf16.mxu0 0
  %72 = vmatpush1.bf16.msra.mxu0 %v52
  %73 = vmatprep.subr.bf16.mxu0 0
  %74 = vmatpush1.bf16.msra.mxu0 %v51
  %75 = vmatprep.subr.bf16.mxu0 0
  %76 = vmatpush1.bf16.msra.mxu0 %v50
  %77 = vmatprep.subr.bf16.mxu0 0
  %78 = vmatpush1.bf16.msra.mxu0 %v49
  %79 = vmatprep.subr.bf16.mxu0 0
  %80 = vmatpush2.bf16.msra.mxu0 0
  %81 = vmatprep.subr.bf16.mxu0 0
  %82 = vmatpush2.bf16.msra.mxu0 0
  %83 = vmatprep.subr.bf16.mxu0 0
  %84 = vmatpush2.bf16.msra.mxu0 0
  %85 = vmatprep.subr.bf16.mxu0 0
  %86 = vmatpush2.bf16.msra.mxu0 0
  %87 = vmatprep.subr.bf16.mxu0 0
  %88 = vmatpush2.bf16.msra.mxu0 0
  %89 = vmatprep.subr.bf16.mxu0 0
  %90 = vmatpush2.bf16.msra.mxu0 0
  %91 = vmatprep.subr.bf16.mxu0 0
  %92 = vmatpush2.bf16.msra.mxu0 0
  %93 = vmatprep.subr.bf16.mxu0 0
  %94 = vmatpush2.bf16.msra.mxu0 0
  %95 = vmatprep.mubr.bf16.mxu0 0
  %96 = vmatmul.mubr.bf16.gmra.mxu0 %v61
  %v97 = vpop.f32.mrf.mxu0
  %v98 = vadd.f32 0.0, %v97
  %v99 = vpop.f32.mrf.mxu0
  %v100 = vpop.f32.mrf.mxu0
  %v101 = vpop.f32.mrf.mxu0
  %102 = vdwg.mxu0
  %v103 = vld [vmem:[%s2] sm:$0x1]
  %v105 = vlaneseq
  %v106 = vshrl.u32 %v105, 7
  %v107 = vsub.s32 0, %v106
  %v108 = vrot.slane %v103, %v107
  %v110 = vmul.f32 %v98, %v108
  %v111 = vld [vmem:[%s3] sm:$0x1]
  %v113 = vlaneseq
  %v114 = vshrl.u32 %v113, 7
  %v115 = vsub.s32 0, %v114
  %v116 = vrot.slane %v111, %v115
  %v118 = vadd.f32 %v110, %v116
  %v119 = vmax.f32 %v118, 0.0
  %v120 = vpack.c.bf16 %v119, %v119
  %vm121 = vcmask 158720
  %122 = vst.msk [vmem:[%s4] sm:$0xf] %vm121, %v120
  // Predicated region
  $region18: #{_lambda_.73} parent=0 // pred_check
    _
  $region19: #{_lambda_.73} parent=0 // pred_check_branch
    %124 = sbr.rel (0) target = $region21
  $region20: #{_lambda_.73} parent=0 // pred_region
    _
  $region21: #{_lambda_.73} parent=0 // pred_fallthru
    _
  // Predicated region
  $region22: #{_lambda_.73} parent=0 // pred_check
    _
  $region23: #{_lambda_.73} parent=0 // pred_check_branch
    %126 = sbr.rel (0) target = $region25
  $region24: #{_lambda_.73} parent=0 // pred_region
    _
  $region25: #{_lambda_.73} parent=0 // pred_fallthru
    _

// kernel: _lambda_.74
$region0: #{_lambda_.74}
  #allocation0 [shape = 'u32[]', space=smem, size = 0x4, offset = 0x4, fixed_abs, tag = 'smem constant byte address 0x4 - core index']
  #allocation1 [shape = 'u32[144,128]{1,0:T(1,128)}', space=vmem, size = 0x12000, scoped, tag = 'internal scratch']
  %s0 = inlined_call_operand.vmem [shape: bf16[2,4,4,20], index: 0, kind: input, shape index: {}]
  %s1 = inlined_call_operand.vmem [shape: f32[9,1,20], index: 1, kind: input, shape index: {}]
  %s2 = inlined_call_operand.vmem [shape: f32[1,1,20], index: 2, kind: input, shape index: {}]
  %s3 = inlined_call_operand.vmem [shape: f32[1,1,20], index: 3, kind: input, shape index: {}]
  %s4 = inlined_call_operand.vmem [shape: bf16[2,2,2,20], index: 4, kind: output, shape index: {}]
  %s5 = sld [smem:[#allocation0]]
  $region49: #{_lambda_.74} parent=0
    _
  %s7 = ssub.s32 1, %s5
  %s8 = scalar_select 0, %s7, %s5
  loop: start=0, step=1, limit=4
  $region2: #{_lambda_.74} parent=0 // loop_pre_header
    _
  $region3: #{_lambda_.74} parent=0 // loop_header
    %s10 = sphi 0, %s14
    %p11 = scmp.ge.s32.totalorder %s10, 4
    %s20 = sphi 0, %s22
    %s23 = sphi 0, %s20
    %s24 = sphi 0, %s23
    %s40 = sphi 0, %s24
    %s44 = sphi 0, %s44
    %s46 = sphi 0, %s44
    %s47 = sphi 0, %s46
    %s61 = sphi 0, %s47
    %s65 = sphi 0, %s65
    %s67 = sphi 0, %s65
    %s68 = sphi 0, %s67
    %s82 = sphi 0, %s68
    %s86 = sphi 0, %s86
    %s88 = sphi 0, %s86
    %s89 = sphi 0, %s88
    %s103 = sphi 0, %s89
    %s109 = sphi 0, %s111
    %s112 = sphi 0, %s109
    %s113 = sphi 0, %s112
    %s129 = sphi 0, %s113
  $region4: #{_lambda_.74} parent=0 // loop_header_branch
    %13 = sbr.rel (%p11) target = $region8
  $region5: #{_lambda_.74} parent=0 // loop_body
    %s15 = ssub.s32 %s10, 1
    %s16 = ssub.s32 %s10, 2
    %s17 = sadd.s32 %s10, 1
    %s18 = ssub.s32 %s10, %s17
    %p19 = scmp.eq.s32.totalorder %s18, 0
    %s21 = sadd.s32 %s20, 1
    %s22 = scalar_select %p19, %s20, %s21
    %p25 = pneg %p19
    %p26 = scmp.eq.s32.totalorder %s10, 1
    %p27 = por %p25, %p26
    %p28 = scmp.ne.s32.totalorder %s20, %s23
    %p29 = scmp.eq.s32.totalorder %s10, 0
    %p30 = por %p28, %p29
    %p31 = scmp.ne.s32.totalorder %s20, %s23
    %p32 = scmp.eq.s32.totalorder %s15, 1
    %p33 = por %p31, %p32
    %p34 = scmp.ne.s32.totalorder %s23, %s24
    %p35 = scmp.eq.s32.totalorder %s15, 0
    %p36 = por %p34, %p35
    %p37 = scmp.ne.s32.totalorder %s23, %s24
    %p38 = scmp.eq.s32.totalorder %s16, 1
    %p39 = por %p37, %p38
    %p41 = scmp.ne.s32.totalorder %s24, %s40
    %p42 = scmp.eq.s32.totalorder %s16, 0
    %p43 = por %p41, %p42
    %s45 = sadd.s32 %s44, 1
    %p48 = scmp.eq.s32.totalorder %s10, 1
    %p49 = scmp.ne.s32.totalorder %s44, %s46
    %p50 = scmp.eq.s32.totalorder %s10, 0
    %p51 = por %p49, %p50
    %p52 = scmp.ne.s32.totalorder %s44, %s46
    %p53 = scmp.eq.s32.totalorder %s15, 1
    %p54 = por %p52, %p53
    %p55 = scmp.ne.s32.totalorder %s46, %s47
    %p56 = scmp.eq.s32.totalorder %s15, 0
    %p57 = por %p55, %p56
    %p58 = scmp.ne.s32.totalorder %s46, %s47
    %p59 = scmp.eq.s32.totalorder %s16, 1
    %p60 = por %p58, %p59
    %p62 = scmp.ne.s32.totalorder %s47, %s61
    %p63 = scmp.eq.s32.totalorder %s16, 0
    %p64 = por %p62, %p63
    %s66 = sadd.s32 %s65, 1
    %p69 = scmp.eq.s32.totalorder %s10, 1
    %p70 = scmp.ne.s32.totalorder %s65, %s67
    %p71 = scmp.eq.s32.totalorder %s10, 0
    %p72 = por %p70, %p71
    %p73 = scmp.ne.s32.totalorder %s65, %s67
    %p74 = scmp.eq.s32.totalorder %s15, 1
    %p75 = por %p73, %p74
    %p76 = scmp.ne.s32.totalorder %s67, %s68
    %p77 = scmp.eq.s32.totalorder %s15, 0
    %p78 = por %p76, %p77
    %p79 = scmp.ne.s32.totalorder %s67, %s68
    %p80 = scmp.eq.s32.totalorder %s16, 1
    %p81 = por %p79, %p80
    %p83 = scmp.ne.s32.totalorder %s68, %s82
    %p84 = scmp.eq.s32.totalorder %s16, 0
    %p85 = por %p83, %p84
    %s87 = sadd.s32 %s86, 1
    %p90 = scmp.eq.s32.totalorder %s10, 1
    %p91 = scmp.ne.s32.totalorder %s86, %s88
    %p92 = scmp.eq.s32.totalorder %s10, 0
    %p93 = por %p91, %p92
    %p94 = scmp.ne.s32.totalorder %s86, %s88
    %p95 = scmp.eq.s32.totalorder %s15, 1
    %p96 = por %p94, %p95
    %p97 = scmp.ne.s32.totalorder %s88, %s89
    %p98 = scmp.eq.s32.totalorder %s15, 0
    %p99 = por %p97, %p98
    %p100 = scmp.ne.s32.totalorder %s88, %s89
    %p101 = scmp.eq.s32.totalorder %s16, 1
    %p102 = por %p100, %p101
    %p104 = scmp.ne.s32.totalorder %s89, %s103
    %p105 = scmp.eq.s32.totalorder %s16, 0
    %p106 = por %p104, %p105
    %s107 = ssub.s32 %s10, %s17
    %p108 = scmp.eq.s32.totalorder %s107, 0
    %s110 = sadd.s32 %s109, 1
    %s111 = scalar_select %p108, %s109, %s110
    %p114 = pneg %p108
    %p115 = scmp.eq.s32.totalorder %s10, 1
    %p116 = por %p114, %p115
    %p117 = scmp.ne.s32.totalorder %s109, %s112
    %p118 = scmp.eq.s32.totalorder %s10, 0
    %p119 = por %p117, %p118
    %p120 = scmp.ne.s32.totalorder %s109, %s112
    %p121 = scmp.eq.s32.totalorder %s15, 1
    %p122 = por %p120, %p121
    %p123 = scmp.ne.s32.totalorder %s112, %s113
    %p124 = scmp.eq.s32.totalorder %s15, 0
    %p125 = por %p123, %p124
    %p126 = scmp.ne.s32.totalorder %s112, %s113
    %p127 = scmp.eq.s32.totalorder %s16, 1
    %p128 = por %p126, %p127
    %p130 = scmp.ne.s32.totalorder %s113, %s129
    %p131 = scmp.eq.s32.totalorder %s16, 0
    %p132 = por %p130, %p131
    %p133 = scmp.le.s32.totalorder 1, %s10
    %p134 = scmp.lt.s32.totalorder %s10, 3
    %p135 = pnand %p133, %p134
    %p136 = pneg %p135
    // Predicated region
    $region9: #{_lambda_.74} parent=5 // pred_check
      _
    $region10: #{_lambda_.74} parent=5 // pred_check_branch
      %138 = sbr.rel (%p135) target = $region12
    $region11: #{_lambda_.74} parent=5 // pred_region
      %s139 = ssub.s32 %s10, 1
      // Predicated region
      $region13: #{_lambda_.74} parent=11 // pred_check
        %p140 = pneg %p57
      $region14: #{_lambda_.74} parent=11 // pred_check_branch
        %142 = sbr.rel (%p140) target = $region16
      $region15: #{_lambda_.74} parent=11 // pred_region
        _
      $region16: #{_lambda_.74} parent=11 // pred_fallthru
        _
      // Predicated region
      $region17: #{_lambda_.74} parent=11 // pred_check
        %p143 = pneg %p78
      $region18: #{_lambda_.74} parent=11 // pred_check_branch
        %145 = sbr.rel (%p143) target = $region20
      $region19: #{_lambda_.74} parent=11 // pred_region
        _
      $region20: #{_lambda_.74} parent=11 // pred_fallthru
        _
      // Predicated region
      $region21: #{_lambda_.74} parent=11 // pred_check
        %p146 = pneg %p99
      $region22: #{_lambda_.74} parent=11 // pred_check_branch
        %148 = sbr.rel (%p146) target = $region24
      $region23: #{_lambda_.74} parent=11 // pred_region
        _
      $region24: #{_lambda_.74} parent=11 // pred_fallthru
        _
    $region12: #{_lambda_.74} parent=5 // pred_fallthru
      _
    %p149 = scmp.lt.s32.totalorder %s10, 2
    // Predicated region
    $region25: #{_lambda_.74} parent=5 // pred_check
      %p150 = pneg %p149
    $region26: #{_lambda_.74} parent=5 // pred_check_branch
      %152 = sbr.rel (%p150) target = $region28
    $region27: #{_lambda_.74} parent=5 // pred_region
      // Predicated region
      $region29: #{_lambda_.74} parent=27 // pred_check
        %p153 = pneg %p30
      $region30: #{_lambda_.74} parent=27 // pred_check_branch
        %155 = sbr.rel (%p153) target = $region32
      $region31: #{_lambda_.74} parent=27 // pred_region
        %p156 = scmp.lt.s32.totalorder %s10, 1
        %s157 = scalar_select %p156, %s10, 1
        %s158 = smul.addr %s157, 4
        %s159 = smul.addr %s158, 2
        %s160 = scalar_lea.vmem %s0, %s159
      $region32: #{_lambda_.74} parent=27 // pred_fallthru
        _
    $region28: #{_lambda_.74} parent=5 // pred_fallthru
      _
    %p161 = scmp.le.s32.totalorder 1, %s10
    %p162 = scmp.lt.s32.totalorder %s10, 3
    %p163 = pnand %p161, %p162
    %p164 = pneg %p163
    // Predicated region
    $region33: #{_lambda_.74} parent=5 // pred_check
      _
    $region34: #{_lambda_.74} parent=5 // pred_check_branch
      %166 = sbr.rel (%p163) target = $region36
    $region35: #{_lambda_.74} parent=5 // pred_region
      %s167 = ssub.s32 %s10, 1
      %p168 = scmp.lt.s32.totalorder %s15, 1
      %s169 = scalar_select %p168, %s15, 1
      %s170 = smul.addr %s169, 4
      %s171 = smul.addr %s170, 2
      %s172 = scalar_lea.vmem %s0, %s171
      %p173 = pneg %p36
      %p174 = pneg %p33
      %p175 = pneg %p57
      %p176 = pneg %p54
      %p177 = pneg %p78
      %p178 = pneg %p75
      %p179 = pneg %p99
      %p180 = pneg %p96
      %p181 = pneg %p125
      %p182 = pneg %p122
      %p183 = scmp.lt.s32.totalorder %s15, 1
      %s184 = scalar_select %p183, %s15, 1
      %s185 = smul.addr %s184, 2
      %s186 = scalar_lea.vmem %s4, %s185
      %p187 = scmp.lt.s32.totalorder %s15, 1
      %s188 = scalar_select %p187, %s15, 1
      %s189 = smul.addr %s188, 4
      %s190 = smul.addr %s189, 2
      %s191 = scalar_lea.vmem %s0, %s190
      %p192 = scmp.lt.s32.totalorder %s15, 1
      %s193 = scalar_select %p192, %s15, 1
      %s194 = smul.addr %s193, 2
      %s195 = scalar_lea.vmem %s4, %s194
      %v196 = vld [vmem:[%s191] sm:$0x1]
      %v197 = vld [vmem:[%s191 + $0x2] sm:$0x1]
      %v198 = vunpack.c.l.bf16 %v196
      %v199 = vunpack.c.l.bf16 %v197
      %v200 = vld [vmem:[%s191] sm:$0x3]
      %v201 = vld [vmem:[%s191 + $0x2] sm:$0x3]
      %v202 = vunpack.c.l.bf16 %v200
      %v203 = vunpack.c.l.bf16 %v201
      %v204 = vld [vmem:[%s191] sm:$0x2]
      %v205 = vld [vmem:[%s191 + $0x2] sm:$0x2]
      %v206 = vunpack.c.l.bf16 %v204
      %v207 = vunpack.c.l.bf16 %v205
      %s208 = scalar_lea.vmem %s191, 2
      %v209 = vld [vmem:[%s208] sm:$0x1]
      %v210 = vld [vmem:[%s208 + $0x2] sm:$0x1]
      %v211 = vunpack.c.l.bf16 %v209
      %v212 = vunpack.c.l.bf16 %v210
      %v213 = vld [vmem:[%s208] sm:$0x3]
      %v214 = vld [vmem:[%s208 + $0x2] sm:$0x3]
      %v215 = vunpack.c.l.bf16 %v213
      %v216 = vunpack.c.l.bf16 %v214
      %v217 = vld [vmem:[%s208] sm:$0x2]
      %v218 = vld [vmem:[%s208 + $0x2] sm:$0x2]
      %v219 = vunpack.c.l.bf16 %v217
      %v220 = vunpack.c.l.bf16 %v218
      %s221 = scalar_lea.vmem %s191, 4
      %v222 = vld [vmem:[%s221] sm:$0x1]
      %v223 = vld [vmem:[%s221 + $0x2] sm:$0x1]
      %v224 = vunpack.c.l.bf16 %v222
      %v225 = vunpack.c.l.bf16 %v223
      %v226 = vld [vmem:[%s221] sm:$0x3]
      %v227 = vld [vmem:[%s221 + $0x2] sm:$0x3]
      %v228 = vunpack.c.l.bf16 %v226
      %v229 = vunpack.c.l.bf16 %v227
      %v230 = vld [vmem:[%s221] sm:$0x2]
      %v231 = vld [vmem:[%s221 + $0x2] sm:$0x2]
      %v232 = vunpack.c.l.bf16 %v230
      %v233 = vunpack.c.l.bf16 %v231
      %v234 = vld [vmem:[%s1] sm:$0x1]
      %v236 = vlaneseq
      %v237 = vshrl.u32 %v236, 7
      %v238 = vsub.s32 0, %v237
      %v239 = vrot.slane %v234, %v238
      %v241 = vmul.f32 %v198, %v239
      %v242 = vmul.f32 %v199, %v239
      %s243 = scalar_lea.vmem %s1, 1
      %v244 = vld [vmem:[%s243] sm:$0x1]
      %v246 = vlaneseq
      %v247 = vshrl.u32 %v246, 7
      %v248 = vsub.s32 0, %v247
      %v249 = vrot.slane %v244, %v248
      %v251 = vmul.f32 %v202, %v249
      %v252 = vmul.f32 %v203, %v249
      %v255 = vrot.slane %v251, 5
      %v256 = vrot.slane %v255, 4
      %v257 = vrot.slane %v252, 5
      %v258 = vrot.slane %v257, 4
      %v261 = vadd.f32 %v241, %v256
      %v262 = vadd.f32 %v242, %v258
      %s263 = scalar_lea.vmem %s1, 2
      %v264 = vld [vmem:[%s263] sm:$0x1]
      %v266 = vlaneseq
      %v267 = vshrl.u32 %v266, 7
      %v268 = vsub.s32 0, %v267
      %v269 = vrot.slane %v264, %v268
      %v271 = vmul.f32 %v206, %v269
      %v272 = vmul.f32 %v207, %v269
      %v275 = vrot.slane %v271, 6
      %v276 = vrot.slane %v275, 4
      %v277 = vrot.slane %v272, 6
      %v278 = vrot.slane %v277, 4
      %v281 = vadd.f32 %v261, %v276
      %v282 = vadd.f32 %v262, %v278
      %s283 = scalar_lea.vmem %s1, 3
      %v284 = vld [vmem:[%s283] sm:$0x1]
      %v286 = vlaneseq
      %v287 = vshrl.u32 %v286, 7
      %v288 = vsub.s32 0, %v287
      %v289 = vrot.slane %v284, %v288
      %v291 = vmul.f32 %v211, %v289
      %v292 = vmul.f32 %v212, %v289
      %v293 = vadd.f32 %v281, %v291
      %v294 = vadd.f32 %v282, %v292
      %s295 = scalar_lea.vmem %s1, 4
      %v296 = vld [vmem:[%s295] sm:$0x1]
      %v298 = vlaneseq
      %v299 = vshrl.u32 %v298, 7
      %v300 = vsub.s32 0, %v299
      %v301 = vrot.slane %v296, %v300
      %v303 = vmul.f32 %v215, %v301
      %v304 = vmul.f32 %v216, %v301
      %v307 = vrot.slane %v303, 5
      %v308 = vrot.slane %v307, 4
      %v309 = vrot.slane %v304, 5
      %v310 = vrot.slane %v309, 4
      %v313 = vadd.f32 %v293, %v308
      %v314 = vadd.f32 %v294, %v310
      %s315 = scalar_lea.vmem %s1, 5
      %v316 = vld [vmem:[%s315] sm:$0x1]
      %v318 = vlaneseq
      %v319 = vshrl.u32 %v318, 7
      %v320 = vsub.s32 0, %v319
      %v321 = vrot.slane %v316, %v320
      %v323 = vmul.f32 %v219, %v321
      %v324 = vmul.f32 %v220, %v321
      %v327 = vrot.slane %v323, 6
      %v328 = vrot.slane %v327, 4
      %v329 = vrot.slane %v324, 6
      %v330 = vrot.slane %v329, 4
      %v333 = vadd.f32 %v313, %v328
      %v334 = vadd.f32 %v314, %v330
      %s335 = scalar_lea.vmem %s1, 6
      %v336 = vld [vmem:[%s335] sm:$0x1]
      %v338 = vlaneseq
      %v339 = vshrl.u32 %v338, 7
      %v340 = vsub.s32 0, %v339
      %v341 = vrot.slane %v336, %v340
      %v343 = vmul.f32 %v224, %v341
      %v344 = vmul.f32 %v225, %v341
      %v345 = vadd.f32 %v333, %v343
      %v346 = vadd.f32 %v334, %v344
      %s347 = scalar_lea.vmem %s1, 7
      %v348 = vld [vmem:[%s347] sm:$0x1]
      %v350 = vlaneseq
      %v351 = vshrl.u32 %v350, 7
      %v352 = vsub.s32 0, %v351
      %v353 = vrot.slane %v348, %v352
      %v355 = vmul.f32 %v228, %v353
      %v356 = vmul.f32 %v229, %v353
      %v359 = vrot.slane %v355, 5
      %v360 = vrot.slane %v359, 4
      %v361 = vrot.slane %v356, 5
      %v362 = vrot.slane %v361, 4
      %v365 = vadd.f32 %v345, %v360
      %v366 = vadd.f32 %v346, %v362
      %s367 = scalar_lea.vmem %s1, 8
      %v368 = vld [vmem:[%s367] sm:$0x1]
      %v370 = vlaneseq
      %v371 = vshrl.u32 %v370, 7
      %v372 = vsub.s32 0, %v371
      %v373 = vrot.slane %v368, %v372
      %v375 = vmul.f32 %v232, %v373
      %v376 = vmul.f32 %v233, %v373
      %v379 = vrot.slane %v375, 6
      %v380 = vrot.slane %v379, 4
      %v381 = vrot.slane %v376, 6
      %v382 = vrot.slane %v381, 4
      %v385 = vadd.f32 %v365, %v380
      %v386 = vadd.f32 %v366, %v382
      %v387 = vld [vmem:[%s2] sm:$0x1]
      %v389 = vlaneseq
      %v390 = vshrl.u32 %v389, 7
      %v391 = vsub.s32 0, %v390
      %v392 = vrot.slane %v387, %v391
      %v394 = vmul.f32 %v385, %v392
      %v395 = vmul.f32 %v386, %v392
      %v396 = vld [vmem:[%s3] sm:$0x1]
      %v398 = vlaneseq
      %v399 = vshrl.u32 %v398, 7
      %v400 = vsub.s32 0, %v399
      %v401 = vrot.slane %v396, %v400
      %v403 = vadd.f32 %v394, %v401
      %v404 = vadd.f32 %v395, %v401
      %v405 = vpack.c.bf16 %v403, %v403
      %v406 = vpack.c.bf16 %v404, %v404
      %vm407 = vcmask 155648
      %408 = vst.msk [vmem:[%s195] sm:$0x1] %vm407, %v405
      %409 = vst.msk [vmem:[%s195 + $0x1] sm:$0x1] %vm407, %v406
      %p410 = scmp.lt.s32.totalorder %s15, 1
      %s411 = scalar_select %p410, %s15, 1
      %s412 = smul.addr %s411, 2
      %s413 = scalar_lea.vmem %s4, %s412
      // Predicated region
      $region37: #{_lambda_.74} parent=35 // pred_check
        %p414 = pneg %p122
      $region38: #{_lambda_.74} parent=35 // pred_check_branch
        %416 = sbr.rel (%p414) target = $region40
      $region39: #{_lambda_.74} parent=35 // pred_region
        _
      $region40: #{_lambda_.74} parent=35 // pred_fallthru
        _
    $region36: #{_lambda_.74} parent=5 // pred_fallthru
      _
    %p417 = scmp.le.s32.totalorder 2, %s10
    // Predicated region
    $region41: #{_lambda_.74} parent=5 // pred_check
      %p418 = pneg %p417
    $region42: #{_lambda_.74} parent=5 // pred_check_branch
      %420 = sbr.rel (%p418) target = $region44
    $region43: #{_lambda_.74} parent=5 // pred_region
      %s421 = ssub.s32 %s10, 2
      // Predicated region
      $region45: #{_lambda_.74} parent=43 // pred_check
        %p422 = pneg %p128
      $region46: #{_lambda_.74} parent=43 // pred_check_branch
        %424 = sbr.rel (%p422) target = $region48
      $region47: #{_lambda_.74} parent=43 // pred_region
        %p425 = scmp.lt.s32.totalorder %s16, 1
        %s426 = scalar_select %p425, %s16, 1
        %s427 = smul.addr %s426, 2
        %s428 = scalar_lea.vmem %s4, %s427
      $region48: #{_lambda_.74} parent=43 // pred_fallthru
        _
    $region44: #{_lambda_.74} parent=5 // pred_fallthru
      _
  $region6: #{_lambda_.74} parent=0 // loop_footer
    %s14 = sadd.s32 1, %s10
  $region7: #{_lambda_.74} parent=0 // loop_footer_branch
    %9 = sbr.rel target = $region3
  $region8: #{_lambda_.74} parent=0 // loop_exit
    _

// kernel: _lambda_.75
$region0: #{_lambda_.75}
  #allocation0 [shape = 'u32[]', space=smem, size = 0x4, offset = 0x4, fixed_abs, tag = 'smem constant byte address 0x4 - core index']
  #allocation1 [shape = 'u32[144,128]{1,0:T(1,128)}', space=vmem, size = 0x12000, scoped, tag = 'internal scratch']
  %s0 = inlined_call_operand.vmem [shape: bf16[8,20], index: 0, kind: input, shape index: {}]
  %s1 = inlined_call_operand.vmem [shape: bf16[20,80], index: 1, kind: input, shape index: {}]
  %s2 = inlined_call_operand.vmem [shape: f32[1,80], index: 2, kind: input, shape index: {}]
  %s3 = inlined_call_operand.vmem [shape: f32[1,80], index: 3, kind: input, shape index: {}]
  %s4 = inlined_call_operand.vmem [shape: bf16[8,80], index: 4, kind: input, shape index: {}, may-alias: {4,5}]
  %s5 = inlined_call_operand.vmem [shape: bf16[8,80], index: 5, kind: output, shape index: {}, may-alias: {4,5}]
  %s6 = sld [smem:[#allocation0]]
  $region30: #{_lambda_.75} parent=0
    _
  %s8 = ssub.s32 1, %s6
  %s9 = scalar_select 0, %s8, %s6
  // Predicated region
  $region2: #{_lambda_.75} parent=0 // pred_check
    _
  $region3: #{_lambda_.75} parent=0 // pred_check_branch
    %11 = sbr.rel (0) target = $region5
  $region4: #{_lambda_.75} parent=0 // pred_region
    _
  $region5: #{_lambda_.75} parent=0 // pred_fallthru
    _
  // Predicated region
  $region6: #{_lambda_.75} parent=0 // pred_check
    _
  $region7: #{_lambda_.75} parent=0 // pred_check_branch
    %13 = sbr.rel (0) target = $region9
  $region8: #{_lambda_.75} parent=0 // pred_region
    _
  $region9: #{_lambda_.75} parent=0 // pred_fallthru
    _
  // Predicated region
  $region10: #{_lambda_.75} parent=0 // pred_check
    _
  $region11: #{_lambda_.75} parent=0 // pred_check_branch
    %15 = sbr.rel (0) target = $region13
  $region12: #{_lambda_.75} parent=0 // pred_region
    _
  $region13: #{_lambda_.75} parent=0 // pred_fallthru
    _
  // Predicated region
  $region14: #{_lambda_.75} parent=0 // pred_check
    _
  $region15: #{_lambda_.75} parent=0 // pred_check_branch
    %17 = sbr.rel (0) target = $region17
  $region16: #{_lambda_.75} parent=0 // pred_region
    _
  $region17: #{_lambda_.75} parent=0 // pred_fallthru
    _
  // Predicated region
  $region18: #{_lambda_.75} parent=0 // pred_check
    _
  $region19: #{_lambda_.75} parent=0 // pred_check_branch
    %19 = sbr.rel (0) target = $region21
  $region20: #{_lambda_.75} parent=0 // pred_region
    _
  $region21: #{_lambda_.75} parent=0 // pred_fallthru
    _
  %v21 = vld [vmem:[%s0] sm:$0xf]
  %v22 = vld [vmem:[%s1] sm:$0xf]
  %v23 = vld [vmem:[%s1 + $0x4] sm:$0xf]
  %v24 = vld [vmem:[%s1 + $0x8] sm:$0x3]
  %v28 = vunpack.c.l.b16 %v22
  %v29 = vunpack.c.l.b16 %v23
  %v30 = vunpack.c.l.b16 %v24
  %v31 = vpack.c.b16 %v29, %v28
  %v32 = vpack.c.b16 %v30, %v30
  %vm34 = vcmask 162816
  %v36 = vsel %vm34, %v21, 0
  %vm38 = vcmask 1041408
  %v40 = vsel %vm38, %v32, 0
  %42 = vmatprep.subr.bf16.mxu0 0
  %43 = vmatpush1.bf16.msra.mxu0 0
  %44 = vmatprep.subr.bf16.mxu0 0
  %45 = vmatpush1.bf16.msra.mxu0 0
  %46 = vmatprep.subr.bf16.mxu0 0
  %47 = vmatpush1.bf16.msra.mxu0 0
  %48 = vmatprep.subr.bf16.mxu0 0
  %49 = vmatpush1.bf16.msra.mxu0 0
  %50 = vmatprep.subr.bf16.mxu0 0
  %51 = vmatpush1.bf16.msra.mxu0 0
  %52 = vmatprep.subr.bf16.mxu0 0
  %53 = vmatpush1.bf16.msra.mxu0 0
  %54 = vmatprep.subr.bf16.mxu0 0
  %55 = vmatpush1.bf16.msra.mxu0 %v40
  %56 = vmatprep.subr.bf16.mxu0 0
  %57 = vmatpush1.bf16.msra.mxu0 %v31
  %58 = vmatprep.subr.bf16.mxu0 0
  %59 = vmatpush2.bf16.msra.mxu0 0
  %60 = vmatprep.subr.bf16.mxu0 0
  %61 = vmatpush2.bf16.msra.mxu0 0
  %62 = vmatprep.subr.bf16.mxu0 0
  %63 = vmatpush2.bf16.msra.mxu0 0
  %64 = vmatprep.subr.bf16.mxu0 0
  %65 = vmatpush2.bf16.msra.mxu0 0
  %66 = vmatprep.subr.bf16.mxu0 0
  %67 = vmatpush2.bf16.msra.mxu0 0
  %68 = vmatprep.subr.bf16.mxu0 0
  %69 = vmatpush2.bf16.msra.mxu0 0
  %70 = vmatprep.subr.bf16.mxu0 0
  %71 = vmatpush2.bf16.msra.mxu0 0
  %72 = vmatprep.subr.bf16.mxu0 0
  %73 = vmatpush2.bf16.msra.mxu0 0
  %74 = vmatprep.mubr.bf16.mxu0 0
  %75 = vmatmul.mubr.bf16.gmra.mxu0 %v36
  %v76 = vpop.f32.mrf.mxu0
  %v77 = vadd.f32 0.0, %v76
  %v78 = vpop.f32.mrf.mxu0
  %v79 = vpop.f32.mrf.mxu0
  %v80 = vpop.f32.mrf.mxu0
  %81 = vdwg.mxu0
  %v82 = vld [vmem:[%s2] sm:$0x1]
  %v84 = vlaneseq
  %v85 = vshrl.u32 %v84, 7
  %v86 = vsub.s32 0, %v85
  %v87 = vrot.slane %v82, %v86
  %v89 = vmul.f32 %v77, %v87
  %v90 = vld [vmem:[%s3] sm:$0x1]
  %v92 = vlaneseq
  %v93 = vshrl.u32 %v92, 7
  %v94 = vsub.s32 0, %v93
  %v95 = vrot.slane %v90, %v94
  %v97 = vadd.f32 %v89, %v95
  %v98 = vld [vmem:[%s4] sm:$0xf]
  %v99 = vunpack.c.l.bf16 %v98
  %v100 = vadd.f32 %v97, %v99
  %v101 = vmax.f32 %v100, 0.0
  %v102 = vpack.c.bf16 %v101, %v101
  %vm103 = vcmask 650240
  %104 = vst.msk [vmem:[%s5] sm:$0xf] %vm103, %v102
  // Predicated region
  $region22: #{_lambda_.75} parent=0 // pred_check
    _
  $region23: #{_lambda_.75} parent=0 // pred_check_branch
    %106 = sbr.rel (0) target = $region25
  $region24: #{_lambda_.75} parent=0 // pred_region
    _
  $region25: #{_lambda_.75} parent=0 // pred_fallthru
    _
  // Predicated region
  $region26: #{_lambda_.75} parent=0 // pred_check
    _
  $region27: #{_lambda_.75} parent=0 // pred_check_branch
    %108 = sbr.rel (0) target = $region29
  $region28: #{_lambda_.75} parent=0 // pred_region
    _
  $region29: #{_lambda_.75} parent=0 // pred_fallthru
    _

// kernel: _lambda_.94
$region0: #{_lambda_.94}
  #allocation0 [shape = 'u32[]', space=smem, size = 0x4, offset = 0x4, fixed_abs, tag = 'smem constant byte address 0x4 - core index']
  #allocation1 [shape = 'u32[144,128]{1,0:T(1,128)}', space=vmem, size = 0x12000, scoped, tag = 'internal scratch']
  %s0 = inlined_call_operand.vmem [shape: bf16[8,80], index: 0, kind: input, shape index: {}]
  %s1 = inlined_call_operand.vmem [shape: bf16[80,40], index: 1, kind: input, shape index: {}]
  %s2 = inlined_call_operand.vmem [shape: f32[1,40], index: 2, kind: input, shape index: {}]
  %s3 = inlined_call_operand.vmem [shape: f32[1,40], index: 3, kind: input, shape index: {}]
  %s4 = inlined_call_operand.vmem [shape: bf16[8,40], index: 4, kind: output, shape index: {}]
  %s5 = sld [smem:[#allocation0]]
  $region26: #{_lambda_.94} parent=0
    _
  %s7 = ssub.s32 1, %s5
  %s8 = scalar_select 0, %s7, %s5
  // Predicated region
  $region2: #{_lambda_.94} parent=0 // pred_check
    _
  $region3: #{_lambda_.94} parent=0 // pred_check_branch
    %10 = sbr.rel (0) target = $region5
  $region4: #{_lambda_.94} parent=0 // pred_region
    _
  $region5: #{_lambda_.94} parent=0 // pred_fallthru
    _
  // Predicated region
  $region6: #{_lambda_.94} parent=0 // pred_check
    _
  $region7: #{_lambda_.94} parent=0 // pred_check_branch
    %12 = sbr.rel (0) target = $region9
  $region8: #{_lambda_.94} parent=0 // pred_region
    _
  $region9: #{_lambda_.94} parent=0 // pred_fallthru
    _
  // Predicated region
  $region10: #{_lambda_.94} parent=0 // pred_check
    _
  $region11: #{_lambda_.94} parent=0 // pred_check_branch
    %14 = sbr.rel (0) target = $region13
  $region12: #{_lambda_.94} parent=0 // pred_region
    _
  $region13: #{_lambda_.94} parent=0 // pred_fallthru
    _
  // Predicated region
  $region14: #{_lambda_.94} parent=0 // pred_check
    _
  $region15: #{_lambda_.94} parent=0 // pred_check_branch
    %16 = sbr.rel (0) target = $region17
  $region16: #{_lambda_.94} parent=0 // pred_region
    _
  $region17: #{_lambda_.94} parent=0 // pred_fallthru
    _
  %v18 = vld [vmem:[%s0] sm:$0xf]
  %v19 = vld [vmem:[%s1] sm:$0xf]
  %v20 = vld [vmem:[%s1 + $0x4] sm:$0xf]
  %v21 = vld [vmem:[%s1 + $0x8] sm:$0xf]
  %v22 = vld [vmem:[%s1 + $0xc] sm:$0xf]
  %v23 = vld [vmem:[%s1 + $0x10] sm:$0xf]
  %v24 = vld [vmem:[%s1 + $0x14] sm:$0xf]
  %v25 = vld [vmem:[%s1 + $0x18] sm:$0xf]
  %v26 = vld [vmem:[%s1 + $0x1c] sm:$0xf]
  %v27 = vld [vmem:[%s1 + $0x20] sm:$0xf]
  %v28 = vld [vmem:[%s1 + $0x24] sm:$0xf]
  %v39 = vunpack.c.l.b16 %v19
  %v40 = vunpack.c.l.b16 %v20
  %v41 = vunpack.c.l.b16 %v21
  %v42 = vunpack.c.l.b16 %v22
  %v43 = vunpack.c.l.b16 %v23
  %v44 = vunpack.c.l.b16 %v24
  %v45 = vunpack.c.l.b16 %v25
  %v46 = vunpack.c.l.b16 %v26
  %v47 = vunpack.c.l.b16 %v27
  %v48 = vunpack.c.l.b16 %v28
  %v49 = vpack.c.b16 %v40, %v39
  %v50 = vpack.c.b16 %v42, %v41
  %v51 = vpack.c.b16 %v44, %v43
  %v52 = vpack.c.b16 %v46, %v45
  %v53 = vpack.c.b16 %v48, %v47
  %vm59 = vcmask 654336
  %v61 = vsel %vm59, %v18, 0
  %63 = vmatprep.subr.bf16.mxu0 0
  %64 = vmatpush1.bf16.msra.mxu0 0
  %65 = vmatprep.subr.bf16.mxu0 0
  %66 = vmatpush1.bf16.msra.mxu0 0
  %67 = vmatprep.subr.bf16.mxu0 0
  %68 = vmatpush1.bf16.msra.mxu0 0
  %69 = vmatprep.subr.bf16.mxu0 0
  %70 = vmatpush1.bf16.msra.mxu0 %v53
  %71 = vmatprep.subr.bf16.mxu0 0
  %72 = vmatpush1.bf16.msra.mxu0 %v52
  %73 = vmatprep.subr.bf16.mxu0 0
  %74 = vmatpush1.bf16.msra.mxu0 %v51
  %75 = vmatprep.subr.bf16.mxu0 0
  %76 = vmatpush1.bf16.msra.mxu0 %v50
  %77 = vmatprep.subr.bf16.mxu0 0
  %78 = vmatpush1.bf16.msra.mxu0 %v49
  %79 = vmatprep.subr.bf16.mxu0 0
  %80 = vmatpush2.bf16.msra.mxu0 0
  %81 = vmatprep.subr.bf16.mxu0 0
  %82 = vmatpush2.bf16.msra.mxu0 0
  %83 = vmatprep.subr.bf16.mxu0 0
  %84 = vmatpush2.bf16.msra.mxu0 0
  %85 = vmatprep.subr.bf16.mxu0 0
  %86 = vmatpush2.bf16.msra.mxu0 0
  %87 = vmatprep.subr.bf16.mxu0 0
  %88 = vmatpush2.bf16.msra.mxu0 0
  %89 = vmatprep.subr.bf16.mxu0 0
  %90 = vmatpush2.bf16.msra.mxu0 0
  %91 = vmatprep.subr.bf16.mxu0 0
  %92 = vmatpush2.bf16.msra.mxu0 0
  %93 = vmatprep.subr.bf16.mxu0 0
  %94 = vmatpush2.bf16.msra.mxu0 0
  %95 = vmatprep.mubr.bf16.mxu0 0
  %96 = vmatmul.mubr.bf16.gmra.mxu0 %v61
  %v97 = vpop.f32.mrf.mxu0
  %v98 = vadd.f32 0.0, %v97
  %v99 = vpop.f32.mrf.mxu0
  %v100 = vpop.f32.mrf.mxu0
  %v101 = vpop.f32.mrf.mxu0
  %102 = vdwg.mxu0
  %v103 = vld [vmem:[%s2] sm:$0x1]
  %v105 = vlaneseq
  %v106 = vshrl.u32 %v105, 7
  %v107 = vsub.s32 0, %v106
  %v108 = vrot.slane %v103, %v107
  %v110 = vmul.f32 %v98, %v108
  %v111 = vld [vmem:[%s3] sm:$0x1]
  %v113 = vlaneseq
  %v114 = vshrl.u32 %v113, 7
  %v115 = vsub.s32 0, %v114
  %v116 = vrot.slane %v111, %v115
  %v118 = vadd.f32 %v110, %v116
  %v119 = vmax.f32 %v118, 0.0
  %v120 = vpack.c.bf16 %v119, %v119
  %vm121 = vcmask 322560
  %122 = vst.msk [vmem:[%s4] sm:$0xf] %vm121, %v120
  // Predicated region
  $region18: #{_lambda_.94} parent=0 // pred_check
    _
  $region19: #{_lambda_.94} parent=0 // pred_check_branch
    %124 = sbr.rel (0) target = $region21
  $region20: #{_lambda_.94} parent=0 // pred_region
    _
  $region21: #{_lambda_.94} parent=0 // pred_fallthru
    _
  // Predicated region
  $region22: #{_lambda_.94} parent=0 // pred_check
    _
  $region23: #{_lambda_.94} parent=0 // pred_check_branch
    %126 = sbr.rel (0) target = $region25
  $region24: #{_lambda_.94} parent=0 // pred_region
    _
  $region25: #{_lambda_.94} parent=0 // pred_fallthru
    _

// kernel: _lambda_.96
$region0: #{_lambda_.96}
  #allocation0 [shape = 'u32[]', space=smem, size = 0x4, offset = 0x4, fixed_abs, tag = 'smem constant byte address 0x4 - core index']
  #allocation1 [shape = 'u32[144,128]{1,0:T(1,128)}', space=vmem, size = 0x12000, scoped, tag = 'internal scratch']
  %s0 = inlined_call_operand.vmem [shape: bf16[2,40], index: 0, kind: input, shape index: {}]
  %s1 = inlined_call_operand.vmem [shape: bf16[40,80], index: 1, kind: input, shape index: {}]
  %s2 = inlined_call_operand.vmem [shape: f32[1,80], index: 2, kind: input, shape index: {}]
  %s3 = inlined_call_operand.vmem [shape: f32[1,80], index: 3, kind: input, shape index: {}]
  %s4 = inlined_call_operand.vmem [shape: bf16[2,80], index: 4, kind: output, shape index: {}]
  %s5 = sld [smem:[#allocation0]]
  $region26: #{_lambda_.96} parent=0
    _
  %s7 = ssub.s32 1, %s5
  %s8 = scalar_select 0, %s7, %s5
  // Predicated region
  $region2: #{_lambda_.96} parent=0 // pred_check
    _
  $region3: #{_lambda_.96} parent=0 // pred_check_branch
    %10 = sbr.rel (0) target = $region5
  $region4: #{_lambda_.96} parent=0 // pred_region
    _
  $region5: #{_lambda_.96} parent=0 // pred_fallthru
    _
  // Predicated region
  $region6: #{_lambda_.96} parent=0 // pred_check
    _
  $region7: #{_lambda_.96} parent=0 // pred_check_branch
    %12 = sbr.rel (0) target = $region9
  $region8: #{_lambda_.96} parent=0 // pred_region
    _
  $region9: #{_lambda_.96} parent=0 // pred_fallthru
    _
  // Predicated region
  $region10: #{_lambda_.96} parent=0 // pred_check
    _
  $region11: #{_lambda_.96} parent=0 // pred_check_branch
    %14 = sbr.rel (0) target = $region13
  $region12: #{_lambda_.96} parent=0 // pred_region
    _
  $region13: #{_lambda_.96} parent=0 // pred_fallthru
    _
  // Predicated region
  $region14: #{_lambda_.96} parent=0 // pred_check
    _
  $region15: #{_lambda_.96} parent=0 // pred_check_branch
    %16 = sbr.rel (0) target = $region17
  $region16: #{_lambda_.96} parent=0 // pred_region
    _
  $region17: #{_lambda_.96} parent=0 // pred_fallthru
    _
  %v18 = vld [vmem:[%s0] sm:$0x1]
  %v19 = vld [vmem:[%s1] sm:$0xf]
  %v20 = vld [vmem:[%s1 + $0x4] sm:$0xf]
  %v21 = vld [vmem:[%s1 + $0x8] sm:$0xf]
  %v22 = vld [vmem:[%s1 + $0xc] sm:$0xf]
  %v23 = vld [vmem:[%s1 + $0x10] sm:$0xf]
  %v29 = vunpack.c.l.b16 %v19
  %v30 = vunpack.c.l.b16 %v20
  %v31 = vunpack.c.l.b16 %v21
  %v32 = vunpack.c.l.b16 %v22
  %v33 = vunpack.c.l.b16 %v23
  %v34 = vpack.c.b16 %v30, %v29
  %v35 = vpack.c.b16 %v32, %v31
  %v36 = vpack.c.b16 %v33, %v33
  %vm39 = vcmask 326656
  %v41 = vsel %vm39, %v18, 0
  %vm43 = vcmask 1043456
  %v45 = vsel %vm43, %v36, 0
  %47 = vmatprep.subr.bf16.mxu0 0
  %48 = vmatpush1.bf16.msra.mxu0 0
  %49 = vmatprep.subr.bf16.mxu0 0
  %50 = vmatpush1.bf16.msra.mxu0 0
  %51 = vmatprep.subr.bf16.mxu0 0
  %52 = vmatpush1.bf16.msra.mxu0 0
  %53 = vmatprep.subr.bf16.mxu0 0
  %54 = vmatpush1.bf16.msra.mxu0 0
  %55 = vmatprep.subr.bf16.mxu0 0
  %56 = vmatpush1.bf16.msra.mxu0 0
  %57 = vmatprep.subr.bf16.mxu0 0
  %58 = vmatpush1.bf16.msra.mxu0 %v45
  %59 = vmatprep.subr.bf16.mxu0 0
  %60 = vmatpush1.bf16.msra.mxu0 %v35
  %61 = vmatprep.subr.bf16.mxu0 0
  %62 = vmatpush1.bf16.msra.mxu0 %v34
  %63 = vmatprep.subr.bf16.mxu0 0
  %64 = vmatpush2.bf16.msra.mxu0 0
  %65 = vmatprep.subr.bf16.mxu0 0
  %66 = vmatpush2.bf16.msra.mxu0 0
  %67 = vmatprep.subr.bf16.mxu0 0
  %68 = vmatpush2.bf16.msra.mxu0 0
  %69 = vmatprep.subr.bf16.mxu0 0
  %70 = vmatpush2.bf16.msra.mxu0 0
  %71 = vmatprep.subr.bf16.mxu0 0
  %72 = vmatpush2.bf16.msra.mxu0 0
  %73 = vmatprep.subr.bf16.mxu0 0
  %74 = vmatpush2.bf16.msra.mxu0 0
  %75 = vmatprep.subr.bf16.mxu0 0
  %76 = vmatpush2.bf16.msra.mxu0 0
  %77 = vmatprep.subr.bf16.mxu0 0
  %78 = vmatpush2.bf16.msra.mxu0 0
  %79 = vmatprep.mubr.bf16.mxu0 0
  %80 = vmatmul.mubr.bf16.gmra.mxu0 %v41
  %v81 = vpop.f32.mrf.mxu0
  %v82 = vadd.f32 0.0, %v81
  %v83 = vpop.f32.mrf.mxu0
  %v84 = vpop.f32.mrf.mxu0
  %v85 = vpop.f32.mrf.mxu0
  %86 = vdwg.mxu0
  %v87 = vld [vmem:[%s2] sm:$0x1]
  %v89 = vlaneseq
  %v90 = vshrl.u32 %v89, 7
  %v91 = vsub.s32 0, %v90
  %v92 = vrot.slane %v87, %v91
  %v94 = vmul.f32 %v82, %v92
  %v95 = vld [vmem:[%s3] sm:$0x1]
  %v97 = vlaneseq
  %v98 = vshrl.u32 %v97, 7
  %v99 = vsub.s32 0, %v98
  %v100 = vrot.slane %v95, %v99
  %v102 = vadd.f32 %v94, %v100
  %v103 = vmax.f32 %v102, 0.0
  %v104 = vpack.c.bf16 %v103, %v103
  %vm105 = vcmask 647168
  %106 = vst.msk [vmem:[%s4] sm:$0x1] %vm105, %v104
  // Predicated region
  $region18: #{_lambda_.96} parent=0 // pred_check
    _
  $region19: #{_lambda_.96} parent=0 // pred_check_branch
    %108 = sbr.rel (0) target = $region21
  $region20: #{_lambda_.96} parent=0 // pred_region
    _
  $region21: #{_lambda_.96} parent=0 // pred_fallthru
    _
  // Predicated region
  $region22: #{_lambda_.96} parent=0 // pred_check
    _
  $region23: #{_lambda_.96} parent=0 // pred_check_branch
    %110 = sbr.rel (0) target = $region25
  $region24: #{_lambda_.96} parent=0 // pred_region
    _
  $region25: #{_lambda_.96} parent=0 // pred_fallthru
    _

// kernel: _lambda_.95
$region0: #{_lambda_.95}
  #allocation0 [shape = 'u32[]', space=smem, size = 0x4, offset = 0x4, fixed_abs, tag = 'smem constant byte address 0x4 - core index']
  #allocation1 [shape = 'u32[144,128]{1,0:T(1,128)}', space=vmem, size = 0x12000, scoped, tag = 'internal scratch']
  %s0 = inlined_call_operand.vmem [shape: bf16[2,2,2,40], index: 0, kind: input, shape index: {}]
  %s1 = inlined_call_operand.vmem [shape: bf16[2,2,2,40], index: 1, kind: input, shape index: {}]
  %s2 = inlined_call_operand.vmem [shape: bf16[2,2,2,40], index: 2, kind: input, shape index: {}]
  %s3 = inlined_call_operand.vmem [shape: bf16[2,2,2,40], index: 3, kind: input, shape index: {}]
  %s4 = inlined_call_operand.vmem [shape: f32[9,1,40], index: 4, kind: input, shape index: {}]
  %s5 = inlined_call_operand.vmem [shape: f32[1,1,40], index: 5, kind: input, shape index: {}]
  %s6 = inlined_call_operand.vmem [shape: f32[1,1,40], index: 6, kind: input, shape index: {}]
  %s7 = inlined_call_operand.vmem [shape: bf16[2,1,1,40], index: 7, kind: output, shape index: {}]
  %s8 = sld [smem:[#allocation0]]
  $region61: #{_lambda_.95} parent=0
    _
  %s10 = ssub.s32 1, %s8
  %s11 = scalar_select 0, %s10, %s8
  loop: start=0, step=1, limit=4
  $region2: #{_lambda_.95} parent=0 // loop_pre_header
    _
  $region3: #{_lambda_.95} parent=0 // loop_header
    %s13 = sphi 0, %s17
    %p14 = scmp.ge.s32.totalorder %s13, 4
    %s23 = sphi 0, %s25
    %s26 = sphi 0, %s23
    %s27 = sphi 0, %s26
    %s43 = sphi 0, %s27
    %s49 = sphi 0, %s51
    %s52 = sphi 0, %s49
    %s53 = sphi 0, %s52
    %s69 = sphi 0, %s53
    %s75 = sphi 0, %s77
    %s78 = sphi 0, %s75
    %s79 = sphi 0, %s78
    %s95 = sphi 0, %s79
    %s101 = sphi 0, %s103
    %s104 = sphi 0, %s101
    %s105 = sphi 0, %s104
    %s121 = sphi 0, %s105
    %s125 = sphi 0, %s125
    %s127 = sphi 0, %s125
    %s128 = sphi 0, %s127
    %s142 = sphi 0, %s128
    %s146 = sphi 0, %s146
    %s148 = sphi 0, %s146
    %s149 = sphi 0, %s148
    %s163 = sphi 0, %s149
    %s167 = sphi 0, %s167
    %s169 = sphi 0, %s167
    %s170 = sphi 0, %s169
    %s184 = sphi 0, %s170
    %s190 = sphi 0, %s192
    %s193 = sphi 0, %s190
    %s194 = sphi 0, %s193
    %s210 = sphi 0, %s194
  $region4: #{_lambda_.95} parent=0 // loop_header_branch
    %16 = sbr.rel (%p14) target = $region8
  $region5: #{_lambda_.95} parent=0 // loop_body
    %s18 = ssub.s32 %s13, 1
    %s19 = ssub.s32 %s13, 2
    %s20 = sadd.s32 %s13, 1
    %s21 = ssub.s32 %s13, %s20
    %p22 = scmp.eq.s32.totalorder %s21, 0
    %s24 = sadd.s32 %s23, 1
    %s25 = scalar_select %p22, %s23, %s24
    %p28 = pneg %p22
    %p29 = scmp.eq.s32.totalorder %s13, 1
    %p30 = por %p28, %p29
    %p31 = scmp.ne.s32.totalorder %s23, %s26
    %p32 = scmp.eq.s32.totalorder %s13, 0
    %p33 = por %p31, %p32
    %p34 = scmp.ne.s32.totalorder %s23, %s26
    %p35 = scmp.eq.s32.totalorder %s18, 1
    %p36 = por %p34, %p35
    %p37 = scmp.ne.s32.totalorder %s26, %s27
    %p38 = scmp.eq.s32.totalorder %s18, 0
    %p39 = por %p37, %p38
    %p40 = scmp.ne.s32.totalorder %s26, %s27
    %p41 = scmp.eq.s32.totalorder %s19, 1
    %p42 = por %p40, %p41
    %p44 = scmp.ne.s32.totalorder %s27, %s43
    %p45 = scmp.eq.s32.totalorder %s19, 0
    %p46 = por %p44, %p45
    %s47 = ssub.s32 %s13, %s20
    %p48 = scmp.eq.s32.totalorder %s47, 0
    %s50 = sadd.s32 %s49, 1
    %s51 = scalar_select %p48, %s49, %s50
    %p54 = pneg %p48
    %p55 = scmp.eq.s32.totalorder %s13, 1
    %p56 = por %p54, %p55
    %p57 = scmp.ne.s32.totalorder %s49, %s52
    %p58 = scmp.eq.s32.totalorder %s13, 0
    %p59 = por %p57, %p58
    %p60 = scmp.ne.s32.totalorder %s49, %s52
    %p61 = scmp.eq.s32.totalorder %s18, 1
    %p62 = por %p60, %p61
    %p63 = scmp.ne.s32.totalorder %s52, %s53
    %p64 = scmp.eq.s32.totalorder %s18, 0
    %p65 = por %p63, %p64
    %p66 = scmp.ne.s32.totalorder %s52, %s53
    %p67 = scmp.eq.s32.totalorder %s19, 1
    %p68 = por %p66, %p67
    %p70 = scmp.ne.s32.totalorder %s53, %s69
    %p71 = scmp.eq.s32.totalorder %s19, 0
    %p72 = por %p70, %p71
    %s73 = ssub.s32 %s13, %s20
    %p74 = scmp.eq.s32.totalorder %s73, 0
    %s76 = sadd.s32 %s75, 1
    %s77 = scalar_select %p74, %s75, %s76
    %p80 = pneg %p74
    %p81 = scmp.eq.s32.totalorder %s13, 1
    %p82 = por %p80, %p81
    %p83 = scmp.ne.s32.totalorder %s75, %s78
    %p84 = scmp.eq.s32.totalorder %s13, 0
    %p85 = por %p83, %p84
    %p86 = scmp.ne.s32.totalorder %s75, %s78
    %p87 = scmp.eq.s32.totalorder %s18, 1
    %p88 = por %p86, %p87
    %p89 = scmp.ne.s32.totalorder %s78, %s79
    %p90 = scmp.eq.s32.totalorder %s18, 0
    %p91 = por %p89, %p90
    %p92 = scmp.ne.s32.totalorder %s78, %s79
    %p93 = scmp.eq.s32.totalorder %s19, 1
    %p94 = por %p92, %p93
    %p96 = scmp.ne.s32.totalorder %s79, %s95
    %p97 = scmp.eq.s32.totalorder %s19, 0
    %p98 = por %p96, %p97
    %s99 = ssub.s32 %s13, %s20
    %p100 = scmp.eq.s32.totalorder %s99, 0
    %s102 = sadd.s32 %s101, 1
    %s103 = scalar_select %p100, %s101, %s102
    %p106 = pneg %p100
    %p107 = scmp.eq.s32.totalorder %s13, 1
    %p108 = por %p106, %p107
    %p109 = scmp.ne.s32.totalorder %s101, %s104
    %p110 = scmp.eq.s32.totalorder %s13, 0
    %p111 = por %p109, %p110
    %p112 = scmp.ne.s32.totalorder %s101, %s104
    %p113 = scmp.eq.s32.totalorder %s18, 1
    %p114 = por %p112, %p113
    %p115 = scmp.ne.s32.totalorder %s104, %s105
    %p116 = scmp.eq.s32.totalorder %s18, 0
    %p117 = por %p115, %p116
    %p118 = scmp.ne.s32.totalorder %s104, %s105
    %p119 = scmp.eq.s32.totalorder %s19, 1
    %p120 = por %p118, %p119
    %p122 = scmp.ne.s32.totalorder %s105, %s121
    %p123 = scmp.eq.s32.totalorder %s19, 0
    %p124 = por %p122, %p123
    %s126 = sadd.s32 %s125, 1
    %p129 = scmp.eq.s32.totalorder %s13, 1
    %p130 = scmp.ne.s32.totalorder %s125, %s127
    %p131 = scmp.eq.s32.totalorder %s13, 0
    %p132 = por %p130, %p131
    %p133 = scmp.ne.s32.totalorder %s125, %s127
    %p134 = scmp.eq.s32.totalorder %s18, 1
    %p135 = por %p133, %p134
    %p136 = scmp.ne.s32.totalorder %s127, %s128
    %p137 = scmp.eq.s32.totalorder %s18, 0
    %p138 = por %p136, %p137
    %p139 = scmp.ne.s32.totalorder %s127, %s128
    %p140 = scmp.eq.s32.totalorder %s19, 1
    %p141 = por %p139, %p140
    %p143 = scmp.ne.s32.totalorder %s128, %s142
    %p144 = scmp.eq.s32.totalorder %s19, 0
    %p145 = por %p143, %p144
    %s147 = sadd.s32 %s146, 1
    %p150 = scmp.eq.s32.totalorder %s13, 1
    %p151 = scmp.ne.s32.totalorder %s146, %s148
    %p152 = scmp.eq.s32.totalorder %s13, 0
    %p153 = por %p151, %p152
    %p154 = scmp.ne.s32.totalorder %s146, %s148
    %p155 = scmp.eq.s32.totalorder %s18, 1
    %p156 = por %p154, %p155
    %p157 = scmp.ne.s32.totalorder %s148, %s149
    %p158 = scmp.eq.s32.totalorder %s18, 0
    %p159 = por %p157, %p158
    %p160 = scmp.ne.s32.totalorder %s148, %s149
    %p161 = scmp.eq.s32.totalorder %s19, 1
    %p162 = por %p160, %p161
    %p164 = scmp.ne.s32.totalorder %s149, %s163
    %p165 = scmp.eq.s32.totalorder %s19, 0
    %p166 = por %p164, %p165
    %s168 = sadd.s32 %s167, 1
    %p171 = scmp.eq.s32.totalorder %s13, 1
    %p172 = scmp.ne.s32.totalorder %s167, %s169
    %p173 = scmp.eq.s32.totalorder %s13, 0
    %p174 = por %p172, %p173
    %p175 = scmp.ne.s32.totalorder %s167, %s169
    %p176 = scmp.eq.s32.totalorder %s18, 1
    %p177 = por %p175, %p176
    %p178 = scmp.ne.s32.totalorder %s169, %s170
    %p179 = scmp.eq.s32.totalorder %s18, 0
    %p180 = por %p178, %p179
    %p181 = scmp.ne.s32.totalorder %s169, %s170
    %p182 = scmp.eq.s32.totalorder %s19, 1
    %p183 = por %p181, %p182
    %p185 = scmp.ne.s32.totalorder %s170, %s184
    %p186 = scmp.eq.s32.totalorder %s19, 0
    %p187 = por %p185, %p186
    %s188 = ssub.s32 %s13, %s20
    %p189 = scmp.eq.s32.totalorder %s188, 0
    %s191 = sadd.s32 %s190, 1
    %s192 = scalar_select %p189, %s190, %s191
    %p195 = pneg %p189
    %p196 = scmp.eq.s32.totalorder %s13, 1
    %p197 = por %p195, %p196
    %p198 = scmp.ne.s32.totalorder %s190, %s193
    %p199 = scmp.eq.s32.totalorder %s13, 0
    %p200 = por %p198, %p199
    %p201 = scmp.ne.s32.totalorder %s190, %s193
    %p202 = scmp.eq.s32.totalorder %s18, 1
    %p203 = por %p201, %p202
    %p204 = scmp.ne.s32.totalorder %s193, %s194
    %p205 = scmp.eq.s32.totalorder %s18, 0
    %p206 = por %p204, %p205
    %p207 = scmp.ne.s32.totalorder %s193, %s194
    %p208 = scmp.eq.s32.totalorder %s19, 1
    %p209 = por %p207, %p208
    %p211 = scmp.ne.s32.totalorder %s194, %s210
    %p212 = scmp.eq.s32.totalorder %s19, 0
    %p213 = por %p211, %p212
    %p214 = scmp.le.s32.totalorder 1, %s13
    %p215 = scmp.lt.s32.totalorder %s13, 3
    %p216 = pnand %p214, %p215
    %p217 = pneg %p216
    // Predicated region
    $region9: #{_lambda_.95} parent=5 // pred_check
      _
    $region10: #{_lambda_.95} parent=5 // pred_check_branch
      %219 = sbr.rel (%p216) target = $region12
    $region11: #{_lambda_.95} parent=5 // pred_region
      %s220 = ssub.s32 %s13, 1
      // Predicated region
      $region13: #{_lambda_.95} parent=11 // pred_check
        %p221 = pneg %p138
      $region14: #{_lambda_.95} parent=11 // pred_check_branch
        %223 = sbr.rel (%p221) target = $region16
      $region15: #{_lambda_.95} parent=11 // pred_region
        _
      $region16: #{_lambda_.95} parent=11 // pred_fallthru
        _
      // Predicated region
      $region17: #{_lambda_.95} parent=11 // pred_check
        %p224 = pneg %p159
      $region18: #{_lambda_.95} parent=11 // pred_check_branch
        %226 = sbr.rel (%p224) target = $region20
      $region19: #{_lambda_.95} parent=11 // pred_region
        _
      $region20: #{_lambda_.95} parent=11 // pred_fallthru
        _
      // Predicated region
      $region21: #{_lambda_.95} parent=11 // pred_check
        %p227 = pneg %p180
      $region22: #{_lambda_.95} parent=11 // pred_check_branch
        %229 = sbr.rel (%p227) target = $region24
      $region23: #{_lambda_.95} parent=11 // pred_region
        _
      $region24: #{_lambda_.95} parent=11 // pred_fallthru
        _
    $region12: #{_lambda_.95} parent=5 // pred_fallthru
      _
    %p230 = scmp.lt.s32.totalorder %s13, 2
    // Predicated region
    $region25: #{_lambda_.95} parent=5 // pred_check
      %p231 = pneg %p230
    $region26: #{_lambda_.95} parent=5 // pred_check_branch
      %233 = sbr.rel (%p231) target = $region28
    $region27: #{_lambda_.95} parent=5 // pred_region
      // Predicated region
      $region29: #{_lambda_.95} parent=27 // pred_check
        %p234 = pneg %p33
      $region30: #{_lambda_.95} parent=27 // pred_check_branch
        %236 = sbr.rel (%p234) target = $region32
      $region31: #{_lambda_.95} parent=27 // pred_region
        %p237 = scmp.lt.s32.totalorder %s13, 1
        %s238 = scalar_select %p237, %s13, 1
        %s239 = smul.addr %s238, 2
        %s240 = scalar_lea.vmem %s0, %s239
      $region32: #{_lambda_.95} parent=27 // pred_fallthru
        _
      // Predicated region
      $region33: #{_lambda_.95} parent=27 // pred_check
        %p241 = pneg %p59
      $region34: #{_lambda_.95} parent=27 // pred_check_branch
        %243 = sbr.rel (%p241) target = $region36
      $region35: #{_lambda_.95} parent=27 // pred_region
        %p244 = scmp.lt.s32.totalorder %s13, 1
        %s245 = scalar_select %p244, %s13, 1
        %s246 = smul.addr %s245, 2
        %s247 = scalar_lea.vmem %s1, %s246
      $region36: #{_lambda_.95} parent=27 // pred_fallthru
        _
      // Predicated region
      $region37: #{_lambda_.95} parent=27 // pred_check
        %p248 = pneg %p85
      $region38: #{_lambda_.95} parent=27 // pred_check_branch
        %250 = sbr.rel (%p248) target = $region40
      $region39: #{_lambda_.95} parent=27 // pred_region
        %p251 = scmp.lt.s32.totalorder %s13, 1
        %s252 = scalar_select %p251, %s13, 1
        %s253 = smul.addr %s252, 2
        %s254 = scalar_lea.vmem %s2, %s253
      $region40: #{_lambda_.95} parent=27 // pred_fallthru
        _
      // Predicated region
      $region41: #{_lambda_.95} parent=27 // pred_check
        %p255 = pneg %p111
      $region42: #{_lambda_.95} parent=27 // pred_check_branch
        %257 = sbr.rel (%p255) target = $region44
      $region43: #{_lambda_.95} parent=27 // pred_region
        %p258 = scmp.lt.s32.totalorder %s13, 1
        %s259 = scalar_select %p258, %s13, 1
        %s260 = smul.addr %s259, 2
        %s261 = scalar_lea.vmem %s3, %s260
      $region44: #{_lambda_.95} parent=27 // pred_fallthru
        _
    $region28: #{_lambda_.95} parent=5 // pred_fallthru
      _
    %p262 = scmp.le.s32.totalorder 1, %s13
    %p263 = scmp.lt.s32.totalorder %s13, 3
    %p264 = pnand %p262, %p263
    %p265 = pneg %p264
    // Predicated region
    $region45: #{_lambda_.95} parent=5 // pred_check
      _
    $region46: #{_lambda_.95} parent=5 // pred_check_branch
      %267 = sbr.rel (%p264) target = $region48
    $region47: #{_lambda_.95} parent=5 // pred_region
      %s268 = ssub.s32 %s13, 1
      %p269 = scmp.lt.s32.totalorder %s18, 1
      %s270 = scalar_select %p269, %s18, 1
      %s271 = smul.addr %s270, 2
      %s272 = scalar_lea.vmem %s0, %s271
      %p273 = pneg %p39
      %p274 = pneg %p36
      %p275 = scmp.lt.s32.totalorder %s18, 1
      %s276 = scalar_select %p275, %s18, 1
      %s277 = smul.addr %s276, 2
      %s278 = scalar_lea.vmem %s1, %s277
      %p279 = pneg %p65
      %p280 = pneg %p62
      %p281 = scmp.lt.s32.totalorder %s18, 1
      %s282 = scalar_select %p281, %s18, 1
      %s283 = smul.addr %s282, 2
      %s284 = scalar_lea.vmem %s2, %s283
      %p285 = pneg %p91
      %p286 = pneg %p88
      %p287 = scmp.lt.s32.totalorder %s18, 1
      %s288 = scalar_select %p287, %s18, 1
      %s289 = smul.addr %s288, 2
      %s290 = scalar_lea.vmem %s3, %s289
      %p291 = pneg %p117
      %p292 = pneg %p114
      %p293 = pneg %p138
      %p294 = pneg %p135
      %p295 = pneg %p159
      %p296 = pneg %p156
      %p297 = pneg %p180
      %p298 = pneg %p177
      %p299 = pneg %p206
      %p300 = pneg %p203
      %p301 = scmp.lt.s32.totalorder %s18, 1
      %s302 = scalar_select %p301, %s18, 1
      %s303 = scalar_lea.vmem %s7, %s302
      %p304 = scmp.lt.s32.totalorder %s18, 1
      %s305 = scalar_select %p304, %s18, 1
      %s306 = smul.addr %s305, 2
      %s307 = scalar_lea.vmem %s0, %s306
      %p308 = scmp.lt.s32.totalorder %s18, 1
      %s309 = scalar_select %p308, %s18, 1
      %s310 = smul.addr %s309, 2
      %s311 = scalar_lea.vmem %s1, %s310
      %p312 = scmp.lt.s32.totalorder %s18, 1
      %s313 = scalar_select %p312, %s18, 1
      %s314 = smul.addr %s313, 2
      %s315 = scalar_lea.vmem %s2, %s314
      %p316 = scmp.lt.s32.totalorder %s18, 1
      %s317 = scalar_select %p316, %s18, 1
      %s318 = smul.addr %s317, 2
      %s319 = scalar_lea.vmem %s3, %s318
      %p320 = scmp.lt.s32.totalorder %s18, 1
      %s321 = scalar_select %p320, %s18, 1
      %s322 = scalar_lea.vmem %s7, %s321
      %v323 = vld [vmem:[%s307] sm:$0x1]
      %v324 = vunpack.c.l.bf16 %v323
      %v325 = vld [vmem:[%s311] sm:$0x1]
      %v326 = vunpack.c.l.bf16 %v325
      %v327 = vld [vmem:[%s315] sm:$0x1]
      %v328 = vunpack.c.l.bf16 %v327
      %v329 = vld [vmem:[%s319] sm:$0x1]
      %v330 = vunpack.c.l.bf16 %v329
      %s331 = scalar_lea.vmem %s307, 1
      %v332 = vld [vmem:[%s331] sm:$0x1]
      %v333 = vunpack.c.l.bf16 %v332
      %s334 = scalar_lea.vmem %s311, 1
      %v335 = vld [vmem:[%s334] sm:$0x1]
      %v336 = vunpack.c.l.bf16 %v335
      %v337 = vld [vmem:[%s4] sm:$0x1]
      %v338 = vmul.f32 %v324, %v337
      %s339 = scalar_lea.vmem %s4, 1
      %v340 = vld [vmem:[%s339] sm:$0x1]
      %v341 = vmul.f32 %v326, %v340
      %v342 = vadd.f32 %v338, %v341
      %s343 = scalar_lea.vmem %s4, 2
      %v344 = vld [vmem:[%s343] sm:$0x1]
      %v347 = vunpack.c.l.s4 857870592
      %v348 = vunpack.c.0.s8 %v347
      %v349 = vlaneseq
      %v350 = vshrl.u32 %v349, 7
      %v351 = vsub.s32 %v348, %v350
      %v352 = vrot.slane %v344, %v351
      %v354 = vmul.f32 %v324, %v352
      %v356 = vrot.slane %v354, 7
      %v357 = vrot.slane %v356, 2
      %v359 = vadd.f32 %v342, %v357
      %s360 = scalar_lea.vmem %s4, 3
      %v361 = vld [vmem:[%s360] sm:$0x1]
      %v362 = vmul.f32 %v328, %v361
      %v363 = vadd.f32 %v359, %v362
      %s364 = scalar_lea.vmem %s4, 4
      %v365 = vld [vmem:[%s364] sm:$0x1]
      %v366 = vmul.f32 %v330, %v365
      %v367 = vadd.f32 %v363, %v366
      %s368 = scalar_lea.vmem %s4, 5
      %v369 = vld [vmem:[%s368] sm:$0x1]
      %v372 = vunpack.c.l.s4 857870592
      %v373 = vunpack.c.0.s8 %v372
      %v374 = vlaneseq
      %v375 = vshrl.u32 %v374, 7
      %v376 = vsub.s32 %v373, %v375
      %v377 = vrot.slane %v369, %v376
      %v379 = vmul.f32 %v328, %v377
      %v381 = vrot.slane %v379, 7
      %v382 = vrot.slane %v381, 2
      %v384 = vadd.f32 %v367, %v382
      %s385 = scalar_lea.vmem %s4, 6
      %v386 = vld [vmem:[%s385] sm:$0x1]
      %v387 = vmul.f32 %v333, %v386
      %v388 = vadd.f32 %v384, %v387
      %s389 = scalar_lea.vmem %s4, 7
      %v390 = vld [vmem:[%s389] sm:$0x1]
      %v391 = vmul.f32 %v336, %v390
      %v392 = vadd.f32 %v388, %v391
      %s393 = scalar_lea.vmem %s4, 8
      %v394 = vld [vmem:[%s393] sm:$0x1]
      %v397 = vunpack.c.l.s4 857870592
      %v398 = vunpack.c.0.s8 %v397
      %v399 = vlaneseq
      %v400 = vshrl.u32 %v399, 7
      %v401 = vsub.s32 %v398, %v400
      %v402 = vrot.slane %v394, %v401
      %v404 = vmul.f32 %v333, %v402
      %v406 = vrot.slane %v404, 7
      %v407 = vrot.slane %v406, 2
      %v409 = vadd.f32 %v392, %v407
      %v410 = vld [vmem:[%s5] sm:$0x1]
      %v411 = vmul.f32 %v409, %v410
      %v412 = vld [vmem:[%s6] sm:$0x1]
      %v413 = vadd.f32 %v411, %v412
      %v414 = vpack.c.bf16 %v413, %v413
      %vm415 = vcmask 319488
      %vm416 = vsmask.f32 256
      %vm417 = vmand %vm415, %vm416
      %v418 = vld [vmem:[%s322] sm:$0x1]
      %v419 = vsel %vm417, %v414, %v418
      %420 = vst [vmem:[%s322] sm:$0x1] %v419
      %p421 = scmp.lt.s32.totalorder %s18, 1
      %s422 = scalar_select %p421, %s18, 1
      %s423 = scalar_lea.vmem %s7, %s422
      // Predicated region
      $region49: #{_lambda_.95} parent=47 // pred_check
        %p424 = pneg %p203
      $region50: #{_lambda_.95} parent=47 // pred_check_branch
        %426 = sbr.rel (%p424) target = $region52
      $region51: #{_lambda_.95} parent=47 // pred_region
        _
      $region52: #{_lambda_.95} parent=47 // pred_fallthru
        _
    $region48: #{_lambda_.95} parent=5 // pred_fallthru
      _
    %p427 = scmp.le.s32.totalorder 2, %s13
    // Predicated region
    $region53: #{_lambda_.95} parent=5 // pred_check
      %p428 = pneg %p427
    $region54: #{_lambda_.95} parent=5 // pred_check_branch
      %430 = sbr.rel (%p428) target = $region56
    $region55: #{_lambda_.95} parent=5 // pred_region
      %s431 = ssub.s32 %s13, 2
      // Predicated region
      $region57: #{_lambda_.95} parent=55 // pred_check
        %p432 = pneg %p209
      $region58: #{_lambda_.95} parent=55 // pred_check_branch
        %434 = sbr.rel (%p432) target = $region60
      $region59: #{_lambda_.95} parent=55 // pred_region
        %p435 = scmp.lt.s32.totalorder %s19, 1
        %s436 = scalar_select %p435, %s19, 1
        %s437 = scalar_lea.vmem %s7, %s436
      $region60: #{_lambda_.95} parent=55 // pred_fallthru
        _
    $region56: #{_lambda_.95} parent=5 // pred_fallthru
      _
  $region6: #{_lambda_.95} parent=0 // loop_footer
    %s17 = sadd.s32 1, %s13
  $region7: #{_lambda_.95} parent=0 // loop_footer_branch
    %12 = sbr.rel target = $region3
  $region8: #{_lambda_.95} parent=0 // loop_exit
    _

// kernel: _lambda_.97
$region0: #{_lambda_.97}
  #allocation0 [shape = 'u32[]', space=smem, size = 0x4, offset = 0x4, fixed_abs, tag = 'smem constant byte address 0x4 - core index']
  #allocation1 [shape = 'u32[144,128]{1,0:T(1,128)}', space=vmem, size = 0x12000, scoped, tag = 'internal scratch']
  %s0 = inlined_call_operand.vmem [shape: bf16[2,2,2,80], index: 0, kind: input, shape index: {}]
  %s1 = inlined_call_operand.vmem [shape: bf16[2,2,2,80], index: 1, kind: input, shape index: {}]
  %s2 = inlined_call_operand.vmem [shape: bf16[2,2,2,80], index: 2, kind: input, shape index: {}]
  %s3 = inlined_call_operand.vmem [shape: bf16[2,2,2,80], index: 3, kind: input, shape index: {}]
  %s4 = inlined_call_operand.vmem [shape: bf16[2,1,1,80], index: 4, kind: output, shape index: {}]
  %s5 = sld [smem:[#allocation0]]
  $region49: #{_lambda_.97} parent=0
    _
  %s7 = ssub.s32 1, %s5
  %s8 = scalar_select 0, %s7, %s5
  loop: start=0, step=1, limit=4
  $region2: #{_lambda_.97} parent=0 // loop_pre_header
    _
  $region3: #{_lambda_.97} parent=0 // loop_header
    %s10 = sphi 0, %s14
    %p11 = scmp.ge.s32.totalorder %s10, 4
    %s20 = sphi 0, %s22
    %s23 = sphi 0, %s20
    %s24 = sphi 0, %s23
    %s40 = sphi 0, %s24
    %s46 = sphi 0, %s48
    %s49 = sphi 0, %s46
    %s50 = sphi 0, %s49
    %s66 = sphi 0, %s50
    %s72 = sphi 0, %s74
    %s75 = sphi 0, %s72
    %s76 = sphi 0, %s75
    %s92 = sphi 0, %s76
    %s98 = sphi 0, %s100
    %s101 = sphi 0, %s98
    %s102 = sphi 0, %s101
    %s118 = sphi 0, %s102
    %s124 = sphi 0, %s126
    %s127 = sphi 0, %s124
    %s128 = sphi 0, %s127
    %s144 = sphi 0, %s128
  $region4: #{_lambda_.97} parent=0 // loop_header_branch
    %13 = sbr.rel (%p11) target = $region8
  $region5: #{_lambda_.97} parent=0 // loop_body
    %s15 = ssub.s32 %s10, 1
    %s16 = ssub.s32 %s10, 2
    %s17 = sadd.s32 %s10, 1
    %s18 = ssub.s32 %s10, %s17
    %p19 = scmp.eq.s32.totalorder %s18, 0
    %s21 = sadd.s32 %s20, 1
    %s22 = scalar_select %p19, %s20, %s21
    %p25 = pneg %p19
    %p26 = scmp.eq.s32.totalorder %s10, 1
    %p27 = por %p25, %p26
    %p28 = scmp.ne.s32.totalorder %s20, %s23
    %p29 = scmp.eq.s32.totalorder %s10, 0
    %p30 = por %p28, %p29
    %p31 = scmp.ne.s32.totalorder %s20, %s23
    %p32 = scmp.eq.s32.totalorder %s15, 1
    %p33 = por %p31, %p32
    %p34 = scmp.ne.s32.totalorder %s23, %s24
    %p35 = scmp.eq.s32.totalorder %s15, 0
    %p36 = por %p34, %p35
    %p37 = scmp.ne.s32.totalorder %s23, %s24
    %p38 = scmp.eq.s32.totalorder %s16, 1
    %p39 = por %p37, %p38
    %p41 = scmp.ne.s32.totalorder %s24, %s40
    %p42 = scmp.eq.s32.totalorder %s16, 0
    %p43 = por %p41, %p42
    %s44 = ssub.s32 %s10, %s17
    %p45 = scmp.eq.s32.totalorder %s44, 0
    %s47 = sadd.s32 %s46, 1
    %s48 = scalar_select %p45, %s46, %s47
    %p51 = pneg %p45
    %p52 = scmp.eq.s32.totalorder %s10, 1
    %p53 = por %p51, %p52
    %p54 = scmp.ne.s32.totalorder %s46, %s49
    %p55 = scmp.eq.s32.totalorder %s10, 0
    %p56 = por %p54, %p55
    %p57 = scmp.ne.s32.totalorder %s46, %s49
    %p58 = scmp.eq.s32.totalorder %s15, 1
    %p59 = por %p57, %p58
    %p60 = scmp.ne.s32.totalorder %s49, %s50
    %p61 = scmp.eq.s32.totalorder %s15, 0
    %p62 = por %p60, %p61
    %p63 = scmp.ne.s32.totalorder %s49, %s50
    %p64 = scmp.eq.s32.totalorder %s16, 1
    %p65 = por %p63, %p64
    %p67 = scmp.ne.s32.totalorder %s50, %s66
    %p68 = scmp.eq.s32.totalorder %s16, 0
    %p69 = por %p67, %p68
    %s70 = ssub.s32 %s10, %s17
    %p71 = scmp.eq.s32.totalorder %s70, 0
    %s73 = sadd.s32 %s72, 1
    %s74 = scalar_select %p71, %s72, %s73
    %p77 = pneg %p71
    %p78 = scmp.eq.s32.totalorder %s10, 1
    %p79 = por %p77, %p78
    %p80 = scmp.ne.s32.totalorder %s72, %s75
    %p81 = scmp.eq.s32.totalorder %s10, 0
    %p82 = por %p80, %p81
    %p83 = scmp.ne.s32.totalorder %s72, %s75
    %p84 = scmp.eq.s32.totalorder %s15, 1
    %p85 = por %p83, %p84
    %p86 = scmp.ne.s32.totalorder %s75, %s76
    %p87 = scmp.eq.s32.totalorder %s15, 0
    %p88 = por %p86, %p87
    %p89 = scmp.ne.s32.totalorder %s75, %s76
    %p90 = scmp.eq.s32.totalorder %s16, 1
    %p91 = por %p89, %p90
    %p93 = scmp.ne.s32.totalorder %s76, %s92
    %p94 = scmp.eq.s32.totalorder %s16, 0
    %p95 = por %p93, %p94
    %s96 = ssub.s32 %s10, %s17
    %p97 = scmp.eq.s32.totalorder %s96, 0
    %s99 = sadd.s32 %s98, 1
    %s100 = scalar_select %p97, %s98, %s99
    %p103 = pneg %p97
    %p104 = scmp.eq.s32.totalorder %s10, 1
    %p105 = por %p103, %p104
    %p106 = scmp.ne.s32.totalorder %s98, %s101
    %p107 = scmp.eq.s32.totalorder %s10, 0
    %p108 = por %p106, %p107
    %p109 = scmp.ne.s32.totalorder %s98, %s101
    %p110 = scmp.eq.s32.totalorder %s15, 1
    %p111 = por %p109, %p110
    %p112 = scmp.ne.s32.totalorder %s101, %s102
    %p113 = scmp.eq.s32.totalorder %s15, 0
    %p114 = por %p112, %p113
    %p115 = scmp.ne.s32.totalorder %s101, %s102
    %p116 = scmp.eq.s32.totalorder %s16, 1
    %p117 = por %p115, %p116
    %p119 = scmp.ne.s32.totalorder %s102, %s118
    %p120 = scmp.eq.s32.totalorder %s16, 0
    %p121 = por %p119, %p120
    %s122 = ssub.s32 %s10, %s17
    %p123 = scmp.eq.s32.totalorder %s122, 0
    %s125 = sadd.s32 %s124, 1
    %s126 = scalar_select %p123, %s124, %s125
    %p129 = pneg %p123
    %p130 = scmp.eq.s32.totalorder %s10, 1
    %p131 = por %p129, %p130
    %p132 = scmp.ne.s32.totalorder %s124, %s127
    %p133 = scmp.eq.s32.totalorder %s10, 0
    %p134 = por %p132, %p133
    %p135 = scmp.ne.s32.totalorder %s124, %s127
    %p136 = scmp.eq.s32.totalorder %s15, 1
    %p137 = por %p135, %p136
    %p138 = scmp.ne.s32.totalorder %s127, %s128
    %p139 = scmp.eq.s32.totalorder %s15, 0
    %p140 = por %p138, %p139
    %p141 = scmp.ne.s32.totalorder %s127, %s128
    %p142 = scmp.eq.s32.totalorder %s16, 1
    %p143 = por %p141, %p142
    %p145 = scmp.ne.s32.totalorder %s128, %s144
    %p146 = scmp.eq.s32.totalorder %s16, 0
    %p147 = por %p145, %p146
    %p148 = scmp.le.s32.totalorder 1, %s10
    %p149 = scmp.lt.s32.totalorder %s10, 3
    %p150 = pnand %p148, %p149
    %p151 = pneg %p150
    // Predicated region
    $region9: #{_lambda_.97} parent=5 // pred_check
      _
    $region10: #{_lambda_.97} parent=5 // pred_check_branch
      %153 = sbr.rel (%p150) target = $region12
    $region11: #{_lambda_.97} parent=5 // pred_region
      %s154 = ssub.s32 %s10, 1
    $region12: #{_lambda_.97} parent=5 // pred_fallthru
      _
    %p155 = scmp.lt.s32.totalorder %s10, 2
    // Predicated region
    $region13: #{_lambda_.97} parent=5 // pred_check
      %p156 = pneg %p155
    $region14: #{_lambda_.97} parent=5 // pred_check_branch
      %158 = sbr.rel (%p156) target = $region16
    $region15: #{_lambda_.97} parent=5 // pred_region
      // Predicated region
      $region17: #{_lambda_.97} parent=15 // pred_check
        %p159 = pneg %p30
      $region18: #{_lambda_.97} parent=15 // pred_check_branch
        %161 = sbr.rel (%p159) target = $region20
      $region19: #{_lambda_.97} parent=15 // pred_region
        %p162 = scmp.lt.s32.totalorder %s10, 1
        %s163 = scalar_select %p162, %s10, 1
        %s164 = smul.addr %s163, 2
        %s165 = scalar_lea.vmem %s0, %s164
      $region20: #{_lambda_.97} parent=15 // pred_fallthru
        _
      // Predicated region
      $region21: #{_lambda_.97} parent=15 // pred_check
        %p166 = pneg %p56
      $region22: #{_lambda_.97} parent=15 // pred_check_branch
        %168 = sbr.rel (%p166) target = $region24
      $region23: #{_lambda_.97} parent=15 // pred_region
        %p169 = scmp.lt.s32.totalorder %s10, 1
        %s170 = scalar_select %p169, %s10, 1
        %s171 = smul.addr %s170, 2
        %s172 = scalar_lea.vmem %s1, %s171
      $region24: #{_lambda_.97} parent=15 // pred_fallthru
        _
      // Predicated region
      $region25: #{_lambda_.97} parent=15 // pred_check
        %p173 = pneg %p82
      $region26: #{_lambda_.97} parent=15 // pred_check_branch
        %175 = sbr.rel (%p173) target = $region28
      $region27: #{_lambda_.97} parent=15 // pred_region
        %p176 = scmp.lt.s32.totalorder %s10, 1
        %s177 = scalar_select %p176, %s10, 1
        %s178 = smul.addr %s177, 2
        %s179 = scalar_lea.vmem %s2, %s178
      $region28: #{_lambda_.97} parent=15 // pred_fallthru
        _
      // Predicated region
      $region29: #{_lambda_.97} parent=15 // pred_check
        %p180 = pneg %p108
      $region30: #{_lambda_.97} parent=15 // pred_check_branch
        %182 = sbr.rel (%p180) target = $region32
      $region31: #{_lambda_.97} parent=15 // pred_region
        %p183 = scmp.lt.s32.totalorder %s10, 1
        %s184 = scalar_select %p183, %s10, 1
        %s185 = smul.addr %s184, 2
        %s186 = scalar_lea.vmem %s3, %s185
      $region32: #{_lambda_.97} parent=15 // pred_fallthru
        _
    $region16: #{_lambda_.97} parent=5 // pred_fallthru
      _
    %p187 = scmp.le.s32.totalorder 1, %s10
    %p188 = scmp.lt.s32.totalorder %s10, 3
    %p189 = pnand %p187, %p188
    %p190 = pneg %p189
    // Predicated region
    $region33: #{_lambda_.97} parent=5 // pred_check
      _
    $region34: #{_lambda_.97} parent=5 // pred_check_branch
      %192 = sbr.rel (%p189) target = $region36
    $region35: #{_lambda_.97} parent=5 // pred_region
      %s193 = ssub.s32 %s10, 1
      %p194 = scmp.lt.s32.totalorder %s15, 1
      %s195 = scalar_select %p194, %s15, 1
      %s196 = smul.addr %s195, 2
      %s197 = scalar_lea.vmem %s0, %s196
      %p198 = pneg %p36
      %p199 = pneg %p33
      %p200 = scmp.lt.s32.totalorder %s15, 1
      %s201 = scalar_select %p200, %s15, 1
      %s202 = smul.addr %s201, 2
      %s203 = scalar_lea.vmem %s1, %s202
      %p204 = pneg %p62
      %p205 = pneg %p59
      %p206 = scmp.lt.s32.totalorder %s15, 1
      %s207 = scalar_select %p206, %s15, 1
      %s208 = smul.addr %s207, 2
      %s209 = scalar_lea.vmem %s2, %s208
      %p210 = pneg %p88
      %p211 = pneg %p85
      %p212 = scmp.lt.s32.totalorder %s15, 1
      %s213 = scalar_select %p212, %s15, 1
      %s214 = smul.addr %s213, 2
      %s215 = scalar_lea.vmem %s3, %s214
      %p216 = pneg %p114
      %p217 = pneg %p111
      %p218 = pneg %p140
      %p219 = pneg %p137
      %p220 = scmp.lt.s32.totalorder %s15, 1
      %s221 = scalar_select %p220, %s15, 1
      %s222 = scalar_lea.vmem %s4, %s221
      %p223 = scmp.lt.s32.totalorder %s15, 1
      %s224 = scalar_select %p223, %s15, 1
      %s225 = smul.addr %s224, 2
      %s226 = scalar_lea.vmem %s0, %s225
      %p227 = scmp.lt.s32.totalorder %s15, 1
      %s228 = scalar_select %p227, %s15, 1
      %s229 = smul.addr %s228, 2
      %s230 = scalar_lea.vmem %s1, %s229
      %p231 = scmp.lt.s32.totalorder %s15, 1
      %s232 = scalar_select %p231, %s15, 1
      %s233 = smul.addr %s232, 2
      %s234 = scalar_lea.vmem %s2, %s233
      %p235 = scmp.lt.s32.totalorder %s15, 1
      %s236 = scalar_select %p235, %s15, 1
      %s237 = smul.addr %s236, 2
      %s238 = scalar_lea.vmem %s3, %s237
      %p239 = scmp.lt.s32.totalorder %s15, 1
      %s240 = scalar_select %p239, %s15, 1
      %s241 = scalar_lea.vmem %s4, %s240
      %v242 = vld [vmem:[%s226] sm:$0x1]
      %v243 = vunpack.c.l.bf16 %v242
      %v244 = vld [vmem:[%s230] sm:$0x1]
      %v245 = vunpack.c.l.bf16 %v244
      %v246 = vld [vmem:[%s234] sm:$0x1]
      %v247 = vunpack.c.l.bf16 %v246
      %v248 = vld [vmem:[%s238] sm:$0x1]
      %v249 = vunpack.c.l.bf16 %v248
      %s250 = scalar_lea.vmem %s226, 1
      %v251 = vld [vmem:[%s250] sm:$0x1]
      %v252 = vunpack.c.l.bf16 %v251
      %s253 = scalar_lea.vmem %s230, 1
      %v254 = vld [vmem:[%s253] sm:$0x1]
      %v255 = vunpack.c.l.bf16 %v254
      %v256 = vadd.f32 %v243, %v245
      %v258 = vrot.slane %v243, 7
      %v259 = vrot.slane %v258, 2
      %v261 = vadd.f32 %v256, %v259
      %v262 = vadd.f32 %v261, %v247
      %v263 = vadd.f32 %v262, %v249
      %v265 = vrot.slane %v247, 7
      %v266 = vrot.slane %v265, 2
      %v268 = vadd.f32 %v263, %v266
      %v269 = vadd.f32 %v268, %v252
      %v270 = vadd.f32 %v269, %v255
      %v272 = vrot.slane %v252, 7
      %v273 = vrot.slane %v272, 2
      %v275 = vadd.f32 %v270, %v273
      %v276 = vmul.f32 %v275, 0.11111111
      %v277 = vmax.f32 %v276, 0.0
      %v278 = vpack.c.bf16 %v277, %v277
      %vm279 = vcmask 647168
      %vm280 = vsmask.f32 256
      %vm281 = vmand %vm279, %vm280
      %v282 = vld [vmem:[%s241] sm:$0x1]
      %v283 = vsel %vm281, %v278, %v282
      %284 = vst [vmem:[%s241] sm:$0x1] %v283
      %p285 = scmp.lt.s32.totalorder %s15, 1
      %s286 = scalar_select %p285, %s15, 1
      %s287 = scalar_lea.vmem %s4, %s286
      // Predicated region
      $region37: #{_lambda_.97} parent=35 // pred_check
        %p288 = pneg %p137
      $region38: #{_lambda_.97} parent=35 // pred_check_branch
        %290 = sbr.rel (%p288) target = $region40
      $region39: #{_lambda_.97} parent=35 // pred_region
        _
      $region40: #{_lambda_.97} parent=35 // pred_fallthru
        _
    $region36: #{_lambda_.97} parent=5 // pred_fallthru
      _
    %p291 = scmp.le.s32.totalorder 2, %s10
    // Predicated region
    $region41: #{_lambda_.97} parent=5 // pred_check
      %p292 = pneg %p291
    $region42: #{_lambda_.97} parent=5 // pred_check_branch
      %294 = sbr.rel (%p292) target = $region44
    $region43: #{_lambda_.97} parent=5 // pred_region
      %s295 = ssub.s32 %s10, 2
      // Predicated region
      $region45: #{_lambda_.97} parent=43 // pred_check
        %p296 = pneg %p143
      $region46: #{_lambda_.97} parent=43 // pred_check_branch
        %298 = sbr.rel (%p296) target = $region48
      $region47: #{_lambda_.97} parent=43 // pred_region
        %p299 = scmp.lt.s32.totalorder %s16, 1
        %s300 = scalar_select %p299, %s16, 1
        %s301 = scalar_lea.vmem %s4, %s300
      $region48: #{_lambda_.97} parent=43 // pred_fallthru
        _
    $region44: #{_lambda_.97} parent=5 // pred_fallthru
      _
  $region6: #{_lambda_.97} parent=0 // loop_footer
    %s14 = sadd.s32 1, %s10
  $region7: #{_lambda_.97} parent=0 // loop_footer_branch
    %9 = sbr.rel target = $region3
  $region8: #{_lambda_.97} parent=0 // loop_exit
    _

// kernel: _lambda_.98
$region0: #{_lambda_.98}
  #allocation0 [shape = 'u32[]', space=smem, size = 0x4, offset = 0x4, fixed_abs, tag = 'smem constant byte address 0x4 - core index']
  #allocation1 [shape = 'u32[144,128]{1,0:T(1,128)}', space=vmem, size = 0x12000, scoped, tag = 'internal scratch']
  %s0 = inlined_call_operand.vmem [shape: bf16[2,160], index: 0, kind: input, shape index: {}]
  %s1 = inlined_call_operand.vmem [shape: bf16[160,40], index: 1, kind: input, shape index: {}]
  %s2 = inlined_call_operand.vmem [shape: f32[1,40], index: 2, kind: input, shape index: {}]
  %s3 = inlined_call_operand.vmem [shape: f32[1,40], index: 3, kind: input, shape index: {}]
  %s4 = inlined_call_operand.vmem [shape: bf16[2,40], index: 4, kind: output, shape index: {}]
  %s5 = sld [smem:[#allocation0]]
  $region26: #{_lambda_.98} parent=0
    _
  %s7 = ssub.s32 1, %s5
  %s8 = scalar_select 0, %s7, %s5
  // Predicated region
  $region2: #{_lambda_.98} parent=0 // pred_check
    _
  $region3: #{_lambda_.98} parent=0 // pred_check_branch
    %10 = sbr.rel (0) target = $region5
  $region4: #{_lambda_.98} parent=0 // pred_region
    _
  $region5: #{_lambda_.98} parent=0 // pred_fallthru
    _
  // Predicated region
  $region6: #{_lambda_.98} parent=0 // pred_check
    _
  $region7: #{_lambda_.98} parent=0 // pred_check_branch
    %12 = sbr.rel (0) target = $region9
  $region8: #{_lambda_.98} parent=0 // pred_region
    _
  $region9: #{_lambda_.98} parent=0 // pred_fallthru
    _
  // Predicated region
  $region10: #{_lambda_.98} parent=0 // pred_check
    _
  $region11: #{_lambda_.98} parent=0 // pred_check_branch
    %14 = sbr.rel (0) target = $region13
  $region12: #{_lambda_.98} parent=0 // pred_region
    _
  $region13: #{_lambda_.98} parent=0 // pred_fallthru
    _
  // Predicated region
  $region14: #{_lambda_.98} parent=0 // pred_check
    _
  $region15: #{_lambda_.98} parent=0 // pred_check_branch
    %16 = sbr.rel (0) target = $region17
  $region16: #{_lambda_.98} parent=0 // pred_region
    _
  $region17: #{_lambda_.98} parent=0 // pred_fallthru
    _
  %v18 = vld [vmem:[%s0] sm:$0x3]
  %v19 = vld [vmem:[%s1] sm:$0xf]
  %v20 = vld [vmem:[%s1 + $0x4] sm:$0xf]
  %v21 = vld [vmem:[%s1 + $0x8] sm:$0xf]
  %v22 = vld [vmem:[%s1 + $0xc] sm:$0xf]
  %v23 = vld [vmem:[%s1 + $0x10] sm:$0xf]
  %v24 = vld [vmem:[%s1 + $0x14] sm:$0xf]
  %v25 = vld [vmem:[%s1 + $0x18] sm:$0xf]
  %v26 = vld [vmem:[%s1 + $0x1c] sm:$0xf]
  %v27 = vld [vmem:[%s1 + $0x20] sm:$0xf]
  %v28 = vld [vmem:[%s1 + $0x24] sm:$0xf]
  %v29 = vld [vmem:[%s1 + $0x28] sm:$0xf]
  %v30 = vld [vmem:[%s1 + $0x2c] sm:$0xf]
  %v31 = vld [vmem:[%s1 + $0x30] sm:$0xf]
  %v32 = vld [vmem:[%s1 + $0x34] sm:$0xf]
  %v33 = vld [vmem:[%s1 + $0x38] sm:$0xf]
  %v34 = vld [vmem:[%s1 + $0x3c] sm:$0xf]
  %v35 = vld [vmem:[%s1 + $0x40] sm:$0xf]
  %v36 = vld [vmem:[%s1 + $0x44] sm:$0xf]
  %v37 = vld [vmem:[%s1 + $0x48] sm:$0xf]
  %v38 = vld [vmem:[%s1 + $0x4c] sm:$0xf]
  %v41 = vunpack.c.l.s4 1966171168
  %v42 = vunpack.c.0.s8 %v41
  %v43 = vlaneseq
  %v44 = vshrl.u32 %v43, 7
  %v45 = vsub.s32 %v42, %v44
  %v46 = vrot.slane %v18, %v45
  %v47 = vcombine.high %v46, %v46
  %v49 = vunpack.c.l.s4 1966171168
  %v50 = vunpack.c.0.s8 %v49
  %v51 = vlaneseq
  %v52 = vshrl.u32 %v51, 7
  %v53 = vsub.s32 %v50, %v52
  %v54 = vrot.slane %v46, %v53
  %v56 = vunpack.c.l.s4 1966171168
  %v57 = vunpack.c.0.s8 %v56
  %v58 = vlaneseq
  %v59 = vshrl.u32 %v58, 7
  %v60 = vsub.s32 %v57, %v59
  %v61 = vrot.slane %v47, %v60
  %v83 = vunpack.c.l.b16 %v19
  %v84 = vunpack.c.l.b16 %v20
  %v85 = vunpack.c.l.b16 %v21
  %v86 = vunpack.c.l.b16 %v22
  %v87 = vunpack.c.l.b16 %v23
  %v88 = vunpack.c.l.b16 %v24
  %v89 = vunpack.c.l.b16 %v25
  %v90 = vunpack.c.l.b16 %v26
  %v91 = vunpack.c.l.b16 %v27
  %v92 = vunpack.c.l.b16 %v28
  %v93 = vunpack.c.l.b16 %v29
  %v94 = vunpack.c.l.b16 %v30
  %v95 = vunpack.c.l.b16 %v31
  %v96 = vunpack.c.l.b16 %v32
  %v97 = vunpack.c.l.b16 %v33
  %v98 = vunpack.c.l.b16 %v34
  %v99 = vunpack.c.l.b16 %v35
  %v100 = vunpack.c.l.b16 %v36
  %v101 = vunpack.c.l.b16 %v37
  %v102 = vunpack.c.l.b16 %v38
  %v103 = vpack.c.b16 %v84, %v83
  %v104 = vpack.c.b16 %v86, %v85
  %v105 = vpack.c.b16 %v88, %v87
  %v106 = vpack.c.b16 %v90, %v89
  %v107 = vpack.c.b16 %v92, %v91
  %v108 = vpack.c.b16 %v94, %v93
  %v109 = vpack.c.b16 %v96, %v95
  %v110 = vpack.c.b16 %v98, %v97
  %v111 = vpack.c.b16 %v100, %v99
  %v112 = vpack.c.b16 %v102, %v101
  %vm123 = vcmask 261120
  %v125 = vsel %vm123, %v61, 0
  %127 = vmatprep.subr.bf16.mxu0 0
  %128 = vmatpush1.bf16.msra.mxu0 %v110
  %129 = vmatprep.subr.bf16.mxu0 0
  %130 = vmatpush1.bf16.msra.mxu0 %v109
  %131 = vmatprep.subr.bf16.mxu0 0
  %132 = vmatpush1.bf16.msra.mxu0 %v108
  %133 = vmatprep.subr.bf16.mxu0 0
  %134 = vmatpush1.bf16.msra.mxu0 %v107
  %135 = vmatprep.subr.bf16.mxu0 0
  %136 = vmatpush1.bf16.msra.mxu0 %v106
  %137 = vmatprep.subr.bf16.mxu0 0
  %138 = vmatpush1.bf16.msra.mxu0 %v105
  %139 = vmatprep.subr.bf16.mxu0 0
  %140 = vmatpush1.bf16.msra.mxu0 %v104
  %141 = vmatprep.subr.bf16.mxu0 0
  %142 = vmatpush1.bf16.msra.mxu0 %v103
  %143 = vmatprep.subr.bf16.mxu0 0
  %144 = vmatpush2.bf16.msra.mxu0 0
  %145 = vmatprep.subr.bf16.mxu0 0
  %146 = vmatpush2.bf16.msra.mxu0 0
  %147 = vmatprep.subr.bf16.mxu0 0
  %148 = vmatpush2.bf16.msra.mxu0 0
  %149 = vmatprep.subr.bf16.mxu0 0
  %150 = vmatpush2.bf16.msra.mxu0 0
  %151 = vmatprep.subr.bf16.mxu0 0
  %152 = vmatpush2.bf16.msra.mxu0 0
  %153 = vmatprep.subr.bf16.mxu0 0
  %154 = vmatpush2.bf16.msra.mxu0 0
  %155 = vmatprep.subr.bf16.mxu0 0
  %156 = vmatpush2.bf16.msra.mxu0 %v112
  %157 = vmatprep.subr.bf16.mxu0 0
  %158 = vmatpush2.bf16.msra.mxu0 %v111
  %159 = vmatprep.mubr.bf16.mxu0 %v125
  %160 = vmatmul.mubr.bf16.gmra.mxu0 %v54
  %v161 = vpop.f32.mrf.mxu0
  %v162 = vadd.f32 0.0, %v161
  %v163 = vpop.f32.mrf.mxu0
  %v164 = vpop.f32.mrf.mxu0
  %v165 = vpop.f32.mrf.mxu0
  %166 = vdwg.mxu0
  %v167 = vld [vmem:[%s2] sm:$0x1]
  %v169 = vlaneseq
  %v170 = vshrl.u32 %v169, 7
  %v171 = vsub.s32 0, %v170
  %v172 = vrot.slane %v167, %v171
  %v174 = vmul.f32 %v162, %v172
  %v175 = vld [vmem:[%s3] sm:$0x1]
  %v177 = vlaneseq
  %v178 = vshrl.u32 %v177, 7
  %v179 = vsub.s32 0, %v178
  %v180 = vrot.slane %v175, %v179
  %v182 = vadd.f32 %v174, %v180
  %v183 = vmax.f32 %v182, 0.0
  %v184 = vpack.c.bf16 %v183, %v183
  %vm185 = vcmask 319488
  %186 = vst.msk [vmem:[%s4] sm:$0x1] %vm185, %v184
  // Predicated region
  $region18: #{_lambda_.98} parent=0 // pred_check
    _
  $region19: #{_lambda_.98} parent=0 // pred_check_branch
    %188 = sbr.rel (0) target = $region21
  $region20: #{_lambda_.98} parent=0 // pred_region
    _
  $region21: #{_lambda_.98} parent=0 // pred_fallthru
    _
  // Predicated region
  $region22: #{_lambda_.98} parent=0 // pred_check
    _
  $region23: #{_lambda_.98} parent=0 // pred_check_branch
    %190 = sbr.rel (0) target = $region25
  $region24: #{_lambda_.98} parent=0 // pred_region
    _
  $region25: #{_lambda_.98} parent=0 // pred_fallthru
    _

// kernel: _lambda_.99
$region0: #{_lambda_.99}
  #allocation0 [shape = 'u32[]', space=smem, size = 0x4, offset = 0x4, fixed_abs, tag = 'smem constant byte address 0x4 - core index']
  #allocation1 [shape = 'u32[144,128]{1,0:T(1,128)}', space=vmem, size = 0x12000, scoped, tag = 'internal scratch']
  %s0 = inlined_call_operand.vmem [shape: bf16[2,3,3,40], index: 0, kind: input, shape index: {}]
  %s1 = inlined_call_operand.vmem [shape: f32[9,1,40], index: 1, kind: input, shape index: {}]
  %s2 = inlined_call_operand.vmem [shape: f32[1,1,40], index: 2, kind: input, shape index: {}]
  %s3 = inlined_call_operand.vmem [shape: f32[1,1,40], index: 3, kind: input, shape index: {}]
  %s4 = inlined_call_operand.vmem [shape: bf16[2,1,1,40], index: 4, kind: output, shape index: {}]
  %s5 = sld [smem:[#allocation0]]
  $region49: #{_lambda_.99} parent=0
    _
  %s7 = ssub.s32 1, %s5
  %s8 = scalar_select 0, %s7, %s5
  loop: start=0, step=1, limit=4
  $region2: #{_lambda_.99} parent=0 // loop_pre_header
    _
  $region3: #{_lambda_.99} parent=0 // loop_header
    %s10 = sphi 0, %s14
    %p11 = scmp.ge.s32.totalorder %s10, 4
    %s20 = sphi 0, %s22
    %s23 = sphi 0, %s20
    %s24 = sphi 0, %s23
    %s40 = sphi 0, %s24
    %s44 = sphi 0, %s44
    %s46 = sphi 0, %s44
    %s47 = sphi 0, %s46
    %s61 = sphi 0, %s47
    %s65 = sphi 0, %s65
    %s67 = sphi 0, %s65
    %s68 = sphi 0, %s67
    %s82 = sphi 0, %s68
    %s86 = sphi 0, %s86
    %s88 = sphi 0, %s86
    %s89 = sphi 0, %s88
    %s103 = sphi 0, %s89
    %s109 = sphi 0, %s111
    %s112 = sphi 0, %s109
    %s113 = sphi 0, %s112
    %s129 = sphi 0, %s113
  $region4: #{_lambda_.99} parent=0 // loop_header_branch
    %13 = sbr.rel (%p11) target = $region8
  $region5: #{_lambda_.99} parent=0 // loop_body
    %s15 = ssub.s32 %s10, 1
    %s16 = ssub.s32 %s10, 2
    %s17 = sadd.s32 %s10, 1
    %s18 = ssub.s32 %s10, %s17
    %p19 = scmp.eq.s32.totalorder %s18, 0
    %s21 = sadd.s32 %s20, 1
    %s22 = scalar_select %p19, %s20, %s21
    %p25 = pneg %p19
    %p26 = scmp.eq.s32.totalorder %s10, 1
    %p27 = por %p25, %p26
    %p28 = scmp.ne.s32.totalorder %s20, %s23
    %p29 = scmp.eq.s32.totalorder %s10, 0
    %p30 = por %p28, %p29
    %p31 = scmp.ne.s32.totalorder %s20, %s23
    %p32 = scmp.eq.s32.totalorder %s15, 1
    %p33 = por %p31, %p32
    %p34 = scmp.ne.s32.totalorder %s23, %s24
    %p35 = scmp.eq.s32.totalorder %s15, 0
    %p36 = por %p34, %p35
    %p37 = scmp.ne.s32.totalorder %s23, %s24
    %p38 = scmp.eq.s32.totalorder %s16, 1
    %p39 = por %p37, %p38
    %p41 = scmp.ne.s32.totalorder %s24, %s40
    %p42 = scmp.eq.s32.totalorder %s16, 0
    %p43 = por %p41, %p42
    %s45 = sadd.s32 %s44, 1
    %p48 = scmp.eq.s32.totalorder %s10, 1
    %p49 = scmp.ne.s32.totalorder %s44, %s46
    %p50 = scmp.eq.s32.totalorder %s10, 0
    %p51 = por %p49, %p50
    %p52 = scmp.ne.s32.totalorder %s44, %s46
    %p53 = scmp.eq.s32.totalorder %s15, 1
    %p54 = por %p52, %p53
    %p55 = scmp.ne.s32.totalorder %s46, %s47
    %p56 = scmp.eq.s32.totalorder %s15, 0
    %p57 = por %p55, %p56
    %p58 = scmp.ne.s32.totalorder %s46, %s47
    %p59 = scmp.eq.s32.totalorder %s16, 1
    %p60 = por %p58, %p59
    %p62 = scmp.ne.s32.totalorder %s47, %s61
    %p63 = scmp.eq.s32.totalorder %s16, 0
    %p64 = por %p62, %p63
    %s66 = sadd.s32 %s65, 1
    %p69 = scmp.eq.s32.totalorder %s10, 1
    %p70 = scmp.ne.s32.totalorder %s65, %s67
    %p71 = scmp.eq.s32.totalorder %s10, 0
    %p72 = por %p70, %p71
    %p73 = scmp.ne.s32.totalorder %s65, %s67
    %p74 = scmp.eq.s32.totalorder %s15, 1
    %p75 = por %p73, %p74
    %p76 = scmp.ne.s32.totalorder %s67, %s68
    %p77 = scmp.eq.s32.totalorder %s15, 0
    %p78 = por %p76, %p77
    %p79 = scmp.ne.s32.totalorder %s67, %s68
    %p80 = scmp.eq.s32.totalorder %s16, 1
    %p81 = por %p79, %p80
    %p83 = scmp.ne.s32.totalorder %s68, %s82
    %p84 = scmp.eq.s32.totalorder %s16, 0
    %p85 = por %p83, %p84
    %s87 = sadd.s32 %s86, 1
    %p90 = scmp.eq.s32.totalorder %s10, 1
    %p91 = scmp.ne.s32.totalorder %s86, %s88
    %p92 = scmp.eq.s32.totalorder %s10, 0
    %p93 = por %p91, %p92
    %p94 = scmp.ne.s32.totalorder %s86, %s88
    %p95 = scmp.eq.s32.totalorder %s15, 1
    %p96 = por %p94, %p95
    %p97 = scmp.ne.s32.totalorder %s88, %s89
    %p98 = scmp.eq.s32.totalorder %s15, 0
    %p99 = por %p97, %p98
    %p100 = scmp.ne.s32.totalorder %s88, %s89
    %p101 = scmp.eq.s32.totalorder %s16, 1
    %p102 = por %p100, %p101
    %p104 = scmp.ne.s32.totalorder %s89, %s103
    %p105 = scmp.eq.s32.totalorder %s16, 0
    %p106 = por %p104, %p105
    %s107 = ssub.s32 %s10, %s17
    %p108 = scmp.eq.s32.totalorder %s107, 0
    %s110 = sadd.s32 %s109, 1
    %s111 = scalar_select %p108, %s109, %s110
    %p114 = pneg %p108
    %p115 = scmp.eq.s32.totalorder %s10, 1
    %p116 = por %p114, %p115
    %p117 = scmp.ne.s32.totalorder %s109, %s112
    %p118 = scmp.eq.s32.totalorder %s10, 0
    %p119 = por %p117, %p118
    %p120 = scmp.ne.s32.totalorder %s109, %s112
    %p121 = scmp.eq.s32.totalorder %s15, 1
    %p122 = por %p120, %p121
    %p123 = scmp.ne.s32.totalorder %s112, %s113
    %p124 = scmp.eq.s32.totalorder %s15, 0
    %p125 = por %p123, %p124
    %p126 = scmp.ne.s32.totalorder %s112, %s113
    %p127 = scmp.eq.s32.totalorder %s16, 1
    %p128 = por %p126, %p127
    %p130 = scmp.ne.s32.totalorder %s113, %s129
    %p131 = scmp.eq.s32.totalorder %s16, 0
    %p132 = por %p130, %p131
    %p133 = scmp.le.s32.totalorder 1, %s10
    %p134 = scmp.lt.s32.totalorder %s10, 3
    %p135 = pnand %p133, %p134
    %p136 = pneg %p135
    // Predicated region
    $region9: #{_lambda_.99} parent=5 // pred_check
      _
    $region10: #{_lambda_.99} parent=5 // pred_check_branch
      %138 = sbr.rel (%p135) target = $region12
    $region11: #{_lambda_.99} parent=5 // pred_region
      %s139 = ssub.s32 %s10, 1
      // Predicated region
      $region13: #{_lambda_.99} parent=11 // pred_check
        %p140 = pneg %p57
      $region14: #{_lambda_.99} parent=11 // pred_check_branch
        %142 = sbr.rel (%p140) target = $region16
      $region15: #{_lambda_.99} parent=11 // pred_region
        _
      $region16: #{_lambda_.99} parent=11 // pred_fallthru
        _
      // Predicated region
      $region17: #{_lambda_.99} parent=11 // pred_check
        %p143 = pneg %p78
      $region18: #{_lambda_.99} parent=11 // pred_check_branch
        %145 = sbr.rel (%p143) target = $region20
      $region19: #{_lambda_.99} parent=11 // pred_region
        _
      $region20: #{_lambda_.99} parent=11 // pred_fallthru
        _
      // Predicated region
      $region21: #{_lambda_.99} parent=11 // pred_check
        %p146 = pneg %p99
      $region22: #{_lambda_.99} parent=11 // pred_check_branch
        %148 = sbr.rel (%p146) target = $region24
      $region23: #{_lambda_.99} parent=11 // pred_region
        _
      $region24: #{_lambda_.99} parent=11 // pred_fallthru
        _
    $region12: #{_lambda_.99} parent=5 // pred_fallthru
      _
    %p149 = scmp.lt.s32.totalorder %s10, 2
    // Predicated region
    $region25: #{_lambda_.99} parent=5 // pred_check
      %p150 = pneg %p149
    $region26: #{_lambda_.99} parent=5 // pred_check_branch
      %152 = sbr.rel (%p150) target = $region28
    $region27: #{_lambda_.99} parent=5 // pred_region
      // Predicated region
      $region29: #{_lambda_.99} parent=27 // pred_check
        %p153 = pneg %p30
      $region30: #{_lambda_.99} parent=27 // pred_check_branch
        %155 = sbr.rel (%p153) target = $region32
      $region31: #{_lambda_.99} parent=27 // pred_region
        %p156 = scmp.lt.s32.totalorder %s10, 1
        %s157 = scalar_select %p156, %s10, 1
        %s158 = smul.addr %s157, 3
        %s159 = smul.addr %s158, 2
        %s160 = scalar_lea.vmem %s0, %s159
      $region32: #{_lambda_.99} parent=27 // pred_fallthru
        _
    $region28: #{_lambda_.99} parent=5 // pred_fallthru
      _
    %p161 = scmp.le.s32.totalorder 1, %s10
    %p162 = scmp.lt.s32.totalorder %s10, 3
    %p163 = pnand %p161, %p162
    %p164 = pneg %p163
    // Predicated region
    $region33: #{_lambda_.99} parent=5 // pred_check
      _
    $region34: #{_lambda_.99} parent=5 // pred_check_branch
      %166 = sbr.rel (%p163) target = $region36
    $region35: #{_lambda_.99} parent=5 // pred_region
      %s167 = ssub.s32 %s10, 1
      %p168 = scmp.lt.s32.totalorder %s15, 1
      %s169 = scalar_select %p168, %s15, 1
      %s170 = smul.addr %s169, 3
      %s171 = smul.addr %s170, 2
      %s172 = scalar_lea.vmem %s0, %s171
      %p173 = pneg %p36
      %p174 = pneg %p33
      %p175 = pneg %p57
      %p176 = pneg %p54
      %p177 = pneg %p78
      %p178 = pneg %p75
      %p179 = pneg %p99
      %p180 = pneg %p96
      %p181 = pneg %p125
      %p182 = pneg %p122
      %p183 = scmp.lt.s32.totalorder %s15, 1
      %s184 = scalar_select %p183, %s15, 1
      %s185 = scalar_lea.vmem %s4, %s184
      %p186 = scmp.lt.s32.totalorder %s15, 1
      %s187 = scalar_select %p186, %s15, 1
      %s188 = smul.addr %s187, 3
      %s189 = smul.addr %s188, 2
      %s190 = scalar_lea.vmem %s0, %s189
      %p191 = scmp.lt.s32.totalorder %s15, 1
      %s192 = scalar_select %p191, %s15, 1
      %s193 = scalar_lea.vmem %s4, %s192
      %v194 = vld [vmem:[%s190] sm:$0x1]
      %v195 = vunpack.c.l.bf16 %v194
      %v196 = vld [vmem:[%s190] sm:$0x2]
      %v197 = vunpack.c.l.bf16 %v196
      %s198 = scalar_lea.vmem %s190, 2
      %v199 = vld [vmem:[%s198] sm:$0x1]
      %v200 = vunpack.c.l.bf16 %v199
      %v201 = vld [vmem:[%s198] sm:$0x2]
      %v202 = vunpack.c.l.bf16 %v201
      %s203 = scalar_lea.vmem %s190, 4
      %v204 = vld [vmem:[%s203] sm:$0x1]
      %v205 = vunpack.c.l.bf16 %v204
      %v206 = vld [vmem:[%s203] sm:$0x2]
      %v207 = vunpack.c.l.bf16 %v206
      %v208 = vld [vmem:[%s1] sm:$0x1]
      %v209 = vmul.f32 %v195, %v208
      %s210 = scalar_lea.vmem %s1, 1
      %v211 = vld [vmem:[%s210] sm:$0x1]
      %v214 = vunpack.c.l.s4 286326784
      %v215 = vunpack.c.0.s8 %v214
      %v216 = vlaneseq
      %v217 = vshrl.u32 %v216, 7
      %v218 = vsub.s32 %v215, %v217
      %v219 = vrot.slane %v211, %v218
      %v221 = vmul.f32 %v195, %v219
      %v223 = vrot.slane %v221, 5
      %v224 = vrot.slane %v223, 4
      %v226 = vadd.f32 %v209, %v224
      %s227 = scalar_lea.vmem %s1, 2
      %v228 = vld [vmem:[%s227] sm:$0x1]
      %v231 = vunpack.c.l.s4 286326784
      %v232 = vunpack.c.0.s8 %v231
      %v233 = vlaneseq
      %v234 = vshrl.u32 %v233, 7
      %v235 = vsub.s32 %v232, %v234
      %v236 = vrot.slane %v228, %v235
      %v238 = vmul.f32 %v197, %v236
      %v240 = vrot.slane %v238, 6
      %v241 = vrot.slane %v240, 4
      %v243 = vadd.f32 %v226, %v241
      %s244 = scalar_lea.vmem %s1, 3
      %v245 = vld [vmem:[%s244] sm:$0x1]
      %v246 = vmul.f32 %v200, %v245
      %v247 = vadd.f32 %v243, %v246
      %s248 = scalar_lea.vmem %s1, 4
      %v249 = vld [vmem:[%s248] sm:$0x1]
      %v252 = vunpack.c.l.s4 286326784
      %v253 = vunpack.c.0.s8 %v252
      %v254 = vlaneseq
      %v255 = vshrl.u32 %v254, 7
      %v256 = vsub.s32 %v253, %v255
      %v257 = vrot.slane %v249, %v256
      %v259 = vmul.f32 %v200, %v257
      %v261 = vrot.slane %v259, 5
      %v262 = vrot.slane %v261, 4
      %v264 = vadd.f32 %v247, %v262
      %s265 = scalar_lea.vmem %s1, 5
      %v266 = vld [vmem:[%s265] sm:$0x1]
      %v269 = vunpack.c.l.s4 286326784
      %v270 = vunpack.c.0.s8 %v269
      %v271 = vlaneseq
      %v272 = vshrl.u32 %v271, 7
      %v273 = vsub.s32 %v270, %v272
      %v274 = vrot.slane %v266, %v273
      %v276 = vmul.f32 %v202, %v274
      %v278 = vrot.slane %v276, 6
      %v279 = vrot.slane %v278, 4
      %v281 = vadd.f32 %v264, %v279
      %s282 = scalar_lea.vmem %s1, 6
      %v283 = vld [vmem:[%s282] sm:$0x1]
      %v284 = vmul.f32 %v205, %v283
      %v285 = vadd.f32 %v281, %v284
      %s286 = scalar_lea.vmem %s1, 7
      %v287 = vld [vmem:[%s286] sm:$0x1]
      %v290 = vunpack.c.l.s4 286326784
      %v291 = vunpack.c.0.s8 %v290
      %v292 = vlaneseq
      %v293 = vshrl.u32 %v292, 7
      %v294 = vsub.s32 %v291, %v293
      %v295 = vrot.slane %v287, %v294
      %v297 = vmul.f32 %v205, %v295
      %v299 = vrot.slane %v297, 5
      %v300 = vrot.slane %v299, 4
      %v302 = vadd.f32 %v285, %v300
      %s303 = scalar_lea.vmem %s1, 8
      %v304 = vld [vmem:[%s303] sm:$0x1]
      %v307 = vunpack.c.l.s4 286326784
      %v308 = vunpack.c.0.s8 %v307
      %v309 = vlaneseq
      %v310 = vshrl.u32 %v309, 7
      %v311 = vsub.s32 %v308, %v310
      %v312 = vrot.slane %v304, %v311
      %v314 = vmul.f32 %v207, %v312
      %v316 = vrot.slane %v314, 6
      %v317 = vrot.slane %v316, 4
      %v319 = vadd.f32 %v302, %v317
      %v320 = vld [vmem:[%s2] sm:$0x1]
      %v321 = vmul.f32 %v319, %v320
      %v322 = vld [vmem:[%s3] sm:$0x1]
      %v323 = vadd.f32 %v321, %v322
      %v324 = vpack.c.bf16 %v323, %v323
      %vm325 = vcmask 319488
      %vm326 = vsmask.f32 256
      %vm327 = vmand %vm325, %vm326
      %v328 = vld [vmem:[%s193] sm:$0x1]
      %v329 = vsel %vm327, %v324, %v328
      %330 = vst [vmem:[%s193] sm:$0x1] %v329
      %p331 = scmp.lt.s32.totalorder %s15, 1
      %s332 = scalar_select %p331, %s15, 1
      %s333 = scalar_lea.vmem %s4, %s332
      // Predicated region
      $region37: #{_lambda_.99} parent=35 // pred_check
        %p334 = pneg %p122
      $region38: #{_lambda_.99} parent=35 // pred_check_branch
        %336 = sbr.rel (%p334) target = $region40
      $region39: #{_lambda_.99} parent=35 // pred_region
        _
      $region40: #{_lambda_.99} parent=35 // pred_fallthru
        _
    $region36: #{_lambda_.99} parent=5 // pred_fallthru
      _
    %p337 = scmp.le.s32.totalorder 2, %s10
    // Predicated region
    $region41: #{_lambda_.99} parent=5 // pred_check
      %p338 = pneg %p337
    $region42: #{_lambda_.99} parent=5 // pred_check_branch
      %340 = sbr.rel (%p338) target = $region44
    $region43: #{_lambda_.99} parent=5 // pred_region
      %s341 = ssub.s32 %s10, 2
      // Predicated region
      $region45: #{_lambda_.99} parent=43 // pred_check
        %p342 = pneg %p128
      $region46: #{_lambda_.99} parent=43 // pred_check_branch
        %344 = sbr.rel (%p342) target = $region48
      $region47: #{_lambda_.99} parent=43 // pred_region
        %p345 = scmp.lt.s32.totalorder %s16, 1
        %s346 = scalar_select %p345, %s16, 1
        %s347 = scalar_lea.vmem %s4, %s346
      $region48: #{_lambda_.99} parent=43 // pred_fallthru
        _
    $region44: #{_lambda_.99} parent=5 // pred_fallthru
      _
  $region6: #{_lambda_.99} parent=0 // loop_footer
    %s14 = sadd.s32 1, %s10
  $region7: #{_lambda_.99} parent=0 // loop_footer_branch
    %9 = sbr.rel target = $region3
  $region8: #{_lambda_.99} parent=0 // loop_exit
    _

// kernel: _lambda_.100
$region0: #{_lambda_.100}
  #allocation0 [shape = 'u32[]', space=smem, size = 0x4, offset = 0x4, fixed_abs, tag = 'smem constant byte address 0x4 - core index']
  #allocation1 [shape = 'u32[144,128]{1,0:T(1,128)}', space=vmem, size = 0x12000, scoped, tag = 'internal scratch']
  %s0 = inlined_call_operand.vmem [shape: bf16[2,40], index: 0, kind: input, shape index: {}]
  %s1 = inlined_call_operand.vmem [shape: bf16[40,160], index: 1, kind: input, shape index: {}]
  %s2 = inlined_call_operand.vmem [shape: f32[1,160], index: 2, kind: input, shape index: {}]
  %s3 = inlined_call_operand.vmem [shape: f32[1,160], index: 3, kind: input, shape index: {}]
  %s4 = inlined_call_operand.vmem [shape: bf16[2,160], index: 4, kind: input, shape index: {}, may-alias: {4,5}]
  %s5 = inlined_call_operand.vmem [shape: bf16[2,160], index: 5, kind: output, shape index: {}, may-alias: {4,5}]
  %s6 = sld [smem:[#allocation0]]
  $region30: #{_lambda_.100} parent=0
    _
  %s8 = ssub.s32 1, %s6
  %s9 = scalar_select 0, %s8, %s6
  // Predicated region
  $region2: #{_lambda_.100} parent=0 // pred_check
    _
  $region3: #{_lambda_.100} parent=0 // pred_check_branch
    %11 = sbr.rel (0) target = $region5
  $region4: #{_lambda_.100} parent=0 // pred_region
    _
  $region5: #{_lambda_.100} parent=0 // pred_fallthru
    _
  // Predicated region
  $region6: #{_lambda_.100} parent=0 // pred_check
    _
  $region7: #{_lambda_.100} parent=0 // pred_check_branch
    %13 = sbr.rel (0) target = $region9
  $region8: #{_lambda_.100} parent=0 // pred_region
    _
  $region9: #{_lambda_.100} parent=0 // pred_fallthru
    _
  // Predicated region
  $region10: #{_lambda_.100} parent=0 // pred_check
    _
  $region11: #{_lambda_.100} parent=0 // pred_check_branch
    %15 = sbr.rel (0) target = $region13
  $region12: #{_lambda_.100} parent=0 // pred_region
    _
  $region13: #{_lambda_.100} parent=0 // pred_fallthru
    _
  // Predicated region
  $region14: #{_lambda_.100} parent=0 // pred_check
    _
  $region15: #{_lambda_.100} parent=0 // pred_check_branch
    %17 = sbr.rel (0) target = $region17
  $region16: #{_lambda_.100} parent=0 // pred_region
    _
  $region17: #{_lambda_.100} parent=0 // pred_fallthru
    _
  // Predicated region
  $region18: #{_lambda_.100} parent=0 // pred_check
    _
  $region19: #{_lambda_.100} parent=0 // pred_check_branch
    %19 = sbr.rel (0) target = $region21
  $region20: #{_lambda_.100} parent=0 // pred_region
    _
  $region21: #{_lambda_.100} parent=0 // pred_fallthru
    _
  %v21 = vld [vmem:[%s0] sm:$0x1]
  %v22 = vld [vmem:[%s1] sm:$0xff]
  %v23 = vld [vmem:[%s1 + $0x8] sm:$0xff]
  %v24 = vld [vmem:[%s1 + $0x10] sm:$0xff]
  %v25 = vld [vmem:[%s1 + $0x18] sm:$0xff]
  %v26 = vld [vmem:[%s1 + $0x20] sm:$0xff]
  %v32 = vunpack.c.l.b16 %v22
  %v33 = vunpack.c.h.b16 %v22
  %v34 = vunpack.c.l.b16 %v23
  %v35 = vunpack.c.h.b16 %v23
  %v36 = vunpack.c.l.b16 %v24
  %v37 = vunpack.c.h.b16 %v24
  %v38 = vunpack.c.l.b16 %v25
  %v39 = vunpack.c.h.b16 %v25
  %v40 = vunpack.c.l.b16 %v26
  %v41 = vunpack.c.h.b16 %v26
  %v42 = vpack.c.b16 %v34, %v32
  %v43 = vpack.c.b16 %v35, %v33
  %v44 = vpack.c.b16 %v38, %v36
  %v45 = vpack.c.b16 %v39, %v37
  %v46 = vpack.c.b16 %v40, %v40
  %v47 = vpack.c.b16 %v41, %v41
  %vm52 = vcmask 326656
  %v54 = vsel %vm52, %v21, 0
  %vm56 = vcmask 1043456
  %v58 = vsel %vm56, %v46, 0
  %v61 = vsel %vm56, %v47, 0
  %63 = vmatprep.subr.bf16.mxu0 0
  %64 = vmatpush1.bf16.msra.mxu0 0
  %65 = vmatprep.subr.bf16.mxu0 0
  %66 = vmatpush1.bf16.msra.mxu0 0
  %67 = vmatprep.subr.bf16.mxu0 0
  %68 = vmatpush1.bf16.msra.mxu0 0
  %69 = vmatprep.subr.bf16.mxu0 0
  %70 = vmatpush1.bf16.msra.mxu0 0
  %71 = vmatprep.subr.bf16.mxu0 0
  %72 = vmatpush1.bf16.msra.mxu0 0
  %73 = vmatprep.subr.bf16.mxu0 %v61
  %74 = vmatpush1.bf16.msra.mxu0 %v58
  %75 = vmatprep.subr.bf16.mxu0 %v45
  %76 = vmatpush1.bf16.msra.mxu0 %v44
  %77 = vmatprep.subr.bf16.mxu0 %v43
  %78 = vmatpush1.bf16.msra.mxu0 %v42
  %79 = vmatprep.subr.bf16.mxu0 0
  %80 = vmatpush2.bf16.msra.mxu0 0
  %81 = vmatprep.subr.bf16.mxu0 0
  %82 = vmatpush2.bf16.msra.mxu0 0
  %83 = vmatprep.subr.bf16.mxu0 0
  %84 = vmatpush2.bf16.msra.mxu0 0
  %85 = vmatprep.subr.bf16.mxu0 0
  %86 = vmatpush2.bf16.msra.mxu0 0
  %87 = vmatprep.subr.bf16.mxu0 0
  %88 = vmatpush2.bf16.msra.mxu0 0
  %89 = vmatprep.subr.bf16.mxu0 0
  %90 = vmatpush2.bf16.msra.mxu0 0
  %91 = vmatprep.subr.bf16.mxu0 0
  %92 = vmatpush2.bf16.msra.mxu0 0
  %93 = vmatprep.subr.bf16.mxu0 0
  %94 = vmatpush2.bf16.msra.mxu0 0
  %95 = vmatprep.mubr.bf16.mxu0 0
  %96 = vmatmul.mubr.bf16.gmra.mxu0 %v54
  %v97 = vpop.f32.mrf.mxu0
  %v98 = vadd.f32 0.0, %v97
  %v99 = vpop.f32.mrf.mxu0
  %v100 = vadd.f32 0.0, %v99
  %v101 = vpop.f32.mrf.mxu0
  %v102 = vpop.f32.mrf.mxu0
  %103 = vdwg.mxu0
  %v104 = vld [vmem:[%s2] sm:$0x3]
  %v106 = vlaneseq
  %v107 = vshrl.u32 %v106, 7
  %v108 = vsub.s32 0, %v107
  %v109 = vrot.slane %v104, %v108
  %v110 = vlaneseq
  %v111 = vshrl.u32 %v110, 7
  %v112 = vsub.s32 1, %v111
  %v113 = vrot.slane %v104, %v112
  %v116 = vmul.f32 %v98, %v109
  %v117 = vmul.f32 %v100, %v113
  %v118 = vld [vmem:[%s3] sm:$0x3]
  %v120 = vlaneseq
  %v121 = vshrl.u32 %v120, 7
  %v122 = vsub.s32 0, %v121
  %v123 = vrot.slane %v118, %v122
  %v124 = vlaneseq
  %v125 = vshrl.u32 %v124, 7
  %v126 = vsub.s32 1, %v125
  %v127 = vrot.slane %v118, %v126
  %v130 = vadd.f32 %v116, %v123
  %v131 = vadd.f32 %v117, %v127
  %v132 = vld [vmem:[%s4] sm:$0x3]
  %v133 = vunpack.c.l.bf16 %v132
  %v136 = vunpack.c.l.s4 1983009808
  %v137 = vunpack.c.0.s8 %v136
  %v138 = vlaneseq
  %v139 = vshrl.u32 %v138, 7
  %v140 = vsub.s32 %v137, %v139
  %v141 = vrot.slane %v133, %v140
  %v142 = vcombine.high %v141, %v141
  %v145 = vadd.f32 %v130, %v141
  %v146 = vadd.f32 %v131, %v142
  %v147 = vmax.f32 %v145, 0.0
  %v148 = vmax.f32 %v146, 0.0
  %v149 = vpack.c.bf16 %v147, %v147
  %v150 = vpack.c.bf16 %v148, %v148
  %v153 = vcombine.low %v149, %v150
  %v155 = vunpack.c.l.s4 1966171168
  %v156 = vunpack.c.0.s8 %v155
  %v157 = vlaneseq
  %v158 = vshrl.u32 %v157, 7
  %v159 = vsub.s32 %v156, %v158
  %v160 = vrot.slane %v153, %v159
  %v162 = vunpack.c.l.s4 1966171168
  %v163 = vunpack.c.0.s8 %v162
  %v164 = vlaneseq
  %v165 = vshrl.u32 %v164, 7
  %v166 = vsub.s32 %v163, %v165
  %v167 = vrot.slane %v160, %v166
  %vm169 = vcmask 1040384
  %vm170 = vcmask 254977
  %vm171 = vmor %vm170, %vm169
  %172 = vst.msk [vmem:[%s5] sm:$0x3] %vm171, %v167
  // Predicated region
  $region22: #{_lambda_.100} parent=0 // pred_check
    _
  $region23: #{_lambda_.100} parent=0 // pred_check_branch
    %174 = sbr.rel (0) target = $region25
  $region24: #{_lambda_.100} parent=0 // pred_region
    _
  $region25: #{_lambda_.100} parent=0 // pred_fallthru
    _
  // Predicated region
  $region26: #{_lambda_.100} parent=0 // pred_check
    _
  $region27: #{_lambda_.100} parent=0 // pred_check_branch
    %176 = sbr.rel (0) target = $region29
  $region28: #{_lambda_.100} parent=0 // pred_region
    _
  $region29: #{_lambda_.100} parent=0 // pred_fallthru
    _

// kernel: _lambda_.107
$region0: #{_lambda_.107}
  #allocation0 [shape = 'u32[]', space=smem, size = 0x4, offset = 0x4, fixed_abs, tag = 'smem constant byte address 0x4 - core index']
  #allocation1 [shape = 'u32[144,128]{1,0:T(1,128)}', space=vmem, size = 0x12000, scoped, tag = 'internal scratch']
  %s0 = inlined_call_operand.vmem [shape: bf16[2,1,160], index: 0, kind: input, shape index: {}]
  %s1 = inlined_call_operand.vmem [shape: f32[160,10], index: 1, kind: input, shape index: {}]
  %s2 = inlined_call_operand.vmem [shape: f32[1,10], index: 2, kind: input, shape index: {}]
  %s3 = inlined_call_operand.hbm [shape: f32[2,10], index: 3, kind: output, shape index: {}]
  %s4 = sld [smem:[#allocation0]]
  $region22: #{_lambda_.107} parent=0
    _
  %s6 = ssub.s32 1, %s4
  %s7 = scalar_select 0, %s6, %s4
  $region1: #{_lambda_.107} parent=0
    #allocation2 [shape = 'u8[1024]{0}', space=vmem, size = 0x400, scoped, tag = 'output window, operand 0, single buffered']
    #allocation3 [shape = 's32[1]{0}', space=sflag, size = 0x4, scoped, tag = 'scoped memory for _lambda_.107']
    %8 = vsyncpa [#allocation3], 0
    // Predicated region
    $region2: #{_lambda_.107} parent=1 // pred_check
      _
    $region3: #{_lambda_.107} parent=1 // pred_check_branch
      %10 = sbr.rel (0) target = $region5
    $region4: #{_lambda_.107} parent=1 // pred_region
      _
    $region5: #{_lambda_.107} parent=1 // pred_fallthru
      _
    // Predicated region
    $region6: #{_lambda_.107} parent=1 // pred_check
      _
    $region7: #{_lambda_.107} parent=1 // pred_check_branch
      %12 = sbr.rel (0) target = $region9
    $region8: #{_lambda_.107} parent=1 // pred_region
      _
    $region9: #{_lambda_.107} parent=1 // pred_fallthru
      _
    // Predicated region
    $region10: #{_lambda_.107} parent=1 // pred_check
      _
    $region11: #{_lambda_.107} parent=1 // pred_check_branch
      %14 = sbr.rel (0) target = $region13
    $region12: #{_lambda_.107} parent=1 // pred_region
      _
    $region13: #{_lambda_.107} parent=1 // pred_fallthru
      _
    %v15 = vld [vmem:[%s0] sm:$0x3]
    %v16 = vld [vmem:[%s0 + $0x2] sm:$0x3]
    %v17 = vunpack.c.l.bf16 %v15
    %v18 = vunpack.c.l.bf16 %v16
    %v19 = vadd.f32 %v17, 0.0
    %v20 = vadd.f32 %v18, 0.0
    %v21 = vld [vmem:[%s1] sm:$0xff]
    %v22 = vld [vmem:[%s1 + $0x8] sm:$0xff]
    %v23 = vld [vmem:[%s1 + $0x10] sm:$0xff]
    %v24 = vld [vmem:[%s1 + $0x18] sm:$0xff]
    %v25 = vld [vmem:[%s1 + $0x20] sm:$0xff]
    %v26 = vld [vmem:[%s1 + $0x28] sm:$0xff]
    %v27 = vld [vmem:[%s1 + $0x30] sm:$0xff]
    %v28 = vld [vmem:[%s1 + $0x38] sm:$0xff]
    %v29 = vld [vmem:[%s1 + $0x40] sm:$0xff]
    %v30 = vld [vmem:[%s1 + $0x48] sm:$0xff]
    %v31 = vld [vmem:[%s1 + $0x50] sm:$0xff]
    %v32 = vld [vmem:[%s1 + $0x58] sm:$0xff]
    %v33 = vld [vmem:[%s1 + $0x60] sm:$0xff]
    %v34 = vld [vmem:[%s1 + $0x68] sm:$0xff]
    %v35 = vld [vmem:[%s1 + $0x70] sm:$0xff]
    %v36 = vld [vmem:[%s1 + $0x78] sm:$0xff]
    %v37 = vld [vmem:[%s1 + $0x80] sm:$0xff]
    %v38 = vld [vmem:[%s1 + $0x88] sm:$0xff]
    %v39 = vld [vmem:[%s1 + $0x90] sm:$0xff]
    %v40 = vld [vmem:[%s1 + $0x98] sm:$0xff]
    %v41 = vld [vmem:[%s2] sm:$0x1]
    %v43 = vlaneseq
    %v44 = vshrl.u32 %v43, 7
    %v45 = vsub.s32 0, %v44
    %v46 = vrot.slane %v41, %v45
    %v50 = vlaneseq
    %v51 = vshrl.u32 %v50, 7
    %v52 = vsub.s32 0, %v51
    %v53 = vrot.slane %v19, %v52
    %v54 = vlaneseq
    %v55 = vshrl.u32 %v54, 7
    %v56 = vsub.s32 2, %v55
    %v57 = vrot.slane %v19, %v56
    %v58 = vlaneseq
    %v59 = vshrl.u32 %v58, 7
    %v60 = vsub.s32 0, %v59
    %v61 = vrot.slane %v20, %v60
    %v62 = vlaneseq
    %v63 = vshrl.u32 %v62, 7
    %v64 = vsub.s32 2, %v63
    %v65 = vrot.slane %v20, %v64
    %vm66 = vcmask 1041409
    %v67 = vsel %vm66, %v61, %v53
    %v68 = vsel %vm66, %v65, %v57
    %vm70 = vcmask 261120
    %v71 = vsel %vm70, %v68, 0
    %73 = vmatprep.subr.mxu0 0.0
    %74 = vmatpush1.msra.mxu0 %v36
    %75 = vmatprep.subr.mxu0 0.0
    %76 = vmatpush1.msra.mxu0 %v35
    %77 = vmatprep.subr.mxu0 0.0
    %78 = vmatpush1.msra.mxu0 %v34
    %79 = vmatprep.subr.mxu0 0.0
    %80 = vmatpush1.msra.mxu0 %v33
    %81 = vmatprep.subr.mxu0 0.0
    %82 = vmatpush1.msra.mxu0 %v32
    %83 = vmatprep.subr.mxu0 0.0
    %84 = vmatpush1.msra.mxu0 %v31
    %85 = vmatprep.subr.mxu0 0.0
    %86 = vmatpush1.msra.mxu0 %v30
    %87 = vmatprep.subr.mxu0 0.0
    %88 = vmatpush1.msra.mxu0 %v29
    %89 = vmatprep.subr.mxu0 0.0
    %90 = vmatpush1.msra.mxu0 %v28
    %91 = vmatprep.subr.mxu0 0.0
    %92 = vmatpush1.msra.mxu0 %v27
    %93 = vmatprep.subr.mxu0 0.0
    %94 = vmatpush1.msra.mxu0 %v26
    %95 = vmatprep.subr.mxu0 0.0
    %96 = vmatpush1.msra.mxu0 %v25
    %97 = vmatprep.subr.mxu0 0.0
    %98 = vmatpush1.msra.mxu0 %v24
    %99 = vmatprep.subr.mxu0 0.0
    %100 = vmatpush1.msra.mxu0 %v23
    %101 = vmatprep.subr.mxu0 0.0
    %102 = vmatpush1.msra.mxu0 %v22
    %103 = vmatprep.subr.mxu0 0.0
    %104 = vmatpush1.msra.mxu0 %v21
    %105 = vmatprep.subr.mxu0 0.0
    %106 = vmatpush2.msra.mxu0 0.0
    %107 = vmatprep.subr.mxu0 0.0
    %108 = vmatpush2.msra.mxu0 0.0
    %109 = vmatprep.subr.mxu0 0.0
    %110 = vmatpush2.msra.mxu0 0.0
    %111 = vmatprep.subr.mxu0 0.0
    %112 = vmatpush2.msra.mxu0 0.0
    %113 = vmatprep.subr.mxu0 0.0
    %114 = vmatpush2.msra.mxu0 0.0
    %115 = vmatprep.subr.mxu0 0.0
    %116 = vmatpush2.msra.mxu0 0.0
    %117 = vmatprep.subr.mxu0 0.0
    %118 = vmatpush2.msra.mxu0 0.0
    %119 = vmatprep.subr.mxu0 0.0
    %120 = vmatpush2.msra.mxu0 0.0
    %121 = vmatprep.subr.mxu0 0.0
    %122 = vmatpush2.msra.mxu0 0.0
    %123 = vmatprep.subr.mxu0 0.0
    %124 = vmatpush2.msra.mxu0 0.0
    %125 = vmatprep.subr.mxu0 0.0
    %126 = vmatpush2.msra.mxu0 0.0
    %127 = vmatprep.subr.mxu0 0.0
    %128 = vmatpush2.msra.mxu0 0.0
    %129 = vmatprep.subr.mxu0 0.0
    %130 = vmatpush2.msra.mxu0 %v40
    %131 = vmatprep.subr.mxu0 0.0
    %132 = vmatpush2.msra.mxu0 %v39
    %133 = vmatprep.subr.mxu0 0.0
    %134 = vmatpush2.msra.mxu0 %v38
    %135 = vmatprep.subr.mxu0 0.0
    %136 = vmatpush2.msra.mxu0 %v37
    %137 = vmatprep.mubr.f32.mxu0 %v71
    %138 = vmatmul.mubr.f32.gmra.mxu0 %v67
    %v139 = vpop.f32.mrf.mxu0
    %v140 = vadd.f32 %v46, %v139
    %v141 = vpop.f32.mrf.mxu0
    %142 = vdwg.mxu0
    %vm143 = vcmask 74752
    %144 = vst.msk [vmem:[#allocation2] sm:$0x3] %vm143, %v140
    // Predicated region
    $region14: #{_lambda_.107} parent=1 // pred_check
      _
    $region15: #{_lambda_.107} parent=1 // pred_check_branch
      %146 = sbr.rel (0) target = $region17
    $region16: #{_lambda_.107} parent=1 // pred_region
      %s148 = ssub.s32 32, 32
      %149 = vsyncadd [#allocation3], %s148
      %s151 = sshll.u32 [#allocation2], 4
      %s152 = int_to_ptr.vmem [resolvable:$true] %s151
      %154 = dma.vmem_to_hbm [thread:$0]  %s152, 32, %s3, [#allocation3]
    $region17: #{_lambda_.107} parent=1 // pred_fallthru
      _
    // Predicated region
    $region18: #{_lambda_.107} parent=1 // pred_check
      _
    $region19: #{_lambda_.107} parent=1 // pred_check_branch
      %156 = sbr.rel (0) target = $region21
    $region20: #{_lambda_.107} parent=1 // pred_region
      %157 = dma.done [#allocation3], 32
    $region21: #{_lambda_.107} parent=1 // pred_fallthru
      _
    %158 = vsyncpa [#allocation3], 1

</llo_original>
